<compile_context>
chip_gen: v6e
topology: v6e:2x2x1
jax: 0.10.0
libtpu: 0.0.40
codegen_flags: <defaults>
</compile_context>

<pallas_src>
import functools

import jax
import jax.numpy as jnp
from jax.experimental import pallas as pl
from jax.experimental.pallas import tpu as pltpu


def _mylstm_kernel(H, C, D, Dp, mxu_dtype,
                   xp_ref, sk_ref, sc_ref, ul_ref, whh_ref,
                   out_ref, h_ref, c_ref):
    """Grid = (batch_blocks, T // C); one call runs C timesteps of the RNN."""

    @pl.when(pl.program_id(1) == 0)
    def _init():  # start of the time recurrence for this batch block
        h_ref[...] = jnp.zeros_like(h_ref)
        c_ref[...] = jnp.zeros_like(c_ref)

    # Grid-invariant blocks, loaded once per grid step.
    s_k = sk_ref[...]      # (B, 2H)  hoisted attention context
    s_c = sc_ref[...]      # (B, 2H)  s_k @ C_lambda + b_lambda
    u_l = ul_ref[...]      # (2H, 2H) U_lambda
    w_hh = whh_ref[...]    # (2H, 8H) block-diag [Whh_fw|Whh_bw], gate order [i|f|o|g]

    # State carried as values across the unrolled chunk (scratch refs are only
    # touched at the chunk boundaries).
    hidden = h_ref[...]    # (B, 2H) = [fw_h | bw_h]
    cell = c_ref[...]      # (B, 2H) = [fw_c | bw_c]

    pad = Dp - D
    if pad:  # hoisted constant (JAX does not CSE broadcasts inside the loop)
        zpad = jnp.zeros((hidden.shape[0], pad), jnp.float32)

    for j in range(C):  # static unroll over the timestep chunk
        # lambda gate (the attention context s_k is time-invariant).
        lam = jax.nn.sigmoid(
            jnp.dot(hidden.astype(mxu_dtype), u_l,
                    preferred_element_type=jnp.float32) + s_c)
        h_out = (1.0 - lam) * hidden + lam * s_k            # module output, step j
        if pad:
            out_ref[j] = jnp.concatenate([h_out, zpad],
                                         axis=-1).astype(out_ref.dtype)
        else:
            out_ref[j] = h_out.astype(out_ref.dtype)

        # Both LSTM cells with a single MXU push: block-diagonal recurrent
        # weight; the input projection (incl. both biases) is already in xp.
        gates = xp_ref[j] + jnp.dot(h_out.astype(mxu_dtype), w_hh,
                                    preferred_element_type=jnp.float32)  # (B, 8H)
        sg = jax.nn.sigmoid(gates[:, :6 * H])   # [i_fw,i_bw,f_fw,f_bw,o_fw,o_bw]
        tg = jnp.tanh(gates[:, 6 * H:])         # [g_fw, g_bw]
        i_g = sg[:, 0:2 * H]
        f_g = sg[:, 2 * H:4 * H]
        o_g = sg[:, 4 * H:6 * H]
        cell = f_g * cell + i_g * tg
        hidden = o_g * jnp.tanh(cell)

    h_ref[...] = hidden
    c_ref[...] = cell


def _pick_chunk(T, target):
    c = min(target, T)
    while T % c:
        c -= 1
    return c


def mylstm_forward(x, y, mask, params, hidden_size, *,
                   chunk_target=16, batch_blocks=1,
                   single_buffer_constants=True,
                   pad_output_lanes=True,
                   mxu_dtype=jnp.float32):
    """Pallas forward of MYLSTM.  x: (B,T,I), y: (B,T,2H) -> (B,T,2H).

    `mask` is accepted for API parity but unused (the reference forward never
    reads it).  mxu_dtype=bfloat16 (f32 accumulation/state) is worthwhile on
    all TPU generations (v5e emulates f32 matmul operands with ~3x passes),
    but validate the compounded recurrence error at realistic T before use.
    """
    del mask  # TODO(synk): the original PyTorch forward also ignores `mask`.
    B, T, I = x.shape
    H = hidden_size
    D = 2 * H
    assert y.shape == (B, T, D), "knowledge_size must equal 2*hidden_size"
    assert B % batch_blocks == 0
    Bblk = B // batch_blocks
    # (8,128) rule + megacore guidance: only split the batch when each block
    # still fills at least one sublane tile.
    assert batch_blocks == 1 or Bblk % 8 == 0, (
        "batch_blocks > 1 requires each batch block to be a multiple of 8 rows")

    x = x.astype(jnp.float32)
    y = y.astype(jnp.float32)

    # ---- attention hoisted out of the recurrence ---------------------------
    # softmax over t is shift-invariant and the hidden-dependent logit term
    # (hidden @ W_a) @ w_a is constant over t, so attention / s_k / the
    # lambda-gate context are identical at every timestep.
    source = y @ params["U_a"]                                    # (B, T, D)
    logits = ((source + params["b_a"]) @ params["w_a"])[..., 0]   # (B, T)
    attn = jax.nn.softmax(logits, axis=1)
    s_k = jnp.sum(y * attn[:, :, None], axis=1)                   # (B, D)
    sC = s_k @ params["C_lambda"] + params["b_lambda"]            # (B, D)

    # ---- input projection hoisted into one big GEMM per direction ----------
    # PyTorch LSTMCell gate order is [i, f, g, o]; kernel layout is
    # [i_fw, i_bw, f_fw, f_bw, o_fw, o_bw, g_fw, g_bw]  (sigmoid 6H | tanh 2H).
    b_fw = params["fw_bih"] + params["fw_bhh"]
    b_bw = params["bw_bih"] + params["bw_bhh"]
    xp_fw = x @ params["fw_Wih"].T + b_fw                         # (B, T, 4H)
    xp_bw = x[:, ::-1, :] @ params["bw_Wih"].T + b_bw             # reversed time

    def g4(a, k):  # gate block k (PyTorch order i,f,g,o) along the last dim
        return a[..., k * H:(k + 1) * H]

    x_proj = jnp.concatenate(
        [g4(xp_fw, 0), g4(xp_bw, 0),      # i
         g4(xp_fw, 1), g4(xp_bw, 1),      # f
         g4(xp_fw, 3), g4(xp_bw, 3),      # o
         g4(xp_fw, 2), g4(xp_bw, 2)],     # g
        axis=-1)                                                   # (B, T, 8H)
    x_proj = jnp.transpose(x_proj, (1, 0, 2))                      # (T, B, 8H)

    # ---- block-diagonal recurrent weight: one MXU push per timestep --------
    Whf = params["fw_Whh"].T                                       # (H, 4H)
    Whb = params["bw_Whh"].T
    W_blk = jnp.zeros((D, 8 * H), jnp.float32)
    for col, gk in enumerate((0, 1, 3, 2)):                        # i, f, o, g
        W_blk = W_blk.at[0:H, (2 * col) * H:(2 * col + 1) * H].set(g4(Whf, gk))
        W_blk = W_blk.at[H:D, (2 * col + 1) * H:(2 * col + 2) * H].set(g4(Whb, gk))
    Ul = params["U_lambda"]

    if mxu_dtype != jnp.float32:   # bf16 MXU operands, f32 accumulation/state
        W_blk = W_blk.astype(mxu_dtype)
        Ul = Ul.astype(mxu_dtype)

    # ---- lane-dense output: pad 2H up to a multiple of 128 -----------------
    if pad_output_lanes and D % 128 != 0:
        Dp = ((D + 127) // 128) * 128
    else:
        Dp = D

    C = _pick_chunk(T, chunk_target)
    NC = T // C
    NB = batch_blocks

    def const_spec(shape):                       # grid-invariant weights
        idx = lambda b, c: (0, 0)
        if single_buffer_constants:
            return pl.BlockSpec(shape, idx, pipeline_mode=pl.Buffered(1))
        return pl.BlockSpec(shape, idx)

    def batch_const_spec(shape):                 # invariant along the time axis
        idx = lambda b, c: (b, 0)
        if single_buffer_constants:
            return pl.BlockSpec(shape, idx, pipeline_mode=pl.Buffered(1))
        return pl.BlockSpec(shape, idx)

    kernel = functools.partial(_mylstm_kernel, H, C, D, Dp, mxu_dtype)

    # ---- VMEM budget (no 32 MiB floor; capped for v7x's 64 MiB/TC) ---------
    w_item = jnp.dtype(mxu_dtype).itemsize
    n_const = 1 if single_buffer_constants else 2
    est = (2 * C * Bblk * 8 * H * 4            # x_proj chunk (double-buffered)
           + 2 * C * Bblk * Dp * 4             # output chunk (double-buffered)
           + n_const * 2 * Bblk * D * 4        # s_k, sC
           + n_const * (D * D + D * 8 * H) * w_item   # U_lambda, W_blk
           + 2 * Bblk * D * 4)                 # hidden/cell scratch
    vmem_limit = int(min(max(2 * est + (2 << 20), 8 << 20), 48 << 20))

    cost = pl.CostEstimate(
        flops=2 * T * B * (D * 8 * H + D * D),
        transcendentals=12 * T * B * H,
        bytes_accessed=4 * (T * B * 8 * H + T * B * Dp + 2 * B * D
                            + D * D + D * 8 * H))

    out_t = pl.pallas_call(
        kernel,
        out_shape=jax.ShapeDtypeStruct((T, B, Dp), jnp.float32),
        grid_spec=pltpu.PrefetchScalarGridSpec(
            num_scalar_prefetch=0,
            grid=(NB, NC),
            in_specs=[
                pl.BlockSpec((C, Bblk, 8 * H), lambda b, c: (c, b, 0)),  # x_proj
                batch_const_spec((Bblk, D)),                             # s_k
                batch_const_spec((Bblk, D)),                             # s_k@C+b
                const_spec((D, D)),                                      # U_lambda
                const_spec((D, 8 * H)),                                  # W_blk
            ],
            out_specs=pl.BlockSpec((C, Bblk, Dp), lambda b, c: (c, b, 0)),
            scratch_shapes=[
                pltpu.VMEM((Bblk, D), jnp.float32),   # hidden = [fw_h | bw_h]
                pltpu.VMEM((Bblk, D), jnp.float32),   # cell   = [fw_c | bw_c]
            ],
        ),
        compiler_params=pltpu.CompilerParams(
            dimension_semantics=("parallel", "arbitrary"),
            vmem_limit_bytes=vmem_limit),
        cost_estimate=cost,
    )(x_proj, s_k, sC, Ul, W_blk)

    # One small output-side transpose; the input side needs none (the
    # projection GEMM above emits the time-major stream directly).
    return jnp.transpose(out_t[..., :D], (1, 0, 2))                # (B, T, 2H)


def mylstm_reference(x, y, params, hidden_size):
    """Pure-JAX faithful transcription of the PyTorch forward (validation)."""
    B, T, _ = x.shape
    H = hidden_size
    fw_h = jnp.zeros((B, H), jnp.float32)
    fw_c = jnp.zeros((B, H), jnp.float32)
    bw_h = jnp.zeros((B, H), jnp.float32)
    bw_c = jnp.zeros((B, H), jnp.float32)
    source = y @ params["U_a"]

    def cell(xv, hv, cv, Wih, Whh, bih, bhh):
        gates = xv @ Wih.T + bih + hv @ Whh.T + bhh
        i = jax.nn.sigmoid(gates[:, :H])
        f = jax.nn.sigmoid(gates[:, H:2 * H])
        g = jnp.tanh(gates[:, 2 * H:3 * H])
        o = jax.nn.sigmoid(gates[:, 3 * H:])
        c = f * cv + i * g
        return o * jnp.tanh(c), c

    outs = []
    for k in range(T):
        curx = x[:, k, :]
        curx_bw = x[:, T - 1 - k, :]
        hidden = jnp.concatenate([fw_h, bw_h], axis=-1)
        hidden_tmp = hidden @ params["W_a"]
        matrix = ((hidden_tmp[:, None, :] + source + params["b_a"])
                  @ params["w_a"])[..., 0]
        attn = jax.nn.softmax(matrix, axis=1)
        s_k = jnp.sum(y * attn[:, :, None], axis=1)
        lam = jax.nn.sigmoid(hidden @ params["U_lambda"]
                             + s_k @ params["C_lambda"] + params["b_lambda"])
        hidden = (1.0 - lam) * hidden + lam * s_k
        fw_h = hidden[:, :H]
        bw_h = hidden[:, H:]
        fw_h, fw_c = cell(curx, fw_h, fw_c, params["fw_Wih"], params["fw_Whh"],
                          params["fw_bih"], params["fw_bhh"])
        bw_h, bw_c = cell(curx_bw, bw_h, bw_c, params["bw_Wih"], params["bw_Whh"],
                          params["bw_bih"], params["bw_bhh"])
        outs.append(hidden)
    return jnp.stack(outs, axis=1)


def init_params(key, input_size, hidden_size):
    """Deterministic synthetic init (xavier-like weights, zero att biases)."""
    H = hidden_size
    D = 2 * H
    I = input_size
    ks = jax.random.split(key, 12)

    def xavier(k, shape):
        fan_in, fan_out = shape[0], shape[1]
        std = (2.0 / (fan_in + fan_out)) ** 0.5
        return std * jax.random.normal(k, shape, jnp.float32)

    def uni(k, shape):
        bound = 1.0 / (H ** 0.5)
        return jax.random.uniform(k, shape, jnp.float32, -bound, bound)

    return {
        "W_a": xavier(ks[0], (D, D)),
        "U_a": xavier(ks[1], (D, D)),
        "b_a": jnp.zeros((D,), jnp.float32),
        "w_a": xavier(ks[2], (D, 1)),
        "U_lambda": xavier(ks[3], (D, D)),
        "C_lambda": xavier(ks[4], (D, D)),
        "b_lambda": jnp.zeros((D,), jnp.float32),
        "fw_Wih": uni(ks[5], (4 * H, I)),
        "fw_Whh": uni(ks[6], (4 * H, H)),
        "fw_bih": uni(ks[7], (4 * H,)),
        "fw_bhh": uni(ks[8], (4 * H,)),
        "bw_Wih": uni(ks[9], (4 * H, I)),
        "bw_Whh": uni(ks[10], (4 * H, H)),
        "bw_bih": uni(ks[11], (4 * H,)),
        "bw_bhh": jnp.zeros((4 * H,), jnp.float32),
    }


if __name__ == "__main__":
    # Small shapes consistent with the module (the original hard-codes
    # knowledge_size == 2*hidden_size).  H=16 -> D=32, 8H=128 so the projected
    # input stream is already lane-dense and the output is padded 32 -> 128.
    B, T, I, H = 2, 16, 24, 16
    D = 2 * H

    key = jax.random.PRNGKey(0)
    kx, ky, kp = jax.random.split(key, 3)
    x = jax.random.normal(kx, (B, T, I), jnp.float32)
    y = jax.random.normal(ky, (B, T, D), jnp.float32)
    mask = jnp.ones((B, T), jnp.int32)  # unused by forward, kept for API parity
    params = init_params(kp, I, H)

    def run(single_buffer):
        return mylstm_forward(x, y, mask, params, H,
                              single_buffer_constants=single_buffer)

    try:
        out = run(True)
    except Exception:
        # pipeline_mode=pl.Buffered(1) (single-buffered constants) may be
        # unsupported on this JAX/Mosaic version; retry with default
        # double-buffering.  Genuine errors re-raise from the retry.
        out = run(False)
    out = jax.block_until_ready(out)

    ref = jax.block_until_ready(mylstm_reference(x, y, params, H))
    assert out.shape == (B, T, D), out.shape
    max_err = float(jnp.max(jnp.abs(out - ref)))
    assert max_err < 1e-3, max_err

    print("KERNEL_OK")
</pallas_src>

<mosaic_0001>
module attributes {stable_mosaic.version = 11 : i64} {
  func.func @_mylstm_kernel(%arg0: i32, %arg1: i32, %arg2: memref<16x2x128xf32, #tpu.memory_space<vmem>>, %arg3: memref<2x32xf32, #tpu.memory_space<vmem>>, %arg4: memref<2x32xf32, #tpu.memory_space<vmem>>, %arg5: memref<32x32xf32, #tpu.memory_space<vmem>>, %arg6: memref<32x128xf32, #tpu.memory_space<vmem>>, %arg7: memref<16x2x128xf32, #tpu.memory_space<vmem>>, %arg8: memref<2x32xf32, #tpu.memory_space<vmem>>, %arg9: memref<2x32xf32, #tpu.memory_space<vmem>>) attributes {dimension_semantics = [#tpu.dimension_semantics<parallel>, #tpu.dimension_semantics<arbitrary>], iteration_bounds = array<i64: 1, 1>, scalar_prefetch = 0 : i64, scratch_operands = 2 : i64, tpu.core_type = #tpu.core_type<tc>, window_params = [{transform_indices = @transform_0, window_bounds = array<i64: 16, 2, 128>}, {pipeline_mode = #tpu.pipeline_mode<synchronous>, transform_indices = @transform_1, window_bounds = array<i64: 2, 32>}, {pipeline_mode = #tpu.pipeline_mode<synchronous>, transform_indices = @transform_2, window_bounds = array<i64: 2, 32>}, {pipeline_mode = #tpu.pipeline_mode<synchronous>, transform_indices = @transform_3, window_bounds = array<i64: 32, 32>}, {pipeline_mode = #tpu.pipeline_mode<synchronous>, transform_indices = @transform_4, window_bounds = array<i64: 32, 128>}, {transform_indices = @transform_5, window_bounds = array<i64: 16, 2, 128>}]} {
    %c0_i32 = arith.constant 0 : i32
    %0 = arith.cmpi eq, %arg1, %c0_i32 : i32
    %1 = arith.extui %0 : i1 to i32
    %c0_i32_0 = arith.constant 0 : i32
    %2 = arith.cmpi ne, %1, %c0_i32_0 : i32
    scf.if %2 {
      %cst_177 = arith.constant 0.000000e+00 : f32
      %588 = vector.broadcast %cst_177 : f32 to vector<2x32xf32>
      %c0_178 = arith.constant 0 : index
      %c0_179 = arith.constant 0 : index
      %589 = vector.load %arg8[%c0_178, %c0_179] : memref<2x32xf32, #tpu.memory_space<vmem>>, vector<2x32xf32>
      tpu.vector_store %arg8[%c0_178, %c0_179], %588 {strides = array<i32>} : memref<2x32xf32, #tpu.memory_space<vmem>>, vector<2x32xf32>,
      %cst_180 = arith.constant 0.000000e+00 : f32
      %590 = vector.broadcast %cst_180 : f32 to vector<2x32xf32>
      %c0_181 = arith.constant 0 : index
      %c0_182 = arith.constant 0 : index
      %591 = vector.load %arg9[%c0_181, %c0_182] : memref<2x32xf32, #tpu.memory_space<vmem>>, vector<2x32xf32>
      tpu.vector_store %arg9[%c0_181, %c0_182], %590 {strides = array<i32>} : memref<2x32xf32, #tpu.memory_space<vmem>>, vector<2x32xf32>,
    } else {
    }
    %c0 = arith.constant 0 : index
    %c0_1 = arith.constant 0 : index
    %3 = vector.load %arg3[%c0, %c0_1] : memref<2x32xf32, #tpu.memory_space<vmem>>, vector<2x32xf32>
    %c0_2 = arith.constant 0 : index
    %c0_3 = arith.constant 0 : index
    %4 = vector.load %arg4[%c0_2, %c0_3] : memref<2x32xf32, #tpu.memory_space<vmem>>, vector<2x32xf32>
    %c0_4 = arith.constant 0 : index
    %c0_5 = arith.constant 0 : index
    %5 = vector.load %arg5[%c0_4, %c0_5] : memref<32x32xf32, #tpu.memory_space<vmem>>, vector<32x32xf32>
    %c0_6 = arith.constant 0 : index
    %c0_7 = arith.constant 0 : index
    %6 = vector.load %arg6[%c0_6, %c0_7] : memref<32x128xf32, #tpu.memory_space<vmem>>, vector<32x128xf32>
    %c0_8 = arith.constant 0 : index
    %c0_9 = arith.constant 0 : index
    %7 = vector.load %arg8[%c0_8, %c0_9] : memref<2x32xf32, #tpu.memory_space<vmem>>, vector<2x32xf32>
    %c0_10 = arith.constant 0 : index
    %c0_11 = arith.constant 0 : index
    %8 = vector.load %arg9[%c0_10, %c0_11] : memref<2x32xf32, #tpu.memory_space<vmem>>, vector<2x32xf32>
    %cst = arith.constant 0.000000e+00 : f32
    %9 = vector.broadcast %cst : f32 to vector<2x96xf32>
    %cst_12 = arith.constant dense<0.000000e+00> : vector<2x32xf32>
    %10 = tpu.matmul %7, %5, %cst_12 {dimension_numbers = #tpu.dot_dimension_numbers<[1], [0], [0], [1], [0, 0, 1, 1], [], []>} : vector<2x32xf32>, vector<32x32xf32>, vector<2x32xf32> -> vector<2x32xf32>
    %11 = arith.addf %10, %4 : vector<2x32xf32>
    %12 = arith.negf %11 : vector<2x32xf32>
    %13 = math.exp %12 : vector<2x32xf32>
    %cst_13 = arith.constant 1.000000e+00 : f32
    %14 = vector.broadcast %cst_13 : f32 to vector<2x32xf32>
    %15 = arith.addf %14, %13 : vector<2x32xf32>
    %16 = arith.divf %14, %15 : vector<2x32xf32>
    %cst_14 = arith.constant 1.000000e+00 : f32
    %17 = vector.broadcast %cst_14 : f32 to vector<2x32xf32>
    %18 = arith.subf %17, %16 : vector<2x32xf32>
    %19 = arith.mulf %18, %7 : vector<2x32xf32>
    %20 = arith.mulf %16, %3 : vector<2x32xf32>
    %21 = arith.addf %19, %20 : vector<2x32xf32>
    %22 = tpu.concatenate %21, %9 in 1 : vector<2x32xf32>, vector<2x96xf32> -> vector<2x128xf32>
    %c0_15 = arith.constant 0 : index
    %c0_16 = arith.constant 0 : index
    %c0_17 = arith.constant 0 : index
    %23 = vector.load %arg7[%c0_15, %c0_16, %c0_17] : memref<16x2x128xf32, #tpu.memory_space<vmem>>, vector<1x2x128xf32>
    %24 = vector.shape_cast %23 : vector<1x2x128xf32> to vector<2x128xf32>
    %25 = vector.shape_cast %22 : vector<2x128xf32> to vector<1x2x128xf32>
    tpu.vector_store %arg7[%c0_15, %c0_16, %c0_17], %25 {strides = array<i32>} : memref<16x2x128xf32, #tpu.memory_space<vmem>>, vector<1x2x128xf32>,
    %c0_18 = arith.constant 0 : index
    %c0_19 = arith.constant 0 : index
    %c0_20 = arith.constant 0 : index
    %26 = vector.load %arg2[%c0_18, %c0_19, %c0_20] : memref<16x2x128xf32, #tpu.memory_space<vmem>>, vector<1x2x128xf32>
    %27 = vector.shape_cast %26 : vector<1x2x128xf32> to vector<2x128xf32>
    %cst_21 = arith.constant dense<0.000000e+00> : vector<2x128xf32>
    %28 = tpu.matmul %21, %6, %cst_21 {dimension_numbers = #tpu.dot_dimension_numbers<[1], [0], [0], [1], [0, 0, 1, 1], [], []>} : vector<2x32xf32>, vector<32x128xf32>, vector<2x128xf32> -> vector<2x128xf32>
    %29 = arith.addf %27, %28 : vector<2x128xf32>
    %30 = vector.extract_strided_slice %29 {offsets = [0, 0], sizes = [2, 96], strides = [1, 1]} : vector<2x128xf32> to vector<2x96xf32>
    %31 = arith.negf %30 : vector<2x96xf32>
    %32 = math.exp %31 : vector<2x96xf32>
    %cst_22 = arith.constant 1.000000e+00 : f32
    %33 = vector.broadcast %cst_22 : f32 to vector<2x96xf32>
    %34 = arith.addf %33, %32 : vector<2x96xf32>
    %35 = arith.divf %33, %34 : vector<2x96xf32>
    %36 = vector.extract_strided_slice %29 {offsets = [0, 96], sizes = [2, 32], strides = [1, 1]} : vector<2x128xf32> to vector<2x32xf32>
    %37 = math.tanh %36 : vector<2x32xf32>
    %38 = vector.extract_strided_slice %35 {offsets = [0, 0], sizes = [2, 32], strides = [1, 1]} : vector<2x96xf32> to vector<2x32xf32>
    %39 = vector.extract_strided_slice %35 {offsets = [0, 32], sizes = [2, 32], strides = [1, 1]} : vector<2x96xf32> to vector<2x32xf32>
    %40 = vector.extract_strided_slice %35 {offsets = [0, 64], sizes = [2, 32], strides = [1, 1]} : vector<2x96xf32> to vector<2x32xf32>
    %41 = arith.mulf %39, %8 : vector<2x32xf32>
    %42 = arith.mulf %38, %37 : vector<2x32xf32>
    %43 = arith.addf %41, %42 : vector<2x32xf32>
    %44 = math.tanh %43 : vector<2x32xf32>
    %45 = arith.mulf %40, %44 : vector<2x32xf32>
    %cst_23 = arith.constant dense<0.000000e+00> : vector<2x32xf32>
    %46 = tpu.matmul %45, %5, %cst_23 {dimension_numbers = #tpu.dot_dimension_numbers<[1], [0], [0], [1], [0, 0, 1, 1], [], []>} : vector<2x32xf32>, vector<32x32xf32>, vector<2x32xf32> -> vector<2x32xf32>
    %47 = arith.addf %46, %4 : vector<2x32xf32>
    %48 = arith.negf %47 : vector<2x32xf32>
    %49 = math.exp %48 : vector<2x32xf32>
    %cst_24 = arith.constant 1.000000e+00 : f32
    %50 = vector.broadcast %cst_24 : f32 to vector<2x32xf32>
    %51 = arith.addf %50, %49 : vector<2x32xf32>
    %52 = arith.divf %50, %51 : vector<2x32xf32>
    %cst_25 = arith.constant 1.000000e+00 : f32
    %53 = vector.broadcast %cst_25 : f32 to vector<2x32xf32>
    %54 = arith.subf %53, %52 : vector<2x32xf32>
    %55 = arith.mulf %54, %45 : vector<2x32xf32>
    %56 = arith.mulf %52, %3 : vector<2x32xf32>
    %57 = arith.addf %55, %56 : vector<2x32xf32>
    %58 = tpu.concatenate %57, %9 in 1 : vector<2x32xf32>, vector<2x96xf32> -> vector<2x128xf32>
    %c1 = arith.constant 1 : index
    %c0_26 = arith.constant 0 : index
    %c0_27 = arith.constant 0 : index
    %59 = vector.load %arg7[%c1, %c0_26, %c0_27] : memref<16x2x128xf32, #tpu.memory_space<vmem>>, vector<1x2x128xf32>
    %60 = vector.shape_cast %59 : vector<1x2x128xf32> to vector<2x128xf32>
    %61 = vector.shape_cast %58 : vector<2x128xf32> to vector<1x2x128xf32>
    tpu.vector_store %arg7[%c1, %c0_26, %c0_27], %61 {strides = array<i32>} : memref<16x2x128xf32, #tpu.memory_space<vmem>>, vector<1x2x128xf32>,
    %c1_28 = arith.constant 1 : index
    %c0_29 = arith.constant 0 : index
    %c0_30 = arith.constant 0 : index
    %62 = vector.load %arg2[%c1_28, %c0_29, %c0_30] : memref<16x2x128xf32, #tpu.memory_space<vmem>>, vector<1x2x128xf32>
    %63 = vector.shape_cast %62 : vector<1x2x128xf32> to vector<2x128xf32>
    %cst_31 = arith.constant dense<0.000000e+00> : vector<2x128xf32>
    %64 = tpu.matmul %57, %6, %cst_31 {dimension_numbers = #tpu.dot_dimension_numbers<[1], [0], [0], [1], [0, 0, 1, 1], [], []>} : vector<2x32xf32>, vector<32x128xf32>, vector<2x128xf32> -> vector<2x128xf32>
    %65 = arith.addf %63, %64 : vector<2x128xf32>
    %66 = vector.extract_strided_slice %65 {offsets = [0, 0], sizes = [2, 96], strides = [1, 1]} : vector<2x128xf32> to vector<2x96xf32>
    %67 = arith.negf %66 : vector<2x96xf32>
    %68 = math.exp %67 : vector<2x96xf32>
    %cst_32 = arith.constant 1.000000e+00 : f32
    %69 = vector.broadcast %cst_32 : f32 to vector<2x96xf32>
    %70 = arith.addf %69, %68 : vector<2x96xf32>
    %71 = arith.divf %69, %70 : vector<2x96xf32>
    %72 = vector.extract_strided_slice %65 {offsets = [0, 96], sizes = [2, 32], strides = [1, 1]} : vector<2x128xf32> to vector<2x32xf32>
    %73 = math.tanh %72 : vector<2x32xf32>
    %74 = vector.extract_strided_slice %71 {offsets = [0, 0], sizes = [2, 32], strides = [1, 1]} : vector<2x96xf32> to vector<2x32xf32>
    %75 = vector.extract_strided_slice %71 {offsets = [0, 32], sizes = [2, 32], strides = [1, 1]} : vector<2x96xf32> to vector<2x32xf32>
    %76 = vector.extract_strided_slice %71 {offsets = [0, 64], sizes = [2, 32], strides = [1, 1]} : vector<2x96xf32> to vector<2x32xf32>
    %77 = arith.mulf %75, %43 : vector<2x32xf32>
    %78 = arith.mulf %74, %73 : vector<2x32xf32>
    %79 = arith.addf %77, %78 : vector<2x32xf32>
    %80 = math.tanh %79 : vector<2x32xf32>
    %81 = arith.mulf %76, %80 : vector<2x32xf32>
    %cst_33 = arith.constant dense<0.000000e+00> : vector<2x32xf32>
    %82 = tpu.matmul %81, %5, %cst_33 {dimension_numbers = #tpu.dot_dimension_numbers<[1], [0], [0], [1], [0, 0, 1, 1], [], []>} : vector<2x32xf32>, vector<32x32xf32>, vector<2x32xf32> -> vector<2x32xf32>
    %83 = arith.addf %82, %4 : vector<2x32xf32>
    %84 = arith.negf %83 : vector<2x32xf32>
    %85 = math.exp %84 : vector<2x32xf32>
    %cst_34 = arith.constant 1.000000e+00 : f32
    %86 = vector.broadcast %cst_34 : f32 to vector<2x32xf32>
    %87 = arith.addf %86, %85 : vector<2x32xf32>
    %88 = arith.divf %86, %87 : vector<2x32xf32>
    %cst_35 = arith.constant 1.000000e+00 : f32
    %89 = vector.broadcast %cst_35 : f32 to vector<2x32xf32>
    %90 = arith.subf %89, %88 : vector<2x32xf32>
    %91 = arith.mulf %90, %81 : vector<2x32xf32>
    %92 = arith.mulf %88, %3 : vector<2x32xf32>
    %93 = arith.addf %91, %92 : vector<2x32xf32>
    %94 = tpu.concatenate %93, %9 in 1 : vector<2x32xf32>, vector<2x96xf32> -> vector<2x128xf32>
    %c2 = arith.constant 2 : index
    %c0_36 = arith.constant 0 : index
    %c0_37 = arith.constant 0 : index
    %95 = vector.load %arg7[%c2, %c0_36, %c0_37] : memref<16x2x128xf32, #tpu.memory_space<vmem>>, vector<1x2x128xf32>
    %96 = vector.shape_cast %95 : vector<1x2x128xf32> to vector<2x128xf32>
    %97 = vector.shape_cast %94 : vector<2x128xf32> to vector<1x2x128xf32>
    tpu.vector_store %arg7[%c2, %c0_36, %c0_37], %97 {strides = array<i32>} : memref<16x2x128xf32, #tpu.memory_space<vmem>>, vector<1x2x128xf32>,
    %c2_38 = arith.constant 2 : index
    %c0_39 = arith.constant 0 : index
    %c0_40 = arith.constant 0 : index
    %98 = vector.load %arg2[%c2_38, %c0_39, %c0_40] : memref<16x2x128xf32, #tpu.memory_space<vmem>>, vector<1x2x128xf32>
    %99 = vector.shape_cast %98 : vector<1x2x128xf32> to vector<2x128xf32>
    %cst_41 = arith.constant dense<0.000000e+00> : vector<2x128xf32>
    %100 = tpu.matmul %93, %6, %cst_41 {dimension_numbers = #tpu.dot_dimension_numbers<[1], [0], [0], [1], [0, 0, 1, 1], [], []>} : vector<2x32xf32>, vector<32x128xf32>, vector<2x128xf32> -> vector<2x128xf32>
    %101 = arith.addf %99, %100 : vector<2x128xf32>
    %102 = vector.extract_strided_slice %101 {offsets = [0, 0], sizes = [2, 96], strides = [1, 1]} : vector<2x128xf32> to vector<2x96xf32>
    %103 = arith.negf %102 : vector<2x96xf32>
    %104 = math.exp %103 : vector<2x96xf32>
    %cst_42 = arith.constant 1.000000e+00 : f32
    %105 = vector.broadcast %cst_42 : f32 to vector<2x96xf32>
    %106 = arith.addf %105, %104 : vector<2x96xf32>
    %107 = arith.divf %105, %106 : vector<2x96xf32>
    %108 = vector.extract_strided_slice %101 {offsets = [0, 96], sizes = [2, 32], strides = [1, 1]} : vector<2x128xf32> to vector<2x32xf32>
    %109 = math.tanh %108 : vector<2x32xf32>
    %110 = vector.extract_strided_slice %107 {offsets = [0, 0], sizes = [2, 32], strides = [1, 1]} : vector<2x96xf32> to vector<2x32xf32>
    %111 = vector.extract_strided_slice %107 {offsets = [0, 32], sizes = [2, 32], strides = [1, 1]} : vector<2x96xf32> to vector<2x32xf32>
    %112 = vector.extract_strided_slice %107 {offsets = [0, 64], sizes = [2, 32], strides = [1, 1]} : vector<2x96xf32> to vector<2x32xf32>
    %113 = arith.mulf %111, %79 : vector<2x32xf32>
    %114 = arith.mulf %110, %109 : vector<2x32xf32>
    %115 = arith.addf %113, %114 : vector<2x32xf32>
    %116 = math.tanh %115 : vector<2x32xf32>
    %117 = arith.mulf %112, %116 : vector<2x32xf32>
    %cst_43 = arith.constant dense<0.000000e+00> : vector<2x32xf32>
    %118 = tpu.matmul %117, %5, %cst_43 {dimension_numbers = #tpu.dot_dimension_numbers<[1], [0], [0], [1], [0, 0, 1, 1], [], []>} : vector<2x32xf32>, vector<32x32xf32>, vector<2x32xf32> -> vector<2x32xf32>
    %119 = arith.addf %118, %4 : vector<2x32xf32>
    %120 = arith.negf %119 : vector<2x32xf32>
    %121 = math.exp %120 : vector<2x32xf32>
    %cst_44 = arith.constant 1.000000e+00 : f32
    %122 = vector.broadcast %cst_44 : f32 to vector<2x32xf32>
    %123 = arith.addf %122, %121 : vector<2x32xf32>
    %124 = arith.divf %122, %123 : vector<2x32xf32>
    %cst_45 = arith.constant 1.000000e+00 : f32
    %125 = vector.broadcast %cst_45 : f32 to vector<2x32xf32>
    %126 = arith.subf %125, %124 : vector<2x32xf32>
    %127 = arith.mulf %126, %117 : vector<2x32xf32>
    %128 = arith.mulf %124, %3 : vector<2x32xf32>
    %129 = arith.addf %127, %128 : vector<2x32xf32>
    %130 = tpu.concatenate %129, %9 in 1 : vector<2x32xf32>, vector<2x96xf32> -> vector<2x128xf32>
    %c3 = arith.constant 3 : index
    %c0_46 = arith.constant 0 : index
    %c0_47 = arith.constant 0 : index
    %131 = vector.load %arg7[%c3, %c0_46, %c0_47] : memref<16x2x128xf32, #tpu.memory_space<vmem>>, vector<1x2x128xf32>
    %132 = vector.shape_cast %131 : vector<1x2x128xf32> to vector<2x128xf32>
    %133 = vector.shape_cast %130 : vector<2x128xf32> to vector<1x2x128xf32>
    tpu.vector_store %arg7[%c3, %c0_46, %c0_47], %133 {strides = array<i32>} : memref<16x2x128xf32, #tpu.memory_space<vmem>>, vector<1x2x128xf32>,
    %c3_48 = arith.constant 3 : index
    %c0_49 = arith.constant 0 : index
    %c0_50 = arith.constant 0 : index
    %134 = vector.load %arg2[%c3_48, %c0_49, %c0_50] : memref<16x2x128xf32, #tpu.memory_space<vmem>>, vector<1x2x128xf32>
    %135 = vector.shape_cast %134 : vector<1x2x128xf32> to vector<2x128xf32>
    %cst_51 = arith.constant dense<0.000000e+00> : vector<2x128xf32>
    %136 = tpu.matmul %129, %6, %cst_51 {dimension_numbers = #tpu.dot_dimension_numbers<[1], [0], [0], [1], [0, 0, 1, 1], [], []>} : vector<2x32xf32>, vector<32x128xf32>, vector<2x128xf32> -> vector<2x128xf32>
    %137 = arith.addf %135, %136 : vector<2x128xf32>
    %138 = vector.extract_strided_slice %137 {offsets = [0, 0], sizes = [2, 96], strides = [1, 1]} : vector<2x128xf32> to vector<2x96xf32>
    %139 = arith.negf %138 : vector<2x96xf32>
    %140 = math.exp %139 : vector<2x96xf32>
    %cst_52 = arith.constant 1.000000e+00 : f32
    %141 = vector.broadcast %cst_52 : f32 to vector<2x96xf32>
    %142 = arith.addf %141, %140 : vector<2x96xf32>
    %143 = arith.divf %141, %142 : vector<2x96xf32>
    %144 = vector.extract_strided_slice %137 {offsets = [0, 96], sizes = [2, 32], strides = [1, 1]} : vector<2x128xf32> to vector<2x32xf32>
    %145 = math.tanh %144 : vector<2x32xf32>
    %146 = vector.extract_strided_slice %143 {offsets = [0, 0], sizes = [2, 32], strides = [1, 1]} : vector<2x96xf32> to vector<2x32xf32>
    %147 = vector.extract_strided_slice %143 {offsets = [0, 32], sizes = [2, 32], strides = [1, 1]} : vector<2x96xf32> to vector<2x32xf32>
    %148 = vector.extract_strided_slice %143 {offsets = [0, 64], sizes = [2, 32], strides = [1, 1]} : vector<2x96xf32> to vector<2x32xf32>
    %149 = arith.mulf %147, %115 : vector<2x32xf32>
    %150 = arith.mulf %146, %145 : vector<2x32xf32>
    %151 = arith.addf %149, %150 : vector<2x32xf32>
    %152 = math.tanh %151 : vector<2x32xf32>
    %153 = arith.mulf %148, %152 : vector<2x32xf32>
    %cst_53 = arith.constant dense<0.000000e+00> : vector<2x32xf32>
    %154 = tpu.matmul %153, %5, %cst_53 {dimension_numbers = #tpu.dot_dimension_numbers<[1], [0], [0], [1], [0, 0, 1, 1], [], []>} : vector<2x32xf32>, vector<32x32xf32>, vector<2x32xf32> -> vector<2x32xf32>
    %155 = arith.addf %154, %4 : vector<2x32xf32>
    %156 = arith.negf %155 : vector<2x32xf32>
    %157 = math.exp %156 : vector<2x32xf32>
    %cst_54 = arith.constant 1.000000e+00 : f32
    %158 = vector.broadcast %cst_54 : f32 to vector<2x32xf32>
    %159 = arith.addf %158, %157 : vector<2x32xf32>
    %160 = arith.divf %158, %159 : vector<2x32xf32>
    %cst_55 = arith.constant 1.000000e+00 : f32
    %161 = vector.broadcast %cst_55 : f32 to vector<2x32xf32>
    %162 = arith.subf %161, %160 : vector<2x32xf32>
    %163 = arith.mulf %162, %153 : vector<2x32xf32>
    %164 = arith.mulf %160, %3 : vector<2x32xf32>
    %165 = arith.addf %163, %164 : vector<2x32xf32>
    %166 = tpu.concatenate %165, %9 in 1 : vector<2x32xf32>, vector<2x96xf32> -> vector<2x128xf32>
    %c4 = arith.constant 4 : index
    %c0_56 = arith.constant 0 : index
    %c0_57 = arith.constant 0 : index
    %167 = vector.load %arg7[%c4, %c0_56, %c0_57] : memref<16x2x128xf32, #tpu.memory_space<vmem>>, vector<1x2x128xf32>
    %168 = vector.shape_cast %167 : vector<1x2x128xf32> to vector<2x128xf32>
    %169 = vector.shape_cast %166 : vector<2x128xf32> to vector<1x2x128xf32>
    tpu.vector_store %arg7[%c4, %c0_56, %c0_57], %169 {strides = array<i32>} : memref<16x2x128xf32, #tpu.memory_space<vmem>>, vector<1x2x128xf32>,
    %c4_58 = arith.constant 4 : index
    %c0_59 = arith.constant 0 : index
    %c0_60 = arith.constant 0 : index
    %170 = vector.load %arg2[%c4_58, %c0_59, %c0_60] : memref<16x2x128xf32, #tpu.memory_space<vmem>>, vector<1x2x128xf32>
    %171 = vector.shape_cast %170 : vector<1x2x128xf32> to vector<2x128xf32>
    %cst_61 = arith.constant dense<0.000000e+00> : vector<2x128xf32>
    %172 = tpu.matmul %165, %6, %cst_61 {dimension_numbers = #tpu.dot_dimension_numbers<[1], [0], [0], [1], [0, 0, 1, 1], [], []>} : vector<2x32xf32>, vector<32x128xf32>, vector<2x128xf32> -> vector<2x128xf32>
    %173 = arith.addf %171, %172 : vector<2x128xf32>
    %174 = vector.extract_strided_slice %173 {offsets = [0, 0], sizes = [2, 96], strides = [1, 1]} : vector<2x128xf32> to vector<2x96xf32>
    %175 = arith.negf %174 : vector<2x96xf32>
    %176 = math.exp %175 : vector<2x96xf32>
    %cst_62 = arith.constant 1.000000e+00 : f32
    %177 = vector.broadcast %cst_62 : f32 to vector<2x96xf32>
    %178 = arith.addf %177, %176 : vector<2x96xf32>
    %179 = arith.divf %177, %178 : vector<2x96xf32>
    %180 = vector.extract_strided_slice %173 {offsets = [0, 96], sizes = [2, 32], strides = [1, 1]} : vector<2x128xf32> to vector<2x32xf32>
    %181 = math.tanh %180 : vector<2x32xf32>
    %182 = vector.extract_strided_slice %179 {offsets = [0, 0], sizes = [2, 32], strides = [1, 1]} : vector<2x96xf32> to vector<2x32xf32>
    %183 = vector.extract_strided_slice %179 {offsets = [0, 32], sizes = [2, 32], strides = [1, 1]} : vector<2x96xf32> to vector<2x32xf32>
    %184 = vector.extract_strided_slice %179 {offsets = [0, 64], sizes = [2, 32], strides = [1, 1]} : vector<2x96xf32> to vector<2x32xf32>
    %185 = arith.mulf %183, %151 : vector<2x32xf32>
    %186 = arith.mulf %182, %181 : vector<2x32xf32>
    %187 = arith.addf %185, %186 : vector<2x32xf32>
    %188 = math.tanh %187 : vector<2x32xf32>
    %189 = arith.mulf %184, %188 : vector<2x32xf32>
    %cst_63 = arith.constant dense<0.000000e+00> : vector<2x32xf32>
    %190 = tpu.matmul %189, %5, %cst_63 {dimension_numbers = #tpu.dot_dimension_numbers<[1], [0], [0], [1], [0, 0, 1, 1], [], []>} : vector<2x32xf32>, vector<32x32xf32>, vector<2x32xf32> -> vector<2x32xf32>
    %191 = arith.addf %190, %4 : vector<2x32xf32>
    %192 = arith.negf %191 : vector<2x32xf32>
    %193 = math.exp %192 : vector<2x32xf32>
    %cst_64 = arith.constant 1.000000e+00 : f32
    %194 = vector.broadcast %cst_64 : f32 to vector<2x32xf32>
    %195 = arith.addf %194, %193 : vector<2x32xf32>
    %196 = arith.divf %194, %195 : vector<2x32xf32>
    %cst_65 = arith.constant 1.000000e+00 : f32
    %197 = vector.broadcast %cst_65 : f32 to vector<2x32xf32>
    %198 = arith.subf %197, %196 : vector<2x32xf32>
    %199 = arith.mulf %198, %189 : vector<2x32xf32>
    %200 = arith.mulf %196, %3 : vector<2x32xf32>
    %201 = arith.addf %199, %200 : vector<2x32xf32>
    %202 = tpu.concatenate %201, %9 in 1 : vector<2x32xf32>, vector<2x96xf32> -> vector<2x128xf32>
    %c5 = arith.constant 5 : index
    %c0_66 = arith.constant 0 : index
    %c0_67 = arith.constant 0 : index
    %203 = vector.load %arg7[%c5, %c0_66, %c0_67] : memref<16x2x128xf32, #tpu.memory_space<vmem>>, vector<1x2x128xf32>
    %204 = vector.shape_cast %203 : vector<1x2x128xf32> to vector<2x128xf32>
    %205 = vector.shape_cast %202 : vector<2x128xf32> to vector<1x2x128xf32>
    tpu.vector_store %arg7[%c5, %c0_66, %c0_67], %205 {strides = array<i32>} : memref<16x2x128xf32, #tpu.memory_space<vmem>>, vector<1x2x128xf32>,
    %c5_68 = arith.constant 5 : index
    %c0_69 = arith.constant 0 : index
    %c0_70 = arith.constant 0 : index
    %206 = vector.load %arg2[%c5_68, %c0_69, %c0_70] : memref<16x2x128xf32, #tpu.memory_space<vmem>>, vector<1x2x128xf32>
    %207 = vector.shape_cast %206 : vector<1x2x128xf32> to vector<2x128xf32>
    %cst_71 = arith.constant dense<0.000000e+00> : vector<2x128xf32>
    %208 = tpu.matmul %201, %6, %cst_71 {dimension_numbers = #tpu.dot_dimension_numbers<[1], [0], [0], [1], [0, 0, 1, 1], [], []>} : vector<2x32xf32>, vector<32x128xf32>, vector<2x128xf32> -> vector<2x128xf32>
    %209 = arith.addf %207, %208 : vector<2x128xf32>
    %210 = vector.extract_strided_slice %209 {offsets = [0, 0], sizes = [2, 96], strides = [1, 1]} : vector<2x128xf32> to vector<2x96xf32>
    %211 = arith.negf %210 : vector<2x96xf32>
    %212 = math.exp %211 : vector<2x96xf32>
    %cst_72 = arith.constant 1.000000e+00 : f32
    %213 = vector.broadcast %cst_72 : f32 to vector<2x96xf32>
    %214 = arith.addf %213, %212 : vector<2x96xf32>
    %215 = arith.divf %213, %214 : vector<2x96xf32>
    %216 = vector.extract_strided_slice %209 {offsets = [0, 96], sizes = [2, 32], strides = [1, 1]} : vector<2x128xf32> to vector<2x32xf32>
    %217 = math.tanh %216 : vector<2x32xf32>
    %218 = vector.extract_strided_slice %215 {offsets = [0, 0], sizes = [2, 32], strides = [1, 1]} : vector<2x96xf32> to vector<2x32xf32>
    %219 = vector.extract_strided_slice %215 {offsets = [0, 32], sizes = [2, 32], strides = [1, 1]} : vector<2x96xf32> to vector<2x32xf32>
    %220 = vector.extract_strided_slice %215 {offsets = [0, 64], sizes = [2, 32], strides = [1, 1]} : vector<2x96xf32> to vector<2x32xf32>
    %221 = arith.mulf %219, %187 : vector<2x32xf32>
    %222 = arith.mulf %218, %217 : vector<2x32xf32>
    %223 = arith.addf %221, %222 : vector<2x32xf32>
    %224 = math.tanh %223 : vector<2x32xf32>
    %225 = arith.mulf %220, %224 : vector<2x32xf32>
    %cst_73 = arith.constant dense<0.000000e+00> : vector<2x32xf32>
    %226 = tpu.matmul %225, %5, %cst_73 {dimension_numbers = #tpu.dot_dimension_numbers<[1], [0], [0], [1], [0, 0, 1, 1], [], []>} : vector<2x32xf32>, vector<32x32xf32>, vector<2x32xf32> -> vector<2x32xf32>
    %227 = arith.addf %226, %4 : vector<2x32xf32>
    %228 = arith.negf %227 : vector<2x32xf32>
    %229 = math.exp %228 : vector<2x32xf32>
    %cst_74 = arith.constant 1.000000e+00 : f32
    %230 = vector.broadcast %cst_74 : f32 to vector<2x32xf32>
    %231 = arith.addf %230, %229 : vector<2x32xf32>
    %232 = arith.divf %230, %231 : vector<2x32xf32>
    %cst_75 = arith.constant 1.000000e+00 : f32
    %233 = vector.broadcast %cst_75 : f32 to vector<2x32xf32>
    %234 = arith.subf %233, %232 : vector<2x32xf32>
    %235 = arith.mulf %234, %225 : vector<2x32xf32>
    %236 = arith.mulf %232, %3 : vector<2x32xf32>
    %237 = arith.addf %235, %236 : vector<2x32xf32>
    %238 = tpu.concatenate %237, %9 in 1 : vector<2x32xf32>, vector<2x96xf32> -> vector<2x128xf32>
    %c6 = arith.constant 6 : index
    %c0_76 = arith.constant 0 : index
    %c0_77 = arith.constant 0 : index
    %239 = vector.load %arg7[%c6, %c0_76, %c0_77] : memref<16x2x128xf32, #tpu.memory_space<vmem>>, vector<1x2x128xf32>
    %240 = vector.shape_cast %239 : vector<1x2x128xf32> to vector<2x128xf32>
    %241 = vector.shape_cast %238 : vector<2x128xf32> to vector<1x2x128xf32>
    tpu.vector_store %arg7[%c6, %c0_76, %c0_77], %241 {strides = array<i32>} : memref<16x2x128xf32, #tpu.memory_space<vmem>>, vector<1x2x128xf32>,
    %c6_78 = arith.constant 6 : index
    %c0_79 = arith.constant 0 : index
    %c0_80 = arith.constant 0 : index
    %242 = vector.load %arg2[%c6_78, %c0_79, %c0_80] : memref<16x2x128xf32, #tpu.memory_space<vmem>>, vector<1x2x128xf32>
    %243 = vector.shape_cast %242 : vector<1x2x128xf32> to vector<2x128xf32>
    %cst_81 = arith.constant dense<0.000000e+00> : vector<2x128xf32>
    %244 = tpu.matmul %237, %6, %cst_81 {dimension_numbers = #tpu.dot_dimension_numbers<[1], [0], [0], [1], [0, 0, 1, 1], [], []>} : vector<2x32xf32>, vector<32x128xf32>, vector<2x128xf32> -> vector<2x128xf32>
    %245 = arith.addf %243, %244 : vector<2x128xf32>
    %246 = vector.extract_strided_slice %245 {offsets = [0, 0], sizes = [2, 96], strides = [1, 1]} : vector<2x128xf32> to vector<2x96xf32>
    %247 = arith.negf %246 : vector<2x96xf32>
    %248 = math.exp %247 : vector<2x96xf32>
    %cst_82 = arith.constant 1.000000e+00 : f32
    %249 = vector.broadcast %cst_82 : f32 to vector<2x96xf32>
    %250 = arith.addf %249, %248 : vector<2x96xf32>
    %251 = arith.divf %249, %250 : vector<2x96xf32>
    %252 = vector.extract_strided_slice %245 {offsets = [0, 96], sizes = [2, 32], strides = [1, 1]} : vector<2x128xf32> to vector<2x32xf32>
    %253 = math.tanh %252 : vector<2x32xf32>
    %254 = vector.extract_strided_slice %251 {offsets = [0, 0], sizes = [2, 32], strides = [1, 1]} : vector<2x96xf32> to vector<2x32xf32>
    %255 = vector.extract_strided_slice %251 {offsets = [0, 32], sizes = [2, 32], strides = [1, 1]} : vector<2x96xf32> to vector<2x32xf32>
    %256 = vector.extract_strided_slice %251 {offsets = [0, 64], sizes = [2, 32], strides = [1, 1]} : vector<2x96xf32> to vector<2x32xf32>
    %257 = arith.mulf %255, %223 : vector<2x32xf32>
    %258 = arith.mulf %254, %253 : vector<2x32xf32>
    %259 = arith.addf %257, %258 : vector<2x32xf32>
    %260 = math.tanh %259 : vector<2x32xf32>
    %261 = arith.mulf %256, %260 : vector<2x32xf32>
    %cst_83 = arith.constant dense<0.000000e+00> : vector<2x32xf32>
    %262 = tpu.matmul %261, %5, %cst_83 {dimension_numbers = #tpu.dot_dimension_numbers<[1], [0], [0], [1], [0, 0, 1, 1], [], []>} : vector<2x32xf32>, vector<32x32xf32>, vector<2x32xf32> -> vector<2x32xf32>
    %263 = arith.addf %262, %4 : vector<2x32xf32>
    %264 = arith.negf %263 : vector<2x32xf32>
    %265 = math.exp %264 : vector<2x32xf32>
    %cst_84 = arith.constant 1.000000e+00 : f32
    %266 = vector.broadcast %cst_84 : f32 to vector<2x32xf32>
    %267 = arith.addf %266, %265 : vector<2x32xf32>
    %268 = arith.divf %266, %267 : vector<2x32xf32>
    %cst_85 = arith.constant 1.000000e+00 : f32
    %269 = vector.broadcast %cst_85 : f32 to vector<2x32xf32>
    %270 = arith.subf %269, %268 : vector<2x32xf32>
    %271 = arith.mulf %270, %261 : vector<2x32xf32>
    %272 = arith.mulf %268, %3 : vector<2x32xf32>
    %273 = arith.addf %271, %272 : vector<2x32xf32>
    %274 = tpu.concatenate %273, %9 in 1 : vector<2x32xf32>, vector<2x96xf32> -> vector<2x128xf32>
    %c7 = arith.constant 7 : index
    %c0_86 = arith.constant 0 : index
    %c0_87 = arith.constant 0 : index
    %275 = vector.load %arg7[%c7, %c0_86, %c0_87] : memref<16x2x128xf32, #tpu.memory_space<vmem>>, vector<1x2x128xf32>
    %276 = vector.shape_cast %275 : vector<1x2x128xf32> to vector<2x128xf32>
    %277 = vector.shape_cast %274 : vector<2x128xf32> to vector<1x2x128xf32>
    tpu.vector_store %arg7[%c7, %c0_86, %c0_87], %277 {strides = array<i32>} : memref<16x2x128xf32, #tpu.memory_space<vmem>>, vector<1x2x128xf32>,
    %c7_88 = arith.constant 7 : index
    %c0_89 = arith.constant 0 : index
    %c0_90 = arith.constant 0 : index
    %278 = vector.load %arg2[%c7_88, %c0_89, %c0_90] : memref<16x2x128xf32, #tpu.memory_space<vmem>>, vector<1x2x128xf32>
    %279 = vector.shape_cast %278 : vector<1x2x128xf32> to vector<2x128xf32>
    %cst_91 = arith.constant dense<0.000000e+00> : vector<2x128xf32>
    %280 = tpu.matmul %273, %6, %cst_91 {dimension_numbers = #tpu.dot_dimension_numbers<[1], [0], [0], [1], [0, 0, 1, 1], [], []>} : vector<2x32xf32>, vector<32x128xf32>, vector<2x128xf32> -> vector<2x128xf32>
    %281 = arith.addf %279, %280 : vector<2x128xf32>
    %282 = vector.extract_strided_slice %281 {offsets = [0, 0], sizes = [2, 96], strides = [1, 1]} : vector<2x128xf32> to vector<2x96xf32>
    %283 = arith.negf %282 : vector<2x96xf32>
    %284 = math.exp %283 : vector<2x96xf32>
    %cst_92 = arith.constant 1.000000e+00 : f32
    %285 = vector.broadcast %cst_92 : f32 to vector<2x96xf32>
    %286 = arith.addf %285, %284 : vector<2x96xf32>
    %287 = arith.divf %285, %286 : vector<2x96xf32>
    %288 = vector.extract_strided_slice %281 {offsets = [0, 96], sizes = [2, 32], strides = [1, 1]} : vector<2x128xf32> to vector<2x32xf32>
    %289 = math.tanh %288 : vector<2x32xf32>
    %290 = vector.extract_strided_slice %287 {offsets = [0, 0], sizes = [2, 32], strides = [1, 1]} : vector<2x96xf32> to vector<2x32xf32>
    %291 = vector.extract_strided_slice %287 {offsets = [0, 32], sizes = [2, 32], strides = [1, 1]} : vector<2x96xf32> to vector<2x32xf32>
    %292 = vector.extract_strided_slice %287 {offsets = [0, 64], sizes = [2, 32], strides = [1, 1]} : vector<2x96xf32> to vector<2x32xf32>
    %293 = arith.mulf %291, %259 : vector<2x32xf32>
    %294 = arith.mulf %290, %289 : vector<2x32xf32>
    %295 = arith.addf %293, %294 : vector<2x32xf32>
    %296 = math.tanh %295 : vector<2x32xf32>
    %297 = arith.mulf %292, %296 : vector<2x32xf32>
    %cst_93 = arith.constant dense<0.000000e+00> : vector<2x32xf32>
    %298 = tpu.matmul %297, %5, %cst_93 {dimension_numbers = #tpu.dot_dimension_numbers<[1], [0], [0], [1], [0, 0, 1, 1], [], []>} : vector<2x32xf32>, vector<32x32xf32>, vector<2x32xf32> -> vector<2x32xf32>
    %299 = arith.addf %298, %4 : vector<2x32xf32>
    %300 = arith.negf %299 : vector<2x32xf32>
    %301 = math.exp %300 : vector<2x32xf32>
    %cst_94 = arith.constant 1.000000e+00 : f32
    %302 = vector.broadcast %cst_94 : f32 to vector<2x32xf32>
    %303 = arith.addf %302, %301 : vector<2x32xf32>
    %304 = arith.divf %302, %303 : vector<2x32xf32>
    %cst_95 = arith.constant 1.000000e+00 : f32
    %305 = vector.broadcast %cst_95 : f32 to vector<2x32xf32>
    %306 = arith.subf %305, %304 : vector<2x32xf32>
    %307 = arith.mulf %306, %297 : vector<2x32xf32>
    %308 = arith.mulf %304, %3 : vector<2x32xf32>
    %309 = arith.addf %307, %308 : vector<2x32xf32>
    %310 = tpu.concatenate %309, %9 in 1 : vector<2x32xf32>, vector<2x96xf32> -> vector<2x128xf32>
    %c8 = arith.constant 8 : index
    %c0_96 = arith.constant 0 : index
    %c0_97 = arith.constant 0 : index
    %311 = vector.load %arg7[%c8, %c0_96, %c0_97] : memref<16x2x128xf32, #tpu.memory_space<vmem>>, vector<1x2x128xf32>
    %312 = vector.shape_cast %311 : vector<1x2x128xf32> to vector<2x128xf32>
    %313 = vector.shape_cast %310 : vector<2x128xf32> to vector<1x2x128xf32>
    tpu.vector_store %arg7[%c8, %c0_96, %c0_97], %313 {strides = array<i32>} : memref<16x2x128xf32, #tpu.memory_space<vmem>>, vector<1x2x128xf32>,
    %c8_98 = arith.constant 8 : index
    %c0_99 = arith.constant 0 : index
    %c0_100 = arith.constant 0 : index
    %314 = vector.load %arg2[%c8_98, %c0_99, %c0_100] : memref<16x2x128xf32, #tpu.memory_space<vmem>>, vector<1x2x128xf32>
    %315 = vector.shape_cast %314 : vector<1x2x128xf32> to vector<2x128xf32>
    %cst_101 = arith.constant dense<0.000000e+00> : vector<2x128xf32>
    %316 = tpu.matmul %309, %6, %cst_101 {dimension_numbers = #tpu.dot_dimension_numbers<[1], [0], [0], [1], [0, 0, 1, 1], [], []>} : vector<2x32xf32>, vector<32x128xf32>, vector<2x128xf32> -> vector<2x128xf32>
    %317 = arith.addf %315, %316 : vector<2x128xf32>
    %318 = vector.extract_strided_slice %317 {offsets = [0, 0], sizes = [2, 96], strides = [1, 1]} : vector<2x128xf32> to vector<2x96xf32>
    %319 = arith.negf %318 : vector<2x96xf32>
    %320 = math.exp %319 : vector<2x96xf32>
    %cst_102 = arith.constant 1.000000e+00 : f32
    %321 = vector.broadcast %cst_102 : f32 to vector<2x96xf32>
    %322 = arith.addf %321, %320 : vector<2x96xf32>
    %323 = arith.divf %321, %322 : vector<2x96xf32>
    %324 = vector.extract_strided_slice %317 {offsets = [0, 96], sizes = [2, 32], strides = [1, 1]} : vector<2x128xf32> to vector<2x32xf32>
    %325 = math.tanh %324 : vector<2x32xf32>
    %326 = vector.extract_strided_slice %323 {offsets = [0, 0], sizes = [2, 32], strides = [1, 1]} : vector<2x96xf32> to vector<2x32xf32>
    %327 = vector.extract_strided_slice %323 {offsets = [0, 32], sizes = [2, 32], strides = [1, 1]} : vector<2x96xf32> to vector<2x32xf32>
    %328 = vector.extract_strided_slice %323 {offsets = [0, 64], sizes = [2, 32], strides = [1, 1]} : vector<2x96xf32> to vector<2x32xf32>
    %329 = arith.mulf %327, %295 : vector<2x32xf32>
    %330 = arith.mulf %326, %325 : vector<2x32xf32>
    %331 = arith.addf %329, %330 : vector<2x32xf32>
    %332 = math.tanh %331 : vector<2x32xf32>
    %333 = arith.mulf %328, %332 : vector<2x32xf32>
    %cst_103 = arith.constant dense<0.000000e+00> : vector<2x32xf32>
    %334 = tpu.matmul %333, %5, %cst_103 {dimension_numbers = #tpu.dot_dimension_numbers<[1], [0], [0], [1], [0, 0, 1, 1], [], []>} : vector<2x32xf32>, vector<32x32xf32>, vector<2x32xf32> -> vector<2x32xf32>
    %335 = arith.addf %334, %4 : vector<2x32xf32>
    %336 = arith.negf %335 : vector<2x32xf32>
    %337 = math.exp %336 : vector<2x32xf32>
    %cst_104 = arith.constant 1.000000e+00 : f32
    %338 = vector.broadcast %cst_104 : f32 to vector<2x32xf32>
    %339 = arith.addf %338, %337 : vector<2x32xf32>
    %340 = arith.divf %338, %339 : vector<2x32xf32>
    %cst_105 = arith.constant 1.000000e+00 : f32
    %341 = vector.broadcast %cst_105 : f32 to vector<2x32xf32>
    %342 = arith.subf %341, %340 : vector<2x32xf32>
    %343 = arith.mulf %342, %333 : vector<2x32xf32>
    %344 = arith.mulf %340, %3 : vector<2x32xf32>
    %345 = arith.addf %343, %344 : vector<2x32xf32>
    %346 = tpu.concatenate %345, %9 in 1 : vector<2x32xf32>, vector<2x96xf32> -> vector<2x128xf32>
    %c9 = arith.constant 9 : index
    %c0_106 = arith.constant 0 : index
    %c0_107 = arith.constant 0 : index
    %347 = vector.load %arg7[%c9, %c0_106, %c0_107] : memref<16x2x128xf32, #tpu.memory_space<vmem>>, vector<1x2x128xf32>
    %348 = vector.shape_cast %347 : vector<1x2x128xf32> to vector<2x128xf32>
    %349 = vector.shape_cast %346 : vector<2x128xf32> to vector<1x2x128xf32>
    tpu.vector_store %arg7[%c9, %c0_106, %c0_107], %349 {strides = array<i32>} : memref<16x2x128xf32, #tpu.memory_space<vmem>>, vector<1x2x128xf32>,
    %c9_108 = arith.constant 9 : index
    %c0_109 = arith.constant 0 : index
    %c0_110 = arith.constant 0 : index
    %350 = vector.load %arg2[%c9_108, %c0_109, %c0_110] : memref<16x2x128xf32, #tpu.memory_space<vmem>>, vector<1x2x128xf32>
    %351 = vector.shape_cast %350 : vector<1x2x128xf32> to vector<2x128xf32>
    %cst_111 = arith.constant dense<0.000000e+00> : vector<2x128xf32>
    %352 = tpu.matmul %345, %6, %cst_111 {dimension_numbers = #tpu.dot_dimension_numbers<[1], [0], [0], [1], [0, 0, 1, 1], [], []>} : vector<2x32xf32>, vector<32x128xf32>, vector<2x128xf32> -> vector<2x128xf32>
    %353 = arith.addf %351, %352 : vector<2x128xf32>
    %354 = vector.extract_strided_slice %353 {offsets = [0, 0], sizes = [2, 96], strides = [1, 1]} : vector<2x128xf32> to vector<2x96xf32>
    %355 = arith.negf %354 : vector<2x96xf32>
    %356 = math.exp %355 : vector<2x96xf32>
    %cst_112 = arith.constant 1.000000e+00 : f32
    %357 = vector.broadcast %cst_112 : f32 to vector<2x96xf32>
    %358 = arith.addf %357, %356 : vector<2x96xf32>
    %359 = arith.divf %357, %358 : vector<2x96xf32>
    %360 = vector.extract_strided_slice %353 {offsets = [0, 96], sizes = [2, 32], strides = [1, 1]} : vector<2x128xf32> to vector<2x32xf32>
    %361 = math.tanh %360 : vector<2x32xf32>
    %362 = vector.extract_strided_slice %359 {offsets = [0, 0], sizes = [2, 32], strides = [1, 1]} : vector<2x96xf32> to vector<2x32xf32>
    %363 = vector.extract_strided_slice %359 {offsets = [0, 32], sizes = [2, 32], strides = [1, 1]} : vector<2x96xf32> to vector<2x32xf32>
    %364 = vector.extract_strided_slice %359 {offsets = [0, 64], sizes = [2, 32], strides = [1, 1]} : vector<2x96xf32> to vector<2x32xf32>
    %365 = arith.mulf %363, %331 : vector<2x32xf32>
    %366 = arith.mulf %362, %361 : vector<2x32xf32>
    %367 = arith.addf %365, %366 : vector<2x32xf32>
    %368 = math.tanh %367 : vector<2x32xf32>
    %369 = arith.mulf %364, %368 : vector<2x32xf32>
    %cst_113 = arith.constant dense<0.000000e+00> : vector<2x32xf32>
    %370 = tpu.matmul %369, %5, %cst_113 {dimension_numbers = #tpu.dot_dimension_numbers<[1], [0], [0], [1], [0, 0, 1, 1], [], []>} : vector<2x32xf32>, vector<32x32xf32>, vector<2x32xf32> -> vector<2x32xf32>
    %371 = arith.addf %370, %4 : vector<2x32xf32>
    %372 = arith.negf %371 : vector<2x32xf32>
    %373 = math.exp %372 : vector<2x32xf32>
    %cst_114 = arith.constant 1.000000e+00 : f32
    %374 = vector.broadcast %cst_114 : f32 to vector<2x32xf32>
    %375 = arith.addf %374, %373 : vector<2x32xf32>
    %376 = arith.divf %374, %375 : vector<2x32xf32>
    %cst_115 = arith.constant 1.000000e+00 : f32
    %377 = vector.broadcast %cst_115 : f32 to vector<2x32xf32>
    %378 = arith.subf %377, %376 : vector<2x32xf32>
    %379 = arith.mulf %378, %369 : vector<2x32xf32>
    %380 = arith.mulf %376, %3 : vector<2x32xf32>
    %381 = arith.addf %379, %380 : vector<2x32xf32>
    %382 = tpu.concatenate %381, %9 in 1 : vector<2x32xf32>, vector<2x96xf32> -> vector<2x128xf32>
    %c10 = arith.constant 10 : index
    %c0_116 = arith.constant 0 : index
    %c0_117 = arith.constant 0 : index
    %383 = vector.load %arg7[%c10, %c0_116, %c0_117] : memref<16x2x128xf32, #tpu.memory_space<vmem>>, vector<1x2x128xf32>
    %384 = vector.shape_cast %383 : vector<1x2x128xf32> to vector<2x128xf32>
    %385 = vector.shape_cast %382 : vector<2x128xf32> to vector<1x2x128xf32>
    tpu.vector_store %arg7[%c10, %c0_116, %c0_117], %385 {strides = array<i32>} : memref<16x2x128xf32, #tpu.memory_space<vmem>>, vector<1x2x128xf32>,
    %c10_118 = arith.constant 10 : index
    %c0_119 = arith.constant 0 : index
    %c0_120 = arith.constant 0 : index
    %386 = vector.load %arg2[%c10_118, %c0_119, %c0_120] : memref<16x2x128xf32, #tpu.memory_space<vmem>>, vector<1x2x128xf32>
    %387 = vector.shape_cast %386 : vector<1x2x128xf32> to vector<2x128xf32>
    %cst_121 = arith.constant dense<0.000000e+00> : vector<2x128xf32>
    %388 = tpu.matmul %381, %6, %cst_121 {dimension_numbers = #tpu.dot_dimension_numbers<[1], [0], [0], [1], [0, 0, 1, 1], [], []>} : vector<2x32xf32>, vector<32x128xf32>, vector<2x128xf32> -> vector<2x128xf32>
    %389 = arith.addf %387, %388 : vector<2x128xf32>
    %390 = vector.extract_strided_slice %389 {offsets = [0, 0], sizes = [2, 96], strides = [1, 1]} : vector<2x128xf32> to vector<2x96xf32>
    %391 = arith.negf %390 : vector<2x96xf32>
    %392 = math.exp %391 : vector<2x96xf32>
    %cst_122 = arith.constant 1.000000e+00 : f32
    %393 = vector.broadcast %cst_122 : f32 to vector<2x96xf32>
    %394 = arith.addf %393, %392 : vector<2x96xf32>
    %395 = arith.divf %393, %394 : vector<2x96xf32>
    %396 = vector.extract_strided_slice %389 {offsets = [0, 96], sizes = [2, 32], strides = [1, 1]} : vector<2x128xf32> to vector<2x32xf32>
    %397 = math.tanh %396 : vector<2x32xf32>
    %398 = vector.extract_strided_slice %395 {offsets = [0, 0], sizes = [2, 32], strides = [1, 1]} : vector<2x96xf32> to vector<2x32xf32>
    %399 = vector.extract_strided_slice %395 {offsets = [0, 32], sizes = [2, 32], strides = [1, 1]} : vector<2x96xf32> to vector<2x32xf32>
    %400 = vector.extract_strided_slice %395 {offsets = [0, 64], sizes = [2, 32], strides = [1, 1]} : vector<2x96xf32> to vector<2x32xf32>
    %401 = arith.mulf %399, %367 : vector<2x32xf32>
    %402 = arith.mulf %398, %397 : vector<2x32xf32>
    %403 = arith.addf %401, %402 : vector<2x32xf32>
    %404 = math.tanh %403 : vector<2x32xf32>
    %405 = arith.mulf %400, %404 : vector<2x32xf32>
    %cst_123 = arith.constant dense<0.000000e+00> : vector<2x32xf32>
    %406 = tpu.matmul %405, %5, %cst_123 {dimension_numbers = #tpu.dot_dimension_numbers<[1], [0], [0], [1], [0, 0, 1, 1], [], []>} : vector<2x32xf32>, vector<32x32xf32>, vector<2x32xf32> -> vector<2x32xf32>
    %407 = arith.addf %406, %4 : vector<2x32xf32>
    %408 = arith.negf %407 : vector<2x32xf32>
    %409 = math.exp %408 : vector<2x32xf32>
    %cst_124 = arith.constant 1.000000e+00 : f32
    %410 = vector.broadcast %cst_124 : f32 to vector<2x32xf32>
    %411 = arith.addf %410, %409 : vector<2x32xf32>
    %412 = arith.divf %410, %411 : vector<2x32xf32>
    %cst_125 = arith.constant 1.000000e+00 : f32
    %413 = vector.broadcast %cst_125 : f32 to vector<2x32xf32>
    %414 = arith.subf %413, %412 : vector<2x32xf32>
    %415 = arith.mulf %414, %405 : vector<2x32xf32>
    %416 = arith.mulf %412, %3 : vector<2x32xf32>
    %417 = arith.addf %415, %416 : vector<2x32xf32>
    %418 = tpu.concatenate %417, %9 in 1 : vector<2x32xf32>, vector<2x96xf32> -> vector<2x128xf32>
    %c11 = arith.constant 11 : index
    %c0_126 = arith.constant 0 : index
    %c0_127 = arith.constant 0 : index
    %419 = vector.load %arg7[%c11, %c0_126, %c0_127] : memref<16x2x128xf32, #tpu.memory_space<vmem>>, vector<1x2x128xf32>
    %420 = vector.shape_cast %419 : vector<1x2x128xf32> to vector<2x128xf32>
    %421 = vector.shape_cast %418 : vector<2x128xf32> to vector<1x2x128xf32>
    tpu.vector_store %arg7[%c11, %c0_126, %c0_127], %421 {strides = array<i32>} : memref<16x2x128xf32, #tpu.memory_space<vmem>>, vector<1x2x128xf32>,
    %c11_128 = arith.constant 11 : index
    %c0_129 = arith.constant 0 : index
    %c0_130 = arith.constant 0 : index
    %422 = vector.load %arg2[%c11_128, %c0_129, %c0_130] : memref<16x2x128xf32, #tpu.memory_space<vmem>>, vector<1x2x128xf32>
    %423 = vector.shape_cast %422 : vector<1x2x128xf32> to vector<2x128xf32>
    %cst_131 = arith.constant dense<0.000000e+00> : vector<2x128xf32>
    %424 = tpu.matmul %417, %6, %cst_131 {dimension_numbers = #tpu.dot_dimension_numbers<[1], [0], [0], [1], [0, 0, 1, 1], [], []>} : vector<2x32xf32>, vector<32x128xf32>, vector<2x128xf32> -> vector<2x128xf32>
    %425 = arith.addf %423, %424 : vector<2x128xf32>
    %426 = vector.extract_strided_slice %425 {offsets = [0, 0], sizes = [2, 96], strides = [1, 1]} : vector<2x128xf32> to vector<2x96xf32>
    %427 = arith.negf %426 : vector<2x96xf32>
    %428 = math.exp %427 : vector<2x96xf32>
    %cst_132 = arith.constant 1.000000e+00 : f32
    %429 = vector.broadcast %cst_132 : f32 to vector<2x96xf32>
    %430 = arith.addf %429, %428 : vector<2x96xf32>
    %431 = arith.divf %429, %430 : vector<2x96xf32>
    %432 = vector.extract_strided_slice %425 {offsets = [0, 96], sizes = [2, 32], strides = [1, 1]} : vector<2x128xf32> to vector<2x32xf32>
    %433 = math.tanh %432 : vector<2x32xf32>
    %434 = vector.extract_strided_slice %431 {offsets = [0, 0], sizes = [2, 32], strides = [1, 1]} : vector<2x96xf32> to vector<2x32xf32>
    %435 = vector.extract_strided_slice %431 {offsets = [0, 32], sizes = [2, 32], strides = [1, 1]} : vector<2x96xf32> to vector<2x32xf32>
    %436 = vector.extract_strided_slice %431 {offsets = [0, 64], sizes = [2, 32], strides = [1, 1]} : vector<2x96xf32> to vector<2x32xf32>
    %437 = arith.mulf %435, %403 : vector<2x32xf32>
    %438 = arith.mulf %434, %433 : vector<2x32xf32>
    %439 = arith.addf %437, %438 : vector<2x32xf32>
    %440 = math.tanh %439 : vector<2x32xf32>
    %441 = arith.mulf %436, %440 : vector<2x32xf32>
    %cst_133 = arith.constant dense<0.000000e+00> : vector<2x32xf32>
    %442 = tpu.matmul %441, %5, %cst_133 {dimension_numbers = #tpu.dot_dimension_numbers<[1], [0], [0], [1], [0, 0, 1, 1], [], []>} : vector<2x32xf32>, vector<32x32xf32>, vector<2x32xf32> -> vector<2x32xf32>
    %443 = arith.addf %442, %4 : vector<2x32xf32>
    %444 = arith.negf %443 : vector<2x32xf32>
    %445 = math.exp %444 : vector<2x32xf32>
    %cst_134 = arith.constant 1.000000e+00 : f32
    %446 = vector.broadcast %cst_134 : f32 to vector<2x32xf32>
    %447 = arith.addf %446, %445 : vector<2x32xf32>
    %448 = arith.divf %446, %447 : vector<2x32xf32>
    %cst_135 = arith.constant 1.000000e+00 : f32
    %449 = vector.broadcast %cst_135 : f32 to vector<2x32xf32>
    %450 = arith.subf %449, %448 : vector<2x32xf32>
    %451 = arith.mulf %450, %441 : vector<2x32xf32>
    %452 = arith.mulf %448, %3 : vector<2x32xf32>
    %453 = arith.addf %451, %452 : vector<2x32xf32>
    %454 = tpu.concatenate %453, %9 in 1 : vector<2x32xf32>, vector<2x96xf32> -> vector<2x128xf32>
    %c12 = arith.constant 12 : index
    %c0_136 = arith.constant 0 : index
    %c0_137 = arith.constant 0 : index
    %455 = vector.load %arg7[%c12, %c0_136, %c0_137] : memref<16x2x128xf32, #tpu.memory_space<vmem>>, vector<1x2x128xf32>
    %456 = vector.shape_cast %455 : vector<1x2x128xf32> to vector<2x128xf32>
    %457 = vector.shape_cast %454 : vector<2x128xf32> to vector<1x2x128xf32>
    tpu.vector_store %arg7[%c12, %c0_136, %c0_137], %457 {strides = array<i32>} : memref<16x2x128xf32, #tpu.memory_space<vmem>>, vector<1x2x128xf32>,
    %c12_138 = arith.constant 12 : index
    %c0_139 = arith.constant 0 : index
    %c0_140 = arith.constant 0 : index
    %458 = vector.load %arg2[%c12_138, %c0_139, %c0_140] : memref<16x2x128xf32, #tpu.memory_space<vmem>>, vector<1x2x128xf32>
    %459 = vector.shape_cast %458 : vector<1x2x128xf32> to vector<2x128xf32>
    %cst_141 = arith.constant dense<0.000000e+00> : vector<2x128xf32>
    %460 = tpu.matmul %453, %6, %cst_141 {dimension_numbers = #tpu.dot_dimension_numbers<[1], [0], [0], [1], [0, 0, 1, 1], [], []>} : vector<2x32xf32>, vector<32x128xf32>, vector<2x128xf32> -> vector<2x128xf32>
    %461 = arith.addf %459, %460 : vector<2x128xf32>
    %462 = vector.extract_strided_slice %461 {offsets = [0, 0], sizes = [2, 96], strides = [1, 1]} : vector<2x128xf32> to vector<2x96xf32>
    %463 = arith.negf %462 : vector<2x96xf32>
    %464 = math.exp %463 : vector<2x96xf32>
    %cst_142 = arith.constant 1.000000e+00 : f32
    %465 = vector.broadcast %cst_142 : f32 to vector<2x96xf32>
    %466 = arith.addf %465, %464 : vector<2x96xf32>
    %467 = arith.divf %465, %466 : vector<2x96xf32>
    %468 = vector.extract_strided_slice %461 {offsets = [0, 96], sizes = [2, 32], strides = [1, 1]} : vector<2x128xf32> to vector<2x32xf32>
    %469 = math.tanh %468 : vector<2x32xf32>
    %470 = vector.extract_strided_slice %467 {offsets = [0, 0], sizes = [2, 32], strides = [1, 1]} : vector<2x96xf32> to vector<2x32xf32>
    %471 = vector.extract_strided_slice %467 {offsets = [0, 32], sizes = [2, 32], strides = [1, 1]} : vector<2x96xf32> to vector<2x32xf32>
    %472 = vector.extract_strided_slice %467 {offsets = [0, 64], sizes = [2, 32], strides = [1, 1]} : vector<2x96xf32> to vector<2x32xf32>
    %473 = arith.mulf %471, %439 : vector<2x32xf32>
    %474 = arith.mulf %470, %469 : vector<2x32xf32>
    %475 = arith.addf %473, %474 : vector<2x32xf32>
    %476 = math.tanh %475 : vector<2x32xf32>
    %477 = arith.mulf %472, %476 : vector<2x32xf32>
    %cst_143 = arith.constant dense<0.000000e+00> : vector<2x32xf32>
    %478 = tpu.matmul %477, %5, %cst_143 {dimension_numbers = #tpu.dot_dimension_numbers<[1], [0], [0], [1], [0, 0, 1, 1], [], []>} : vector<2x32xf32>, vector<32x32xf32>, vector<2x32xf32> -> vector<2x32xf32>
    %479 = arith.addf %478, %4 : vector<2x32xf32>
    %480 = arith.negf %479 : vector<2x32xf32>
    %481 = math.exp %480 : vector<2x32xf32>
    %cst_144 = arith.constant 1.000000e+00 : f32
    %482 = vector.broadcast %cst_144 : f32 to vector<2x32xf32>
    %483 = arith.addf %482, %481 : vector<2x32xf32>
    %484 = arith.divf %482, %483 : vector<2x32xf32>
    %cst_145 = arith.constant 1.000000e+00 : f32
    %485 = vector.broadcast %cst_145 : f32 to vector<2x32xf32>
    %486 = arith.subf %485, %484 : vector<2x32xf32>
    %487 = arith.mulf %486, %477 : vector<2x32xf32>
    %488 = arith.mulf %484, %3 : vector<2x32xf32>
    %489 = arith.addf %487, %488 : vector<2x32xf32>
    %490 = tpu.concatenate %489, %9 in 1 : vector<2x32xf32>, vector<2x96xf32> -> vector<2x128xf32>
    %c13 = arith.constant 13 : index
    %c0_146 = arith.constant 0 : index
    %c0_147 = arith.constant 0 : index
    %491 = vector.load %arg7[%c13, %c0_146, %c0_147] : memref<16x2x128xf32, #tpu.memory_space<vmem>>, vector<1x2x128xf32>
    %492 = vector.shape_cast %491 : vector<1x2x128xf32> to vector<2x128xf32>
    %493 = vector.shape_cast %490 : vector<2x128xf32> to vector<1x2x128xf32>
    tpu.vector_store %arg7[%c13, %c0_146, %c0_147], %493 {strides = array<i32>} : memref<16x2x128xf32, #tpu.memory_space<vmem>>, vector<1x2x128xf32>,
    %c13_148 = arith.constant 13 : index
    %c0_149 = arith.constant 0 : index
    %c0_150 = arith.constant 0 : index
    %494 = vector.load %arg2[%c13_148, %c0_149, %c0_150] : memref<16x2x128xf32, #tpu.memory_space<vmem>>, vector<1x2x128xf32>
    %495 = vector.shape_cast %494 : vector<1x2x128xf32> to vector<2x128xf32>
    %cst_151 = arith.constant dense<0.000000e+00> : vector<2x128xf32>
    %496 = tpu.matmul %489, %6, %cst_151 {dimension_numbers = #tpu.dot_dimension_numbers<[1], [0], [0], [1], [0, 0, 1, 1], [], []>} : vector<2x32xf32>, vector<32x128xf32>, vector<2x128xf32> -> vector<2x128xf32>
    %497 = arith.addf %495, %496 : vector<2x128xf32>
    %498 = vector.extract_strided_slice %497 {offsets = [0, 0], sizes = [2, 96], strides = [1, 1]} : vector<2x128xf32> to vector<2x96xf32>
    %499 = arith.negf %498 : vector<2x96xf32>
    %500 = math.exp %499 : vector<2x96xf32>
    %cst_152 = arith.constant 1.000000e+00 : f32
    %501 = vector.broadcast %cst_152 : f32 to vector<2x96xf32>
    %502 = arith.addf %501, %500 : vector<2x96xf32>
    %503 = arith.divf %501, %502 : vector<2x96xf32>
    %504 = vector.extract_strided_slice %497 {offsets = [0, 96], sizes = [2, 32], strides = [1, 1]} : vector<2x128xf32> to vector<2x32xf32>
    %505 = math.tanh %504 : vector<2x32xf32>
    %506 = vector.extract_strided_slice %503 {offsets = [0, 0], sizes = [2, 32], strides = [1, 1]} : vector<2x96xf32> to vector<2x32xf32>
    %507 = vector.extract_strided_slice %503 {offsets = [0, 32], sizes = [2, 32], strides = [1, 1]} : vector<2x96xf32> to vector<2x32xf32>
    %508 = vector.extract_strided_slice %503 {offsets = [0, 64], sizes = [2, 32], strides = [1, 1]} : vector<2x96xf32> to vector<2x32xf32>
    %509 = arith.mulf %507, %475 : vector<2x32xf32>
    %510 = arith.mulf %506, %505 : vector<2x32xf32>
    %511 = arith.addf %509, %510 : vector<2x32xf32>
    %512 = math.tanh %511 : vector<2x32xf32>
    %513 = arith.mulf %508, %512 : vector<2x32xf32>
    %cst_153 = arith.constant dense<0.000000e+00> : vector<2x32xf32>
    %514 = tpu.matmul %513, %5, %cst_153 {dimension_numbers = #tpu.dot_dimension_numbers<[1], [0], [0], [1], [0, 0, 1, 1], [], []>} : vector<2x32xf32>, vector<32x32xf32>, vector<2x32xf32> -> vector<2x32xf32>
    %515 = arith.addf %514, %4 : vector<2x32xf32>
    %516 = arith.negf %515 : vector<2x32xf32>
    %517 = math.exp %516 : vector<2x32xf32>
    %cst_154 = arith.constant 1.000000e+00 : f32
    %518 = vector.broadcast %cst_154 : f32 to vector<2x32xf32>
    %519 = arith.addf %518, %517 : vector<2x32xf32>
    %520 = arith.divf %518, %519 : vector<2x32xf32>
    %cst_155 = arith.constant 1.000000e+00 : f32
    %521 = vector.broadcast %cst_155 : f32 to vector<2x32xf32>
    %522 = arith.subf %521, %520 : vector<2x32xf32>
    %523 = arith.mulf %522, %513 : vector<2x32xf32>
    %524 = arith.mulf %520, %3 : vector<2x32xf32>
    %525 = arith.addf %523, %524 : vector<2x32xf32>
    %526 = tpu.concatenate %525, %9 in 1 : vector<2x32xf32>, vector<2x96xf32> -> vector<2x128xf32>
    %c14 = arith.constant 14 : index
    %c0_156 = arith.constant 0 : index
    %c0_157 = arith.constant 0 : index
    %527 = vector.load %arg7[%c14, %c0_156, %c0_157] : memref<16x2x128xf32, #tpu.memory_space<vmem>>, vector<1x2x128xf32>
    %528 = vector.shape_cast %527 : vector<1x2x128xf32> to vector<2x128xf32>
    %529 = vector.shape_cast %526 : vector<2x128xf32> to vector<1x2x128xf32>
    tpu.vector_store %arg7[%c14, %c0_156, %c0_157], %529 {strides = array<i32>} : memref<16x2x128xf32, #tpu.memory_space<vmem>>, vector<1x2x128xf32>,
    %c14_158 = arith.constant 14 : index
    %c0_159 = arith.constant 0 : index
    %c0_160 = arith.constant 0 : index
    %530 = vector.load %arg2[%c14_158, %c0_159, %c0_160] : memref<16x2x128xf32, #tpu.memory_space<vmem>>, vector<1x2x128xf32>
    %531 = vector.shape_cast %530 : vector<1x2x128xf32> to vector<2x128xf32>
    %cst_161 = arith.constant dense<0.000000e+00> : vector<2x128xf32>
    %532 = tpu.matmul %525, %6, %cst_161 {dimension_numbers = #tpu.dot_dimension_numbers<[1], [0], [0], [1], [0, 0, 1, 1], [], []>} : vector<2x32xf32>, vector<32x128xf32>, vector<2x128xf32> -> vector<2x128xf32>
    %533 = arith.addf %531, %532 : vector<2x128xf32>
    %534 = vector.extract_strided_slice %533 {offsets = [0, 0], sizes = [2, 96], strides = [1, 1]} : vector<2x128xf32> to vector<2x96xf32>
    %535 = arith.negf %534 : vector<2x96xf32>
    %536 = math.exp %535 : vector<2x96xf32>
    %cst_162 = arith.constant 1.000000e+00 : f32
    %537 = vector.broadcast %cst_162 : f32 to vector<2x96xf32>
    %538 = arith.addf %537, %536 : vector<2x96xf32>
    %539 = arith.divf %537, %538 : vector<2x96xf32>
    %540 = vector.extract_strided_slice %533 {offsets = [0, 96], sizes = [2, 32], strides = [1, 1]} : vector<2x128xf32> to vector<2x32xf32>
    %541 = math.tanh %540 : vector<2x32xf32>
    %542 = vector.extract_strided_slice %539 {offsets = [0, 0], sizes = [2, 32], strides = [1, 1]} : vector<2x96xf32> to vector<2x32xf32>
    %543 = vector.extract_strided_slice %539 {offsets = [0, 32], sizes = [2, 32], strides = [1, 1]} : vector<2x96xf32> to vector<2x32xf32>
    %544 = vector.extract_strided_slice %539 {offsets = [0, 64], sizes = [2, 32], strides = [1, 1]} : vector<2x96xf32> to vector<2x32xf32>
    %545 = arith.mulf %543, %511 : vector<2x32xf32>
    %546 = arith.mulf %542, %541 : vector<2x32xf32>
    %547 = arith.addf %545, %546 : vector<2x32xf32>
    %548 = math.tanh %547 : vector<2x32xf32>
    %549 = arith.mulf %544, %548 : vector<2x32xf32>
    %cst_163 = arith.constant dense<0.000000e+00> : vector<2x32xf32>
    %550 = tpu.matmul %549, %5, %cst_163 {dimension_numbers = #tpu.dot_dimension_numbers<[1], [0], [0], [1], [0, 0, 1, 1], [], []>} : vector<2x32xf32>, vector<32x32xf32>, vector<2x32xf32> -> vector<2x32xf32>
    %551 = arith.addf %550, %4 : vector<2x32xf32>
    %552 = arith.negf %551 : vector<2x32xf32>
    %553 = math.exp %552 : vector<2x32xf32>
    %cst_164 = arith.constant 1.000000e+00 : f32
    %554 = vector.broadcast %cst_164 : f32 to vector<2x32xf32>
    %555 = arith.addf %554, %553 : vector<2x32xf32>
    %556 = arith.divf %554, %555 : vector<2x32xf32>
    %cst_165 = arith.constant 1.000000e+00 : f32
    %557 = vector.broadcast %cst_165 : f32 to vector<2x32xf32>
    %558 = arith.subf %557, %556 : vector<2x32xf32>
    %559 = arith.mulf %558, %549 : vector<2x32xf32>
    %560 = arith.mulf %556, %3 : vector<2x32xf32>
    %561 = arith.addf %559, %560 : vector<2x32xf32>
    %562 = tpu.concatenate %561, %9 in 1 : vector<2x32xf32>, vector<2x96xf32> -> vector<2x128xf32>
    %c15 = arith.constant 15 : index
    %c0_166 = arith.constant 0 : index
    %c0_167 = arith.constant 0 : index
    %563 = vector.load %arg7[%c15, %c0_166, %c0_167] : memref<16x2x128xf32, #tpu.memory_space<vmem>>, vector<1x2x128xf32>
    %564 = vector.shape_cast %563 : vector<1x2x128xf32> to vector<2x128xf32>
    %565 = vector.shape_cast %562 : vector<2x128xf32> to vector<1x2x128xf32>
    tpu.vector_store %arg7[%c15, %c0_166, %c0_167], %565 {strides = array<i32>} : memref<16x2x128xf32, #tpu.memory_space<vmem>>, vector<1x2x128xf32>,
    %c15_168 = arith.constant 15 : index
    %c0_169 = arith.constant 0 : index
    %c0_170 = arith.constant 0 : index
    %566 = vector.load %arg2[%c15_168, %c0_169, %c0_170] : memref<16x2x128xf32, #tpu.memory_space<vmem>>, vector<1x2x128xf32>
    %567 = vector.shape_cast %566 : vector<1x2x128xf32> to vector<2x128xf32>
    %cst_171 = arith.constant dense<0.000000e+00> : vector<2x128xf32>
    %568 = tpu.matmul %561, %6, %cst_171 {dimension_numbers = #tpu.dot_dimension_numbers<[1], [0], [0], [1], [0, 0, 1, 1], [], []>} : vector<2x32xf32>, vector<32x128xf32>, vector<2x128xf32> -> vector<2x128xf32>
    %569 = arith.addf %567, %568 : vector<2x128xf32>
    %570 = vector.extract_strided_slice %569 {offsets = [0, 0], sizes = [2, 96], strides = [1, 1]} : vector<2x128xf32> to vector<2x96xf32>
    %571 = arith.negf %570 : vector<2x96xf32>
    %572 = math.exp %571 : vector<2x96xf32>
    %cst_172 = arith.constant 1.000000e+00 : f32
    %573 = vector.broadcast %cst_172 : f32 to vector<2x96xf32>
    %574 = arith.addf %573, %572 : vector<2x96xf32>
    %575 = arith.divf %573, %574 : vector<2x96xf32>
    %576 = vector.extract_strided_slice %569 {offsets = [0, 96], sizes = [2, 32], strides = [1, 1]} : vector<2x128xf32> to vector<2x32xf32>
    %577 = math.tanh %576 : vector<2x32xf32>
    %578 = vector.extract_strided_slice %575 {offsets = [0, 0], sizes = [2, 32], strides = [1, 1]} : vector<2x96xf32> to vector<2x32xf32>
    %579 = vector.extract_strided_slice %575 {offsets = [0, 32], sizes = [2, 32], strides = [1, 1]} : vector<2x96xf32> to vector<2x32xf32>
    %580 = vector.extract_strided_slice %575 {offsets = [0, 64], sizes = [2, 32], strides = [1, 1]} : vector<2x96xf32> to vector<2x32xf32>
    %581 = arith.mulf %579, %547 : vector<2x32xf32>
    %582 = arith.mulf %578, %577 : vector<2x32xf32>
    %583 = arith.addf %581, %582 : vector<2x32xf32>
    %584 = math.tanh %583 : vector<2x32xf32>
    %585 = arith.mulf %580, %584 : vector<2x32xf32>
    %c0_173 = arith.constant 0 : index
    %c0_174 = arith.constant 0 : index
    %586 = vector.load %arg8[%c0_173, %c0_174] : memref<2x32xf32, #tpu.memory_space<vmem>>, vector<2x32xf32>
    tpu.vector_store %arg8[%c0_173, %c0_174], %585 {strides = array<i32>} : memref<2x32xf32, #tpu.memory_space<vmem>>, vector<2x32xf32>,
    %c0_175 = arith.constant 0 : index
    %c0_176 = arith.constant 0 : index
    %587 = vector.load %arg9[%c0_175, %c0_176] : memref<2x32xf32, #tpu.memory_space<vmem>>, vector<2x32xf32>
    tpu.vector_store %arg9[%c0_175, %c0_176], %583 {strides = array<i32>} : memref<2x32xf32, #tpu.memory_space<vmem>>, vector<2x32xf32>,
    return
  }
  func.func @transform_0(%arg0: i32, %arg1: i32) -> (i32, i32, i32) {
    %c0_i32 = arith.constant 0 : i32
    %c0_i32_0 = arith.constant 0 : i32
    return %arg1, %arg0, %c0_i32 : i32, i32, i32
  }
  func.func @transform_1(%arg0: i32, %arg1: i32) -> (i32, i32) {
    %c0_i32 = arith.constant 0 : i32
    %c0_i32_0 = arith.constant 0 : i32
    return %arg0, %c0_i32 : i32, i32
  }
  func.func @transform_2(%arg0: i32, %arg1: i32) -> (i32, i32) {
    %c0_i32 = arith.constant 0 : i32
    %c0_i32_0 = arith.constant 0 : i32
    return %arg0, %c0_i32 : i32, i32
  }
  func.func @transform_3(%arg0: i32, %arg1: i32) -> (i32, i32) {
    %c0_i32 = arith.constant 0 : i32
    %c0_i32_0 = arith.constant 0 : i32
    %c0_i32_1 = arith.constant 0 : i32
    return %c0_i32, %c0_i32_0 : i32, i32
  }
  func.func @transform_4(%arg0: i32, %arg1: i32) -> (i32, i32) {
    %c0_i32 = arith.constant 0 : i32
    %c0_i32_0 = arith.constant 0 : i32
    %c0_i32_1 = arith.constant 0 : i32
    return %c0_i32, %c0_i32_0 : i32, i32
  }
  func.func @transform_5(%arg0: i32, %arg1: i32) -> (i32, i32, i32) {
    %c0_i32 = arith.constant 0 : i32
    %c0_i32_0 = arith.constant 0 : i32
    return %arg1, %arg0, %c0_i32 : i32, i32, i32
  }
}

module attributes {stable_mosaic.version = 11 : i64} {
  func.func @_mylstm_kernel(%arg0: i32, %arg1: i32, %arg2: memref<16x2x128xf32, #tpu.memory_space<vmem>>, %arg3: memref<2x32xf32, #tpu.memory_space<vmem>>, %arg4: memref<2x32xf32, #tpu.memory_space<vmem>>, %arg5: memref<32x32xf32, #tpu.memory_space<vmem>>, %arg6: memref<32x128xf32, #tpu.memory_space<vmem>>, %arg7: memref<16x2x128xf32, #tpu.memory_space<vmem>>, %arg8: memref<2x32xf32, #tpu.memory_space<vmem>>, %arg9: memref<2x32xf32, #tpu.memory_space<vmem>>) attributes {dimension_semantics = [#tpu.dimension_semantics<parallel>, #tpu.dimension_semantics<arbitrary>], iteration_bounds = array<i64: 1, 1>, scalar_prefetch = 0 : i64, scratch_operands = 2 : i64, tpu.core_type = #tpu.core_type<tc>, window_params = [{transform_indices = @transform_0, window_bounds = array<i64: 16, 2, 128>}, {transform_indices = @transform_1, window_bounds = array<i64: 2, 32>}, {transform_indices = @transform_2, window_bounds = array<i64: 2, 32>}, {pipeline_mode = #tpu.pipeline_mode<synchronous>, transform_indices = @transform_3, window_bounds = array<i64: 32, 32>}, {pipeline_mode = #tpu.pipeline_mode<synchronous>, transform_indices = @transform_4, window_bounds = array<i64: 32, 128>}, {transform_indices = @transform_5, window_bounds = array<i64: 16, 2, 128>}]} {
    %c0_i32 = arith.constant 0 : i32
    %0 = arith.cmpi eq, %arg1, %c0_i32 : i32
    %1 = arith.extui %0 : i1 to i32
    %c0_i32_0 = arith.constant 0 : i32
    %2 = arith.cmpi ne, %1, %c0_i32_0 : i32
    scf.if %2 {
      %cst_177 = arith.constant 0.000000e+00 : f32
      %588 = vector.broadcast %cst_177 : f32 to vector<2x32xf32>
      %c0_178 = arith.constant 0 : index
      %c0_179 = arith.constant 0 : index
      %589 = vector.load %arg8[%c0_178, %c0_179] : memref<2x32xf32, #tpu.memory_space<vmem>>, vector<2x32xf32>
      tpu.vector_store %arg8[%c0_178, %c0_179], %588 {strides = array<i32>} : memref<2x32xf32, #tpu.memory_space<vmem>>, vector<2x32xf32>,
      %cst_180 = arith.constant 0.000000e+00 : f32
      %590 = vector.broadcast %cst_180 : f32 to vector<2x32xf32>
      %c0_181 = arith.constant 0 : index
      %c0_182 = arith.constant 0 : index
      %591 = vector.load %arg9[%c0_181, %c0_182] : memref<2x32xf32, #tpu.memory_space<vmem>>, vector<2x32xf32>
      tpu.vector_store %arg9[%c0_181, %c0_182], %590 {strides = array<i32>} : memref<2x32xf32, #tpu.memory_space<vmem>>, vector<2x32xf32>,
    } else {
    }
    %c0 = arith.constant 0 : index
    %c0_1 = arith.constant 0 : index
    %3 = vector.load %arg3[%c0, %c0_1] : memref<2x32xf32, #tpu.memory_space<vmem>>, vector<2x32xf32>
    %c0_2 = arith.constant 0 : index
    %c0_3 = arith.constant 0 : index
    %4 = vector.load %arg4[%c0_2, %c0_3] : memref<2x32xf32, #tpu.memory_space<vmem>>, vector<2x32xf32>
    %c0_4 = arith.constant 0 : index
    %c0_5 = arith.constant 0 : index
    %5 = vector.load %arg5[%c0_4, %c0_5] : memref<32x32xf32, #tpu.memory_space<vmem>>, vector<32x32xf32>
    %c0_6 = arith.constant 0 : index
    %c0_7 = arith.constant 0 : index
    %6 = vector.load %arg6[%c0_6, %c0_7] : memref<32x128xf32, #tpu.memory_space<vmem>>, vector<32x128xf32>
    %c0_8 = arith.constant 0 : index
    %c0_9 = arith.constant 0 : index
    %7 = vector.load %arg8[%c0_8, %c0_9] : memref<2x32xf32, #tpu.memory_space<vmem>>, vector<2x32xf32>
    %c0_10 = arith.constant 0 : index
    %c0_11 = arith.constant 0 : index
    %8 = vector.load %arg9[%c0_10, %c0_11] : memref<2x32xf32, #tpu.memory_space<vmem>>, vector<2x32xf32>
    %cst = arith.constant 0.000000e+00 : f32
    %9 = vector.broadcast %cst : f32 to vector<2x96xf32>
    %cst_12 = arith.constant dense<0.000000e+00> : vector<2x32xf32>
    %10 = tpu.matmul %7, %5, %cst_12 {dimension_numbers = #tpu.dot_dimension_numbers<[1], [0], [0], [1], [0, 0, 1, 1], [], []>} : vector<2x32xf32>, vector<32x32xf32>, vector<2x32xf32> -> vector<2x32xf32>
    %11 = arith.addf %10, %4 : vector<2x32xf32>
    %12 = arith.negf %11 : vector<2x32xf32>
    %13 = math.exp %12 : vector<2x32xf32>
    %cst_13 = arith.constant 1.000000e+00 : f32
    %14 = vector.broadcast %cst_13 : f32 to vector<2x32xf32>
    %15 = arith.addf %14, %13 : vector<2x32xf32>
    %16 = arith.divf %14, %15 : vector<2x32xf32>
    %cst_14 = arith.constant 1.000000e+00 : f32
    %17 = vector.broadcast %cst_14 : f32 to vector<2x32xf32>
    %18 = arith.subf %17, %16 : vector<2x32xf32>
    %19 = arith.mulf %18, %7 : vector<2x32xf32>
    %20 = arith.mulf %16, %3 : vector<2x32xf32>
    %21 = arith.addf %19, %20 : vector<2x32xf32>
    %22 = tpu.concatenate %21, %9 in 1 : vector<2x32xf32>, vector<2x96xf32> -> vector<2x128xf32>
    %c0_15 = arith.constant 0 : index
    %c0_16 = arith.constant 0 : index
    %c0_17 = arith.constant 0 : index
    %23 = vector.load %arg7[%c0_15, %c0_16, %c0_17] : memref<16x2x128xf32, #tpu.memory_space<vmem>>, vector<1x2x128xf32>
    %24 = vector.shape_cast %23 : vector<1x2x128xf32> to vector<2x128xf32>
    %25 = vector.shape_cast %22 : vector<2x128xf32> to vector<1x2x128xf32>
    tpu.vector_store %arg7[%c0_15, %c0_16, %c0_17], %25 {strides = array<i32>} : memref<16x2x128xf32, #tpu.memory_space<vmem>>, vector<1x2x128xf32>,
    %c0_18 = arith.constant 0 : index
    %c0_19 = arith.constant 0 : index
    %c0_20 = arith.constant 0 : index
    %26 = vector.load %arg2[%c0_18, %c0_19, %c0_20] : memref<16x2x128xf32, #tpu.memory_space<vmem>>, vector<1x2x128xf32>
    %27 = vector.shape_cast %26 : vector<1x2x128xf32> to vector<2x128xf32>
    %cst_21 = arith.constant dense<0.000000e+00> : vector<2x128xf32>
    %28 = tpu.matmul %21, %6, %cst_21 {dimension_numbers = #tpu.dot_dimension_numbers<[1], [0], [0], [1], [0, 0, 1, 1], [], []>} : vector<2x32xf32>, vector<32x128xf32>, vector<2x128xf32> -> vector<2x128xf32>
    %29 = arith.addf %27, %28 : vector<2x128xf32>
    %30 = vector.extract_strided_slice %29 {offsets = [0, 0], sizes = [2, 96], strides = [1, 1]} : vector<2x128xf32> to vector<2x96xf32>
    %31 = arith.negf %30 : vector<2x96xf32>
    %32 = math.exp %31 : vector<2x96xf32>
    %cst_22 = arith.constant 1.000000e+00 : f32
    %33 = vector.broadcast %cst_22 : f32 to vector<2x96xf32>
    %34 = arith.addf %33, %32 : vector<2x96xf32>
    %35 = arith.divf %33, %34 : vector<2x96xf32>
    %36 = vector.extract_strided_slice %29 {offsets = [0, 96], sizes = [2, 32], strides = [1, 1]} : vector<2x128xf32> to vector<2x32xf32>
    %37 = math.tanh %36 : vector<2x32xf32>
    %38 = vector.extract_strided_slice %35 {offsets = [0, 0], sizes = [2, 32], strides = [1, 1]} : vector<2x96xf32> to vector<2x32xf32>
    %39 = vector.extract_strided_slice %35 {offsets = [0, 32], sizes = [2, 32], strides = [1, 1]} : vector<2x96xf32> to vector<2x32xf32>
    %40 = vector.extract_strided_slice %35 {offsets = [0, 64], sizes = [2, 32], strides = [1, 1]} : vector<2x96xf32> to vector<2x32xf32>
    %41 = arith.mulf %39, %8 : vector<2x32xf32>
    %42 = arith.mulf %38, %37 : vector<2x32xf32>
    %43 = arith.addf %41, %42 : vector<2x32xf32>
    %44 = math.tanh %43 : vector<2x32xf32>
    %45 = arith.mulf %40, %44 : vector<2x32xf32>
    %cst_23 = arith.constant dense<0.000000e+00> : vector<2x32xf32>
    %46 = tpu.matmul %45, %5, %cst_23 {dimension_numbers = #tpu.dot_dimension_numbers<[1], [0], [0], [1], [0, 0, 1, 1], [], []>} : vector<2x32xf32>, vector<32x32xf32>, vector<2x32xf32> -> vector<2x32xf32>
    %47 = arith.addf %46, %4 : vector<2x32xf32>
    %48 = arith.negf %47 : vector<2x32xf32>
    %49 = math.exp %48 : vector<2x32xf32>
    %cst_24 = arith.constant 1.000000e+00 : f32
    %50 = vector.broadcast %cst_24 : f32 to vector<2x32xf32>
    %51 = arith.addf %50, %49 : vector<2x32xf32>
    %52 = arith.divf %50, %51 : vector<2x32xf32>
    %cst_25 = arith.constant 1.000000e+00 : f32
    %53 = vector.broadcast %cst_25 : f32 to vector<2x32xf32>
    %54 = arith.subf %53, %52 : vector<2x32xf32>
    %55 = arith.mulf %54, %45 : vector<2x32xf32>
    %56 = arith.mulf %52, %3 : vector<2x32xf32>
    %57 = arith.addf %55, %56 : vector<2x32xf32>
    %58 = tpu.concatenate %57, %9 in 1 : vector<2x32xf32>, vector<2x96xf32> -> vector<2x128xf32>
    %c1 = arith.constant 1 : index
    %c0_26 = arith.constant 0 : index
    %c0_27 = arith.constant 0 : index
    %59 = vector.load %arg7[%c1, %c0_26, %c0_27] : memref<16x2x128xf32, #tpu.memory_space<vmem>>, vector<1x2x128xf32>
    %60 = vector.shape_cast %59 : vector<1x2x128xf32> to vector<2x128xf32>
    %61 = vector.shape_cast %58 : vector<2x128xf32> to vector<1x2x128xf32>
    tpu.vector_store %arg7[%c1, %c0_26, %c0_27], %61 {strides = array<i32>} : memref<16x2x128xf32, #tpu.memory_space<vmem>>, vector<1x2x128xf32>,
    %c1_28 = arith.constant 1 : index
    %c0_29 = arith.constant 0 : index
    %c0_30 = arith.constant 0 : index
    %62 = vector.load %arg2[%c1_28, %c0_29, %c0_30] : memref<16x2x128xf32, #tpu.memory_space<vmem>>, vector<1x2x128xf32>
    %63 = vector.shape_cast %62 : vector<1x2x128xf32> to vector<2x128xf32>
    %cst_31 = arith.constant dense<0.000000e+00> : vector<2x128xf32>
    %64 = tpu.matmul %57, %6, %cst_31 {dimension_numbers = #tpu.dot_dimension_numbers<[1], [0], [0], [1], [0, 0, 1, 1], [], []>} : vector<2x32xf32>, vector<32x128xf32>, vector<2x128xf32> -> vector<2x128xf32>
    %65 = arith.addf %63, %64 : vector<2x128xf32>
    %66 = vector.extract_strided_slice %65 {offsets = [0, 0], sizes = [2, 96], strides = [1, 1]} : vector<2x128xf32> to vector<2x96xf32>
    %67 = arith.negf %66 : vector<2x96xf32>
    %68 = math.exp %67 : vector<2x96xf32>
    %cst_32 = arith.constant 1.000000e+00 : f32
    %69 = vector.broadcast %cst_32 : f32 to vector<2x96xf32>
    %70 = arith.addf %69, %68 : vector<2x96xf32>
    %71 = arith.divf %69, %70 : vector<2x96xf32>
    %72 = vector.extract_strided_slice %65 {offsets = [0, 96], sizes = [2, 32], strides = [1, 1]} : vector<2x128xf32> to vector<2x32xf32>
    %73 = math.tanh %72 : vector<2x32xf32>
    %74 = vector.extract_strided_slice %71 {offsets = [0, 0], sizes = [2, 32], strides = [1, 1]} : vector<2x96xf32> to vector<2x32xf32>
    %75 = vector.extract_strided_slice %71 {offsets = [0, 32], sizes = [2, 32], strides = [1, 1]} : vector<2x96xf32> to vector<2x32xf32>
    %76 = vector.extract_strided_slice %71 {offsets = [0, 64], sizes = [2, 32], strides = [1, 1]} : vector<2x96xf32> to vector<2x32xf32>
    %77 = arith.mulf %75, %43 : vector<2x32xf32>
    %78 = arith.mulf %74, %73 : vector<2x32xf32>
    %79 = arith.addf %77, %78 : vector<2x32xf32>
    %80 = math.tanh %79 : vector<2x32xf32>
    %81 = arith.mulf %76, %80 : vector<2x32xf32>
    %cst_33 = arith.constant dense<0.000000e+00> : vector<2x32xf32>
    %82 = tpu.matmul %81, %5, %cst_33 {dimension_numbers = #tpu.dot_dimension_numbers<[1], [0], [0], [1], [0, 0, 1, 1], [], []>} : vector<2x32xf32>, vector<32x32xf32>, vector<2x32xf32> -> vector<2x32xf32>
    %83 = arith.addf %82, %4 : vector<2x32xf32>
    %84 = arith.negf %83 : vector<2x32xf32>
    %85 = math.exp %84 : vector<2x32xf32>
    %cst_34 = arith.constant 1.000000e+00 : f32
    %86 = vector.broadcast %cst_34 : f32 to vector<2x32xf32>
    %87 = arith.addf %86, %85 : vector<2x32xf32>
    %88 = arith.divf %86, %87 : vector<2x32xf32>
    %cst_35 = arith.constant 1.000000e+00 : f32
    %89 = vector.broadcast %cst_35 : f32 to vector<2x32xf32>
    %90 = arith.subf %89, %88 : vector<2x32xf32>
    %91 = arith.mulf %90, %81 : vector<2x32xf32>
    %92 = arith.mulf %88, %3 : vector<2x32xf32>
    %93 = arith.addf %91, %92 : vector<2x32xf32>
    %94 = tpu.concatenate %93, %9 in 1 : vector<2x32xf32>, vector<2x96xf32> -> vector<2x128xf32>
    %c2 = arith.constant 2 : index
    %c0_36 = arith.constant 0 : index
    %c0_37 = arith.constant 0 : index
    %95 = vector.load %arg7[%c2, %c0_36, %c0_37] : memref<16x2x128xf32, #tpu.memory_space<vmem>>, vector<1x2x128xf32>
    %96 = vector.shape_cast %95 : vector<1x2x128xf32> to vector<2x128xf32>
    %97 = vector.shape_cast %94 : vector<2x128xf32> to vector<1x2x128xf32>
    tpu.vector_store %arg7[%c2, %c0_36, %c0_37], %97 {strides = array<i32>} : memref<16x2x128xf32, #tpu.memory_space<vmem>>, vector<1x2x128xf32>,
    %c2_38 = arith.constant 2 : index
    %c0_39 = arith.constant 0 : index
    %c0_40 = arith.constant 0 : index
    %98 = vector.load %arg2[%c2_38, %c0_39, %c0_40] : memref<16x2x128xf32, #tpu.memory_space<vmem>>, vector<1x2x128xf32>
    %99 = vector.shape_cast %98 : vector<1x2x128xf32> to vector<2x128xf32>
    %cst_41 = arith.constant dense<0.000000e+00> : vector<2x128xf32>
    %100 = tpu.matmul %93, %6, %cst_41 {dimension_numbers = #tpu.dot_dimension_numbers<[1], [0], [0], [1], [0, 0, 1, 1], [], []>} : vector<2x32xf32>, vector<32x128xf32>, vector<2x128xf32> -> vector<2x128xf32>
    %101 = arith.addf %99, %100 : vector<2x128xf32>
    %102 = vector.extract_strided_slice %101 {offsets = [0, 0], sizes = [2, 96], strides = [1, 1]} : vector<2x128xf32> to vector<2x96xf32>
    %103 = arith.negf %102 : vector<2x96xf32>
    %104 = math.exp %103 : vector<2x96xf32>
    %cst_42 = arith.constant 1.000000e+00 : f32
    %105 = vector.broadcast %cst_42 : f32 to vector<2x96xf32>
    %106 = arith.addf %105, %104 : vector<2x96xf32>
    %107 = arith.divf %105, %106 : vector<2x96xf32>
    %108 = vector.extract_strided_slice %101 {offsets = [0, 96], sizes = [2, 32], strides = [1, 1]} : vector<2x128xf32> to vector<2x32xf32>
    %109 = math.tanh %108 : vector<2x32xf32>
    %110 = vector.extract_strided_slice %107 {offsets = [0, 0], sizes = [2, 32], strides = [1, 1]} : vector<2x96xf32> to vector<2x32xf32>
    %111 = vector.extract_strided_slice %107 {offsets = [0, 32], sizes = [2, 32], strides = [1, 1]} : vector<2x96xf32> to vector<2x32xf32>
    %112 = vector.extract_strided_slice %107 {offsets = [0, 64], sizes = [2, 32], strides = [1, 1]} : vector<2x96xf32> to vector<2x32xf32>
    %113 = arith.mulf %111, %79 : vector<2x32xf32>
    %114 = arith.mulf %110, %109 : vector<2x32xf32>
    %115 = arith.addf %113, %114 : vector<2x32xf32>
    %116 = math.tanh %115 : vector<2x32xf32>
    %117 = arith.mulf %112, %116 : vector<2x32xf32>
    %cst_43 = arith.constant dense<0.000000e+00> : vector<2x32xf32>
    %118 = tpu.matmul %117, %5, %cst_43 {dimension_numbers = #tpu.dot_dimension_numbers<[1], [0], [0], [1], [0, 0, 1, 1], [], []>} : vector<2x32xf32>, vector<32x32xf32>, vector<2x32xf32> -> vector<2x32xf32>
    %119 = arith.addf %118, %4 : vector<2x32xf32>
    %120 = arith.negf %119 : vector<2x32xf32>
    %121 = math.exp %120 : vector<2x32xf32>
    %cst_44 = arith.constant 1.000000e+00 : f32
    %122 = vector.broadcast %cst_44 : f32 to vector<2x32xf32>
    %123 = arith.addf %122, %121 : vector<2x32xf32>
    %124 = arith.divf %122, %123 : vector<2x32xf32>
    %cst_45 = arith.constant 1.000000e+00 : f32
    %125 = vector.broadcast %cst_45 : f32 to vector<2x32xf32>
    %126 = arith.subf %125, %124 : vector<2x32xf32>
    %127 = arith.mulf %126, %117 : vector<2x32xf32>
    %128 = arith.mulf %124, %3 : vector<2x32xf32>
    %129 = arith.addf %127, %128 : vector<2x32xf32>
    %130 = tpu.concatenate %129, %9 in 1 : vector<2x32xf32>, vector<2x96xf32> -> vector<2x128xf32>
    %c3 = arith.constant 3 : index
    %c0_46 = arith.constant 0 : index
    %c0_47 = arith.constant 0 : index
    %131 = vector.load %arg7[%c3, %c0_46, %c0_47] : memref<16x2x128xf32, #tpu.memory_space<vmem>>, vector<1x2x128xf32>
    %132 = vector.shape_cast %131 : vector<1x2x128xf32> to vector<2x128xf32>
    %133 = vector.shape_cast %130 : vector<2x128xf32> to vector<1x2x128xf32>
    tpu.vector_store %arg7[%c3, %c0_46, %c0_47], %133 {strides = array<i32>} : memref<16x2x128xf32, #tpu.memory_space<vmem>>, vector<1x2x128xf32>,
    %c3_48 = arith.constant 3 : index
    %c0_49 = arith.constant 0 : index
    %c0_50 = arith.constant 0 : index
    %134 = vector.load %arg2[%c3_48, %c0_49, %c0_50] : memref<16x2x128xf32, #tpu.memory_space<vmem>>, vector<1x2x128xf32>
    %135 = vector.shape_cast %134 : vector<1x2x128xf32> to vector<2x128xf32>
    %cst_51 = arith.constant dense<0.000000e+00> : vector<2x128xf32>
    %136 = tpu.matmul %129, %6, %cst_51 {dimension_numbers = #tpu.dot_dimension_numbers<[1], [0], [0], [1], [0, 0, 1, 1], [], []>} : vector<2x32xf32>, vector<32x128xf32>, vector<2x128xf32> -> vector<2x128xf32>
    %137 = arith.addf %135, %136 : vector<2x128xf32>
    %138 = vector.extract_strided_slice %137 {offsets = [0, 0], sizes = [2, 96], strides = [1, 1]} : vector<2x128xf32> to vector<2x96xf32>
    %139 = arith.negf %138 : vector<2x96xf32>
    %140 = math.exp %139 : vector<2x96xf32>
    %cst_52 = arith.constant 1.000000e+00 : f32
    %141 = vector.broadcast %cst_52 : f32 to vector<2x96xf32>
    %142 = arith.addf %141, %140 : vector<2x96xf32>
    %143 = arith.divf %141, %142 : vector<2x96xf32>
    %144 = vector.extract_strided_slice %137 {offsets = [0, 96], sizes = [2, 32], strides = [1, 1]} : vector<2x128xf32> to vector<2x32xf32>
    %145 = math.tanh %144 : vector<2x32xf32>
    %146 = vector.extract_strided_slice %143 {offsets = [0, 0], sizes = [2, 32], strides = [1, 1]} : vector<2x96xf32> to vector<2x32xf32>
    %147 = vector.extract_strided_slice %143 {offsets = [0, 32], sizes = [2, 32], strides = [1, 1]} : vector<2x96xf32> to vector<2x32xf32>
    %148 = vector.extract_strided_slice %143 {offsets = [0, 64], sizes = [2, 32], strides = [1, 1]} : vector<2x96xf32> to vector<2x32xf32>
    %149 = arith.mulf %147, %115 : vector<2x32xf32>
    %150 = arith.mulf %146, %145 : vector<2x32xf32>
    %151 = arith.addf %149, %150 : vector<2x32xf32>
    %152 = math.tanh %151 : vector<2x32xf32>
    %153 = arith.mulf %148, %152 : vector<2x32xf32>
    %cst_53 = arith.constant dense<0.000000e+00> : vector<2x32xf32>
    %154 = tpu.matmul %153, %5, %cst_53 {dimension_numbers = #tpu.dot_dimension_numbers<[1], [0], [0], [1], [0, 0, 1, 1], [], []>} : vector<2x32xf32>, vector<32x32xf32>, vector<2x32xf32> -> vector<2x32xf32>
    %155 = arith.addf %154, %4 : vector<2x32xf32>
    %156 = arith.negf %155 : vector<2x32xf32>
    %157 = math.exp %156 : vector<2x32xf32>
    %cst_54 = arith.constant 1.000000e+00 : f32
    %158 = vector.broadcast %cst_54 : f32 to vector<2x32xf32>
    %159 = arith.addf %158, %157 : vector<2x32xf32>
    %160 = arith.divf %158, %159 : vector<2x32xf32>
    %cst_55 = arith.constant 1.000000e+00 : f32
    %161 = vector.broadcast %cst_55 : f32 to vector<2x32xf32>
    %162 = arith.subf %161, %160 : vector<2x32xf32>
    %163 = arith.mulf %162, %153 : vector<2x32xf32>
    %164 = arith.mulf %160, %3 : vector<2x32xf32>
    %165 = arith.addf %163, %164 : vector<2x32xf32>
    %166 = tpu.concatenate %165, %9 in 1 : vector<2x32xf32>, vector<2x96xf32> -> vector<2x128xf32>
    %c4 = arith.constant 4 : index
    %c0_56 = arith.constant 0 : index
    %c0_57 = arith.constant 0 : index
    %167 = vector.load %arg7[%c4, %c0_56, %c0_57] : memref<16x2x128xf32, #tpu.memory_space<vmem>>, vector<1x2x128xf32>
    %168 = vector.shape_cast %167 : vector<1x2x128xf32> to vector<2x128xf32>
    %169 = vector.shape_cast %166 : vector<2x128xf32> to vector<1x2x128xf32>
    tpu.vector_store %arg7[%c4, %c0_56, %c0_57], %169 {strides = array<i32>} : memref<16x2x128xf32, #tpu.memory_space<vmem>>, vector<1x2x128xf32>,
    %c4_58 = arith.constant 4 : index
    %c0_59 = arith.constant 0 : index
    %c0_60 = arith.constant 0 : index
    %170 = vector.load %arg2[%c4_58, %c0_59, %c0_60] : memref<16x2x128xf32, #tpu.memory_space<vmem>>, vector<1x2x128xf32>
    %171 = vector.shape_cast %170 : vector<1x2x128xf32> to vector<2x128xf32>
    %cst_61 = arith.constant dense<0.000000e+00> : vector<2x128xf32>
    %172 = tpu.matmul %165, %6, %cst_61 {dimension_numbers = #tpu.dot_dimension_numbers<[1], [0], [0], [1], [0, 0, 1, 1], [], []>} : vector<2x32xf32>, vector<32x128xf32>, vector<2x128xf32> -> vector<2x128xf32>
    %173 = arith.addf %171, %172 : vector<2x128xf32>
    %174 = vector.extract_strided_slice %173 {offsets = [0, 0], sizes = [2, 96], strides = [1, 1]} : vector<2x128xf32> to vector<2x96xf32>
    %175 = arith.negf %174 : vector<2x96xf32>
    %176 = math.exp %175 : vector<2x96xf32>
    %cst_62 = arith.constant 1.000000e+00 : f32
    %177 = vector.broadcast %cst_62 : f32 to vector<2x96xf32>
    %178 = arith.addf %177, %176 : vector<2x96xf32>
    %179 = arith.divf %177, %178 : vector<2x96xf32>
    %180 = vector.extract_strided_slice %173 {offsets = [0, 96], sizes = [2, 32], strides = [1, 1]} : vector<2x128xf32> to vector<2x32xf32>
    %181 = math.tanh %180 : vector<2x32xf32>
    %182 = vector.extract_strided_slice %179 {offsets = [0, 0], sizes = [2, 32], strides = [1, 1]} : vector<2x96xf32> to vector<2x32xf32>
    %183 = vector.extract_strided_slice %179 {offsets = [0, 32], sizes = [2, 32], strides = [1, 1]} : vector<2x96xf32> to vector<2x32xf32>
    %184 = vector.extract_strided_slice %179 {offsets = [0, 64], sizes = [2, 32], strides = [1, 1]} : vector<2x96xf32> to vector<2x32xf32>
    %185 = arith.mulf %183, %151 : vector<2x32xf32>
    %186 = arith.mulf %182, %181 : vector<2x32xf32>
    %187 = arith.addf %185, %186 : vector<2x32xf32>
    %188 = math.tanh %187 : vector<2x32xf32>
    %189 = arith.mulf %184, %188 : vector<2x32xf32>
    %cst_63 = arith.constant dense<0.000000e+00> : vector<2x32xf32>
    %190 = tpu.matmul %189, %5, %cst_63 {dimension_numbers = #tpu.dot_dimension_numbers<[1], [0], [0], [1], [0, 0, 1, 1], [], []>} : vector<2x32xf32>, vector<32x32xf32>, vector<2x32xf32> -> vector<2x32xf32>
    %191 = arith.addf %190, %4 : vector<2x32xf32>
    %192 = arith.negf %191 : vector<2x32xf32>
    %193 = math.exp %192 : vector<2x32xf32>
    %cst_64 = arith.constant 1.000000e+00 : f32
    %194 = vector.broadcast %cst_64 : f32 to vector<2x32xf32>
    %195 = arith.addf %194, %193 : vector<2x32xf32>
    %196 = arith.divf %194, %195 : vector<2x32xf32>
    %cst_65 = arith.constant 1.000000e+00 : f32
    %197 = vector.broadcast %cst_65 : f32 to vector<2x32xf32>
    %198 = arith.subf %197, %196 : vector<2x32xf32>
    %199 = arith.mulf %198, %189 : vector<2x32xf32>
    %200 = arith.mulf %196, %3 : vector<2x32xf32>
    %201 = arith.addf %199, %200 : vector<2x32xf32>
    %202 = tpu.concatenate %201, %9 in 1 : vector<2x32xf32>, vector<2x96xf32> -> vector<2x128xf32>
    %c5 = arith.constant 5 : index
    %c0_66 = arith.constant 0 : index
    %c0_67 = arith.constant 0 : index
    %203 = vector.load %arg7[%c5, %c0_66, %c0_67] : memref<16x2x128xf32, #tpu.memory_space<vmem>>, vector<1x2x128xf32>
    %204 = vector.shape_cast %203 : vector<1x2x128xf32> to vector<2x128xf32>
    %205 = vector.shape_cast %202 : vector<2x128xf32> to vector<1x2x128xf32>
    tpu.vector_store %arg7[%c5, %c0_66, %c0_67], %205 {strides = array<i32>} : memref<16x2x128xf32, #tpu.memory_space<vmem>>, vector<1x2x128xf32>,
    %c5_68 = arith.constant 5 : index
    %c0_69 = arith.constant 0 : index
    %c0_70 = arith.constant 0 : index
    %206 = vector.load %arg2[%c5_68, %c0_69, %c0_70] : memref<16x2x128xf32, #tpu.memory_space<vmem>>, vector<1x2x128xf32>
    %207 = vector.shape_cast %206 : vector<1x2x128xf32> to vector<2x128xf32>
    %cst_71 = arith.constant dense<0.000000e+00> : vector<2x128xf32>
    %208 = tpu.matmul %201, %6, %cst_71 {dimension_numbers = #tpu.dot_dimension_numbers<[1], [0], [0], [1], [0, 0, 1, 1], [], []>} : vector<2x32xf32>, vector<32x128xf32>, vector<2x128xf32> -> vector<2x128xf32>
    %209 = arith.addf %207, %208 : vector<2x128xf32>
    %210 = vector.extract_strided_slice %209 {offsets = [0, 0], sizes = [2, 96], strides = [1, 1]} : vector<2x128xf32> to vector<2x96xf32>
    %211 = arith.negf %210 : vector<2x96xf32>
    %212 = math.exp %211 : vector<2x96xf32>
    %cst_72 = arith.constant 1.000000e+00 : f32
    %213 = vector.broadcast %cst_72 : f32 to vector<2x96xf32>
    %214 = arith.addf %213, %212 : vector<2x96xf32>
    %215 = arith.divf %213, %214 : vector<2x96xf32>
    %216 = vector.extract_strided_slice %209 {offsets = [0, 96], sizes = [2, 32], strides = [1, 1]} : vector<2x128xf32> to vector<2x32xf32>
    %217 = math.tanh %216 : vector<2x32xf32>
    %218 = vector.extract_strided_slice %215 {offsets = [0, 0], sizes = [2, 32], strides = [1, 1]} : vector<2x96xf32> to vector<2x32xf32>
    %219 = vector.extract_strided_slice %215 {offsets = [0, 32], sizes = [2, 32], strides = [1, 1]} : vector<2x96xf32> to vector<2x32xf32>
    %220 = vector.extract_strided_slice %215 {offsets = [0, 64], sizes = [2, 32], strides = [1, 1]} : vector<2x96xf32> to vector<2x32xf32>
    %221 = arith.mulf %219, %187 : vector<2x32xf32>
    %222 = arith.mulf %218, %217 : vector<2x32xf32>
    %223 = arith.addf %221, %222 : vector<2x32xf32>
    %224 = math.tanh %223 : vector<2x32xf32>
    %225 = arith.mulf %220, %224 : vector<2x32xf32>
    %cst_73 = arith.constant dense<0.000000e+00> : vector<2x32xf32>
    %226 = tpu.matmul %225, %5, %cst_73 {dimension_numbers = #tpu.dot_dimension_numbers<[1], [0], [0], [1], [0, 0, 1, 1], [], []>} : vector<2x32xf32>, vector<32x32xf32>, vector<2x32xf32> -> vector<2x32xf32>
    %227 = arith.addf %226, %4 : vector<2x32xf32>
    %228 = arith.negf %227 : vector<2x32xf32>
    %229 = math.exp %228 : vector<2x32xf32>
    %cst_74 = arith.constant 1.000000e+00 : f32
    %230 = vector.broadcast %cst_74 : f32 to vector<2x32xf32>
    %231 = arith.addf %230, %229 : vector<2x32xf32>
    %232 = arith.divf %230, %231 : vector<2x32xf32>
    %cst_75 = arith.constant 1.000000e+00 : f32
    %233 = vector.broadcast %cst_75 : f32 to vector<2x32xf32>
    %234 = arith.subf %233, %232 : vector<2x32xf32>
    %235 = arith.mulf %234, %225 : vector<2x32xf32>
    %236 = arith.mulf %232, %3 : vector<2x32xf32>
    %237 = arith.addf %235, %236 : vector<2x32xf32>
    %238 = tpu.concatenate %237, %9 in 1 : vector<2x32xf32>, vector<2x96xf32> -> vector<2x128xf32>
    %c6 = arith.constant 6 : index
    %c0_76 = arith.constant 0 : index
    %c0_77 = arith.constant 0 : index
    %239 = vector.load %arg7[%c6, %c0_76, %c0_77] : memref<16x2x128xf32, #tpu.memory_space<vmem>>, vector<1x2x128xf32>
    %240 = vector.shape_cast %239 : vector<1x2x128xf32> to vector<2x128xf32>
    %241 = vector.shape_cast %238 : vector<2x128xf32> to vector<1x2x128xf32>
    tpu.vector_store %arg7[%c6, %c0_76, %c0_77], %241 {strides = array<i32>} : memref<16x2x128xf32, #tpu.memory_space<vmem>>, vector<1x2x128xf32>,
    %c6_78 = arith.constant 6 : index
    %c0_79 = arith.constant 0 : index
    %c0_80 = arith.constant 0 : index
    %242 = vector.load %arg2[%c6_78, %c0_79, %c0_80] : memref<16x2x128xf32, #tpu.memory_space<vmem>>, vector<1x2x128xf32>
    %243 = vector.shape_cast %242 : vector<1x2x128xf32> to vector<2x128xf32>
    %cst_81 = arith.constant dense<0.000000e+00> : vector<2x128xf32>
    %244 = tpu.matmul %237, %6, %cst_81 {dimension_numbers = #tpu.dot_dimension_numbers<[1], [0], [0], [1], [0, 0, 1, 1], [], []>} : vector<2x32xf32>, vector<32x128xf32>, vector<2x128xf32> -> vector<2x128xf32>
    %245 = arith.addf %243, %244 : vector<2x128xf32>
    %246 = vector.extract_strided_slice %245 {offsets = [0, 0], sizes = [2, 96], strides = [1, 1]} : vector<2x128xf32> to vector<2x96xf32>
    %247 = arith.negf %246 : vector<2x96xf32>
    %248 = math.exp %247 : vector<2x96xf32>
    %cst_82 = arith.constant 1.000000e+00 : f32
    %249 = vector.broadcast %cst_82 : f32 to vector<2x96xf32>
    %250 = arith.addf %249, %248 : vector<2x96xf32>
    %251 = arith.divf %249, %250 : vector<2x96xf32>
    %252 = vector.extract_strided_slice %245 {offsets = [0, 96], sizes = [2, 32], strides = [1, 1]} : vector<2x128xf32> to vector<2x32xf32>
    %253 = math.tanh %252 : vector<2x32xf32>
    %254 = vector.extract_strided_slice %251 {offsets = [0, 0], sizes = [2, 32], strides = [1, 1]} : vector<2x96xf32> to vector<2x32xf32>
    %255 = vector.extract_strided_slice %251 {offsets = [0, 32], sizes = [2, 32], strides = [1, 1]} : vector<2x96xf32> to vector<2x32xf32>
    %256 = vector.extract_strided_slice %251 {offsets = [0, 64], sizes = [2, 32], strides = [1, 1]} : vector<2x96xf32> to vector<2x32xf32>
    %257 = arith.mulf %255, %223 : vector<2x32xf32>
    %258 = arith.mulf %254, %253 : vector<2x32xf32>
    %259 = arith.addf %257, %258 : vector<2x32xf32>
    %260 = math.tanh %259 : vector<2x32xf32>
    %261 = arith.mulf %256, %260 : vector<2x32xf32>
    %cst_83 = arith.constant dense<0.000000e+00> : vector<2x32xf32>
    %262 = tpu.matmul %261, %5, %cst_83 {dimension_numbers = #tpu.dot_dimension_numbers<[1], [0], [0], [1], [0, 0, 1, 1], [], []>} : vector<2x32xf32>, vector<32x32xf32>, vector<2x32xf32> -> vector<2x32xf32>
    %263 = arith.addf %262, %4 : vector<2x32xf32>
    %264 = arith.negf %263 : vector<2x32xf32>
    %265 = math.exp %264 : vector<2x32xf32>
    %cst_84 = arith.constant 1.000000e+00 : f32
    %266 = vector.broadcast %cst_84 : f32 to vector<2x32xf32>
    %267 = arith.addf %266, %265 : vector<2x32xf32>
    %268 = arith.divf %266, %267 : vector<2x32xf32>
    %cst_85 = arith.constant 1.000000e+00 : f32
    %269 = vector.broadcast %cst_85 : f32 to vector<2x32xf32>
    %270 = arith.subf %269, %268 : vector<2x32xf32>
    %271 = arith.mulf %270, %261 : vector<2x32xf32>
    %272 = arith.mulf %268, %3 : vector<2x32xf32>
    %273 = arith.addf %271, %272 : vector<2x32xf32>
    %274 = tpu.concatenate %273, %9 in 1 : vector<2x32xf32>, vector<2x96xf32> -> vector<2x128xf32>
    %c7 = arith.constant 7 : index
    %c0_86 = arith.constant 0 : index
    %c0_87 = arith.constant 0 : index
    %275 = vector.load %arg7[%c7, %c0_86, %c0_87] : memref<16x2x128xf32, #tpu.memory_space<vmem>>, vector<1x2x128xf32>
    %276 = vector.shape_cast %275 : vector<1x2x128xf32> to vector<2x128xf32>
    %277 = vector.shape_cast %274 : vector<2x128xf32> to vector<1x2x128xf32>
    tpu.vector_store %arg7[%c7, %c0_86, %c0_87], %277 {strides = array<i32>} : memref<16x2x128xf32, #tpu.memory_space<vmem>>, vector<1x2x128xf32>,
    %c7_88 = arith.constant 7 : index
    %c0_89 = arith.constant 0 : index
    %c0_90 = arith.constant 0 : index
    %278 = vector.load %arg2[%c7_88, %c0_89, %c0_90] : memref<16x2x128xf32, #tpu.memory_space<vmem>>, vector<1x2x128xf32>
    %279 = vector.shape_cast %278 : vector<1x2x128xf32> to vector<2x128xf32>
    %cst_91 = arith.constant dense<0.000000e+00> : vector<2x128xf32>
    %280 = tpu.matmul %273, %6, %cst_91 {dimension_numbers = #tpu.dot_dimension_numbers<[1], [0], [0], [1], [0, 0, 1, 1], [], []>} : vector<2x32xf32>, vector<32x128xf32>, vector<2x128xf32> -> vector<2x128xf32>
    %281 = arith.addf %279, %280 : vector<2x128xf32>
    %282 = vector.extract_strided_slice %281 {offsets = [0, 0], sizes = [2, 96], strides = [1, 1]} : vector<2x128xf32> to vector<2x96xf32>
    %283 = arith.negf %282 : vector<2x96xf32>
    %284 = math.exp %283 : vector<2x96xf32>
    %cst_92 = arith.constant 1.000000e+00 : f32
    %285 = vector.broadcast %cst_92 : f32 to vector<2x96xf32>
    %286 = arith.addf %285, %284 : vector<2x96xf32>
    %287 = arith.divf %285, %286 : vector<2x96xf32>
    %288 = vector.extract_strided_slice %281 {offsets = [0, 96], sizes = [2, 32], strides = [1, 1]} : vector<2x128xf32> to vector<2x32xf32>
    %289 = math.tanh %288 : vector<2x32xf32>
    %290 = vector.extract_strided_slice %287 {offsets = [0, 0], sizes = [2, 32], strides = [1, 1]} : vector<2x96xf32> to vector<2x32xf32>
    %291 = vector.extract_strided_slice %287 {offsets = [0, 32], sizes = [2, 32], strides = [1, 1]} : vector<2x96xf32> to vector<2x32xf32>
    %292 = vector.extract_strided_slice %287 {offsets = [0, 64], sizes = [2, 32], strides = [1, 1]} : vector<2x96xf32> to vector<2x32xf32>
    %293 = arith.mulf %291, %259 : vector<2x32xf32>
    %294 = arith.mulf %290, %289 : vector<2x32xf32>
    %295 = arith.addf %293, %294 : vector<2x32xf32>
    %296 = math.tanh %295 : vector<2x32xf32>
    %297 = arith.mulf %292, %296 : vector<2x32xf32>
    %cst_93 = arith.constant dense<0.000000e+00> : vector<2x32xf32>
    %298 = tpu.matmul %297, %5, %cst_93 {dimension_numbers = #tpu.dot_dimension_numbers<[1], [0], [0], [1], [0, 0, 1, 1], [], []>} : vector<2x32xf32>, vector<32x32xf32>, vector<2x32xf32> -> vector<2x32xf32>
    %299 = arith.addf %298, %4 : vector<2x32xf32>
    %300 = arith.negf %299 : vector<2x32xf32>
    %301 = math.exp %300 : vector<2x32xf32>
    %cst_94 = arith.constant 1.000000e+00 : f32
    %302 = vector.broadcast %cst_94 : f32 to vector<2x32xf32>
    %303 = arith.addf %302, %301 : vector<2x32xf32>
    %304 = arith.divf %302, %303 : vector<2x32xf32>
    %cst_95 = arith.constant 1.000000e+00 : f32
    %305 = vector.broadcast %cst_95 : f32 to vector<2x32xf32>
    %306 = arith.subf %305, %304 : vector<2x32xf32>
    %307 = arith.mulf %306, %297 : vector<2x32xf32>
    %308 = arith.mulf %304, %3 : vector<2x32xf32>
    %309 = arith.addf %307, %308 : vector<2x32xf32>
    %310 = tpu.concatenate %309, %9 in 1 : vector<2x32xf32>, vector<2x96xf32> -> vector<2x128xf32>
    %c8 = arith.constant 8 : index
    %c0_96 = arith.constant 0 : index
    %c0_97 = arith.constant 0 : index
    %311 = vector.load %arg7[%c8, %c0_96, %c0_97] : memref<16x2x128xf32, #tpu.memory_space<vmem>>, vector<1x2x128xf32>
    %312 = vector.shape_cast %311 : vector<1x2x128xf32> to vector<2x128xf32>
    %313 = vector.shape_cast %310 : vector<2x128xf32> to vector<1x2x128xf32>
    tpu.vector_store %arg7[%c8, %c0_96, %c0_97], %313 {strides = array<i32>} : memref<16x2x128xf32, #tpu.memory_space<vmem>>, vector<1x2x128xf32>,
    %c8_98 = arith.constant 8 : index
    %c0_99 = arith.constant 0 : index
    %c0_100 = arith.constant 0 : index
    %314 = vector.load %arg2[%c8_98, %c0_99, %c0_100] : memref<16x2x128xf32, #tpu.memory_space<vmem>>, vector<1x2x128xf32>
    %315 = vector.shape_cast %314 : vector<1x2x128xf32> to vector<2x128xf32>
    %cst_101 = arith.constant dense<0.000000e+00> : vector<2x128xf32>
    %316 = tpu.matmul %309, %6, %cst_101 {dimension_numbers = #tpu.dot_dimension_numbers<[1], [0], [0], [1], [0, 0, 1, 1], [], []>} : vector<2x32xf32>, vector<32x128xf32>, vector<2x128xf32> -> vector<2x128xf32>
    %317 = arith.addf %315, %316 : vector<2x128xf32>
    %318 = vector.extract_strided_slice %317 {offsets = [0, 0], sizes = [2, 96], strides = [1, 1]} : vector<2x128xf32> to vector<2x96xf32>
    %319 = arith.negf %318 : vector<2x96xf32>
    %320 = math.exp %319 : vector<2x96xf32>
    %cst_102 = arith.constant 1.000000e+00 : f32
    %321 = vector.broadcast %cst_102 : f32 to vector<2x96xf32>
    %322 = arith.addf %321, %320 : vector<2x96xf32>
    %323 = arith.divf %321, %322 : vector<2x96xf32>
    %324 = vector.extract_strided_slice %317 {offsets = [0, 96], sizes = [2, 32], strides = [1, 1]} : vector<2x128xf32> to vector<2x32xf32>
    %325 = math.tanh %324 : vector<2x32xf32>
    %326 = vector.extract_strided_slice %323 {offsets = [0, 0], sizes = [2, 32], strides = [1, 1]} : vector<2x96xf32> to vector<2x32xf32>
    %327 = vector.extract_strided_slice %323 {offsets = [0, 32], sizes = [2, 32], strides = [1, 1]} : vector<2x96xf32> to vector<2x32xf32>
    %328 = vector.extract_strided_slice %323 {offsets = [0, 64], sizes = [2, 32], strides = [1, 1]} : vector<2x96xf32> to vector<2x32xf32>
    %329 = arith.mulf %327, %295 : vector<2x32xf32>
    %330 = arith.mulf %326, %325 : vector<2x32xf32>
    %331 = arith.addf %329, %330 : vector<2x32xf32>
    %332 = math.tanh %331 : vector<2x32xf32>
    %333 = arith.mulf %328, %332 : vector<2x32xf32>
    %cst_103 = arith.constant dense<0.000000e+00> : vector<2x32xf32>
    %334 = tpu.matmul %333, %5, %cst_103 {dimension_numbers = #tpu.dot_dimension_numbers<[1], [0], [0], [1], [0, 0, 1, 1], [], []>} : vector<2x32xf32>, vector<32x32xf32>, vector<2x32xf32> -> vector<2x32xf32>
    %335 = arith.addf %334, %4 : vector<2x32xf32>
    %336 = arith.negf %335 : vector<2x32xf32>
    %337 = math.exp %336 : vector<2x32xf32>
    %cst_104 = arith.constant 1.000000e+00 : f32
    %338 = vector.broadcast %cst_104 : f32 to vector<2x32xf32>
    %339 = arith.addf %338, %337 : vector<2x32xf32>
    %340 = arith.divf %338, %339 : vector<2x32xf32>
    %cst_105 = arith.constant 1.000000e+00 : f32
    %341 = vector.broadcast %cst_105 : f32 to vector<2x32xf32>
    %342 = arith.subf %341, %340 : vector<2x32xf32>
    %343 = arith.mulf %342, %333 : vector<2x32xf32>
    %344 = arith.mulf %340, %3 : vector<2x32xf32>
    %345 = arith.addf %343, %344 : vector<2x32xf32>
    %346 = tpu.concatenate %345, %9 in 1 : vector<2x32xf32>, vector<2x96xf32> -> vector<2x128xf32>
    %c9 = arith.constant 9 : index
    %c0_106 = arith.constant 0 : index
    %c0_107 = arith.constant 0 : index
    %347 = vector.load %arg7[%c9, %c0_106, %c0_107] : memref<16x2x128xf32, #tpu.memory_space<vmem>>, vector<1x2x128xf32>
    %348 = vector.shape_cast %347 : vector<1x2x128xf32> to vector<2x128xf32>
    %349 = vector.shape_cast %346 : vector<2x128xf32> to vector<1x2x128xf32>
    tpu.vector_store %arg7[%c9, %c0_106, %c0_107], %349 {strides = array<i32>} : memref<16x2x128xf32, #tpu.memory_space<vmem>>, vector<1x2x128xf32>,
    %c9_108 = arith.constant 9 : index
    %c0_109 = arith.constant 0 : index
    %c0_110 = arith.constant 0 : index
    %350 = vector.load %arg2[%c9_108, %c0_109, %c0_110] : memref<16x2x128xf32, #tpu.memory_space<vmem>>, vector<1x2x128xf32>
    %351 = vector.shape_cast %350 : vector<1x2x128xf32> to vector<2x128xf32>
    %cst_111 = arith.constant dense<0.000000e+00> : vector<2x128xf32>
    %352 = tpu.matmul %345, %6, %cst_111 {dimension_numbers = #tpu.dot_dimension_numbers<[1], [0], [0], [1], [0, 0, 1, 1], [], []>} : vector<2x32xf32>, vector<32x128xf32>, vector<2x128xf32> -> vector<2x128xf32>
    %353 = arith.addf %351, %352 : vector<2x128xf32>
    %354 = vector.extract_strided_slice %353 {offsets = [0, 0], sizes = [2, 96], strides = [1, 1]} : vector<2x128xf32> to vector<2x96xf32>
    %355 = arith.negf %354 : vector<2x96xf32>
    %356 = math.exp %355 : vector<2x96xf32>
    %cst_112 = arith.constant 1.000000e+00 : f32
    %357 = vector.broadcast %cst_112 : f32 to vector<2x96xf32>
    %358 = arith.addf %357, %356 : vector<2x96xf32>
    %359 = arith.divf %357, %358 : vector<2x96xf32>
    %360 = vector.extract_strided_slice %353 {offsets = [0, 96], sizes = [2, 32], strides = [1, 1]} : vector<2x128xf32> to vector<2x32xf32>
    %361 = math.tanh %360 : vector<2x32xf32>
    %362 = vector.extract_strided_slice %359 {offsets = [0, 0], sizes = [2, 32], strides = [1, 1]} : vector<2x96xf32> to vector<2x32xf32>
    %363 = vector.extract_strided_slice %359 {offsets = [0, 32], sizes = [2, 32], strides = [1, 1]} : vector<2x96xf32> to vector<2x32xf32>
    %364 = vector.extract_strided_slice %359 {offsets = [0, 64], sizes = [2, 32], strides = [1, 1]} : vector<2x96xf32> to vector<2x32xf32>
    %365 = arith.mulf %363, %331 : vector<2x32xf32>
    %366 = arith.mulf %362, %361 : vector<2x32xf32>
    %367 = arith.addf %365, %366 : vector<2x32xf32>
    %368 = math.tanh %367 : vector<2x32xf32>
    %369 = arith.mulf %364, %368 : vector<2x32xf32>
    %cst_113 = arith.constant dense<0.000000e+00> : vector<2x32xf32>
    %370 = tpu.matmul %369, %5, %cst_113 {dimension_numbers = #tpu.dot_dimension_numbers<[1], [0], [0], [1], [0, 0, 1, 1], [], []>} : vector<2x32xf32>, vector<32x32xf32>, vector<2x32xf32> -> vector<2x32xf32>
    %371 = arith.addf %370, %4 : vector<2x32xf32>
    %372 = arith.negf %371 : vector<2x32xf32>
    %373 = math.exp %372 : vector<2x32xf32>
    %cst_114 = arith.constant 1.000000e+00 : f32
    %374 = vector.broadcast %cst_114 : f32 to vector<2x32xf32>
    %375 = arith.addf %374, %373 : vector<2x32xf32>
    %376 = arith.divf %374, %375 : vector<2x32xf32>
    %cst_115 = arith.constant 1.000000e+00 : f32
    %377 = vector.broadcast %cst_115 : f32 to vector<2x32xf32>
    %378 = arith.subf %377, %376 : vector<2x32xf32>
    %379 = arith.mulf %378, %369 : vector<2x32xf32>
    %380 = arith.mulf %376, %3 : vector<2x32xf32>
    %381 = arith.addf %379, %380 : vector<2x32xf32>
    %382 = tpu.concatenate %381, %9 in 1 : vector<2x32xf32>, vector<2x96xf32> -> vector<2x128xf32>
    %c10 = arith.constant 10 : index
    %c0_116 = arith.constant 0 : index
    %c0_117 = arith.constant 0 : index
    %383 = vector.load %arg7[%c10, %c0_116, %c0_117] : memref<16x2x128xf32, #tpu.memory_space<vmem>>, vector<1x2x128xf32>
    %384 = vector.shape_cast %383 : vector<1x2x128xf32> to vector<2x128xf32>
    %385 = vector.shape_cast %382 : vector<2x128xf32> to vector<1x2x128xf32>
    tpu.vector_store %arg7[%c10, %c0_116, %c0_117], %385 {strides = array<i32>} : memref<16x2x128xf32, #tpu.memory_space<vmem>>, vector<1x2x128xf32>,
    %c10_118 = arith.constant 10 : index
    %c0_119 = arith.constant 0 : index
    %c0_120 = arith.constant 0 : index
    %386 = vector.load %arg2[%c10_118, %c0_119, %c0_120] : memref<16x2x128xf32, #tpu.memory_space<vmem>>, vector<1x2x128xf32>
    %387 = vector.shape_cast %386 : vector<1x2x128xf32> to vector<2x128xf32>
    %cst_121 = arith.constant dense<0.000000e+00> : vector<2x128xf32>
    %388 = tpu.matmul %381, %6, %cst_121 {dimension_numbers = #tpu.dot_dimension_numbers<[1], [0], [0], [1], [0, 0, 1, 1], [], []>} : vector<2x32xf32>, vector<32x128xf32>, vector<2x128xf32> -> vector<2x128xf32>
    %389 = arith.addf %387, %388 : vector<2x128xf32>
    %390 = vector.extract_strided_slice %389 {offsets = [0, 0], sizes = [2, 96], strides = [1, 1]} : vector<2x128xf32> to vector<2x96xf32>
    %391 = arith.negf %390 : vector<2x96xf32>
    %392 = math.exp %391 : vector<2x96xf32>
    %cst_122 = arith.constant 1.000000e+00 : f32
    %393 = vector.broadcast %cst_122 : f32 to vector<2x96xf32>
    %394 = arith.addf %393, %392 : vector<2x96xf32>
    %395 = arith.divf %393, %394 : vector<2x96xf32>
    %396 = vector.extract_strided_slice %389 {offsets = [0, 96], sizes = [2, 32], strides = [1, 1]} : vector<2x128xf32> to vector<2x32xf32>
    %397 = math.tanh %396 : vector<2x32xf32>
    %398 = vector.extract_strided_slice %395 {offsets = [0, 0], sizes = [2, 32], strides = [1, 1]} : vector<2x96xf32> to vector<2x32xf32>
    %399 = vector.extract_strided_slice %395 {offsets = [0, 32], sizes = [2, 32], strides = [1, 1]} : vector<2x96xf32> to vector<2x32xf32>
    %400 = vector.extract_strided_slice %395 {offsets = [0, 64], sizes = [2, 32], strides = [1, 1]} : vector<2x96xf32> to vector<2x32xf32>
    %401 = arith.mulf %399, %367 : vector<2x32xf32>
    %402 = arith.mulf %398, %397 : vector<2x32xf32>
    %403 = arith.addf %401, %402 : vector<2x32xf32>
    %404 = math.tanh %403 : vector<2x32xf32>
    %405 = arith.mulf %400, %404 : vector<2x32xf32>
    %cst_123 = arith.constant dense<0.000000e+00> : vector<2x32xf32>
    %406 = tpu.matmul %405, %5, %cst_123 {dimension_numbers = #tpu.dot_dimension_numbers<[1], [0], [0], [1], [0, 0, 1, 1], [], []>} : vector<2x32xf32>, vector<32x32xf32>, vector<2x32xf32> -> vector<2x32xf32>
    %407 = arith.addf %406, %4 : vector<2x32xf32>
    %408 = arith.negf %407 : vector<2x32xf32>
    %409 = math.exp %408 : vector<2x32xf32>
    %cst_124 = arith.constant 1.000000e+00 : f32
    %410 = vector.broadcast %cst_124 : f32 to vector<2x32xf32>
    %411 = arith.addf %410, %409 : vector<2x32xf32>
    %412 = arith.divf %410, %411 : vector<2x32xf32>
    %cst_125 = arith.constant 1.000000e+00 : f32
    %413 = vector.broadcast %cst_125 : f32 to vector<2x32xf32>
    %414 = arith.subf %413, %412 : vector<2x32xf32>
    %415 = arith.mulf %414, %405 : vector<2x32xf32>
    %416 = arith.mulf %412, %3 : vector<2x32xf32>
    %417 = arith.addf %415, %416 : vector<2x32xf32>
    %418 = tpu.concatenate %417, %9 in 1 : vector<2x32xf32>, vector<2x96xf32> -> vector<2x128xf32>
    %c11 = arith.constant 11 : index
    %c0_126 = arith.constant 0 : index
    %c0_127 = arith.constant 0 : index
    %419 = vector.load %arg7[%c11, %c0_126, %c0_127] : memref<16x2x128xf32, #tpu.memory_space<vmem>>, vector<1x2x128xf32>
    %420 = vector.shape_cast %419 : vector<1x2x128xf32> to vector<2x128xf32>
    %421 = vector.shape_cast %418 : vector<2x128xf32> to vector<1x2x128xf32>
    tpu.vector_store %arg7[%c11, %c0_126, %c0_127], %421 {strides = array<i32>} : memref<16x2x128xf32, #tpu.memory_space<vmem>>, vector<1x2x128xf32>,
    %c11_128 = arith.constant 11 : index
    %c0_129 = arith.constant 0 : index
    %c0_130 = arith.constant 0 : index
    %422 = vector.load %arg2[%c11_128, %c0_129, %c0_130] : memref<16x2x128xf32, #tpu.memory_space<vmem>>, vector<1x2x128xf32>
    %423 = vector.shape_cast %422 : vector<1x2x128xf32> to vector<2x128xf32>
    %cst_131 = arith.constant dense<0.000000e+00> : vector<2x128xf32>
    %424 = tpu.matmul %417, %6, %cst_131 {dimension_numbers = #tpu.dot_dimension_numbers<[1], [0], [0], [1], [0, 0, 1, 1], [], []>} : vector<2x32xf32>, vector<32x128xf32>, vector<2x128xf32> -> vector<2x128xf32>
    %425 = arith.addf %423, %424 : vector<2x128xf32>
    %426 = vector.extract_strided_slice %425 {offsets = [0, 0], sizes = [2, 96], strides = [1, 1]} : vector<2x128xf32> to vector<2x96xf32>
    %427 = arith.negf %426 : vector<2x96xf32>
    %428 = math.exp %427 : vector<2x96xf32>
    %cst_132 = arith.constant 1.000000e+00 : f32
    %429 = vector.broadcast %cst_132 : f32 to vector<2x96xf32>
    %430 = arith.addf %429, %428 : vector<2x96xf32>
    %431 = arith.divf %429, %430 : vector<2x96xf32>
    %432 = vector.extract_strided_slice %425 {offsets = [0, 96], sizes = [2, 32], strides = [1, 1]} : vector<2x128xf32> to vector<2x32xf32>
    %433 = math.tanh %432 : vector<2x32xf32>
    %434 = vector.extract_strided_slice %431 {offsets = [0, 0], sizes = [2, 32], strides = [1, 1]} : vector<2x96xf32> to vector<2x32xf32>
    %435 = vector.extract_strided_slice %431 {offsets = [0, 32], sizes = [2, 32], strides = [1, 1]} : vector<2x96xf32> to vector<2x32xf32>
    %436 = vector.extract_strided_slice %431 {offsets = [0, 64], sizes = [2, 32], strides = [1, 1]} : vector<2x96xf32> to vector<2x32xf32>
    %437 = arith.mulf %435, %403 : vector<2x32xf32>
    %438 = arith.mulf %434, %433 : vector<2x32xf32>
    %439 = arith.addf %437, %438 : vector<2x32xf32>
    %440 = math.tanh %439 : vector<2x32xf32>
    %441 = arith.mulf %436, %440 : vector<2x32xf32>
    %cst_133 = arith.constant dense<0.000000e+00> : vector<2x32xf32>
    %442 = tpu.matmul %441, %5, %cst_133 {dimension_numbers = #tpu.dot_dimension_numbers<[1], [0], [0], [1], [0, 0, 1, 1], [], []>} : vector<2x32xf32>, vector<32x32xf32>, vector<2x32xf32> -> vector<2x32xf32>
    %443 = arith.addf %442, %4 : vector<2x32xf32>
    %444 = arith.negf %443 : vector<2x32xf32>
    %445 = math.exp %444 : vector<2x32xf32>
    %cst_134 = arith.constant 1.000000e+00 : f32
    %446 = vector.broadcast %cst_134 : f32 to vector<2x32xf32>
    %447 = arith.addf %446, %445 : vector<2x32xf32>
    %448 = arith.divf %446, %447 : vector<2x32xf32>
    %cst_135 = arith.constant 1.000000e+00 : f32
    %449 = vector.broadcast %cst_135 : f32 to vector<2x32xf32>
    %450 = arith.subf %449, %448 : vector<2x32xf32>
    %451 = arith.mulf %450, %441 : vector<2x32xf32>
    %452 = arith.mulf %448, %3 : vector<2x32xf32>
    %453 = arith.addf %451, %452 : vector<2x32xf32>
    %454 = tpu.concatenate %453, %9 in 1 : vector<2x32xf32>, vector<2x96xf32> -> vector<2x128xf32>
    %c12 = arith.constant 12 : index
    %c0_136 = arith.constant 0 : index
    %c0_137 = arith.constant 0 : index
    %455 = vector.load %arg7[%c12, %c0_136, %c0_137] : memref<16x2x128xf32, #tpu.memory_space<vmem>>, vector<1x2x128xf32>
    %456 = vector.shape_cast %455 : vector<1x2x128xf32> to vector<2x128xf32>
    %457 = vector.shape_cast %454 : vector<2x128xf32> to vector<1x2x128xf32>
    tpu.vector_store %arg7[%c12, %c0_136, %c0_137], %457 {strides = array<i32>} : memref<16x2x128xf32, #tpu.memory_space<vmem>>, vector<1x2x128xf32>,
    %c12_138 = arith.constant 12 : index
    %c0_139 = arith.constant 0 : index
    %c0_140 = arith.constant 0 : index
    %458 = vector.load %arg2[%c12_138, %c0_139, %c0_140] : memref<16x2x128xf32, #tpu.memory_space<vmem>>, vector<1x2x128xf32>
    %459 = vector.shape_cast %458 : vector<1x2x128xf32> to vector<2x128xf32>
    %cst_141 = arith.constant dense<0.000000e+00> : vector<2x128xf32>
    %460 = tpu.matmul %453, %6, %cst_141 {dimension_numbers = #tpu.dot_dimension_numbers<[1], [0], [0], [1], [0, 0, 1, 1], [], []>} : vector<2x32xf32>, vector<32x128xf32>, vector<2x128xf32> -> vector<2x128xf32>
    %461 = arith.addf %459, %460 : vector<2x128xf32>
    %462 = vector.extract_strided_slice %461 {offsets = [0, 0], sizes = [2, 96], strides = [1, 1]} : vector<2x128xf32> to vector<2x96xf32>
    %463 = arith.negf %462 : vector<2x96xf32>
    %464 = math.exp %463 : vector<2x96xf32>
    %cst_142 = arith.constant 1.000000e+00 : f32
    %465 = vector.broadcast %cst_142 : f32 to vector<2x96xf32>
    %466 = arith.addf %465, %464 : vector<2x96xf32>
    %467 = arith.divf %465, %466 : vector<2x96xf32>
    %468 = vector.extract_strided_slice %461 {offsets = [0, 96], sizes = [2, 32], strides = [1, 1]} : vector<2x128xf32> to vector<2x32xf32>
    %469 = math.tanh %468 : vector<2x32xf32>
    %470 = vector.extract_strided_slice %467 {offsets = [0, 0], sizes = [2, 32], strides = [1, 1]} : vector<2x96xf32> to vector<2x32xf32>
    %471 = vector.extract_strided_slice %467 {offsets = [0, 32], sizes = [2, 32], strides = [1, 1]} : vector<2x96xf32> to vector<2x32xf32>
    %472 = vector.extract_strided_slice %467 {offsets = [0, 64], sizes = [2, 32], strides = [1, 1]} : vector<2x96xf32> to vector<2x32xf32>
    %473 = arith.mulf %471, %439 : vector<2x32xf32>
    %474 = arith.mulf %470, %469 : vector<2x32xf32>
    %475 = arith.addf %473, %474 : vector<2x32xf32>
    %476 = math.tanh %475 : vector<2x32xf32>
    %477 = arith.mulf %472, %476 : vector<2x32xf32>
    %cst_143 = arith.constant dense<0.000000e+00> : vector<2x32xf32>
    %478 = tpu.matmul %477, %5, %cst_143 {dimension_numbers = #tpu.dot_dimension_numbers<[1], [0], [0], [1], [0, 0, 1, 1], [], []>} : vector<2x32xf32>, vector<32x32xf32>, vector<2x32xf32> -> vector<2x32xf32>
    %479 = arith.addf %478, %4 : vector<2x32xf32>
    %480 = arith.negf %479 : vector<2x32xf32>
    %481 = math.exp %480 : vector<2x32xf32>
    %cst_144 = arith.constant 1.000000e+00 : f32
    %482 = vector.broadcast %cst_144 : f32 to vector<2x32xf32>
    %483 = arith.addf %482, %481 : vector<2x32xf32>
    %484 = arith.divf %482, %483 : vector<2x32xf32>
    %cst_145 = arith.constant 1.000000e+00 : f32
    %485 = vector.broadcast %cst_145 : f32 to vector<2x32xf32>
    %486 = arith.subf %485, %484 : vector<2x32xf32>
    %487 = arith.mulf %486, %477 : vector<2x32xf32>
    %488 = arith.mulf %484, %3 : vector<2x32xf32>
    %489 = arith.addf %487, %488 : vector<2x32xf32>
    %490 = tpu.concatenate %489, %9 in 1 : vector<2x32xf32>, vector<2x96xf32> -> vector<2x128xf32>
    %c13 = arith.constant 13 : index
    %c0_146 = arith.constant 0 : index
    %c0_147 = arith.constant 0 : index
    %491 = vector.load %arg7[%c13, %c0_146, %c0_147] : memref<16x2x128xf32, #tpu.memory_space<vmem>>, vector<1x2x128xf32>
    %492 = vector.shape_cast %491 : vector<1x2x128xf32> to vector<2x128xf32>
    %493 = vector.shape_cast %490 : vector<2x128xf32> to vector<1x2x128xf32>
    tpu.vector_store %arg7[%c13, %c0_146, %c0_147], %493 {strides = array<i32>} : memref<16x2x128xf32, #tpu.memory_space<vmem>>, vector<1x2x128xf32>,
    %c13_148 = arith.constant 13 : index
    %c0_149 = arith.constant 0 : index
    %c0_150 = arith.constant 0 : index
    %494 = vector.load %arg2[%c13_148, %c0_149, %c0_150] : memref<16x2x128xf32, #tpu.memory_space<vmem>>, vector<1x2x128xf32>
    %495 = vector.shape_cast %494 : vector<1x2x128xf32> to vector<2x128xf32>
    %cst_151 = arith.constant dense<0.000000e+00> : vector<2x128xf32>
    %496 = tpu.matmul %489, %6, %cst_151 {dimension_numbers = #tpu.dot_dimension_numbers<[1], [0], [0], [1], [0, 0, 1, 1], [], []>} : vector<2x32xf32>, vector<32x128xf32>, vector<2x128xf32> -> vector<2x128xf32>
    %497 = arith.addf %495, %496 : vector<2x128xf32>
    %498 = vector.extract_strided_slice %497 {offsets = [0, 0], sizes = [2, 96], strides = [1, 1]} : vector<2x128xf32> to vector<2x96xf32>
    %499 = arith.negf %498 : vector<2x96xf32>
    %500 = math.exp %499 : vector<2x96xf32>
    %cst_152 = arith.constant 1.000000e+00 : f32
    %501 = vector.broadcast %cst_152 : f32 to vector<2x96xf32>
    %502 = arith.addf %501, %500 : vector<2x96xf32>
    %503 = arith.divf %501, %502 : vector<2x96xf32>
    %504 = vector.extract_strided_slice %497 {offsets = [0, 96], sizes = [2, 32], strides = [1, 1]} : vector<2x128xf32> to vector<2x32xf32>
    %505 = math.tanh %504 : vector<2x32xf32>
    %506 = vector.extract_strided_slice %503 {offsets = [0, 0], sizes = [2, 32], strides = [1, 1]} : vector<2x96xf32> to vector<2x32xf32>
    %507 = vector.extract_strided_slice %503 {offsets = [0, 32], sizes = [2, 32], strides = [1, 1]} : vector<2x96xf32> to vector<2x32xf32>
    %508 = vector.extract_strided_slice %503 {offsets = [0, 64], sizes = [2, 32], strides = [1, 1]} : vector<2x96xf32> to vector<2x32xf32>
    %509 = arith.mulf %507, %475 : vector<2x32xf32>
    %510 = arith.mulf %506, %505 : vector<2x32xf32>
    %511 = arith.addf %509, %510 : vector<2x32xf32>
    %512 = math.tanh %511 : vector<2x32xf32>
    %513 = arith.mulf %508, %512 : vector<2x32xf32>
    %cst_153 = arith.constant dense<0.000000e+00> : vector<2x32xf32>
    %514 = tpu.matmul %513, %5, %cst_153 {dimension_numbers = #tpu.dot_dimension_numbers<[1], [0], [0], [1], [0, 0, 1, 1], [], []>} : vector<2x32xf32>, vector<32x32xf32>, vector<2x32xf32> -> vector<2x32xf32>
    %515 = arith.addf %514, %4 : vector<2x32xf32>
    %516 = arith.negf %515 : vector<2x32xf32>
    %517 = math.exp %516 : vector<2x32xf32>
    %cst_154 = arith.constant 1.000000e+00 : f32
    %518 = vector.broadcast %cst_154 : f32 to vector<2x32xf32>
    %519 = arith.addf %518, %517 : vector<2x32xf32>
    %520 = arith.divf %518, %519 : vector<2x32xf32>
    %cst_155 = arith.constant 1.000000e+00 : f32
    %521 = vector.broadcast %cst_155 : f32 to vector<2x32xf32>
    %522 = arith.subf %521, %520 : vector<2x32xf32>
    %523 = arith.mulf %522, %513 : vector<2x32xf32>
    %524 = arith.mulf %520, %3 : vector<2x32xf32>
    %525 = arith.addf %523, %524 : vector<2x32xf32>
    %526 = tpu.concatenate %525, %9 in 1 : vector<2x32xf32>, vector<2x96xf32> -> vector<2x128xf32>
    %c14 = arith.constant 14 : index
    %c0_156 = arith.constant 0 : index
    %c0_157 = arith.constant 0 : index
    %527 = vector.load %arg7[%c14, %c0_156, %c0_157] : memref<16x2x128xf32, #tpu.memory_space<vmem>>, vector<1x2x128xf32>
    %528 = vector.shape_cast %527 : vector<1x2x128xf32> to vector<2x128xf32>
    %529 = vector.shape_cast %526 : vector<2x128xf32> to vector<1x2x128xf32>
    tpu.vector_store %arg7[%c14, %c0_156, %c0_157], %529 {strides = array<i32>} : memref<16x2x128xf32, #tpu.memory_space<vmem>>, vector<1x2x128xf32>,
    %c14_158 = arith.constant 14 : index
    %c0_159 = arith.constant 0 : index
    %c0_160 = arith.constant 0 : index
    %530 = vector.load %arg2[%c14_158, %c0_159, %c0_160] : memref<16x2x128xf32, #tpu.memory_space<vmem>>, vector<1x2x128xf32>
    %531 = vector.shape_cast %530 : vector<1x2x128xf32> to vector<2x128xf32>
    %cst_161 = arith.constant dense<0.000000e+00> : vector<2x128xf32>
    %532 = tpu.matmul %525, %6, %cst_161 {dimension_numbers = #tpu.dot_dimension_numbers<[1], [0], [0], [1], [0, 0, 1, 1], [], []>} : vector<2x32xf32>, vector<32x128xf32>, vector<2x128xf32> -> vector<2x128xf32>
    %533 = arith.addf %531, %532 : vector<2x128xf32>
    %534 = vector.extract_strided_slice %533 {offsets = [0, 0], sizes = [2, 96], strides = [1, 1]} : vector<2x128xf32> to vector<2x96xf32>
    %535 = arith.negf %534 : vector<2x96xf32>
    %536 = math.exp %535 : vector<2x96xf32>
    %cst_162 = arith.constant 1.000000e+00 : f32
    %537 = vector.broadcast %cst_162 : f32 to vector<2x96xf32>
    %538 = arith.addf %537, %536 : vector<2x96xf32>
    %539 = arith.divf %537, %538 : vector<2x96xf32>
    %540 = vector.extract_strided_slice %533 {offsets = [0, 96], sizes = [2, 32], strides = [1, 1]} : vector<2x128xf32> to vector<2x32xf32>
    %541 = math.tanh %540 : vector<2x32xf32>
    %542 = vector.extract_strided_slice %539 {offsets = [0, 0], sizes = [2, 32], strides = [1, 1]} : vector<2x96xf32> to vector<2x32xf32>
    %543 = vector.extract_strided_slice %539 {offsets = [0, 32], sizes = [2, 32], strides = [1, 1]} : vector<2x96xf32> to vector<2x32xf32>
    %544 = vector.extract_strided_slice %539 {offsets = [0, 64], sizes = [2, 32], strides = [1, 1]} : vector<2x96xf32> to vector<2x32xf32>
    %545 = arith.mulf %543, %511 : vector<2x32xf32>
    %546 = arith.mulf %542, %541 : vector<2x32xf32>
    %547 = arith.addf %545, %546 : vector<2x32xf32>
    %548 = math.tanh %547 : vector<2x32xf32>
    %549 = arith.mulf %544, %548 : vector<2x32xf32>
    %cst_163 = arith.constant dense<0.000000e+00> : vector<2x32xf32>
    %550 = tpu.matmul %549, %5, %cst_163 {dimension_numbers = #tpu.dot_dimension_numbers<[1], [0], [0], [1], [0, 0, 1, 1], [], []>} : vector<2x32xf32>, vector<32x32xf32>, vector<2x32xf32> -> vector<2x32xf32>
    %551 = arith.addf %550, %4 : vector<2x32xf32>
    %552 = arith.negf %551 : vector<2x32xf32>
    %553 = math.exp %552 : vector<2x32xf32>
    %cst_164 = arith.constant 1.000000e+00 : f32
    %554 = vector.broadcast %cst_164 : f32 to vector<2x32xf32>
    %555 = arith.addf %554, %553 : vector<2x32xf32>
    %556 = arith.divf %554, %555 : vector<2x32xf32>
    %cst_165 = arith.constant 1.000000e+00 : f32
    %557 = vector.broadcast %cst_165 : f32 to vector<2x32xf32>
    %558 = arith.subf %557, %556 : vector<2x32xf32>
    %559 = arith.mulf %558, %549 : vector<2x32xf32>
    %560 = arith.mulf %556, %3 : vector<2x32xf32>
    %561 = arith.addf %559, %560 : vector<2x32xf32>
    %562 = tpu.concatenate %561, %9 in 1 : vector<2x32xf32>, vector<2x96xf32> -> vector<2x128xf32>
    %c15 = arith.constant 15 : index
    %c0_166 = arith.constant 0 : index
    %c0_167 = arith.constant 0 : index
    %563 = vector.load %arg7[%c15, %c0_166, %c0_167] : memref<16x2x128xf32, #tpu.memory_space<vmem>>, vector<1x2x128xf32>
    %564 = vector.shape_cast %563 : vector<1x2x128xf32> to vector<2x128xf32>
    %565 = vector.shape_cast %562 : vector<2x128xf32> to vector<1x2x128xf32>
    tpu.vector_store %arg7[%c15, %c0_166, %c0_167], %565 {strides = array<i32>} : memref<16x2x128xf32, #tpu.memory_space<vmem>>, vector<1x2x128xf32>,
    %c15_168 = arith.constant 15 : index
    %c0_169 = arith.constant 0 : index
    %c0_170 = arith.constant 0 : index
    %566 = vector.load %arg2[%c15_168, %c0_169, %c0_170] : memref<16x2x128xf32, #tpu.memory_space<vmem>>, vector<1x2x128xf32>
    %567 = vector.shape_cast %566 : vector<1x2x128xf32> to vector<2x128xf32>
    %cst_171 = arith.constant dense<0.000000e+00> : vector<2x128xf32>
    %568 = tpu.matmul %561, %6, %cst_171 {dimension_numbers = #tpu.dot_dimension_numbers<[1], [0], [0], [1], [0, 0, 1, 1], [], []>} : vector<2x32xf32>, vector<32x128xf32>, vector<2x128xf32> -> vector<2x128xf32>
    %569 = arith.addf %567, %568 : vector<2x128xf32>
    %570 = vector.extract_strided_slice %569 {offsets = [0, 0], sizes = [2, 96], strides = [1, 1]} : vector<2x128xf32> to vector<2x96xf32>
    %571 = arith.negf %570 : vector<2x96xf32>
    %572 = math.exp %571 : vector<2x96xf32>
    %cst_172 = arith.constant 1.000000e+00 : f32
    %573 = vector.broadcast %cst_172 : f32 to vector<2x96xf32>
    %574 = arith.addf %573, %572 : vector<2x96xf32>
    %575 = arith.divf %573, %574 : vector<2x96xf32>
    %576 = vector.extract_strided_slice %569 {offsets = [0, 96], sizes = [2, 32], strides = [1, 1]} : vector<2x128xf32> to vector<2x32xf32>
    %577 = math.tanh %576 : vector<2x32xf32>
    %578 = vector.extract_strided_slice %575 {offsets = [0, 0], sizes = [2, 32], strides = [1, 1]} : vector<2x96xf32> to vector<2x32xf32>
    %579 = vector.extract_strided_slice %575 {offsets = [0, 32], sizes = [2, 32], strides = [1, 1]} : vector<2x96xf32> to vector<2x32xf32>
    %580 = vector.extract_strided_slice %575 {offsets = [0, 64], sizes = [2, 32], strides = [1, 1]} : vector<2x96xf32> to vector<2x32xf32>
    %581 = arith.mulf %579, %547 : vector<2x32xf32>
    %582 = arith.mulf %578, %577 : vector<2x32xf32>
    %583 = arith.addf %581, %582 : vector<2x32xf32>
    %584 = math.tanh %583 : vector<2x32xf32>
    %585 = arith.mulf %580, %584 : vector<2x32xf32>
    %c0_173 = arith.constant 0 : index
    %c0_174 = arith.constant 0 : index
    %586 = vector.load %arg8[%c0_173, %c0_174] : memref<2x32xf32, #tpu.memory_space<vmem>>, vector<2x32xf32>
    tpu.vector_store %arg8[%c0_173, %c0_174], %585 {strides = array<i32>} : memref<2x32xf32, #tpu.memory_space<vmem>>, vector<2x32xf32>,
    %c0_175 = arith.constant 0 : index
    %c0_176 = arith.constant 0 : index
    %587 = vector.load %arg9[%c0_175, %c0_176] : memref<2x32xf32, #tpu.memory_space<vmem>>, vector<2x32xf32>
    tpu.vector_store %arg9[%c0_175, %c0_176], %583 {strides = array<i32>} : memref<2x32xf32, #tpu.memory_space<vmem>>, vector<2x32xf32>,
    return
  }
  func.func @transform_0(%arg0: i32, %arg1: i32) -> (i32, i32, i32) {
    %c0_i32 = arith.constant 0 : i32
    %c0_i32_0 = arith.constant 0 : i32
    return %arg1, %arg0, %c0_i32 : i32, i32, i32
  }
  func.func @transform_1(%arg0: i32, %arg1: i32) -> (i32, i32) {
    %c0_i32 = arith.constant 0 : i32
    %c0_i32_0 = arith.constant 0 : i32
    return %arg0, %c0_i32 : i32, i32
  }
  func.func @transform_2(%arg0: i32, %arg1: i32) -> (i32, i32) {
    %c0_i32 = arith.constant 0 : i32
    %c0_i32_0 = arith.constant 0 : i32
    return %arg0, %c0_i32 : i32, i32
  }
  func.func @transform_3(%arg0: i32, %arg1: i32) -> (i32, i32) {
    %c0_i32 = arith.constant 0 : i32
    %c0_i32_0 = arith.constant 0 : i32
    %c0_i32_1 = arith.constant 0 : i32
    return %c0_i32, %c0_i32_0 : i32, i32
  }
  func.func @transform_4(%arg0: i32, %arg1: i32) -> (i32, i32) {
    %c0_i32 = arith.constant 0 : i32
    %c0_i32_0 = arith.constant 0 : i32
    %c0_i32_1 = arith.constant 0 : i32
    return %c0_i32, %c0_i32_0 : i32, i32
  }
  func.func @transform_5(%arg0: i32, %arg1: i32) -> (i32, i32, i32) {
    %c0_i32 = arith.constant 0 : i32
    %c0_i32_0 = arith.constant 0 : i32
    return %arg1, %arg0, %c0_i32 : i32, i32, i32
  }
}

</mosaic_0001>

<llo_original>
// kernel: tpu_custom_call.1
$region0: #{tpu_custom_call.1}
  #allocation0 [shape = 'u32[]', space=smem, size = 0x4, offset = 0x4, fixed_abs, tag = 'smem constant byte address 0x4 - core index']
  #allocation1 [shape = 'u32[144,128]{1,0:T(1,128)}', space=vmem, size = 0x12000, scoped, tag = 'internal scratch']
  #allocation2 [shape = 'f32[2,32]{1,0:T(2,128)}', space=vmem, size = 0x400, scoped, tag = 'scratch operand']
  #allocation3 [shape = 'f32[2,32]{1,0:T(2,128)}', space=vmem, size = 0x400, scoped, tag = 'scratch operand']
  %s0 = inlined_call_operand.hbm [shape: f32[16,2,128], index: 0, kind: input, shape index: {}]
  %s1 = inlined_call_operand.hbm [shape: f32[2,32], index: 1, kind: input, shape index: {}]
  %s2 = inlined_call_operand.vmem [shape: f32[2,32], index: 2, kind: input, shape index: {}]
  %s3 = inlined_call_operand.hbm [shape: f32[32,32], index: 3, kind: input, shape index: {}]
  %s4 = inlined_call_operand.hbm [shape: f32[32,128], index: 4, kind: input, shape index: {}]
  %s5 = inlined_call_operand.hbm [shape: f32[16,2,128], index: 5, kind: output, shape index: {}]
  %s6 = sld [smem:[#allocation0]]
  $region50: #{tpu_custom_call.1} parent=0
    _
  %s8 = ssub.s32 1, %s6
  %s9 = scalar_select 0, %s8, %s6
  $region1: #{tpu_custom_call.1} parent=0
    #allocation4 [shape = 'u8[16384]{0}', space=vmem, size = 0x4000, scoped, tag = 'input window, operand 0, single buffered']
    #allocation5 [shape = 's32[1]{0}', space=sflag, size = 0x4, scoped, tag = 'scoped memory for tpu_custom_call.1']
    #allocation6 [shape = 's32[1]{0}', space=sflag, size = 0x4, scoped, tag = 'scoped memory for tpu_custom_call.1']
    #allocation7 [shape = 'u8[1024]{0}', space=vmem, size = 0x400, scoped, tag = 'input window, operand 1, single buffered']
    #allocation8 [shape = 's32[1]{0}', space=sflag, size = 0x4, scoped, tag = 'scoped memory for tpu_custom_call.1']
    #allocation9 [shape = 'u8[16384]{0}', space=vmem, size = 0x4000, scoped, tag = 'input window, operand 3, single buffered']
    #allocation10 [shape = 'u8[16384]{0}', space=vmem, size = 0x4000, scoped, tag = 'input window, operand 4, single buffered']
    #allocation11 [shape = 's32[1]{0}', space=sflag, size = 0x4, scoped, tag = 'scoped memory for tpu_custom_call.1']
    #allocation12 [shape = 'u8[16384]{0}', space=vmem, size = 0x4000, scoped, tag = 'output window, operand 0, single buffered']
    %10 = vsyncpa [#allocation5], 0
    %11 = vsyncpa [#allocation8], 0
    %12 = vsyncpa [#allocation11], 0
    %13 = vsyncpa [#allocation6], 0
    // Predicated region
    $region2: #{tpu_custom_call.1} parent=1 // pred_check
      _
    $region3: #{tpu_custom_call.1} parent=1 // pred_check_branch
      %15 = sbr.rel (0) target = $region5
    $region4: #{tpu_custom_call.1} parent=1 // pred_region
      %s17 = ssub.s32 512, 512
      %18 = vsyncadd [#allocation5], %s17
      %s19 = sshll.u32 [#allocation4], 4
      %s20 = int_to_ptr.vmem [resolvable:$true] %s19
      %25 = dma.hbm_to_vmem [thread:$0]  %s0, 512, %s20, [#allocation5], 32, 32, 2
    $region5: #{tpu_custom_call.1} parent=1 // pred_fallthru
      _
    // Predicated region
    $region6: #{tpu_custom_call.1} parent=1 // pred_check
      _
    $region7: #{tpu_custom_call.1} parent=1 // pred_check_branch
      %27 = sbr.rel (0) target = $region9
    $region8: #{tpu_custom_call.1} parent=1 // pred_region
      %s29 = ssub.s32 32, 32
      %30 = vsyncadd [#allocation8], %s29
      %s32 = sshll.u32 [#allocation7], 4
      %s33 = int_to_ptr.vmem [resolvable:$true] %s32
      %35 = dma.hbm_to_vmem [thread:$0]  %s1, 32, %s33, [#allocation8]
    $region9: #{tpu_custom_call.1} parent=1 // pred_fallthru
      _
    // Predicated region
    $region10: #{tpu_custom_call.1} parent=1 // pred_check
      _
    $region11: #{tpu_custom_call.1} parent=1 // pred_check_branch
      %37 = sbr.rel (0) target = $region13
    $region12: #{tpu_custom_call.1} parent=1 // pred_region
      _
    $region13: #{tpu_custom_call.1} parent=1 // pred_fallthru
      _
    // Predicated region
    $region14: #{tpu_custom_call.1} parent=1 // pred_check
      _
    $region15: #{tpu_custom_call.1} parent=1 // pred_check_branch
      %39 = sbr.rel (0) target = $region17
    $region16: #{tpu_custom_call.1} parent=1 // pred_region
      %s41 = ssub.s32 512, 512
      %42 = vsyncadd [#allocation8], %s41
      %s43 = sshll.u32 [#allocation9], 4
      %s44 = int_to_ptr.vmem [resolvable:$true] %s43
      %49 = dma.hbm_to_vmem [thread:$0]  %s3, 512, %s44, [#allocation8], 128, 128, 8
    $region17: #{tpu_custom_call.1} parent=1 // pred_fallthru
      _
    // Predicated region
    $region18: #{tpu_custom_call.1} parent=1 // pred_check
      _
    $region19: #{tpu_custom_call.1} parent=1 // pred_check_branch
      %51 = sbr.rel (0) target = $region21
    $region20: #{tpu_custom_call.1} parent=1 // pred_region
      %s53 = ssub.s32 512, 512
      %54 = vsyncadd [#allocation11], %s53
      %s55 = sshll.u32 [#allocation10], 4
      %s56 = int_to_ptr.vmem [resolvable:$true] %s55
      %61 = dma.hbm_to_vmem [thread:$0]  %s4, 512, %s56, [#allocation11], 128, 128, 8
    $region21: #{tpu_custom_call.1} parent=1 // pred_fallthru
      _
    // Predicated region
    $region22: #{tpu_custom_call.1} parent=1 // pred_check
      _
    $region23: #{tpu_custom_call.1} parent=1 // pred_check_branch
      %63 = sbr.rel (0) target = $region25
    $region24: #{tpu_custom_call.1} parent=1 // pred_region
      %64 = dma.done [#allocation5], 512
    $region25: #{tpu_custom_call.1} parent=1 // pred_fallthru
      _
    // Predicated region
    $region26: #{tpu_custom_call.1} parent=1 // pred_check
      _
    $region27: #{tpu_custom_call.1} parent=1 // pred_check_branch
      %66 = sbr.rel (0) target = $region29
    $region28: #{tpu_custom_call.1} parent=1 // pred_region
      %67 = dma.done [#allocation8], 32
    $region29: #{tpu_custom_call.1} parent=1 // pred_fallthru
      _
    // Predicated region
    $region30: #{tpu_custom_call.1} parent=1 // pred_check
      _
    $region31: #{tpu_custom_call.1} parent=1 // pred_check_branch
      %69 = sbr.rel (0) target = $region33
    $region32: #{tpu_custom_call.1} parent=1 // pred_region
      %70 = dma.done [#allocation8], 512
    $region33: #{tpu_custom_call.1} parent=1 // pred_fallthru
      _
    // Predicated region
    $region34: #{tpu_custom_call.1} parent=1 // pred_check
      _
    $region35: #{tpu_custom_call.1} parent=1 // pred_check_branch
      %72 = sbr.rel (0) target = $region37
    $region36: #{tpu_custom_call.1} parent=1 // pred_region
      %73 = dma.done [#allocation11], 512
    $region37: #{tpu_custom_call.1} parent=1 // pred_fallthru
      _
    %p74 = scmp.eq.s32.totalorder 0, 0
    // Predicated region
    $region38: #{tpu_custom_call.1} parent=1 // pred_check
      %p75 = pneg %p74
    $region39: #{tpu_custom_call.1} parent=1 // pred_check_branch
      %77 = sbr.rel (%p75) target = $region41
    $region40: #{tpu_custom_call.1} parent=1 // pred_region
      %vm78 = vcmask 254976
      %79 = vst.msk [vmem:[#allocation2] sm:$0x3] %vm78, 0.0
      %80 = vst.msk [vmem:[#allocation3] sm:$0x3] %vm78, 0.0
    $region41: #{tpu_custom_call.1} parent=1 // pred_fallthru
      _
    %v81 = vld [vmem:[#allocation7] sm:$0x3]
    %v82 = vld [vmem:[%s2] sm:$0x3]
    %v83 = vld [vmem:[#allocation9] sm:$0xff]
    %v84 = vld [vmem:[#allocation9 + $0x8] sm:$0xff]
    %v85 = vld [vmem:[#allocation9 + $0x10] sm:$0xff]
    %v86 = vld [vmem:[#allocation9 + $0x18] sm:$0xff]
    %v87 = vld [vmem:[#allocation10] sm:$0xff]
    %v88 = vld [vmem:[#allocation10 + $0x8] sm:$0xff]
    %v89 = vld [vmem:[#allocation10 + $0x10] sm:$0xff]
    %v90 = vld [vmem:[#allocation10 + $0x18] sm:$0xff]
    %v91 = vld [vmem:[#allocation2] sm:$0x3]
    %v92 = vld [vmem:[#allocation3] sm:$0x3]
    %vm93 = vcmask 261120
    %v95 = vsel %vm93, %v91, 0
    %97 = vmatprep.subr.mxu0 0.0
    %98 = vmatpush1.msra.mxu0 0.0
    %99 = vmatprep.subr.mxu0 0.0
    %100 = vmatpush1.msra.mxu0 0.0
    %101 = vmatprep.subr.mxu0 0.0
    %102 = vmatpush1.msra.mxu0 0.0
    %103 = vmatprep.subr.mxu0 0.0
    %104 = vmatpush1.msra.mxu0 0.0
    %105 = vmatprep.subr.mxu0 0.0
    %106 = vmatpush1.msra.mxu0 0.0
    %107 = vmatprep.subr.mxu0 0.0
    %108 = vmatpush1.msra.mxu0 0.0
    %109 = vmatprep.subr.mxu0 0.0
    %110 = vmatpush1.msra.mxu0 0.0
    %111 = vmatprep.subr.mxu0 0.0
    %112 = vmatpush1.msra.mxu0 0.0
    %113 = vmatprep.subr.mxu0 0.0
    %114 = vmatpush1.msra.mxu0 0.0
    %115 = vmatprep.subr.mxu0 0.0
    %116 = vmatpush1.msra.mxu0 0.0
    %117 = vmatprep.subr.mxu0 0.0
    %118 = vmatpush1.msra.mxu0 0.0
    %119 = vmatprep.subr.mxu0 0.0
    %120 = vmatpush1.msra.mxu0 0.0
    %121 = vmatprep.subr.mxu0 0.0
    %122 = vmatpush1.msra.mxu0 %v86
    %123 = vmatprep.subr.mxu0 0.0
    %124 = vmatpush1.msra.mxu0 %v85
    %125 = vmatprep.subr.mxu0 0.0
    %126 = vmatpush1.msra.mxu0 %v84
    %127 = vmatprep.subr.mxu0 0.0
    %128 = vmatpush1.msra.mxu0 %v83
    %129 = vmatprep.subr.mxu0 0.0
    %130 = vmatpush2.msra.mxu0 0.0
    %131 = vmatprep.subr.mxu0 0.0
    %132 = vmatpush2.msra.mxu0 0.0
    %133 = vmatprep.subr.mxu0 0.0
    %134 = vmatpush2.msra.mxu0 0.0
    %135 = vmatprep.subr.mxu0 0.0
    %136 = vmatpush2.msra.mxu0 0.0
    %137 = vmatprep.subr.mxu0 0.0
    %138 = vmatpush2.msra.mxu0 0.0
    %139 = vmatprep.subr.mxu0 0.0
    %140 = vmatpush2.msra.mxu0 0.0
    %141 = vmatprep.subr.mxu0 0.0
    %142 = vmatpush2.msra.mxu0 0.0
    %143 = vmatprep.subr.mxu0 0.0
    %144 = vmatpush2.msra.mxu0 0.0
    %145 = vmatprep.subr.mxu0 0.0
    %146 = vmatpush2.msra.mxu0 0.0
    %147 = vmatprep.subr.mxu0 0.0
    %148 = vmatpush2.msra.mxu0 0.0
    %149 = vmatprep.subr.mxu0 0.0
    %150 = vmatpush2.msra.mxu0 0.0
    %151 = vmatprep.subr.mxu0 0.0
    %152 = vmatpush2.msra.mxu0 0.0
    %153 = vmatprep.subr.mxu0 0.0
    %154 = vmatpush2.msra.mxu0 0.0
    %155 = vmatprep.subr.mxu0 0.0
    %156 = vmatpush2.msra.mxu0 0.0
    %157 = vmatprep.subr.mxu0 0.0
    %158 = vmatpush2.msra.mxu0 0.0
    %159 = vmatprep.subr.mxu0 0.0
    %160 = vmatpush2.msra.mxu0 0.0
    %161 = vmatprep.mubr.f32.mxu0 0.0
    %162 = vmatmul.mubr.f32.gmra.mxu0 %v95
    %v163 = vpop.f32.mrf.mxu0
    %v164 = vadd.f32 %v82, %v163
    %v165 = vpop.f32.mrf.mxu0
    %166 = vdwg.mxu0
    %v167 = vxor.u32 %v164, 2147483648
    %v168 = vmul.f32 %v167, 1.442695
    %v169 = vpow.pop %v168
    %v170 = vadd.f32 %v169, 1.0
    %v171 = vrcp.pop %v170
    %v172 = vmul.f32 1.0, %v171
    %v173 = vsub.f32 1.0, %v172
    %v174 = vmul.f32 %v173, %v91
    %v175 = vmul.f32 %v172, %v81
    %v176 = vadd.f32 %v174, %v175
    %v177 = vsel %vm93, %v176, 0.0
    %178 = vst [vmem:[#allocation12] sm:$0x3] %v177
    %v179 = vld [vmem:[#allocation4] sm:$0x3]
    %v181 = vsel %vm93, %v176, 0
    %183 = vmatprep.subr.mxu0 0.0
    %184 = vmatpush1.msra.mxu0 0.0
    %185 = vmatprep.subr.mxu0 0.0
    %186 = vmatpush1.msra.mxu0 0.0
    %187 = vmatprep.subr.mxu0 0.0
    %188 = vmatpush1.msra.mxu0 0.0
    %189 = vmatprep.subr.mxu0 0.0
    %190 = vmatpush1.msra.mxu0 0.0
    %191 = vmatprep.subr.mxu0 0.0
    %192 = vmatpush1.msra.mxu0 0.0
    %193 = vmatprep.subr.mxu0 0.0
    %194 = vmatpush1.msra.mxu0 0.0
    %195 = vmatprep.subr.mxu0 0.0
    %196 = vmatpush1.msra.mxu0 0.0
    %197 = vmatprep.subr.mxu0 0.0
    %198 = vmatpush1.msra.mxu0 0.0
    %199 = vmatprep.subr.mxu0 0.0
    %200 = vmatpush1.msra.mxu0 0.0
    %201 = vmatprep.subr.mxu0 0.0
    %202 = vmatpush1.msra.mxu0 0.0
    %203 = vmatprep.subr.mxu0 0.0
    %204 = vmatpush1.msra.mxu0 0.0
    %205 = vmatprep.subr.mxu0 0.0
    %206 = vmatpush1.msra.mxu0 0.0
    %207 = vmatprep.subr.mxu0 0.0
    %208 = vmatpush1.msra.mxu0 %v90
    %209 = vmatprep.subr.mxu0 0.0
    %210 = vmatpush1.msra.mxu0 %v89
    %211 = vmatprep.subr.mxu0 0.0
    %212 = vmatpush1.msra.mxu0 %v88
    %213 = vmatprep.subr.mxu0 0.0
    %214 = vmatpush1.msra.mxu0 %v87
    %215 = vmatprep.subr.mxu0 0.0
    %216 = vmatpush2.msra.mxu0 0.0
    %217 = vmatprep.subr.mxu0 0.0
    %218 = vmatpush2.msra.mxu0 0.0
    %219 = vmatprep.subr.mxu0 0.0
    %220 = vmatpush2.msra.mxu0 0.0
    %221 = vmatprep.subr.mxu0 0.0
    %222 = vmatpush2.msra.mxu0 0.0
    %223 = vmatprep.subr.mxu0 0.0
    %224 = vmatpush2.msra.mxu0 0.0
    %225 = vmatprep.subr.mxu0 0.0
    %226 = vmatpush2.msra.mxu0 0.0
    %227 = vmatprep.subr.mxu0 0.0
    %228 = vmatpush2.msra.mxu0 0.0
    %229 = vmatprep.subr.mxu0 0.0
    %230 = vmatpush2.msra.mxu0 0.0
    %231 = vmatprep.subr.mxu0 0.0
    %232 = vmatpush2.msra.mxu0 0.0
    %233 = vmatprep.subr.mxu0 0.0
    %234 = vmatpush2.msra.mxu0 0.0
    %235 = vmatprep.subr.mxu0 0.0
    %236 = vmatpush2.msra.mxu0 0.0
    %237 = vmatprep.subr.mxu0 0.0
    %238 = vmatpush2.msra.mxu0 0.0
    %239 = vmatprep.subr.mxu0 0.0
    %240 = vmatpush2.msra.mxu0 0.0
    %241 = vmatprep.subr.mxu0 0.0
    %242 = vmatpush2.msra.mxu0 0.0
    %243 = vmatprep.subr.mxu0 0.0
    %244 = vmatpush2.msra.mxu0 0.0
    %245 = vmatprep.subr.mxu0 0.0
    %246 = vmatpush2.msra.mxu0 0.0
    %247 = vmatprep.mubr.f32.mxu0 0.0
    %248 = vmatmul.mubr.f32.gmra.mxu0 %v181
    %v249 = vpop.f32.mrf.mxu0
    %v250 = vadd.f32 0.0, %v249
    %v251 = vpop.f32.mrf.mxu0
    %252 = vdwg.mxu0
    %v253 = vadd.f32 %v179, %v250
    %v254 = vxor.u32 %v253, 2147483648
    %v255 = vmul.f32 %v254, 1.442695
    %v256 = vpow.pop %v255
    %v257 = vadd.f32 %v256, 1.0
    %v258 = vrcp.pop %v257
    %v259 = vmul.f32 1.0, %v258
    %v260 = vtanh.pop %v253
    %262 = vrot.lane.b32.xlu0 %v92, 32
    %v263 = vpop.permute.xlu0 %262
    %v265 = vmul.f32 %v259, %v263
    %267 = vrot.lane.b32.xlu0 %v260, 32
    %v268 = vpop.permute.xlu0 %267
    %v270 = vmul.f32 %v259, %v268
    %272 = vrot.lane.b32.xlu0 %v270, 32
    %v273 = vpop.permute.xlu0 %272
    %v275 = vadd.f32 %v265, %v273
    %v276 = vtanh.pop %v275
    %278 = vrot.lane.b32.xlu0 %v276, 32
    %v279 = vpop.permute.xlu0 %278
    %v281 = vmul.f32 %v259, %v279
    %283 = vrot.lane.b32.xlu0 %v281, 64
    %v284 = vpop.permute.xlu0 %283
    %v285 = vsel %vm93, %v284, 0
    %287 = vmatprep.subr.mxu0 0.0
    %288 = vmatpush1.msra.mxu0 0.0
    %289 = vmatprep.subr.mxu0 0.0
    %290 = vmatpush1.msra.mxu0 0.0
    %291 = vmatprep.subr.mxu0 0.0
    %292 = vmatpush1.msra.mxu0 0.0
    %293 = vmatprep.subr.mxu0 0.0
    %294 = vmatpush1.msra.mxu0 0.0
    %295 = vmatprep.subr.mxu0 0.0
    %296 = vmatpush1.msra.mxu0 0.0
    %297 = vmatprep.subr.mxu0 0.0
    %298 = vmatpush1.msra.mxu0 0.0
    %299 = vmatprep.subr.mxu0 0.0
    %300 = vmatpush1.msra.mxu0 0.0
    %301 = vmatprep.subr.mxu0 0.0
    %302 = vmatpush1.msra.mxu0 0.0
    %303 = vmatprep.subr.mxu0 0.0
    %304 = vmatpush1.msra.mxu0 0.0
    %305 = vmatprep.subr.mxu0 0.0
    %306 = vmatpush1.msra.mxu0 0.0
    %307 = vmatprep.subr.mxu0 0.0
    %308 = vmatpush1.msra.mxu0 0.0
    %309 = vmatprep.subr.mxu0 0.0
    %310 = vmatpush1.msra.mxu0 0.0
    %311 = vmatprep.subr.mxu0 0.0
    %312 = vmatpush1.msra.mxu0 %v86
    %313 = vmatprep.subr.mxu0 0.0
    %314 = vmatpush1.msra.mxu0 %v85
    %315 = vmatprep.subr.mxu0 0.0
    %316 = vmatpush1.msra.mxu0 %v84
    %317 = vmatprep.subr.mxu0 0.0
    %318 = vmatpush1.msra.mxu0 %v83
    %319 = vmatprep.subr.mxu0 0.0
    %320 = vmatpush2.msra.mxu0 0.0
    %321 = vmatprep.subr.mxu0 0.0
    %322 = vmatpush2.msra.mxu0 0.0
    %323 = vmatprep.subr.mxu0 0.0
    %324 = vmatpush2.msra.mxu0 0.0
    %325 = vmatprep.subr.mxu0 0.0
    %326 = vmatpush2.msra.mxu0 0.0
    %327 = vmatprep.subr.mxu0 0.0
    %328 = vmatpush2.msra.mxu0 0.0
    %329 = vmatprep.subr.mxu0 0.0
    %330 = vmatpush2.msra.mxu0 0.0
    %331 = vmatprep.subr.mxu0 0.0
    %332 = vmatpush2.msra.mxu0 0.0
    %333 = vmatprep.subr.mxu0 0.0
    %334 = vmatpush2.msra.mxu0 0.0
    %335 = vmatprep.subr.mxu0 0.0
    %336 = vmatpush2.msra.mxu0 0.0
    %337 = vmatprep.subr.mxu0 0.0
    %338 = vmatpush2.msra.mxu0 0.0
    %339 = vmatprep.subr.mxu0 0.0
    %340 = vmatpush2.msra.mxu0 0.0
    %341 = vmatprep.subr.mxu0 0.0
    %342 = vmatpush2.msra.mxu0 0.0
    %343 = vmatprep.subr.mxu0 0.0
    %344 = vmatpush2.msra.mxu0 0.0
    %345 = vmatprep.subr.mxu0 0.0
    %346 = vmatpush2.msra.mxu0 0.0
    %347 = vmatprep.subr.mxu0 0.0
    %348 = vmatpush2.msra.mxu0 0.0
    %349 = vmatprep.subr.mxu0 0.0
    %350 = vmatpush2.msra.mxu0 0.0
    %351 = vmatprep.mubr.f32.mxu0 0.0
    %352 = vmatmul.mubr.f32.gmra.mxu0 %v285
    %v353 = vpop.f32.mrf.mxu0
    %v354 = vadd.f32 %v82, %v353
    %v355 = vpop.f32.mrf.mxu0
    %356 = vdwg.mxu0
    %v357 = vxor.u32 %v354, 2147483648
    %v358 = vmul.f32 %v357, 1.442695
    %v359 = vpow.pop %v358
    %v360 = vadd.f32 %v359, 1.0
    %v361 = vrcp.pop %v360
    %v362 = vmul.f32 1.0, %v361
    %v363 = vsub.f32 1.0, %v362
    %v365 = vmul.f32 %v363, %v284
    %v366 = vmul.f32 %v362, %v81
    %v367 = vadd.f32 %v365, %v366
    %v368 = vsel %vm93, %v367, 0.0
    %s369 = scalar_lea.vmem [#allocation12], 2
    %370 = vst [vmem:[%s369] sm:$0x3] %v368
    %s371 = scalar_lea.vmem [#allocation4], 2
    %v372 = vld [vmem:[%s371] sm:$0x3]
    %v374 = vsel %vm93, %v367, 0
    %376 = vmatprep.subr.mxu0 0.0
    %377 = vmatpush1.msra.mxu0 0.0
    %378 = vmatprep.subr.mxu0 0.0
    %379 = vmatpush1.msra.mxu0 0.0
    %380 = vmatprep.subr.mxu0 0.0
    %381 = vmatpush1.msra.mxu0 0.0
    %382 = vmatprep.subr.mxu0 0.0
    %383 = vmatpush1.msra.mxu0 0.0
    %384 = vmatprep.subr.mxu0 0.0
    %385 = vmatpush1.msra.mxu0 0.0
    %386 = vmatprep.subr.mxu0 0.0
    %387 = vmatpush1.msra.mxu0 0.0
    %388 = vmatprep.subr.mxu0 0.0
    %389 = vmatpush1.msra.mxu0 0.0
    %390 = vmatprep.subr.mxu0 0.0
    %391 = vmatpush1.msra.mxu0 0.0
    %392 = vmatprep.subr.mxu0 0.0
    %393 = vmatpush1.msra.mxu0 0.0
    %394 = vmatprep.subr.mxu0 0.0
    %395 = vmatpush1.msra.mxu0 0.0
    %396 = vmatprep.subr.mxu0 0.0
    %397 = vmatpush1.msra.mxu0 0.0
    %398 = vmatprep.subr.mxu0 0.0
    %399 = vmatpush1.msra.mxu0 0.0
    %400 = vmatprep.subr.mxu0 0.0
    %401 = vmatpush1.msra.mxu0 %v90
    %402 = vmatprep.subr.mxu0 0.0
    %403 = vmatpush1.msra.mxu0 %v89
    %404 = vmatprep.subr.mxu0 0.0
    %405 = vmatpush1.msra.mxu0 %v88
    %406 = vmatprep.subr.mxu0 0.0
    %407 = vmatpush1.msra.mxu0 %v87
    %408 = vmatprep.subr.mxu0 0.0
    %409 = vmatpush2.msra.mxu0 0.0
    %410 = vmatprep.subr.mxu0 0.0
    %411 = vmatpush2.msra.mxu0 0.0
    %412 = vmatprep.subr.mxu0 0.0
    %413 = vmatpush2.msra.mxu0 0.0
    %414 = vmatprep.subr.mxu0 0.0
    %415 = vmatpush2.msra.mxu0 0.0
    %416 = vmatprep.subr.mxu0 0.0
    %417 = vmatpush2.msra.mxu0 0.0
    %418 = vmatprep.subr.mxu0 0.0
    %419 = vmatpush2.msra.mxu0 0.0
    %420 = vmatprep.subr.mxu0 0.0
    %421 = vmatpush2.msra.mxu0 0.0
    %422 = vmatprep.subr.mxu0 0.0
    %423 = vmatpush2.msra.mxu0 0.0
    %424 = vmatprep.subr.mxu0 0.0
    %425 = vmatpush2.msra.mxu0 0.0
    %426 = vmatprep.subr.mxu0 0.0
    %427 = vmatpush2.msra.mxu0 0.0
    %428 = vmatprep.subr.mxu0 0.0
    %429 = vmatpush2.msra.mxu0 0.0
    %430 = vmatprep.subr.mxu0 0.0
    %431 = vmatpush2.msra.mxu0 0.0
    %432 = vmatprep.subr.mxu0 0.0
    %433 = vmatpush2.msra.mxu0 0.0
    %434 = vmatprep.subr.mxu0 0.0
    %435 = vmatpush2.msra.mxu0 0.0
    %436 = vmatprep.subr.mxu0 0.0
    %437 = vmatpush2.msra.mxu0 0.0
    %438 = vmatprep.subr.mxu0 0.0
    %439 = vmatpush2.msra.mxu0 0.0
    %440 = vmatprep.mubr.f32.mxu0 0.0
    %441 = vmatmul.mubr.f32.gmra.mxu0 %v374
    %v442 = vpop.f32.mrf.mxu0
    %v443 = vadd.f32 0.0, %v442
    %v444 = vpop.f32.mrf.mxu0
    %445 = vdwg.mxu0
    %v446 = vadd.f32 %v372, %v443
    %v447 = vxor.u32 %v446, 2147483648
    %v448 = vmul.f32 %v447, 1.442695
    %v449 = vpow.pop %v448
    %v450 = vadd.f32 %v449, 1.0
    %v451 = vrcp.pop %v450
    %v452 = vmul.f32 1.0, %v451
    %v453 = vtanh.pop %v446
    %v454 = vmul.f32 %v452, %v275
    %456 = vrot.lane.b32.xlu0 %v453, 32
    %v457 = vpop.permute.xlu0 %456
    %v459 = vmul.f32 %v452, %v457
    %461 = vrot.lane.b32.xlu0 %v459, 32
    %v462 = vpop.permute.xlu0 %461
    %v464 = vadd.f32 %v454, %v462
    %v465 = vtanh.pop %v464
    %467 = vrot.lane.b32.xlu0 %v465, 32
    %v468 = vpop.permute.xlu0 %467
    %v470 = vmul.f32 %v452, %v468
    %472 = vrot.lane.b32.xlu0 %v470, 64
    %v473 = vpop.permute.xlu0 %472
    %v474 = vsel %vm93, %v473, 0
    %476 = vmatprep.subr.mxu0 0.0
    %477 = vmatpush1.msra.mxu0 0.0
    %478 = vmatprep.subr.mxu0 0.0
    %479 = vmatpush1.msra.mxu0 0.0
    %480 = vmatprep.subr.mxu0 0.0
    %481 = vmatpush1.msra.mxu0 0.0
    %482 = vmatprep.subr.mxu0 0.0
    %483 = vmatpush1.msra.mxu0 0.0
    %484 = vmatprep.subr.mxu0 0.0
    %485 = vmatpush1.msra.mxu0 0.0
    %486 = vmatprep.subr.mxu0 0.0
    %487 = vmatpush1.msra.mxu0 0.0
    %488 = vmatprep.subr.mxu0 0.0
    %489 = vmatpush1.msra.mxu0 0.0
    %490 = vmatprep.subr.mxu0 0.0
    %491 = vmatpush1.msra.mxu0 0.0
    %492 = vmatprep.subr.mxu0 0.0
    %493 = vmatpush1.msra.mxu0 0.0
    %494 = vmatprep.subr.mxu0 0.0
    %495 = vmatpush1.msra.mxu0 0.0
    %496 = vmatprep.subr.mxu0 0.0
    %497 = vmatpush1.msra.mxu0 0.0
    %498 = vmatprep.subr.mxu0 0.0
    %499 = vmatpush1.msra.mxu0 0.0
    %500 = vmatprep.subr.mxu0 0.0
    %501 = vmatpush1.msra.mxu0 %v86
    %502 = vmatprep.subr.mxu0 0.0
    %503 = vmatpush1.msra.mxu0 %v85
    %504 = vmatprep.subr.mxu0 0.0
    %505 = vmatpush1.msra.mxu0 %v84
    %506 = vmatprep.subr.mxu0 0.0
    %507 = vmatpush1.msra.mxu0 %v83
    %508 = vmatprep.subr.mxu0 0.0
    %509 = vmatpush2.msra.mxu0 0.0
    %510 = vmatprep.subr.mxu0 0.0
    %511 = vmatpush2.msra.mxu0 0.0
    %512 = vmatprep.subr.mxu0 0.0
    %513 = vmatpush2.msra.mxu0 0.0
    %514 = vmatprep.subr.mxu0 0.0
    %515 = vmatpush2.msra.mxu0 0.0
    %516 = vmatprep.subr.mxu0 0.0
    %517 = vmatpush2.msra.mxu0 0.0
    %518 = vmatprep.subr.mxu0 0.0
    %519 = vmatpush2.msra.mxu0 0.0
    %520 = vmatprep.subr.mxu0 0.0
    %521 = vmatpush2.msra.mxu0 0.0
    %522 = vmatprep.subr.mxu0 0.0
    %523 = vmatpush2.msra.mxu0 0.0
    %524 = vmatprep.subr.mxu0 0.0
    %525 = vmatpush2.msra.mxu0 0.0
    %526 = vmatprep.subr.mxu0 0.0
    %527 = vmatpush2.msra.mxu0 0.0
    %528 = vmatprep.subr.mxu0 0.0
    %529 = vmatpush2.msra.mxu0 0.0
    %530 = vmatprep.subr.mxu0 0.0
    %531 = vmatpush2.msra.mxu0 0.0
    %532 = vmatprep.subr.mxu0 0.0
    %533 = vmatpush2.msra.mxu0 0.0
    %534 = vmatprep.subr.mxu0 0.0
    %535 = vmatpush2.msra.mxu0 0.0
    %536 = vmatprep.subr.mxu0 0.0
    %537 = vmatpush2.msra.mxu0 0.0
    %538 = vmatprep.subr.mxu0 0.0
    %539 = vmatpush2.msra.mxu0 0.0
    %540 = vmatprep.mubr.f32.mxu0 0.0
    %541 = vmatmul.mubr.f32.gmra.mxu0 %v474
    %v542 = vpop.f32.mrf.mxu0
    %v543 = vadd.f32 %v82, %v542
    %v544 = vpop.f32.mrf.mxu0
    %545 = vdwg.mxu0
    %v546 = vxor.u32 %v543, 2147483648
    %v547 = vmul.f32 %v546, 1.442695
    %v548 = vpow.pop %v547
    %v549 = vadd.f32 %v548, 1.0
    %v550 = vrcp.pop %v549
    %v551 = vmul.f32 1.0, %v550
    %v552 = vsub.f32 1.0, %v551
    %v554 = vmul.f32 %v552, %v473
    %v555 = vmul.f32 %v551, %v81
    %v556 = vadd.f32 %v554, %v555
    %v557 = vsel %vm93, %v556, 0.0
    %s558 = scalar_lea.vmem [#allocation12], 4
    %559 = vst [vmem:[%s558] sm:$0x3] %v557
    %s560 = scalar_lea.vmem [#allocation4], 4
    %v561 = vld [vmem:[%s560] sm:$0x3]
    %v563 = vsel %vm93, %v556, 0
    %565 = vmatprep.subr.mxu0 0.0
    %566 = vmatpush1.msra.mxu0 0.0
    %567 = vmatprep.subr.mxu0 0.0
    %568 = vmatpush1.msra.mxu0 0.0
    %569 = vmatprep.subr.mxu0 0.0
    %570 = vmatpush1.msra.mxu0 0.0
    %571 = vmatprep.subr.mxu0 0.0
    %572 = vmatpush1.msra.mxu0 0.0
    %573 = vmatprep.subr.mxu0 0.0
    %574 = vmatpush1.msra.mxu0 0.0
    %575 = vmatprep.subr.mxu0 0.0
    %576 = vmatpush1.msra.mxu0 0.0
    %577 = vmatprep.subr.mxu0 0.0
    %578 = vmatpush1.msra.mxu0 0.0
    %579 = vmatprep.subr.mxu0 0.0
    %580 = vmatpush1.msra.mxu0 0.0
    %581 = vmatprep.subr.mxu0 0.0
    %582 = vmatpush1.msra.mxu0 0.0
    %583 = vmatprep.subr.mxu0 0.0
    %584 = vmatpush1.msra.mxu0 0.0
    %585 = vmatprep.subr.mxu0 0.0
    %586 = vmatpush1.msra.mxu0 0.0
    %587 = vmatprep.subr.mxu0 0.0
    %588 = vmatpush1.msra.mxu0 0.0
    %589 = vmatprep.subr.mxu0 0.0
    %590 = vmatpush1.msra.mxu0 %v90
    %591 = vmatprep.subr.mxu0 0.0
    %592 = vmatpush1.msra.mxu0 %v89
    %593 = vmatprep.subr.mxu0 0.0
    %594 = vmatpush1.msra.mxu0 %v88
    %595 = vmatprep.subr.mxu0 0.0
    %596 = vmatpush1.msra.mxu0 %v87
    %597 = vmatprep.subr.mxu0 0.0
    %598 = vmatpush2.msra.mxu0 0.0
    %599 = vmatprep.subr.mxu0 0.0
    %600 = vmatpush2.msra.mxu0 0.0
    %601 = vmatprep.subr.mxu0 0.0
    %602 = vmatpush2.msra.mxu0 0.0
    %603 = vmatprep.subr.mxu0 0.0
    %604 = vmatpush2.msra.mxu0 0.0
    %605 = vmatprep.subr.mxu0 0.0
    %606 = vmatpush2.msra.mxu0 0.0
    %607 = vmatprep.subr.mxu0 0.0
    %608 = vmatpush2.msra.mxu0 0.0
    %609 = vmatprep.subr.mxu0 0.0
    %610 = vmatpush2.msra.mxu0 0.0
    %611 = vmatprep.subr.mxu0 0.0
    %612 = vmatpush2.msra.mxu0 0.0
    %613 = vmatprep.subr.mxu0 0.0
    %614 = vmatpush2.msra.mxu0 0.0
    %615 = vmatprep.subr.mxu0 0.0
    %616 = vmatpush2.msra.mxu0 0.0
    %617 = vmatprep.subr.mxu0 0.0
    %618 = vmatpush2.msra.mxu0 0.0
    %619 = vmatprep.subr.mxu0 0.0
    %620 = vmatpush2.msra.mxu0 0.0
    %621 = vmatprep.subr.mxu0 0.0
    %622 = vmatpush2.msra.mxu0 0.0
    %623 = vmatprep.subr.mxu0 0.0
    %624 = vmatpush2.msra.mxu0 0.0
    %625 = vmatprep.subr.mxu0 0.0
    %626 = vmatpush2.msra.mxu0 0.0
    %627 = vmatprep.subr.mxu0 0.0
    %628 = vmatpush2.msra.mxu0 0.0
    %629 = vmatprep.mubr.f32.mxu0 0.0
    %630 = vmatmul.mubr.f32.gmra.mxu0 %v563
    %v631 = vpop.f32.mrf.mxu0
    %v632 = vadd.f32 0.0, %v631
    %v633 = vpop.f32.mrf.mxu0
    %634 = vdwg.mxu0
    %v635 = vadd.f32 %v561, %v632
    %v636 = vxor.u32 %v635, 2147483648
    %v637 = vmul.f32 %v636, 1.442695
    %v638 = vpow.pop %v637
    %v639 = vadd.f32 %v638, 1.0
    %v640 = vrcp.pop %v639
    %v641 = vmul.f32 1.0, %v640
    %v642 = vtanh.pop %v635
    %v643 = vmul.f32 %v641, %v464
    %645 = vrot.lane.b32.xlu0 %v642, 32
    %v646 = vpop.permute.xlu0 %645
    %v648 = vmul.f32 %v641, %v646
    %650 = vrot.lane.b32.xlu0 %v648, 32
    %v651 = vpop.permute.xlu0 %650
    %v653 = vadd.f32 %v643, %v651
    %v654 = vtanh.pop %v653
    %656 = vrot.lane.b32.xlu0 %v654, 32
    %v657 = vpop.permute.xlu0 %656
    %v659 = vmul.f32 %v641, %v657
    %661 = vrot.lane.b32.xlu0 %v659, 64
    %v662 = vpop.permute.xlu0 %661
    %v663 = vsel %vm93, %v662, 0
    %665 = vmatprep.subr.mxu0 0.0
    %666 = vmatpush1.msra.mxu0 0.0
    %667 = vmatprep.subr.mxu0 0.0
    %668 = vmatpush1.msra.mxu0 0.0
    %669 = vmatprep.subr.mxu0 0.0
    %670 = vmatpush1.msra.mxu0 0.0
    %671 = vmatprep.subr.mxu0 0.0
    %672 = vmatpush1.msra.mxu0 0.0
    %673 = vmatprep.subr.mxu0 0.0
    %674 = vmatpush1.msra.mxu0 0.0
    %675 = vmatprep.subr.mxu0 0.0
    %676 = vmatpush1.msra.mxu0 0.0
    %677 = vmatprep.subr.mxu0 0.0
    %678 = vmatpush1.msra.mxu0 0.0
    %679 = vmatprep.subr.mxu0 0.0
    %680 = vmatpush1.msra.mxu0 0.0
    %681 = vmatprep.subr.mxu0 0.0
    %682 = vmatpush1.msra.mxu0 0.0
    %683 = vmatprep.subr.mxu0 0.0
    %684 = vmatpush1.msra.mxu0 0.0
    %685 = vmatprep.subr.mxu0 0.0
    %686 = vmatpush1.msra.mxu0 0.0
    %687 = vmatprep.subr.mxu0 0.0
    %688 = vmatpush1.msra.mxu0 0.0
    %689 = vmatprep.subr.mxu0 0.0
    %690 = vmatpush1.msra.mxu0 %v86
    %691 = vmatprep.subr.mxu0 0.0
    %692 = vmatpush1.msra.mxu0 %v85
    %693 = vmatprep.subr.mxu0 0.0
    %694 = vmatpush1.msra.mxu0 %v84
    %695 = vmatprep.subr.mxu0 0.0
    %696 = vmatpush1.msra.mxu0 %v83
    %697 = vmatprep.subr.mxu0 0.0
    %698 = vmatpush2.msra.mxu0 0.0
    %699 = vmatprep.subr.mxu0 0.0
    %700 = vmatpush2.msra.mxu0 0.0
    %701 = vmatprep.subr.mxu0 0.0
    %702 = vmatpush2.msra.mxu0 0.0
    %703 = vmatprep.subr.mxu0 0.0
    %704 = vmatpush2.msra.mxu0 0.0
    %705 = vmatprep.subr.mxu0 0.0
    %706 = vmatpush2.msra.mxu0 0.0
    %707 = vmatprep.subr.mxu0 0.0
    %708 = vmatpush2.msra.mxu0 0.0
    %709 = vmatprep.subr.mxu0 0.0
    %710 = vmatpush2.msra.mxu0 0.0
    %711 = vmatprep.subr.mxu0 0.0
    %712 = vmatpush2.msra.mxu0 0.0
    %713 = vmatprep.subr.mxu0 0.0
    %714 = vmatpush2.msra.mxu0 0.0
    %715 = vmatprep.subr.mxu0 0.0
    %716 = vmatpush2.msra.mxu0 0.0
    %717 = vmatprep.subr.mxu0 0.0
    %718 = vmatpush2.msra.mxu0 0.0
    %719 = vmatprep.subr.mxu0 0.0
    %720 = vmatpush2.msra.mxu0 0.0
    %721 = vmatprep.subr.mxu0 0.0
    %722 = vmatpush2.msra.mxu0 0.0
    %723 = vmatprep.subr.mxu0 0.0
    %724 = vmatpush2.msra.mxu0 0.0
    %725 = vmatprep.subr.mxu0 0.0
    %726 = vmatpush2.msra.mxu0 0.0
    %727 = vmatprep.subr.mxu0 0.0
    %728 = vmatpush2.msra.mxu0 0.0
    %729 = vmatprep.mubr.f32.mxu0 0.0
    %730 = vmatmul.mubr.f32.gmra.mxu0 %v663
    %v731 = vpop.f32.mrf.mxu0
    %v732 = vadd.f32 %v82, %v731
    %v733 = vpop.f32.mrf.mxu0
    %734 = vdwg.mxu0
    %v735 = vxor.u32 %v732, 2147483648
    %v736 = vmul.f32 %v735, 1.442695
    %v737 = vpow.pop %v736
    %v738 = vadd.f32 %v737, 1.0
    %v739 = vrcp.pop %v738
    %v740 = vmul.f32 1.0, %v739
    %v741 = vsub.f32 1.0, %v740
    %v743 = vmul.f32 %v741, %v662
    %v744 = vmul.f32 %v740, %v81
    %v745 = vadd.f32 %v743, %v744
    %v746 = vsel %vm93, %v745, 0.0
    %s747 = scalar_lea.vmem [#allocation12], 6
    %748 = vst [vmem:[%s747] sm:$0x3] %v746
    %s749 = scalar_lea.vmem [#allocation4], 6
    %v750 = vld [vmem:[%s749] sm:$0x3]
    %v752 = vsel %vm93, %v745, 0
    %754 = vmatprep.subr.mxu0 0.0
    %755 = vmatpush1.msra.mxu0 0.0
    %756 = vmatprep.subr.mxu0 0.0
    %757 = vmatpush1.msra.mxu0 0.0
    %758 = vmatprep.subr.mxu0 0.0
    %759 = vmatpush1.msra.mxu0 0.0
    %760 = vmatprep.subr.mxu0 0.0
    %761 = vmatpush1.msra.mxu0 0.0
    %762 = vmatprep.subr.mxu0 0.0
    %763 = vmatpush1.msra.mxu0 0.0
    %764 = vmatprep.subr.mxu0 0.0
    %765 = vmatpush1.msra.mxu0 0.0
    %766 = vmatprep.subr.mxu0 0.0
    %767 = vmatpush1.msra.mxu0 0.0
    %768 = vmatprep.subr.mxu0 0.0
    %769 = vmatpush1.msra.mxu0 0.0
    %770 = vmatprep.subr.mxu0 0.0
    %771 = vmatpush1.msra.mxu0 0.0
    %772 = vmatprep.subr.mxu0 0.0
    %773 = vmatpush1.msra.mxu0 0.0
    %774 = vmatprep.subr.mxu0 0.0
    %775 = vmatpush1.msra.mxu0 0.0
    %776 = vmatprep.subr.mxu0 0.0
    %777 = vmatpush1.msra.mxu0 0.0
    %778 = vmatprep.subr.mxu0 0.0
    %779 = vmatpush1.msra.mxu0 %v90
    %780 = vmatprep.subr.mxu0 0.0
    %781 = vmatpush1.msra.mxu0 %v89
    %782 = vmatprep.subr.mxu0 0.0
    %783 = vmatpush1.msra.mxu0 %v88
    %784 = vmatprep.subr.mxu0 0.0
    %785 = vmatpush1.msra.mxu0 %v87
    %786 = vmatprep.subr.mxu0 0.0
    %787 = vmatpush2.msra.mxu0 0.0
    %788 = vmatprep.subr.mxu0 0.0
    %789 = vmatpush2.msra.mxu0 0.0
    %790 = vmatprep.subr.mxu0 0.0
    %791 = vmatpush2.msra.mxu0 0.0
    %792 = vmatprep.subr.mxu0 0.0
    %793 = vmatpush2.msra.mxu0 0.0
    %794 = vmatprep.subr.mxu0 0.0
    %795 = vmatpush2.msra.mxu0 0.0
    %796 = vmatprep.subr.mxu0 0.0
    %797 = vmatpush2.msra.mxu0 0.0
    %798 = vmatprep.subr.mxu0 0.0
    %799 = vmatpush2.msra.mxu0 0.0
    %800 = vmatprep.subr.mxu0 0.0
    %801 = vmatpush2.msra.mxu0 0.0
    %802 = vmatprep.subr.mxu0 0.0
    %803 = vmatpush2.msra.mxu0 0.0
    %804 = vmatprep.subr.mxu0 0.0
    %805 = vmatpush2.msra.mxu0 0.0
    %806 = vmatprep.subr.mxu0 0.0
    %807 = vmatpush2.msra.mxu0 0.0
    %808 = vmatprep.subr.mxu0 0.0
    %809 = vmatpush2.msra.mxu0 0.0
    %810 = vmatprep.subr.mxu0 0.0
    %811 = vmatpush2.msra.mxu0 0.0
    %812 = vmatprep.subr.mxu0 0.0
    %813 = vmatpush2.msra.mxu0 0.0
    %814 = vmatprep.subr.mxu0 0.0
    %815 = vmatpush2.msra.mxu0 0.0
    %816 = vmatprep.subr.mxu0 0.0
    %817 = vmatpush2.msra.mxu0 0.0
    %818 = vmatprep.mubr.f32.mxu0 0.0
    %819 = vmatmul.mubr.f32.gmra.mxu0 %v752
    %v820 = vpop.f32.mrf.mxu0
    %v821 = vadd.f32 0.0, %v820
    %v822 = vpop.f32.mrf.mxu0
    %823 = vdwg.mxu0
    %v824 = vadd.f32 %v750, %v821
    %v825 = vxor.u32 %v824, 2147483648
    %v826 = vmul.f32 %v825, 1.442695
    %v827 = vpow.pop %v826
    %v828 = vadd.f32 %v827, 1.0
    %v829 = vrcp.pop %v828
    %v830 = vmul.f32 1.0, %v829
    %v831 = vtanh.pop %v824
    %v832 = vmul.f32 %v830, %v653
    %834 = vrot.lane.b32.xlu0 %v831, 32
    %v835 = vpop.permute.xlu0 %834
    %v837 = vmul.f32 %v830, %v835
    %839 = vrot.lane.b32.xlu0 %v837, 32
    %v840 = vpop.permute.xlu0 %839
    %v842 = vadd.f32 %v832, %v840
    %v843 = vtanh.pop %v842
    %845 = vrot.lane.b32.xlu0 %v843, 32
    %v846 = vpop.permute.xlu0 %845
    %v848 = vmul.f32 %v830, %v846
    %850 = vrot.lane.b32.xlu0 %v848, 64
    %v851 = vpop.permute.xlu0 %850
    %v852 = vsel %vm93, %v851, 0
    %854 = vmatprep.subr.mxu0 0.0
    %855 = vmatpush1.msra.mxu0 0.0
    %856 = vmatprep.subr.mxu0 0.0
    %857 = vmatpush1.msra.mxu0 0.0
    %858 = vmatprep.subr.mxu0 0.0
    %859 = vmatpush1.msra.mxu0 0.0
    %860 = vmatprep.subr.mxu0 0.0
    %861 = vmatpush1.msra.mxu0 0.0
    %862 = vmatprep.subr.mxu0 0.0
    %863 = vmatpush1.msra.mxu0 0.0
    %864 = vmatprep.subr.mxu0 0.0
    %865 = vmatpush1.msra.mxu0 0.0
    %866 = vmatprep.subr.mxu0 0.0
    %867 = vmatpush1.msra.mxu0 0.0
    %868 = vmatprep.subr.mxu0 0.0
    %869 = vmatpush1.msra.mxu0 0.0
    %870 = vmatprep.subr.mxu0 0.0
    %871 = vmatpush1.msra.mxu0 0.0
    %872 = vmatprep.subr.mxu0 0.0
    %873 = vmatpush1.msra.mxu0 0.0
    %874 = vmatprep.subr.mxu0 0.0
    %875 = vmatpush1.msra.mxu0 0.0
    %876 = vmatprep.subr.mxu0 0.0
    %877 = vmatpush1.msra.mxu0 0.0
    %878 = vmatprep.subr.mxu0 0.0
    %879 = vmatpush1.msra.mxu0 %v86
    %880 = vmatprep.subr.mxu0 0.0
    %881 = vmatpush1.msra.mxu0 %v85
    %882 = vmatprep.subr.mxu0 0.0
    %883 = vmatpush1.msra.mxu0 %v84
    %884 = vmatprep.subr.mxu0 0.0
    %885 = vmatpush1.msra.mxu0 %v83
    %886 = vmatprep.subr.mxu0 0.0
    %887 = vmatpush2.msra.mxu0 0.0
    %888 = vmatprep.subr.mxu0 0.0
    %889 = vmatpush2.msra.mxu0 0.0
    %890 = vmatprep.subr.mxu0 0.0
    %891 = vmatpush2.msra.mxu0 0.0
    %892 = vmatprep.subr.mxu0 0.0
    %893 = vmatpush2.msra.mxu0 0.0
    %894 = vmatprep.subr.mxu0 0.0
    %895 = vmatpush2.msra.mxu0 0.0
    %896 = vmatprep.subr.mxu0 0.0
    %897 = vmatpush2.msra.mxu0 0.0
    %898 = vmatprep.subr.mxu0 0.0
    %899 = vmatpush2.msra.mxu0 0.0
    %900 = vmatprep.subr.mxu0 0.0
    %901 = vmatpush2.msra.mxu0 0.0
    %902 = vmatprep.subr.mxu0 0.0
    %903 = vmatpush2.msra.mxu0 0.0
    %904 = vmatprep.subr.mxu0 0.0
    %905 = vmatpush2.msra.mxu0 0.0
    %906 = vmatprep.subr.mxu0 0.0
    %907 = vmatpush2.msra.mxu0 0.0
    %908 = vmatprep.subr.mxu0 0.0
    %909 = vmatpush2.msra.mxu0 0.0
    %910 = vmatprep.subr.mxu0 0.0
    %911 = vmatpush2.msra.mxu0 0.0
    %912 = vmatprep.subr.mxu0 0.0
    %913 = vmatpush2.msra.mxu0 0.0
    %914 = vmatprep.subr.mxu0 0.0
    %915 = vmatpush2.msra.mxu0 0.0
    %916 = vmatprep.subr.mxu0 0.0
    %917 = vmatpush2.msra.mxu0 0.0
    %918 = vmatprep.mubr.f32.mxu0 0.0
    %919 = vmatmul.mubr.f32.gmra.mxu0 %v852
    %v920 = vpop.f32.mrf.mxu0
    %v921 = vadd.f32 %v82, %v920
    %v922 = vpop.f32.mrf.mxu0
    %923 = vdwg.mxu0
    %v924 = vxor.u32 %v921, 2147483648
    %v925 = vmul.f32 %v924, 1.442695
    %v926 = vpow.pop %v925
    %v927 = vadd.f32 %v926, 1.0
    %v928 = vrcp.pop %v927
    %v929 = vmul.f32 1.0, %v928
    %v930 = vsub.f32 1.0, %v929
    %v932 = vmul.f32 %v930, %v851
    %v933 = vmul.f32 %v929, %v81
    %v934 = vadd.f32 %v932, %v933
    %v935 = vsel %vm93, %v934, 0.0
    %s936 = scalar_lea.vmem [#allocation12], 8
    %937 = vst [vmem:[%s936] sm:$0x3] %v935
    %s938 = scalar_lea.vmem [#allocation4], 8
    %v939 = vld [vmem:[%s938] sm:$0x3]
    %v941 = vsel %vm93, %v934, 0
    %943 = vmatprep.subr.mxu0 0.0
    %944 = vmatpush1.msra.mxu0 0.0
    %945 = vmatprep.subr.mxu0 0.0
    %946 = vmatpush1.msra.mxu0 0.0
    %947 = vmatprep.subr.mxu0 0.0
    %948 = vmatpush1.msra.mxu0 0.0
    %949 = vmatprep.subr.mxu0 0.0
    %950 = vmatpush1.msra.mxu0 0.0
    %951 = vmatprep.subr.mxu0 0.0
    %952 = vmatpush1.msra.mxu0 0.0
    %953 = vmatprep.subr.mxu0 0.0
    %954 = vmatpush1.msra.mxu0 0.0
    %955 = vmatprep.subr.mxu0 0.0
    %956 = vmatpush1.msra.mxu0 0.0
    %957 = vmatprep.subr.mxu0 0.0
    %958 = vmatpush1.msra.mxu0 0.0
    %959 = vmatprep.subr.mxu0 0.0
    %960 = vmatpush1.msra.mxu0 0.0
    %961 = vmatprep.subr.mxu0 0.0
    %962 = vmatpush1.msra.mxu0 0.0
    %963 = vmatprep.subr.mxu0 0.0
    %964 = vmatpush1.msra.mxu0 0.0
    %965 = vmatprep.subr.mxu0 0.0
    %966 = vmatpush1.msra.mxu0 0.0
    %967 = vmatprep.subr.mxu0 0.0
    %968 = vmatpush1.msra.mxu0 %v90
    %969 = vmatprep.subr.mxu0 0.0
    %970 = vmatpush1.msra.mxu0 %v89
    %971 = vmatprep.subr.mxu0 0.0
    %972 = vmatpush1.msra.mxu0 %v88
    %973 = vmatprep.subr.mxu0 0.0
    %974 = vmatpush1.msra.mxu0 %v87
    %975 = vmatprep.subr.mxu0 0.0
    %976 = vmatpush2.msra.mxu0 0.0
    %977 = vmatprep.subr.mxu0 0.0
    %978 = vmatpush2.msra.mxu0 0.0
    %979 = vmatprep.subr.mxu0 0.0
    %980 = vmatpush2.msra.mxu0 0.0
    %981 = vmatprep.subr.mxu0 0.0
    %982 = vmatpush2.msra.mxu0 0.0
    %983 = vmatprep.subr.mxu0 0.0
    %984 = vmatpush2.msra.mxu0 0.0
    %985 = vmatprep.subr.mxu0 0.0
    %986 = vmatpush2.msra.mxu0 0.0
    %987 = vmatprep.subr.mxu0 0.0
    %988 = vmatpush2.msra.mxu0 0.0
    %989 = vmatprep.subr.mxu0 0.0
    %990 = vmatpush2.msra.mxu0 0.0
    %991 = vmatprep.subr.mxu0 0.0
    %992 = vmatpush2.msra.mxu0 0.0
    %993 = vmatprep.subr.mxu0 0.0
    %994 = vmatpush2.msra.mxu0 0.0
    %995 = vmatprep.subr.mxu0 0.0
    %996 = vmatpush2.msra.mxu0 0.0
    %997 = vmatprep.subr.mxu0 0.0
    %998 = vmatpush2.msra.mxu0 0.0
    %999 = vmatprep.subr.mxu0 0.0
    %1000 = vmatpush2.msra.mxu0 0.0
    %1001 = vmatprep.subr.mxu0 0.0
    %1002 = vmatpush2.msra.mxu0 0.0
    %1003 = vmatprep.subr.mxu0 0.0
    %1004 = vmatpush2.msra.mxu0 0.0
    %1005 = vmatprep.subr.mxu0 0.0
    %1006 = vmatpush2.msra.mxu0 0.0
    %1007 = vmatprep.mubr.f32.mxu0 0.0
    %1008 = vmatmul.mubr.f32.gmra.mxu0 %v941
    %v1009 = vpop.f32.mrf.mxu0
    %v1010 = vadd.f32 0.0, %v1009
    %v1011 = vpop.f32.mrf.mxu0
    %1012 = vdwg.mxu0
    %v1013 = vadd.f32 %v939, %v1010
    %v1014 = vxor.u32 %v1013, 2147483648
    %v1015 = vmul.f32 %v1014, 1.442695
    %v1016 = vpow.pop %v1015
    %v1017 = vadd.f32 %v1016, 1.0
    %v1018 = vrcp.pop %v1017
    %v1019 = vmul.f32 1.0, %v1018
    %v1020 = vtanh.pop %v1013
    %v1021 = vmul.f32 %v1019, %v842
    %1023 = vrot.lane.b32.xlu0 %v1020, 32
    %v1024 = vpop.permute.xlu0 %1023
    %v1026 = vmul.f32 %v1019, %v1024
    %1028 = vrot.lane.b32.xlu0 %v1026, 32
    %v1029 = vpop.permute.xlu0 %1028
    %v1031 = vadd.f32 %v1021, %v1029
    %v1032 = vtanh.pop %v1031
    %1034 = vrot.lane.b32.xlu0 %v1032, 32
    %v1035 = vpop.permute.xlu0 %1034
    %v1037 = vmul.f32 %v1019, %v1035
    %1039 = vrot.lane.b32.xlu0 %v1037, 64
    %v1040 = vpop.permute.xlu0 %1039
    %v1041 = vsel %vm93, %v1040, 0
    %1043 = vmatprep.subr.mxu0 0.0
    %1044 = vmatpush1.msra.mxu0 0.0
    %1045 = vmatprep.subr.mxu0 0.0
    %1046 = vmatpush1.msra.mxu0 0.0
    %1047 = vmatprep.subr.mxu0 0.0
    %1048 = vmatpush1.msra.mxu0 0.0
    %1049 = vmatprep.subr.mxu0 0.0
    %1050 = vmatpush1.msra.mxu0 0.0
    %1051 = vmatprep.subr.mxu0 0.0
    %1052 = vmatpush1.msra.mxu0 0.0
    %1053 = vmatprep.subr.mxu0 0.0
    %1054 = vmatpush1.msra.mxu0 0.0
    %1055 = vmatprep.subr.mxu0 0.0
    %1056 = vmatpush1.msra.mxu0 0.0
    %1057 = vmatprep.subr.mxu0 0.0
    %1058 = vmatpush1.msra.mxu0 0.0
    %1059 = vmatprep.subr.mxu0 0.0
    %1060 = vmatpush1.msra.mxu0 0.0
    %1061 = vmatprep.subr.mxu0 0.0
    %1062 = vmatpush1.msra.mxu0 0.0
    %1063 = vmatprep.subr.mxu0 0.0
    %1064 = vmatpush1.msra.mxu0 0.0
    %1065 = vmatprep.subr.mxu0 0.0
    %1066 = vmatpush1.msra.mxu0 0.0
    %1067 = vmatprep.subr.mxu0 0.0
    %1068 = vmatpush1.msra.mxu0 %v86
    %1069 = vmatprep.subr.mxu0 0.0
    %1070 = vmatpush1.msra.mxu0 %v85
    %1071 = vmatprep.subr.mxu0 0.0
    %1072 = vmatpush1.msra.mxu0 %v84
    %1073 = vmatprep.subr.mxu0 0.0
    %1074 = vmatpush1.msra.mxu0 %v83
    %1075 = vmatprep.subr.mxu0 0.0
    %1076 = vmatpush2.msra.mxu0 0.0
    %1077 = vmatprep.subr.mxu0 0.0
    %1078 = vmatpush2.msra.mxu0 0.0
    %1079 = vmatprep.subr.mxu0 0.0
    %1080 = vmatpush2.msra.mxu0 0.0
    %1081 = vmatprep.subr.mxu0 0.0
    %1082 = vmatpush2.msra.mxu0 0.0
    %1083 = vmatprep.subr.mxu0 0.0
    %1084 = vmatpush2.msra.mxu0 0.0
    %1085 = vmatprep.subr.mxu0 0.0
    %1086 = vmatpush2.msra.mxu0 0.0
    %1087 = vmatprep.subr.mxu0 0.0
    %1088 = vmatpush2.msra.mxu0 0.0
    %1089 = vmatprep.subr.mxu0 0.0
    %1090 = vmatpush2.msra.mxu0 0.0
    %1091 = vmatprep.subr.mxu0 0.0
    %1092 = vmatpush2.msra.mxu0 0.0
    %1093 = vmatprep.subr.mxu0 0.0
    %1094 = vmatpush2.msra.mxu0 0.0
    %1095 = vmatprep.subr.mxu0 0.0
    %1096 = vmatpush2.msra.mxu0 0.0
    %1097 = vmatprep.subr.mxu0 0.0
    %1098 = vmatpush2.msra.mxu0 0.0
    %1099 = vmatprep.subr.mxu0 0.0
    %1100 = vmatpush2.msra.mxu0 0.0
    %1101 = vmatprep.subr.mxu0 0.0
    %1102 = vmatpush2.msra.mxu0 0.0
    %1103 = vmatprep.subr.mxu0 0.0
    %1104 = vmatpush2.msra.mxu0 0.0
    %1105 = vmatprep.subr.mxu0 0.0
    %1106 = vmatpush2.msra.mxu0 0.0
    %1107 = vmatprep.mubr.f32.mxu0 0.0
    %1108 = vmatmul.mubr.f32.gmra.mxu0 %v1041
    %v1109 = vpop.f32.mrf.mxu0
    %v1110 = vadd.f32 %v82, %v1109
    %v1111 = vpop.f32.mrf.mxu0
    %1112 = vdwg.mxu0
    %v1113 = vxor.u32 %v1110, 2147483648
    %v1114 = vmul.f32 %v1113, 1.442695
    %v1115 = vpow.pop %v1114
    %v1116 = vadd.f32 %v1115, 1.0
    %v1117 = vrcp.pop %v1116
    %v1118 = vmul.f32 1.0, %v1117
    %v1119 = vsub.f32 1.0, %v1118
    %v1121 = vmul.f32 %v1119, %v1040
    %v1122 = vmul.f32 %v1118, %v81
    %v1123 = vadd.f32 %v1121, %v1122
    %v1124 = vsel %vm93, %v1123, 0.0
    %s1125 = scalar_lea.vmem [#allocation12], 10
    %1126 = vst [vmem:[%s1125] sm:$0x3] %v1124
    %s1127 = scalar_lea.vmem [#allocation4], 10
    %v1128 = vld [vmem:[%s1127] sm:$0x3]
    %v1130 = vsel %vm93, %v1123, 0
    %1132 = vmatprep.subr.mxu0 0.0
    %1133 = vmatpush1.msra.mxu0 0.0
    %1134 = vmatprep.subr.mxu0 0.0
    %1135 = vmatpush1.msra.mxu0 0.0
    %1136 = vmatprep.subr.mxu0 0.0
    %1137 = vmatpush1.msra.mxu0 0.0
    %1138 = vmatprep.subr.mxu0 0.0
    %1139 = vmatpush1.msra.mxu0 0.0
    %1140 = vmatprep.subr.mxu0 0.0
    %1141 = vmatpush1.msra.mxu0 0.0
    %1142 = vmatprep.subr.mxu0 0.0
    %1143 = vmatpush1.msra.mxu0 0.0
    %1144 = vmatprep.subr.mxu0 0.0
    %1145 = vmatpush1.msra.mxu0 0.0
    %1146 = vmatprep.subr.mxu0 0.0
    %1147 = vmatpush1.msra.mxu0 0.0
    %1148 = vmatprep.subr.mxu0 0.0
    %1149 = vmatpush1.msra.mxu0 0.0
    %1150 = vmatprep.subr.mxu0 0.0
    %1151 = vmatpush1.msra.mxu0 0.0
    %1152 = vmatprep.subr.mxu0 0.0
    %1153 = vmatpush1.msra.mxu0 0.0
    %1154 = vmatprep.subr.mxu0 0.0
    %1155 = vmatpush1.msra.mxu0 0.0
    %1156 = vmatprep.subr.mxu0 0.0
    %1157 = vmatpush1.msra.mxu0 %v90
    %1158 = vmatprep.subr.mxu0 0.0
    %1159 = vmatpush1.msra.mxu0 %v89
    %1160 = vmatprep.subr.mxu0 0.0
    %1161 = vmatpush1.msra.mxu0 %v88
    %1162 = vmatprep.subr.mxu0 0.0
    %1163 = vmatpush1.msra.mxu0 %v87
    %1164 = vmatprep.subr.mxu0 0.0
    %1165 = vmatpush2.msra.mxu0 0.0
    %1166 = vmatprep.subr.mxu0 0.0
    %1167 = vmatpush2.msra.mxu0 0.0
    %1168 = vmatprep.subr.mxu0 0.0
    %1169 = vmatpush2.msra.mxu0 0.0
    %1170 = vmatprep.subr.mxu0 0.0
    %1171 = vmatpush2.msra.mxu0 0.0
    %1172 = vmatprep.subr.mxu0 0.0
    %1173 = vmatpush2.msra.mxu0 0.0
    %1174 = vmatprep.subr.mxu0 0.0
    %1175 = vmatpush2.msra.mxu0 0.0
    %1176 = vmatprep.subr.mxu0 0.0
    %1177 = vmatpush2.msra.mxu0 0.0
    %1178 = vmatprep.subr.mxu0 0.0
    %1179 = vmatpush2.msra.mxu0 0.0
    %1180 = vmatprep.subr.mxu0 0.0
    %1181 = vmatpush2.msra.mxu0 0.0
    %1182 = vmatprep.subr.mxu0 0.0
    %1183 = vmatpush2.msra.mxu0 0.0
    %1184 = vmatprep.subr.mxu0 0.0
    %1185 = vmatpush2.msra.mxu0 0.0
    %1186 = vmatprep.subr.mxu0 0.0
    %1187 = vmatpush2.msra.mxu0 0.0
    %1188 = vmatprep.subr.mxu0 0.0
    %1189 = vmatpush2.msra.mxu0 0.0
    %1190 = vmatprep.subr.mxu0 0.0
    %1191 = vmatpush2.msra.mxu0 0.0
    %1192 = vmatprep.subr.mxu0 0.0
    %1193 = vmatpush2.msra.mxu0 0.0
    %1194 = vmatprep.subr.mxu0 0.0
    %1195 = vmatpush2.msra.mxu0 0.0
    %1196 = vmatprep.mubr.f32.mxu0 0.0
    %1197 = vmatmul.mubr.f32.gmra.mxu0 %v1130
    %v1198 = vpop.f32.mrf.mxu0
    %v1199 = vadd.f32 0.0, %v1198
    %v1200 = vpop.f32.mrf.mxu0
    %1201 = vdwg.mxu0
    %v1202 = vadd.f32 %v1128, %v1199
    %v1203 = vxor.u32 %v1202, 2147483648
    %v1204 = vmul.f32 %v1203, 1.442695
    %v1205 = vpow.pop %v1204
    %v1206 = vadd.f32 %v1205, 1.0
    %v1207 = vrcp.pop %v1206
    %v1208 = vmul.f32 1.0, %v1207
    %v1209 = vtanh.pop %v1202
    %v1210 = vmul.f32 %v1208, %v1031
    %1212 = vrot.lane.b32.xlu0 %v1209, 32
    %v1213 = vpop.permute.xlu0 %1212
    %v1215 = vmul.f32 %v1208, %v1213
    %1217 = vrot.lane.b32.xlu0 %v1215, 32
    %v1218 = vpop.permute.xlu0 %1217
    %v1220 = vadd.f32 %v1210, %v1218
    %v1221 = vtanh.pop %v1220
    %1223 = vrot.lane.b32.xlu0 %v1221, 32
    %v1224 = vpop.permute.xlu0 %1223
    %v1226 = vmul.f32 %v1208, %v1224
    %1228 = vrot.lane.b32.xlu0 %v1226, 64
    %v1229 = vpop.permute.xlu0 %1228
    %v1230 = vsel %vm93, %v1229, 0
    %1232 = vmatprep.subr.mxu0 0.0
    %1233 = vmatpush1.msra.mxu0 0.0
    %1234 = vmatprep.subr.mxu0 0.0
    %1235 = vmatpush1.msra.mxu0 0.0
    %1236 = vmatprep.subr.mxu0 0.0
    %1237 = vmatpush1.msra.mxu0 0.0
    %1238 = vmatprep.subr.mxu0 0.0
    %1239 = vmatpush1.msra.mxu0 0.0
    %1240 = vmatprep.subr.mxu0 0.0
    %1241 = vmatpush1.msra.mxu0 0.0
    %1242 = vmatprep.subr.mxu0 0.0
    %1243 = vmatpush1.msra.mxu0 0.0
    %1244 = vmatprep.subr.mxu0 0.0
    %1245 = vmatpush1.msra.mxu0 0.0
    %1246 = vmatprep.subr.mxu0 0.0
    %1247 = vmatpush1.msra.mxu0 0.0
    %1248 = vmatprep.subr.mxu0 0.0
    %1249 = vmatpush1.msra.mxu0 0.0
    %1250 = vmatprep.subr.mxu0 0.0
    %1251 = vmatpush1.msra.mxu0 0.0
    %1252 = vmatprep.subr.mxu0 0.0
    %1253 = vmatpush1.msra.mxu0 0.0
    %1254 = vmatprep.subr.mxu0 0.0
    %1255 = vmatpush1.msra.mxu0 0.0
    %1256 = vmatprep.subr.mxu0 0.0
    %1257 = vmatpush1.msra.mxu0 %v86
    %1258 = vmatprep.subr.mxu0 0.0
    %1259 = vmatpush1.msra.mxu0 %v85
    %1260 = vmatprep.subr.mxu0 0.0
    %1261 = vmatpush1.msra.mxu0 %v84
    %1262 = vmatprep.subr.mxu0 0.0
    %1263 = vmatpush1.msra.mxu0 %v83
    %1264 = vmatprep.subr.mxu0 0.0
    %1265 = vmatpush2.msra.mxu0 0.0
    %1266 = vmatprep.subr.mxu0 0.0
    %1267 = vmatpush2.msra.mxu0 0.0
    %1268 = vmatprep.subr.mxu0 0.0
    %1269 = vmatpush2.msra.mxu0 0.0
    %1270 = vmatprep.subr.mxu0 0.0
    %1271 = vmatpush2.msra.mxu0 0.0
    %1272 = vmatprep.subr.mxu0 0.0
    %1273 = vmatpush2.msra.mxu0 0.0
    %1274 = vmatprep.subr.mxu0 0.0
    %1275 = vmatpush2.msra.mxu0 0.0
    %1276 = vmatprep.subr.mxu0 0.0
    %1277 = vmatpush2.msra.mxu0 0.0
    %1278 = vmatprep.subr.mxu0 0.0
    %1279 = vmatpush2.msra.mxu0 0.0
    %1280 = vmatprep.subr.mxu0 0.0
    %1281 = vmatpush2.msra.mxu0 0.0
    %1282 = vmatprep.subr.mxu0 0.0
    %1283 = vmatpush2.msra.mxu0 0.0
    %1284 = vmatprep.subr.mxu0 0.0
    %1285 = vmatpush2.msra.mxu0 0.0
    %1286 = vmatprep.subr.mxu0 0.0
    %1287 = vmatpush2.msra.mxu0 0.0
    %1288 = vmatprep.subr.mxu0 0.0
    %1289 = vmatpush2.msra.mxu0 0.0
    %1290 = vmatprep.subr.mxu0 0.0
    %1291 = vmatpush2.msra.mxu0 0.0
    %1292 = vmatprep.subr.mxu0 0.0
    %1293 = vmatpush2.msra.mxu0 0.0
    %1294 = vmatprep.subr.mxu0 0.0
    %1295 = vmatpush2.msra.mxu0 0.0
    %1296 = vmatprep.mubr.f32.mxu0 0.0
    %1297 = vmatmul.mubr.f32.gmra.mxu0 %v1230
    %v1298 = vpop.f32.mrf.mxu0
    %v1299 = vadd.f32 %v82, %v1298
    %v1300 = vpop.f32.mrf.mxu0
    %1301 = vdwg.mxu0
    %v1302 = vxor.u32 %v1299, 2147483648
    %v1303 = vmul.f32 %v1302, 1.442695
    %v1304 = vpow.pop %v1303
    %v1305 = vadd.f32 %v1304, 1.0
    %v1306 = vrcp.pop %v1305
    %v1307 = vmul.f32 1.0, %v1306
    %v1308 = vsub.f32 1.0, %v1307
    %v1310 = vmul.f32 %v1308, %v1229
    %v1311 = vmul.f32 %v1307, %v81
    %v1312 = vadd.f32 %v1310, %v1311
    %v1313 = vsel %vm93, %v1312, 0.0
    %s1314 = scalar_lea.vmem [#allocation12], 12
    %1315 = vst [vmem:[%s1314] sm:$0x3] %v1313
    %s1316 = scalar_lea.vmem [#allocation4], 12
    %v1317 = vld [vmem:[%s1316] sm:$0x3]
    %v1319 = vsel %vm93, %v1312, 0
    %1321 = vmatprep.subr.mxu0 0.0
    %1322 = vmatpush1.msra.mxu0 0.0
    %1323 = vmatprep.subr.mxu0 0.0
    %1324 = vmatpush1.msra.mxu0 0.0
    %1325 = vmatprep.subr.mxu0 0.0
    %1326 = vmatpush1.msra.mxu0 0.0
    %1327 = vmatprep.subr.mxu0 0.0
    %1328 = vmatpush1.msra.mxu0 0.0
    %1329 = vmatprep.subr.mxu0 0.0
    %1330 = vmatpush1.msra.mxu0 0.0
    %1331 = vmatprep.subr.mxu0 0.0
    %1332 = vmatpush1.msra.mxu0 0.0
    %1333 = vmatprep.subr.mxu0 0.0
    %1334 = vmatpush1.msra.mxu0 0.0
    %1335 = vmatprep.subr.mxu0 0.0
    %1336 = vmatpush1.msra.mxu0 0.0
    %1337 = vmatprep.subr.mxu0 0.0
    %1338 = vmatpush1.msra.mxu0 0.0
    %1339 = vmatprep.subr.mxu0 0.0
    %1340 = vmatpush1.msra.mxu0 0.0
    %1341 = vmatprep.subr.mxu0 0.0
    %1342 = vmatpush1.msra.mxu0 0.0
    %1343 = vmatprep.subr.mxu0 0.0
    %1344 = vmatpush1.msra.mxu0 0.0
    %1345 = vmatprep.subr.mxu0 0.0
    %1346 = vmatpush1.msra.mxu0 %v90
    %1347 = vmatprep.subr.mxu0 0.0
    %1348 = vmatpush1.msra.mxu0 %v89
    %1349 = vmatprep.subr.mxu0 0.0
    %1350 = vmatpush1.msra.mxu0 %v88
    %1351 = vmatprep.subr.mxu0 0.0
    %1352 = vmatpush1.msra.mxu0 %v87
    %1353 = vmatprep.subr.mxu0 0.0
    %1354 = vmatpush2.msra.mxu0 0.0
    %1355 = vmatprep.subr.mxu0 0.0
    %1356 = vmatpush2.msra.mxu0 0.0
    %1357 = vmatprep.subr.mxu0 0.0
    %1358 = vmatpush2.msra.mxu0 0.0
    %1359 = vmatprep.subr.mxu0 0.0
    %1360 = vmatpush2.msra.mxu0 0.0
    %1361 = vmatprep.subr.mxu0 0.0
    %1362 = vmatpush2.msra.mxu0 0.0
    %1363 = vmatprep.subr.mxu0 0.0
    %1364 = vmatpush2.msra.mxu0 0.0
    %1365 = vmatprep.subr.mxu0 0.0
    %1366 = vmatpush2.msra.mxu0 0.0
    %1367 = vmatprep.subr.mxu0 0.0
    %1368 = vmatpush2.msra.mxu0 0.0
    %1369 = vmatprep.subr.mxu0 0.0
    %1370 = vmatpush2.msra.mxu0 0.0
    %1371 = vmatprep.subr.mxu0 0.0
    %1372 = vmatpush2.msra.mxu0 0.0
    %1373 = vmatprep.subr.mxu0 0.0
    %1374 = vmatpush2.msra.mxu0 0.0
    %1375 = vmatprep.subr.mxu0 0.0
    %1376 = vmatpush2.msra.mxu0 0.0
    %1377 = vmatprep.subr.mxu0 0.0
    %1378 = vmatpush2.msra.mxu0 0.0
    %1379 = vmatprep.subr.mxu0 0.0
    %1380 = vmatpush2.msra.mxu0 0.0
    %1381 = vmatprep.subr.mxu0 0.0
    %1382 = vmatpush2.msra.mxu0 0.0
    %1383 = vmatprep.subr.mxu0 0.0
    %1384 = vmatpush2.msra.mxu0 0.0
    %1385 = vmatprep.mubr.f32.mxu0 0.0
    %1386 = vmatmul.mubr.f32.gmra.mxu0 %v1319
    %v1387 = vpop.f32.mrf.mxu0
    %v1388 = vadd.f32 0.0, %v1387
    %v1389 = vpop.f32.mrf.mxu0
    %1390 = vdwg.mxu0
    %v1391 = vadd.f32 %v1317, %v1388
    %v1392 = vxor.u32 %v1391, 2147483648
    %v1393 = vmul.f32 %v1392, 1.442695
    %v1394 = vpow.pop %v1393
    %v1395 = vadd.f32 %v1394, 1.0
    %v1396 = vrcp.pop %v1395
    %v1397 = vmul.f32 1.0, %v1396
    %v1398 = vtanh.pop %v1391
    %v1399 = vmul.f32 %v1397, %v1220
    %1401 = vrot.lane.b32.xlu0 %v1398, 32
    %v1402 = vpop.permute.xlu0 %1401
    %v1404 = vmul.f32 %v1397, %v1402
    %1406 = vrot.lane.b32.xlu0 %v1404, 32
    %v1407 = vpop.permute.xlu0 %1406
    %v1409 = vadd.f32 %v1399, %v1407
    %v1410 = vtanh.pop %v1409
    %1412 = vrot.lane.b32.xlu0 %v1410, 32
    %v1413 = vpop.permute.xlu0 %1412
    %v1415 = vmul.f32 %v1397, %v1413
    %1417 = vrot.lane.b32.xlu0 %v1415, 64
    %v1418 = vpop.permute.xlu0 %1417
    %v1419 = vsel %vm93, %v1418, 0
    %1421 = vmatprep.subr.mxu0 0.0
    %1422 = vmatpush1.msra.mxu0 0.0
    %1423 = vmatprep.subr.mxu0 0.0
    %1424 = vmatpush1.msra.mxu0 0.0
    %1425 = vmatprep.subr.mxu0 0.0
    %1426 = vmatpush1.msra.mxu0 0.0
    %1427 = vmatprep.subr.mxu0 0.0
    %1428 = vmatpush1.msra.mxu0 0.0
    %1429 = vmatprep.subr.mxu0 0.0
    %1430 = vmatpush1.msra.mxu0 0.0
    %1431 = vmatprep.subr.mxu0 0.0
    %1432 = vmatpush1.msra.mxu0 0.0
    %1433 = vmatprep.subr.mxu0 0.0
    %1434 = vmatpush1.msra.mxu0 0.0
    %1435 = vmatprep.subr.mxu0 0.0
    %1436 = vmatpush1.msra.mxu0 0.0
    %1437 = vmatprep.subr.mxu0 0.0
    %1438 = vmatpush1.msra.mxu0 0.0
    %1439 = vmatprep.subr.mxu0 0.0
    %1440 = vmatpush1.msra.mxu0 0.0
    %1441 = vmatprep.subr.mxu0 0.0
    %1442 = vmatpush1.msra.mxu0 0.0
    %1443 = vmatprep.subr.mxu0 0.0
    %1444 = vmatpush1.msra.mxu0 0.0
    %1445 = vmatprep.subr.mxu0 0.0
    %1446 = vmatpush1.msra.mxu0 %v86
    %1447 = vmatprep.subr.mxu0 0.0
    %1448 = vmatpush1.msra.mxu0 %v85
    %1449 = vmatprep.subr.mxu0 0.0
    %1450 = vmatpush1.msra.mxu0 %v84
    %1451 = vmatprep.subr.mxu0 0.0
    %1452 = vmatpush1.msra.mxu0 %v83
    %1453 = vmatprep.subr.mxu0 0.0
    %1454 = vmatpush2.msra.mxu0 0.0
    %1455 = vmatprep.subr.mxu0 0.0
    %1456 = vmatpush2.msra.mxu0 0.0
    %1457 = vmatprep.subr.mxu0 0.0
    %1458 = vmatpush2.msra.mxu0 0.0
    %1459 = vmatprep.subr.mxu0 0.0
    %1460 = vmatpush2.msra.mxu0 0.0
    %1461 = vmatprep.subr.mxu0 0.0
    %1462 = vmatpush2.msra.mxu0 0.0
    %1463 = vmatprep.subr.mxu0 0.0
    %1464 = vmatpush2.msra.mxu0 0.0
    %1465 = vmatprep.subr.mxu0 0.0
    %1466 = vmatpush2.msra.mxu0 0.0
    %1467 = vmatprep.subr.mxu0 0.0
    %1468 = vmatpush2.msra.mxu0 0.0
    %1469 = vmatprep.subr.mxu0 0.0
    %1470 = vmatpush2.msra.mxu0 0.0
    %1471 = vmatprep.subr.mxu0 0.0
    %1472 = vmatpush2.msra.mxu0 0.0
    %1473 = vmatprep.subr.mxu0 0.0
    %1474 = vmatpush2.msra.mxu0 0.0
    %1475 = vmatprep.subr.mxu0 0.0
    %1476 = vmatpush2.msra.mxu0 0.0
    %1477 = vmatprep.subr.mxu0 0.0
    %1478 = vmatpush2.msra.mxu0 0.0
    %1479 = vmatprep.subr.mxu0 0.0
    %1480 = vmatpush2.msra.mxu0 0.0
    %1481 = vmatprep.subr.mxu0 0.0
    %1482 = vmatpush2.msra.mxu0 0.0
    %1483 = vmatprep.subr.mxu0 0.0
    %1484 = vmatpush2.msra.mxu0 0.0
    %1485 = vmatprep.mubr.f32.mxu0 0.0
    %1486 = vmatmul.mubr.f32.gmra.mxu0 %v1419
    %v1487 = vpop.f32.mrf.mxu0
    %v1488 = vadd.f32 %v82, %v1487
    %v1489 = vpop.f32.mrf.mxu0
    %1490 = vdwg.mxu0
    %v1491 = vxor.u32 %v1488, 2147483648
    %v1492 = vmul.f32 %v1491, 1.442695
    %v1493 = vpow.pop %v1492
    %v1494 = vadd.f32 %v1493, 1.0
    %v1495 = vrcp.pop %v1494
    %v1496 = vmul.f32 1.0, %v1495
    %v1497 = vsub.f32 1.0, %v1496
    %v1499 = vmul.f32 %v1497, %v1418
    %v1500 = vmul.f32 %v1496, %v81
    %v1501 = vadd.f32 %v1499, %v1500
    %v1502 = vsel %vm93, %v1501, 0.0
    %s1503 = scalar_lea.vmem [#allocation12], 14
    %1504 = vst [vmem:[%s1503] sm:$0x3] %v1502
    %s1505 = scalar_lea.vmem [#allocation4], 14
    %v1506 = vld [vmem:[%s1505] sm:$0x3]
    %v1508 = vsel %vm93, %v1501, 0
    %1510 = vmatprep.subr.mxu0 0.0
    %1511 = vmatpush1.msra.mxu0 0.0
    %1512 = vmatprep.subr.mxu0 0.0
    %1513 = vmatpush1.msra.mxu0 0.0
    %1514 = vmatprep.subr.mxu0 0.0
    %1515 = vmatpush1.msra.mxu0 0.0
    %1516 = vmatprep.subr.mxu0 0.0
    %1517 = vmatpush1.msra.mxu0 0.0
    %1518 = vmatprep.subr.mxu0 0.0
    %1519 = vmatpush1.msra.mxu0 0.0
    %1520 = vmatprep.subr.mxu0 0.0
    %1521 = vmatpush1.msra.mxu0 0.0
    %1522 = vmatprep.subr.mxu0 0.0
    %1523 = vmatpush1.msra.mxu0 0.0
    %1524 = vmatprep.subr.mxu0 0.0
    %1525 = vmatpush1.msra.mxu0 0.0
    %1526 = vmatprep.subr.mxu0 0.0
    %1527 = vmatpush1.msra.mxu0 0.0
    %1528 = vmatprep.subr.mxu0 0.0
    %1529 = vmatpush1.msra.mxu0 0.0
    %1530 = vmatprep.subr.mxu0 0.0
    %1531 = vmatpush1.msra.mxu0 0.0
    %1532 = vmatprep.subr.mxu0 0.0
    %1533 = vmatpush1.msra.mxu0 0.0
    %1534 = vmatprep.subr.mxu0 0.0
    %1535 = vmatpush1.msra.mxu0 %v90
    %1536 = vmatprep.subr.mxu0 0.0
    %1537 = vmatpush1.msra.mxu0 %v89
    %1538 = vmatprep.subr.mxu0 0.0
    %1539 = vmatpush1.msra.mxu0 %v88
    %1540 = vmatprep.subr.mxu0 0.0
    %1541 = vmatpush1.msra.mxu0 %v87
    %1542 = vmatprep.subr.mxu0 0.0
    %1543 = vmatpush2.msra.mxu0 0.0
    %1544 = vmatprep.subr.mxu0 0.0
    %1545 = vmatpush2.msra.mxu0 0.0
    %1546 = vmatprep.subr.mxu0 0.0
    %1547 = vmatpush2.msra.mxu0 0.0
    %1548 = vmatprep.subr.mxu0 0.0
    %1549 = vmatpush2.msra.mxu0 0.0
    %1550 = vmatprep.subr.mxu0 0.0
    %1551 = vmatpush2.msra.mxu0 0.0
    %1552 = vmatprep.subr.mxu0 0.0
    %1553 = vmatpush2.msra.mxu0 0.0
    %1554 = vmatprep.subr.mxu0 0.0
    %1555 = vmatpush2.msra.mxu0 0.0
    %1556 = vmatprep.subr.mxu0 0.0
    %1557 = vmatpush2.msra.mxu0 0.0
    %1558 = vmatprep.subr.mxu0 0.0
    %1559 = vmatpush2.msra.mxu0 0.0
    %1560 = vmatprep.subr.mxu0 0.0
    %1561 = vmatpush2.msra.mxu0 0.0
    %1562 = vmatprep.subr.mxu0 0.0
    %1563 = vmatpush2.msra.mxu0 0.0
    %1564 = vmatprep.subr.mxu0 0.0
    %1565 = vmatpush2.msra.mxu0 0.0
    %1566 = vmatprep.subr.mxu0 0.0
    %1567 = vmatpush2.msra.mxu0 0.0
    %1568 = vmatprep.subr.mxu0 0.0
    %1569 = vmatpush2.msra.mxu0 0.0
    %1570 = vmatprep.subr.mxu0 0.0
    %1571 = vmatpush2.msra.mxu0 0.0
    %1572 = vmatprep.subr.mxu0 0.0
    %1573 = vmatpush2.msra.mxu0 0.0
    %1574 = vmatprep.mubr.f32.mxu0 0.0
    %1575 = vmatmul.mubr.f32.gmra.mxu0 %v1508
    %v1576 = vpop.f32.mrf.mxu0
    %v1577 = vadd.f32 0.0, %v1576
    %v1578 = vpop.f32.mrf.mxu0
    %1579 = vdwg.mxu0
    %v1580 = vadd.f32 %v1506, %v1577
    %v1581 = vxor.u32 %v1580, 2147483648
    %v1582 = vmul.f32 %v1581, 1.442695
    %v1583 = vpow.pop %v1582
    %v1584 = vadd.f32 %v1583, 1.0
    %v1585 = vrcp.pop %v1584
    %v1586 = vmul.f32 1.0, %v1585
    %v1587 = vtanh.pop %v1580
    %v1588 = vmul.f32 %v1586, %v1409
    %1590 = vrot.lane.b32.xlu0 %v1587, 32
    %v1591 = vpop.permute.xlu0 %1590
    %v1593 = vmul.f32 %v1586, %v1591
    %1595 = vrot.lane.b32.xlu0 %v1593, 32
    %v1596 = vpop.permute.xlu0 %1595
    %v1598 = vadd.f32 %v1588, %v1596
    %v1599 = vtanh.pop %v1598
    %1601 = vrot.lane.b32.xlu0 %v1599, 32
    %v1602 = vpop.permute.xlu0 %1601
    %v1604 = vmul.f32 %v1586, %v1602
    %1606 = vrot.lane.b32.xlu0 %v1604, 64
    %v1607 = vpop.permute.xlu0 %1606
    %v1608 = vsel %vm93, %v1607, 0
    %1610 = vmatprep.subr.mxu0 0.0
    %1611 = vmatpush1.msra.mxu0 0.0
    %1612 = vmatprep.subr.mxu0 0.0
    %1613 = vmatpush1.msra.mxu0 0.0
    %1614 = vmatprep.subr.mxu0 0.0
    %1615 = vmatpush1.msra.mxu0 0.0
    %1616 = vmatprep.subr.mxu0 0.0
    %1617 = vmatpush1.msra.mxu0 0.0
    %1618 = vmatprep.subr.mxu0 0.0
    %1619 = vmatpush1.msra.mxu0 0.0
    %1620 = vmatprep.subr.mxu0 0.0
    %1621 = vmatpush1.msra.mxu0 0.0
    %1622 = vmatprep.subr.mxu0 0.0
    %1623 = vmatpush1.msra.mxu0 0.0
    %1624 = vmatprep.subr.mxu0 0.0
    %1625 = vmatpush1.msra.mxu0 0.0
    %1626 = vmatprep.subr.mxu0 0.0
    %1627 = vmatpush1.msra.mxu0 0.0
    %1628 = vmatprep.subr.mxu0 0.0
    %1629 = vmatpush1.msra.mxu0 0.0
    %1630 = vmatprep.subr.mxu0 0.0
    %1631 = vmatpush1.msra.mxu0 0.0
    %1632 = vmatprep.subr.mxu0 0.0
    %1633 = vmatpush1.msra.mxu0 0.0
    %1634 = vmatprep.subr.mxu0 0.0
    %1635 = vmatpush1.msra.mxu0 %v86
    %1636 = vmatprep.subr.mxu0 0.0
    %1637 = vmatpush1.msra.mxu0 %v85
    %1638 = vmatprep.subr.mxu0 0.0
    %1639 = vmatpush1.msra.mxu0 %v84
    %1640 = vmatprep.subr.mxu0 0.0
    %1641 = vmatpush1.msra.mxu0 %v83
    %1642 = vmatprep.subr.mxu0 0.0
    %1643 = vmatpush2.msra.mxu0 0.0
    %1644 = vmatprep.subr.mxu0 0.0
    %1645 = vmatpush2.msra.mxu0 0.0
    %1646 = vmatprep.subr.mxu0 0.0
    %1647 = vmatpush2.msra.mxu0 0.0
    %1648 = vmatprep.subr.mxu0 0.0
    %1649 = vmatpush2.msra.mxu0 0.0
    %1650 = vmatprep.subr.mxu0 0.0
    %1651 = vmatpush2.msra.mxu0 0.0
    %1652 = vmatprep.subr.mxu0 0.0
    %1653 = vmatpush2.msra.mxu0 0.0
    %1654 = vmatprep.subr.mxu0 0.0
    %1655 = vmatpush2.msra.mxu0 0.0
    %1656 = vmatprep.subr.mxu0 0.0
    %1657 = vmatpush2.msra.mxu0 0.0
    %1658 = vmatprep.subr.mxu0 0.0
    %1659 = vmatpush2.msra.mxu0 0.0
    %1660 = vmatprep.subr.mxu0 0.0
    %1661 = vmatpush2.msra.mxu0 0.0
    %1662 = vmatprep.subr.mxu0 0.0
    %1663 = vmatpush2.msra.mxu0 0.0
    %1664 = vmatprep.subr.mxu0 0.0
    %1665 = vmatpush2.msra.mxu0 0.0
    %1666 = vmatprep.subr.mxu0 0.0
    %1667 = vmatpush2.msra.mxu0 0.0
    %1668 = vmatprep.subr.mxu0 0.0
    %1669 = vmatpush2.msra.mxu0 0.0
    %1670 = vmatprep.subr.mxu0 0.0
    %1671 = vmatpush2.msra.mxu0 0.0
    %1672 = vmatprep.subr.mxu0 0.0
    %1673 = vmatpush2.msra.mxu0 0.0
    %1674 = vmatprep.mubr.f32.mxu0 0.0
    %1675 = vmatmul.mubr.f32.gmra.mxu0 %v1608
    %v1676 = vpop.f32.mrf.mxu0
    %v1677 = vadd.f32 %v82, %v1676
    %v1678 = vpop.f32.mrf.mxu0
    %1679 = vdwg.mxu0
    %v1680 = vxor.u32 %v1677, 2147483648
    %v1681 = vmul.f32 %v1680, 1.442695
    %v1682 = vpow.pop %v1681
    %v1683 = vadd.f32 %v1682, 1.0
    %v1684 = vrcp.pop %v1683
    %v1685 = vmul.f32 1.0, %v1684
    %v1686 = vsub.f32 1.0, %v1685
    %v1688 = vmul.f32 %v1686, %v1607
    %v1689 = vmul.f32 %v1685, %v81
    %v1690 = vadd.f32 %v1688, %v1689
    %v1691 = vsel %vm93, %v1690, 0.0
    %s1692 = scalar_lea.vmem [#allocation12], 16
    %1693 = vst [vmem:[%s1692] sm:$0x3] %v1691
    %s1694 = scalar_lea.vmem [#allocation4], 16
    %v1695 = vld [vmem:[%s1694] sm:$0x3]
    %v1697 = vsel %vm93, %v1690, 0
    %1699 = vmatprep.subr.mxu0 0.0
    %1700 = vmatpush1.msra.mxu0 0.0
    %1701 = vmatprep.subr.mxu0 0.0
    %1702 = vmatpush1.msra.mxu0 0.0
    %1703 = vmatprep.subr.mxu0 0.0
    %1704 = vmatpush1.msra.mxu0 0.0
    %1705 = vmatprep.subr.mxu0 0.0
    %1706 = vmatpush1.msra.mxu0 0.0
    %1707 = vmatprep.subr.mxu0 0.0
    %1708 = vmatpush1.msra.mxu0 0.0
    %1709 = vmatprep.subr.mxu0 0.0
    %1710 = vmatpush1.msra.mxu0 0.0
    %1711 = vmatprep.subr.mxu0 0.0
    %1712 = vmatpush1.msra.mxu0 0.0
    %1713 = vmatprep.subr.mxu0 0.0
    %1714 = vmatpush1.msra.mxu0 0.0
    %1715 = vmatprep.subr.mxu0 0.0
    %1716 = vmatpush1.msra.mxu0 0.0
    %1717 = vmatprep.subr.mxu0 0.0
    %1718 = vmatpush1.msra.mxu0 0.0
    %1719 = vmatprep.subr.mxu0 0.0
    %1720 = vmatpush1.msra.mxu0 0.0
    %1721 = vmatprep.subr.mxu0 0.0
    %1722 = vmatpush1.msra.mxu0 0.0
    %1723 = vmatprep.subr.mxu0 0.0
    %1724 = vmatpush1.msra.mxu0 %v90
    %1725 = vmatprep.subr.mxu0 0.0
    %1726 = vmatpush1.msra.mxu0 %v89
    %1727 = vmatprep.subr.mxu0 0.0
    %1728 = vmatpush1.msra.mxu0 %v88
    %1729 = vmatprep.subr.mxu0 0.0
    %1730 = vmatpush1.msra.mxu0 %v87
    %1731 = vmatprep.subr.mxu0 0.0
    %1732 = vmatpush2.msra.mxu0 0.0
    %1733 = vmatprep.subr.mxu0 0.0
    %1734 = vmatpush2.msra.mxu0 0.0
    %1735 = vmatprep.subr.mxu0 0.0
    %1736 = vmatpush2.msra.mxu0 0.0
    %1737 = vmatprep.subr.mxu0 0.0
    %1738 = vmatpush2.msra.mxu0 0.0
    %1739 = vmatprep.subr.mxu0 0.0
    %1740 = vmatpush2.msra.mxu0 0.0
    %1741 = vmatprep.subr.mxu0 0.0
    %1742 = vmatpush2.msra.mxu0 0.0
    %1743 = vmatprep.subr.mxu0 0.0
    %1744 = vmatpush2.msra.mxu0 0.0
    %1745 = vmatprep.subr.mxu0 0.0
    %1746 = vmatpush2.msra.mxu0 0.0
    %1747 = vmatprep.subr.mxu0 0.0
    %1748 = vmatpush2.msra.mxu0 0.0
    %1749 = vmatprep.subr.mxu0 0.0
    %1750 = vmatpush2.msra.mxu0 0.0
    %1751 = vmatprep.subr.mxu0 0.0
    %1752 = vmatpush2.msra.mxu0 0.0
    %1753 = vmatprep.subr.mxu0 0.0
    %1754 = vmatpush2.msra.mxu0 0.0
    %1755 = vmatprep.subr.mxu0 0.0
    %1756 = vmatpush2.msra.mxu0 0.0
    %1757 = vmatprep.subr.mxu0 0.0
    %1758 = vmatpush2.msra.mxu0 0.0
    %1759 = vmatprep.subr.mxu0 0.0
    %1760 = vmatpush2.msra.mxu0 0.0
    %1761 = vmatprep.subr.mxu0 0.0
    %1762 = vmatpush2.msra.mxu0 0.0
    %1763 = vmatprep.mubr.f32.mxu0 0.0
    %1764 = vmatmul.mubr.f32.gmra.mxu0 %v1697
    %v1765 = vpop.f32.mrf.mxu0
    %v1766 = vadd.f32 0.0, %v1765
    %v1767 = vpop.f32.mrf.mxu0
    %1768 = vdwg.mxu0
    %v1769 = vadd.f32 %v1695, %v1766
    %v1770 = vxor.u32 %v1769, 2147483648
    %v1771 = vmul.f32 %v1770, 1.442695
    %v1772 = vpow.pop %v1771
    %v1773 = vadd.f32 %v1772, 1.0
    %v1774 = vrcp.pop %v1773
    %v1775 = vmul.f32 1.0, %v1774
    %v1776 = vtanh.pop %v1769
    %v1777 = vmul.f32 %v1775, %v1598
    %1779 = vrot.lane.b32.xlu0 %v1776, 32
    %v1780 = vpop.permute.xlu0 %1779
    %v1782 = vmul.f32 %v1775, %v1780
    %1784 = vrot.lane.b32.xlu0 %v1782, 32
    %v1785 = vpop.permute.xlu0 %1784
    %v1787 = vadd.f32 %v1777, %v1785
    %v1788 = vtanh.pop %v1787
    %1790 = vrot.lane.b32.xlu0 %v1788, 32
    %v1791 = vpop.permute.xlu0 %1790
    %v1793 = vmul.f32 %v1775, %v1791
    %1795 = vrot.lane.b32.xlu0 %v1793, 64
    %v1796 = vpop.permute.xlu0 %1795
    %v1797 = vsel %vm93, %v1796, 0
    %1799 = vmatprep.subr.mxu0 0.0
    %1800 = vmatpush1.msra.mxu0 0.0
    %1801 = vmatprep.subr.mxu0 0.0
    %1802 = vmatpush1.msra.mxu0 0.0
    %1803 = vmatprep.subr.mxu0 0.0
    %1804 = vmatpush1.msra.mxu0 0.0
    %1805 = vmatprep.subr.mxu0 0.0
    %1806 = vmatpush1.msra.mxu0 0.0
    %1807 = vmatprep.subr.mxu0 0.0
    %1808 = vmatpush1.msra.mxu0 0.0
    %1809 = vmatprep.subr.mxu0 0.0
    %1810 = vmatpush1.msra.mxu0 0.0
    %1811 = vmatprep.subr.mxu0 0.0
    %1812 = vmatpush1.msra.mxu0 0.0
    %1813 = vmatprep.subr.mxu0 0.0
    %1814 = vmatpush1.msra.mxu0 0.0
    %1815 = vmatprep.subr.mxu0 0.0
    %1816 = vmatpush1.msra.mxu0 0.0
    %1817 = vmatprep.subr.mxu0 0.0
    %1818 = vmatpush1.msra.mxu0 0.0
    %1819 = vmatprep.subr.mxu0 0.0
    %1820 = vmatpush1.msra.mxu0 0.0
    %1821 = vmatprep.subr.mxu0 0.0
    %1822 = vmatpush1.msra.mxu0 0.0
    %1823 = vmatprep.subr.mxu0 0.0
    %1824 = vmatpush1.msra.mxu0 %v86
    %1825 = vmatprep.subr.mxu0 0.0
    %1826 = vmatpush1.msra.mxu0 %v85
    %1827 = vmatprep.subr.mxu0 0.0
    %1828 = vmatpush1.msra.mxu0 %v84
    %1829 = vmatprep.subr.mxu0 0.0
    %1830 = vmatpush1.msra.mxu0 %v83
    %1831 = vmatprep.subr.mxu0 0.0
    %1832 = vmatpush2.msra.mxu0 0.0
    %1833 = vmatprep.subr.mxu0 0.0
    %1834 = vmatpush2.msra.mxu0 0.0
    %1835 = vmatprep.subr.mxu0 0.0
    %1836 = vmatpush2.msra.mxu0 0.0
    %1837 = vmatprep.subr.mxu0 0.0
    %1838 = vmatpush2.msra.mxu0 0.0
    %1839 = vmatprep.subr.mxu0 0.0
    %1840 = vmatpush2.msra.mxu0 0.0
    %1841 = vmatprep.subr.mxu0 0.0
    %1842 = vmatpush2.msra.mxu0 0.0
    %1843 = vmatprep.subr.mxu0 0.0
    %1844 = vmatpush2.msra.mxu0 0.0
    %1845 = vmatprep.subr.mxu0 0.0
    %1846 = vmatpush2.msra.mxu0 0.0
    %1847 = vmatprep.subr.mxu0 0.0
    %1848 = vmatpush2.msra.mxu0 0.0
    %1849 = vmatprep.subr.mxu0 0.0
    %1850 = vmatpush2.msra.mxu0 0.0
    %1851 = vmatprep.subr.mxu0 0.0
    %1852 = vmatpush2.msra.mxu0 0.0
    %1853 = vmatprep.subr.mxu0 0.0
    %1854 = vmatpush2.msra.mxu0 0.0
    %1855 = vmatprep.subr.mxu0 0.0
    %1856 = vmatpush2.msra.mxu0 0.0
    %1857 = vmatprep.subr.mxu0 0.0
    %1858 = vmatpush2.msra.mxu0 0.0
    %1859 = vmatprep.subr.mxu0 0.0
    %1860 = vmatpush2.msra.mxu0 0.0
    %1861 = vmatprep.subr.mxu0 0.0
    %1862 = vmatpush2.msra.mxu0 0.0
    %1863 = vmatprep.mubr.f32.mxu0 0.0
    %1864 = vmatmul.mubr.f32.gmra.mxu0 %v1797
    %v1865 = vpop.f32.mrf.mxu0
    %v1866 = vadd.f32 %v82, %v1865
    %v1867 = vpop.f32.mrf.mxu0
    %1868 = vdwg.mxu0
    %v1869 = vxor.u32 %v1866, 2147483648
    %v1870 = vmul.f32 %v1869, 1.442695
    %v1871 = vpow.pop %v1870
    %v1872 = vadd.f32 %v1871, 1.0
    %v1873 = vrcp.pop %v1872
    %v1874 = vmul.f32 1.0, %v1873
    %v1875 = vsub.f32 1.0, %v1874
    %v1877 = vmul.f32 %v1875, %v1796
    %v1878 = vmul.f32 %v1874, %v81
    %v1879 = vadd.f32 %v1877, %v1878
    %v1880 = vsel %vm93, %v1879, 0.0
    %s1881 = scalar_lea.vmem [#allocation12], 18
    %1882 = vst [vmem:[%s1881] sm:$0x3] %v1880
    %s1883 = scalar_lea.vmem [#allocation4], 18
    %v1884 = vld [vmem:[%s1883] sm:$0x3]
    %v1886 = vsel %vm93, %v1879, 0
    %1888 = vmatprep.subr.mxu0 0.0
    %1889 = vmatpush1.msra.mxu0 0.0
    %1890 = vmatprep.subr.mxu0 0.0
    %1891 = vmatpush1.msra.mxu0 0.0
    %1892 = vmatprep.subr.mxu0 0.0
    %1893 = vmatpush1.msra.mxu0 0.0
    %1894 = vmatprep.subr.mxu0 0.0
    %1895 = vmatpush1.msra.mxu0 0.0
    %1896 = vmatprep.subr.mxu0 0.0
    %1897 = vmatpush1.msra.mxu0 0.0
    %1898 = vmatprep.subr.mxu0 0.0
    %1899 = vmatpush1.msra.mxu0 0.0
    %1900 = vmatprep.subr.mxu0 0.0
    %1901 = vmatpush1.msra.mxu0 0.0
    %1902 = vmatprep.subr.mxu0 0.0
    %1903 = vmatpush1.msra.mxu0 0.0
    %1904 = vmatprep.subr.mxu0 0.0
    %1905 = vmatpush1.msra.mxu0 0.0
    %1906 = vmatprep.subr.mxu0 0.0
    %1907 = vmatpush1.msra.mxu0 0.0
    %1908 = vmatprep.subr.mxu0 0.0
    %1909 = vmatpush1.msra.mxu0 0.0
    %1910 = vmatprep.subr.mxu0 0.0
    %1911 = vmatpush1.msra.mxu0 0.0
    %1912 = vmatprep.subr.mxu0 0.0
    %1913 = vmatpush1.msra.mxu0 %v90
    %1914 = vmatprep.subr.mxu0 0.0
    %1915 = vmatpush1.msra.mxu0 %v89
    %1916 = vmatprep.subr.mxu0 0.0
    %1917 = vmatpush1.msra.mxu0 %v88
    %1918 = vmatprep.subr.mxu0 0.0
    %1919 = vmatpush1.msra.mxu0 %v87
    %1920 = vmatprep.subr.mxu0 0.0
    %1921 = vmatpush2.msra.mxu0 0.0
    %1922 = vmatprep.subr.mxu0 0.0
    %1923 = vmatpush2.msra.mxu0 0.0
    %1924 = vmatprep.subr.mxu0 0.0
    %1925 = vmatpush2.msra.mxu0 0.0
    %1926 = vmatprep.subr.mxu0 0.0
    %1927 = vmatpush2.msra.mxu0 0.0
    %1928 = vmatprep.subr.mxu0 0.0
    %1929 = vmatpush2.msra.mxu0 0.0
    %1930 = vmatprep.subr.mxu0 0.0
    %1931 = vmatpush2.msra.mxu0 0.0
    %1932 = vmatprep.subr.mxu0 0.0
    %1933 = vmatpush2.msra.mxu0 0.0
    %1934 = vmatprep.subr.mxu0 0.0
    %1935 = vmatpush2.msra.mxu0 0.0
    %1936 = vmatprep.subr.mxu0 0.0
    %1937 = vmatpush2.msra.mxu0 0.0
    %1938 = vmatprep.subr.mxu0 0.0
    %1939 = vmatpush2.msra.mxu0 0.0
    %1940 = vmatprep.subr.mxu0 0.0
    %1941 = vmatpush2.msra.mxu0 0.0
    %1942 = vmatprep.subr.mxu0 0.0
    %1943 = vmatpush2.msra.mxu0 0.0
    %1944 = vmatprep.subr.mxu0 0.0
    %1945 = vmatpush2.msra.mxu0 0.0
    %1946 = vmatprep.subr.mxu0 0.0
    %1947 = vmatpush2.msra.mxu0 0.0
    %1948 = vmatprep.subr.mxu0 0.0
    %1949 = vmatpush2.msra.mxu0 0.0
    %1950 = vmatprep.subr.mxu0 0.0
    %1951 = vmatpush2.msra.mxu0 0.0
    %1952 = vmatprep.mubr.f32.mxu0 0.0
    %1953 = vmatmul.mubr.f32.gmra.mxu0 %v1886
    %v1954 = vpop.f32.mrf.mxu0
    %v1955 = vadd.f32 0.0, %v1954
    %v1956 = vpop.f32.mrf.mxu0
    %1957 = vdwg.mxu0
    %v1958 = vadd.f32 %v1884, %v1955
    %v1959 = vxor.u32 %v1958, 2147483648
    %v1960 = vmul.f32 %v1959, 1.442695
    %v1961 = vpow.pop %v1960
    %v1962 = vadd.f32 %v1961, 1.0
    %v1963 = vrcp.pop %v1962
    %v1964 = vmul.f32 1.0, %v1963
    %v1965 = vtanh.pop %v1958
    %v1966 = vmul.f32 %v1964, %v1787
    %1968 = vrot.lane.b32.xlu0 %v1965, 32
    %v1969 = vpop.permute.xlu0 %1968
    %v1971 = vmul.f32 %v1964, %v1969
    %1973 = vrot.lane.b32.xlu0 %v1971, 32
    %v1974 = vpop.permute.xlu0 %1973
    %v1976 = vadd.f32 %v1966, %v1974
    %v1977 = vtanh.pop %v1976
    %1979 = vrot.lane.b32.xlu0 %v1977, 32
    %v1980 = vpop.permute.xlu0 %1979
    %v1982 = vmul.f32 %v1964, %v1980
    %1984 = vrot.lane.b32.xlu0 %v1982, 64
    %v1985 = vpop.permute.xlu0 %1984
    %v1986 = vsel %vm93, %v1985, 0
    %1988 = vmatprep.subr.mxu0 0.0
    %1989 = vmatpush1.msra.mxu0 0.0
    %1990 = vmatprep.subr.mxu0 0.0
    %1991 = vmatpush1.msra.mxu0 0.0
    %1992 = vmatprep.subr.mxu0 0.0
    %1993 = vmatpush1.msra.mxu0 0.0
    %1994 = vmatprep.subr.mxu0 0.0
    %1995 = vmatpush1.msra.mxu0 0.0
    %1996 = vmatprep.subr.mxu0 0.0
    %1997 = vmatpush1.msra.mxu0 0.0
    %1998 = vmatprep.subr.mxu0 0.0
    %1999 = vmatpush1.msra.mxu0 0.0
    %2000 = vmatprep.subr.mxu0 0.0
    %2001 = vmatpush1.msra.mxu0 0.0
    %2002 = vmatprep.subr.mxu0 0.0
    %2003 = vmatpush1.msra.mxu0 0.0
    %2004 = vmatprep.subr.mxu0 0.0
    %2005 = vmatpush1.msra.mxu0 0.0
    %2006 = vmatprep.subr.mxu0 0.0
    %2007 = vmatpush1.msra.mxu0 0.0
    %2008 = vmatprep.subr.mxu0 0.0
    %2009 = vmatpush1.msra.mxu0 0.0
    %2010 = vmatprep.subr.mxu0 0.0
    %2011 = vmatpush1.msra.mxu0 0.0
    %2012 = vmatprep.subr.mxu0 0.0
    %2013 = vmatpush1.msra.mxu0 %v86
    %2014 = vmatprep.subr.mxu0 0.0
    %2015 = vmatpush1.msra.mxu0 %v85
    %2016 = vmatprep.subr.mxu0 0.0
    %2017 = vmatpush1.msra.mxu0 %v84
    %2018 = vmatprep.subr.mxu0 0.0
    %2019 = vmatpush1.msra.mxu0 %v83
    %2020 = vmatprep.subr.mxu0 0.0
    %2021 = vmatpush2.msra.mxu0 0.0
    %2022 = vmatprep.subr.mxu0 0.0
    %2023 = vmatpush2.msra.mxu0 0.0
    %2024 = vmatprep.subr.mxu0 0.0
    %2025 = vmatpush2.msra.mxu0 0.0
    %2026 = vmatprep.subr.mxu0 0.0
    %2027 = vmatpush2.msra.mxu0 0.0
    %2028 = vmatprep.subr.mxu0 0.0
    %2029 = vmatpush2.msra.mxu0 0.0
    %2030 = vmatprep.subr.mxu0 0.0
    %2031 = vmatpush2.msra.mxu0 0.0
    %2032 = vmatprep.subr.mxu0 0.0
    %2033 = vmatpush2.msra.mxu0 0.0
    %2034 = vmatprep.subr.mxu0 0.0
    %2035 = vmatpush2.msra.mxu0 0.0
    %2036 = vmatprep.subr.mxu0 0.0
    %2037 = vmatpush2.msra.mxu0 0.0
    %2038 = vmatprep.subr.mxu0 0.0
    %2039 = vmatpush2.msra.mxu0 0.0
    %2040 = vmatprep.subr.mxu0 0.0
    %2041 = vmatpush2.msra.mxu0 0.0
    %2042 = vmatprep.subr.mxu0 0.0
    %2043 = vmatpush2.msra.mxu0 0.0
    %2044 = vmatprep.subr.mxu0 0.0
    %2045 = vmatpush2.msra.mxu0 0.0
    %2046 = vmatprep.subr.mxu0 0.0
    %2047 = vmatpush2.msra.mxu0 0.0
    %2048 = vmatprep.subr.mxu0 0.0
    %2049 = vmatpush2.msra.mxu0 0.0
    %2050 = vmatprep.subr.mxu0 0.0
    %2051 = vmatpush2.msra.mxu0 0.0
    %2052 = vmatprep.mubr.f32.mxu0 0.0
    %2053 = vmatmul.mubr.f32.gmra.mxu0 %v1986
    %v2054 = vpop.f32.mrf.mxu0
    %v2055 = vadd.f32 %v82, %v2054
    %v2056 = vpop.f32.mrf.mxu0
    %2057 = vdwg.mxu0
    %v2058 = vxor.u32 %v2055, 2147483648
    %v2059 = vmul.f32 %v2058, 1.442695
    %v2060 = vpow.pop %v2059
    %v2061 = vadd.f32 %v2060, 1.0
    %v2062 = vrcp.pop %v2061
    %v2063 = vmul.f32 1.0, %v2062
    %v2064 = vsub.f32 1.0, %v2063
    %v2066 = vmul.f32 %v2064, %v1985
    %v2067 = vmul.f32 %v2063, %v81
    %v2068 = vadd.f32 %v2066, %v2067
    %v2069 = vsel %vm93, %v2068, 0.0
    %s2070 = scalar_lea.vmem [#allocation12], 20
    %2071 = vst [vmem:[%s2070] sm:$0x3] %v2069
    %s2072 = scalar_lea.vmem [#allocation4], 20
    %v2073 = vld [vmem:[%s2072] sm:$0x3]
    %v2075 = vsel %vm93, %v2068, 0
    %2077 = vmatprep.subr.mxu0 0.0
    %2078 = vmatpush1.msra.mxu0 0.0
    %2079 = vmatprep.subr.mxu0 0.0
    %2080 = vmatpush1.msra.mxu0 0.0
    %2081 = vmatprep.subr.mxu0 0.0
    %2082 = vmatpush1.msra.mxu0 0.0
    %2083 = vmatprep.subr.mxu0 0.0
    %2084 = vmatpush1.msra.mxu0 0.0
    %2085 = vmatprep.subr.mxu0 0.0
    %2086 = vmatpush1.msra.mxu0 0.0
    %2087 = vmatprep.subr.mxu0 0.0
    %2088 = vmatpush1.msra.mxu0 0.0
    %2089 = vmatprep.subr.mxu0 0.0
    %2090 = vmatpush1.msra.mxu0 0.0
    %2091 = vmatprep.subr.mxu0 0.0
    %2092 = vmatpush1.msra.mxu0 0.0
    %2093 = vmatprep.subr.mxu0 0.0
    %2094 = vmatpush1.msra.mxu0 0.0
    %2095 = vmatprep.subr.mxu0 0.0
    %2096 = vmatpush1.msra.mxu0 0.0
    %2097 = vmatprep.subr.mxu0 0.0
    %2098 = vmatpush1.msra.mxu0 0.0
    %2099 = vmatprep.subr.mxu0 0.0
    %2100 = vmatpush1.msra.mxu0 0.0
    %2101 = vmatprep.subr.mxu0 0.0
    %2102 = vmatpush1.msra.mxu0 %v90
    %2103 = vmatprep.subr.mxu0 0.0
    %2104 = vmatpush1.msra.mxu0 %v89
    %2105 = vmatprep.subr.mxu0 0.0
    %2106 = vmatpush1.msra.mxu0 %v88
    %2107 = vmatprep.subr.mxu0 0.0
    %2108 = vmatpush1.msra.mxu0 %v87
    %2109 = vmatprep.subr.mxu0 0.0
    %2110 = vmatpush2.msra.mxu0 0.0
    %2111 = vmatprep.subr.mxu0 0.0
    %2112 = vmatpush2.msra.mxu0 0.0
    %2113 = vmatprep.subr.mxu0 0.0
    %2114 = vmatpush2.msra.mxu0 0.0
    %2115 = vmatprep.subr.mxu0 0.0
    %2116 = vmatpush2.msra.mxu0 0.0
    %2117 = vmatprep.subr.mxu0 0.0
    %2118 = vmatpush2.msra.mxu0 0.0
    %2119 = vmatprep.subr.mxu0 0.0
    %2120 = vmatpush2.msra.mxu0 0.0
    %2121 = vmatprep.subr.mxu0 0.0
    %2122 = vmatpush2.msra.mxu0 0.0
    %2123 = vmatprep.subr.mxu0 0.0
    %2124 = vmatpush2.msra.mxu0 0.0
    %2125 = vmatprep.subr.mxu0 0.0
    %2126 = vmatpush2.msra.mxu0 0.0
    %2127 = vmatprep.subr.mxu0 0.0
    %2128 = vmatpush2.msra.mxu0 0.0
    %2129 = vmatprep.subr.mxu0 0.0
    %2130 = vmatpush2.msra.mxu0 0.0
    %2131 = vmatprep.subr.mxu0 0.0
    %2132 = vmatpush2.msra.mxu0 0.0
    %2133 = vmatprep.subr.mxu0 0.0
    %2134 = vmatpush2.msra.mxu0 0.0
    %2135 = vmatprep.subr.mxu0 0.0
    %2136 = vmatpush2.msra.mxu0 0.0
    %2137 = vmatprep.subr.mxu0 0.0
    %2138 = vmatpush2.msra.mxu0 0.0
    %2139 = vmatprep.subr.mxu0 0.0
    %2140 = vmatpush2.msra.mxu0 0.0
    %2141 = vmatprep.mubr.f32.mxu0 0.0
    %2142 = vmatmul.mubr.f32.gmra.mxu0 %v2075
    %v2143 = vpop.f32.mrf.mxu0
    %v2144 = vadd.f32 0.0, %v2143
    %v2145 = vpop.f32.mrf.mxu0
    %2146 = vdwg.mxu0
    %v2147 = vadd.f32 %v2073, %v2144
    %v2148 = vxor.u32 %v2147, 2147483648
    %v2149 = vmul.f32 %v2148, 1.442695
    %v2150 = vpow.pop %v2149
    %v2151 = vadd.f32 %v2150, 1.0
    %v2152 = vrcp.pop %v2151
    %v2153 = vmul.f32 1.0, %v2152
    %v2154 = vtanh.pop %v2147
    %v2155 = vmul.f32 %v2153, %v1976
    %2157 = vrot.lane.b32.xlu0 %v2154, 32
    %v2158 = vpop.permute.xlu0 %2157
    %v2160 = vmul.f32 %v2153, %v2158
    %2162 = vrot.lane.b32.xlu0 %v2160, 32
    %v2163 = vpop.permute.xlu0 %2162
    %v2165 = vadd.f32 %v2155, %v2163
    %v2166 = vtanh.pop %v2165
    %2168 = vrot.lane.b32.xlu0 %v2166, 32
    %v2169 = vpop.permute.xlu0 %2168
    %v2171 = vmul.f32 %v2153, %v2169
    %2173 = vrot.lane.b32.xlu0 %v2171, 64
    %v2174 = vpop.permute.xlu0 %2173
    %v2175 = vsel %vm93, %v2174, 0
    %2177 = vmatprep.subr.mxu0 0.0
    %2178 = vmatpush1.msra.mxu0 0.0
    %2179 = vmatprep.subr.mxu0 0.0
    %2180 = vmatpush1.msra.mxu0 0.0
    %2181 = vmatprep.subr.mxu0 0.0
    %2182 = vmatpush1.msra.mxu0 0.0
    %2183 = vmatprep.subr.mxu0 0.0
    %2184 = vmatpush1.msra.mxu0 0.0
    %2185 = vmatprep.subr.mxu0 0.0
    %2186 = vmatpush1.msra.mxu0 0.0
    %2187 = vmatprep.subr.mxu0 0.0
    %2188 = vmatpush1.msra.mxu0 0.0
    %2189 = vmatprep.subr.mxu0 0.0
    %2190 = vmatpush1.msra.mxu0 0.0
    %2191 = vmatprep.subr.mxu0 0.0
    %2192 = vmatpush1.msra.mxu0 0.0
    %2193 = vmatprep.subr.mxu0 0.0
    %2194 = vmatpush1.msra.mxu0 0.0
    %2195 = vmatprep.subr.mxu0 0.0
    %2196 = vmatpush1.msra.mxu0 0.0
    %2197 = vmatprep.subr.mxu0 0.0
    %2198 = vmatpush1.msra.mxu0 0.0
    %2199 = vmatprep.subr.mxu0 0.0
    %2200 = vmatpush1.msra.mxu0 0.0
    %2201 = vmatprep.subr.mxu0 0.0
    %2202 = vmatpush1.msra.mxu0 %v86
    %2203 = vmatprep.subr.mxu0 0.0
    %2204 = vmatpush1.msra.mxu0 %v85
    %2205 = vmatprep.subr.mxu0 0.0
    %2206 = vmatpush1.msra.mxu0 %v84
    %2207 = vmatprep.subr.mxu0 0.0
    %2208 = vmatpush1.msra.mxu0 %v83
    %2209 = vmatprep.subr.mxu0 0.0
    %2210 = vmatpush2.msra.mxu0 0.0
    %2211 = vmatprep.subr.mxu0 0.0
    %2212 = vmatpush2.msra.mxu0 0.0
    %2213 = vmatprep.subr.mxu0 0.0
    %2214 = vmatpush2.msra.mxu0 0.0
    %2215 = vmatprep.subr.mxu0 0.0
    %2216 = vmatpush2.msra.mxu0 0.0
    %2217 = vmatprep.subr.mxu0 0.0
    %2218 = vmatpush2.msra.mxu0 0.0
    %2219 = vmatprep.subr.mxu0 0.0
    %2220 = vmatpush2.msra.mxu0 0.0
    %2221 = vmatprep.subr.mxu0 0.0
    %2222 = vmatpush2.msra.mxu0 0.0
    %2223 = vmatprep.subr.mxu0 0.0
    %2224 = vmatpush2.msra.mxu0 0.0
    %2225 = vmatprep.subr.mxu0 0.0
    %2226 = vmatpush2.msra.mxu0 0.0
    %2227 = vmatprep.subr.mxu0 0.0
    %2228 = vmatpush2.msra.mxu0 0.0
    %2229 = vmatprep.subr.mxu0 0.0
    %2230 = vmatpush2.msra.mxu0 0.0
    %2231 = vmatprep.subr.mxu0 0.0
    %2232 = vmatpush2.msra.mxu0 0.0
    %2233 = vmatprep.subr.mxu0 0.0
    %2234 = vmatpush2.msra.mxu0 0.0
    %2235 = vmatprep.subr.mxu0 0.0
    %2236 = vmatpush2.msra.mxu0 0.0
    %2237 = vmatprep.subr.mxu0 0.0
    %2238 = vmatpush2.msra.mxu0 0.0
    %2239 = vmatprep.subr.mxu0 0.0
    %2240 = vmatpush2.msra.mxu0 0.0
    %2241 = vmatprep.mubr.f32.mxu0 0.0
    %2242 = vmatmul.mubr.f32.gmra.mxu0 %v2175
    %v2243 = vpop.f32.mrf.mxu0
    %v2244 = vadd.f32 %v82, %v2243
    %v2245 = vpop.f32.mrf.mxu0
    %2246 = vdwg.mxu0
    %v2247 = vxor.u32 %v2244, 2147483648
    %v2248 = vmul.f32 %v2247, 1.442695
    %v2249 = vpow.pop %v2248
    %v2250 = vadd.f32 %v2249, 1.0
    %v2251 = vrcp.pop %v2250
    %v2252 = vmul.f32 1.0, %v2251
    %v2253 = vsub.f32 1.0, %v2252
    %v2255 = vmul.f32 %v2253, %v2174
    %v2256 = vmul.f32 %v2252, %v81
    %v2257 = vadd.f32 %v2255, %v2256
    %v2258 = vsel %vm93, %v2257, 0.0
    %s2259 = scalar_lea.vmem [#allocation12], 22
    %2260 = vst [vmem:[%s2259] sm:$0x3] %v2258
    %s2261 = scalar_lea.vmem [#allocation4], 22
    %v2262 = vld [vmem:[%s2261] sm:$0x3]
    %v2264 = vsel %vm93, %v2257, 0
    %2266 = vmatprep.subr.mxu0 0.0
    %2267 = vmatpush1.msra.mxu0 0.0
    %2268 = vmatprep.subr.mxu0 0.0
    %2269 = vmatpush1.msra.mxu0 0.0
    %2270 = vmatprep.subr.mxu0 0.0
    %2271 = vmatpush1.msra.mxu0 0.0
    %2272 = vmatprep.subr.mxu0 0.0
    %2273 = vmatpush1.msra.mxu0 0.0
    %2274 = vmatprep.subr.mxu0 0.0
    %2275 = vmatpush1.msra.mxu0 0.0
    %2276 = vmatprep.subr.mxu0 0.0
    %2277 = vmatpush1.msra.mxu0 0.0
    %2278 = vmatprep.subr.mxu0 0.0
    %2279 = vmatpush1.msra.mxu0 0.0
    %2280 = vmatprep.subr.mxu0 0.0
    %2281 = vmatpush1.msra.mxu0 0.0
    %2282 = vmatprep.subr.mxu0 0.0
    %2283 = vmatpush1.msra.mxu0 0.0
    %2284 = vmatprep.subr.mxu0 0.0
    %2285 = vmatpush1.msra.mxu0 0.0
    %2286 = vmatprep.subr.mxu0 0.0
    %2287 = vmatpush1.msra.mxu0 0.0
    %2288 = vmatprep.subr.mxu0 0.0
    %2289 = vmatpush1.msra.mxu0 0.0
    %2290 = vmatprep.subr.mxu0 0.0
    %2291 = vmatpush1.msra.mxu0 %v90
    %2292 = vmatprep.subr.mxu0 0.0
    %2293 = vmatpush1.msra.mxu0 %v89
    %2294 = vmatprep.subr.mxu0 0.0
    %2295 = vmatpush1.msra.mxu0 %v88
    %2296 = vmatprep.subr.mxu0 0.0
    %2297 = vmatpush1.msra.mxu0 %v87
    %2298 = vmatprep.subr.mxu0 0.0
    %2299 = vmatpush2.msra.mxu0 0.0
    %2300 = vmatprep.subr.mxu0 0.0
    %2301 = vmatpush2.msra.mxu0 0.0
    %2302 = vmatprep.subr.mxu0 0.0
    %2303 = vmatpush2.msra.mxu0 0.0
    %2304 = vmatprep.subr.mxu0 0.0
    %2305 = vmatpush2.msra.mxu0 0.0
    %2306 = vmatprep.subr.mxu0 0.0
    %2307 = vmatpush2.msra.mxu0 0.0
    %2308 = vmatprep.subr.mxu0 0.0
    %2309 = vmatpush2.msra.mxu0 0.0
    %2310 = vmatprep.subr.mxu0 0.0
    %2311 = vmatpush2.msra.mxu0 0.0
    %2312 = vmatprep.subr.mxu0 0.0
    %2313 = vmatpush2.msra.mxu0 0.0
    %2314 = vmatprep.subr.mxu0 0.0
    %2315 = vmatpush2.msra.mxu0 0.0
    %2316 = vmatprep.subr.mxu0 0.0
    %2317 = vmatpush2.msra.mxu0 0.0
    %2318 = vmatprep.subr.mxu0 0.0
    %2319 = vmatpush2.msra.mxu0 0.0
    %2320 = vmatprep.subr.mxu0 0.0
    %2321 = vmatpush2.msra.mxu0 0.0
    %2322 = vmatprep.subr.mxu0 0.0
    %2323 = vmatpush2.msra.mxu0 0.0
    %2324 = vmatprep.subr.mxu0 0.0
    %2325 = vmatpush2.msra.mxu0 0.0
    %2326 = vmatprep.subr.mxu0 0.0
    %2327 = vmatpush2.msra.mxu0 0.0
    %2328 = vmatprep.subr.mxu0 0.0
    %2329 = vmatpush2.msra.mxu0 0.0
    %2330 = vmatprep.mubr.f32.mxu0 0.0
    %2331 = vmatmul.mubr.f32.gmra.mxu0 %v2264
    %v2332 = vpop.f32.mrf.mxu0
    %v2333 = vadd.f32 0.0, %v2332
    %v2334 = vpop.f32.mrf.mxu0
    %2335 = vdwg.mxu0
    %v2336 = vadd.f32 %v2262, %v2333
    %v2337 = vxor.u32 %v2336, 2147483648
    %v2338 = vmul.f32 %v2337, 1.442695
    %v2339 = vpow.pop %v2338
    %v2340 = vadd.f32 %v2339, 1.0
    %v2341 = vrcp.pop %v2340
    %v2342 = vmul.f32 1.0, %v2341
    %v2343 = vtanh.pop %v2336
    %v2344 = vmul.f32 %v2342, %v2165
    %2346 = vrot.lane.b32.xlu0 %v2343, 32
    %v2347 = vpop.permute.xlu0 %2346
    %v2349 = vmul.f32 %v2342, %v2347
    %2351 = vrot.lane.b32.xlu0 %v2349, 32
    %v2352 = vpop.permute.xlu0 %2351
    %v2354 = vadd.f32 %v2344, %v2352
    %v2355 = vtanh.pop %v2354
    %2357 = vrot.lane.b32.xlu0 %v2355, 32
    %v2358 = vpop.permute.xlu0 %2357
    %v2360 = vmul.f32 %v2342, %v2358
    %2362 = vrot.lane.b32.xlu0 %v2360, 64
    %v2363 = vpop.permute.xlu0 %2362
    %v2364 = vsel %vm93, %v2363, 0
    %2366 = vmatprep.subr.mxu0 0.0
    %2367 = vmatpush1.msra.mxu0 0.0
    %2368 = vmatprep.subr.mxu0 0.0
    %2369 = vmatpush1.msra.mxu0 0.0
    %2370 = vmatprep.subr.mxu0 0.0
    %2371 = vmatpush1.msra.mxu0 0.0
    %2372 = vmatprep.subr.mxu0 0.0
    %2373 = vmatpush1.msra.mxu0 0.0
    %2374 = vmatprep.subr.mxu0 0.0
    %2375 = vmatpush1.msra.mxu0 0.0
    %2376 = vmatprep.subr.mxu0 0.0
    %2377 = vmatpush1.msra.mxu0 0.0
    %2378 = vmatprep.subr.mxu0 0.0
    %2379 = vmatpush1.msra.mxu0 0.0
    %2380 = vmatprep.subr.mxu0 0.0
    %2381 = vmatpush1.msra.mxu0 0.0
    %2382 = vmatprep.subr.mxu0 0.0
    %2383 = vmatpush1.msra.mxu0 0.0
    %2384 = vmatprep.subr.mxu0 0.0
    %2385 = vmatpush1.msra.mxu0 0.0
    %2386 = vmatprep.subr.mxu0 0.0
    %2387 = vmatpush1.msra.mxu0 0.0
    %2388 = vmatprep.subr.mxu0 0.0
    %2389 = vmatpush1.msra.mxu0 0.0
    %2390 = vmatprep.subr.mxu0 0.0
    %2391 = vmatpush1.msra.mxu0 %v86
    %2392 = vmatprep.subr.mxu0 0.0
    %2393 = vmatpush1.msra.mxu0 %v85
    %2394 = vmatprep.subr.mxu0 0.0
    %2395 = vmatpush1.msra.mxu0 %v84
    %2396 = vmatprep.subr.mxu0 0.0
    %2397 = vmatpush1.msra.mxu0 %v83
    %2398 = vmatprep.subr.mxu0 0.0
    %2399 = vmatpush2.msra.mxu0 0.0
    %2400 = vmatprep.subr.mxu0 0.0
    %2401 = vmatpush2.msra.mxu0 0.0
    %2402 = vmatprep.subr.mxu0 0.0
    %2403 = vmatpush2.msra.mxu0 0.0
    %2404 = vmatprep.subr.mxu0 0.0
    %2405 = vmatpush2.msra.mxu0 0.0
    %2406 = vmatprep.subr.mxu0 0.0
    %2407 = vmatpush2.msra.mxu0 0.0
    %2408 = vmatprep.subr.mxu0 0.0
    %2409 = vmatpush2.msra.mxu0 0.0
    %2410 = vmatprep.subr.mxu0 0.0
    %2411 = vmatpush2.msra.mxu0 0.0
    %2412 = vmatprep.subr.mxu0 0.0
    %2413 = vmatpush2.msra.mxu0 0.0
    %2414 = vmatprep.subr.mxu0 0.0
    %2415 = vmatpush2.msra.mxu0 0.0
    %2416 = vmatprep.subr.mxu0 0.0
    %2417 = vmatpush2.msra.mxu0 0.0
    %2418 = vmatprep.subr.mxu0 0.0
    %2419 = vmatpush2.msra.mxu0 0.0
    %2420 = vmatprep.subr.mxu0 0.0
    %2421 = vmatpush2.msra.mxu0 0.0
    %2422 = vmatprep.subr.mxu0 0.0
    %2423 = vmatpush2.msra.mxu0 0.0
    %2424 = vmatprep.subr.mxu0 0.0
    %2425 = vmatpush2.msra.mxu0 0.0
    %2426 = vmatprep.subr.mxu0 0.0
    %2427 = vmatpush2.msra.mxu0 0.0
    %2428 = vmatprep.subr.mxu0 0.0
    %2429 = vmatpush2.msra.mxu0 0.0
    %2430 = vmatprep.mubr.f32.mxu0 0.0
    %2431 = vmatmul.mubr.f32.gmra.mxu0 %v2364
    %v2432 = vpop.f32.mrf.mxu0
    %v2433 = vadd.f32 %v82, %v2432
    %v2434 = vpop.f32.mrf.mxu0
    %2435 = vdwg.mxu0
    %v2436 = vxor.u32 %v2433, 2147483648
    %v2437 = vmul.f32 %v2436, 1.442695
    %v2438 = vpow.pop %v2437
    %v2439 = vadd.f32 %v2438, 1.0
    %v2440 = vrcp.pop %v2439
    %v2441 = vmul.f32 1.0, %v2440
    %v2442 = vsub.f32 1.0, %v2441
    %v2444 = vmul.f32 %v2442, %v2363
    %v2445 = vmul.f32 %v2441, %v81
    %v2446 = vadd.f32 %v2444, %v2445
    %v2447 = vsel %vm93, %v2446, 0.0
    %s2448 = scalar_lea.vmem [#allocation12], 24
    %2449 = vst [vmem:[%s2448] sm:$0x3] %v2447
    %s2450 = scalar_lea.vmem [#allocation4], 24
    %v2451 = vld [vmem:[%s2450] sm:$0x3]
    %v2453 = vsel %vm93, %v2446, 0
    %2455 = vmatprep.subr.mxu0 0.0
    %2456 = vmatpush1.msra.mxu0 0.0
    %2457 = vmatprep.subr.mxu0 0.0
    %2458 = vmatpush1.msra.mxu0 0.0
    %2459 = vmatprep.subr.mxu0 0.0
    %2460 = vmatpush1.msra.mxu0 0.0
    %2461 = vmatprep.subr.mxu0 0.0
    %2462 = vmatpush1.msra.mxu0 0.0
    %2463 = vmatprep.subr.mxu0 0.0
    %2464 = vmatpush1.msra.mxu0 0.0
    %2465 = vmatprep.subr.mxu0 0.0
    %2466 = vmatpush1.msra.mxu0 0.0
    %2467 = vmatprep.subr.mxu0 0.0
    %2468 = vmatpush1.msra.mxu0 0.0
    %2469 = vmatprep.subr.mxu0 0.0
    %2470 = vmatpush1.msra.mxu0 0.0
    %2471 = vmatprep.subr.mxu0 0.0
    %2472 = vmatpush1.msra.mxu0 0.0
    %2473 = vmatprep.subr.mxu0 0.0
    %2474 = vmatpush1.msra.mxu0 0.0
    %2475 = vmatprep.subr.mxu0 0.0
    %2476 = vmatpush1.msra.mxu0 0.0
    %2477 = vmatprep.subr.mxu0 0.0
    %2478 = vmatpush1.msra.mxu0 0.0
    %2479 = vmatprep.subr.mxu0 0.0
    %2480 = vmatpush1.msra.mxu0 %v90
    %2481 = vmatprep.subr.mxu0 0.0
    %2482 = vmatpush1.msra.mxu0 %v89
    %2483 = vmatprep.subr.mxu0 0.0
    %2484 = vmatpush1.msra.mxu0 %v88
    %2485 = vmatprep.subr.mxu0 0.0
    %2486 = vmatpush1.msra.mxu0 %v87
    %2487 = vmatprep.subr.mxu0 0.0
    %2488 = vmatpush2.msra.mxu0 0.0
    %2489 = vmatprep.subr.mxu0 0.0
    %2490 = vmatpush2.msra.mxu0 0.0
    %2491 = vmatprep.subr.mxu0 0.0
    %2492 = vmatpush2.msra.mxu0 0.0
    %2493 = vmatprep.subr.mxu0 0.0
    %2494 = vmatpush2.msra.mxu0 0.0
    %2495 = vmatprep.subr.mxu0 0.0
    %2496 = vmatpush2.msra.mxu0 0.0
    %2497 = vmatprep.subr.mxu0 0.0
    %2498 = vmatpush2.msra.mxu0 0.0
    %2499 = vmatprep.subr.mxu0 0.0
    %2500 = vmatpush2.msra.mxu0 0.0
    %2501 = vmatprep.subr.mxu0 0.0
    %2502 = vmatpush2.msra.mxu0 0.0
    %2503 = vmatprep.subr.mxu0 0.0
    %2504 = vmatpush2.msra.mxu0 0.0
    %2505 = vmatprep.subr.mxu0 0.0
    %2506 = vmatpush2.msra.mxu0 0.0
    %2507 = vmatprep.subr.mxu0 0.0
    %2508 = vmatpush2.msra.mxu0 0.0
    %2509 = vmatprep.subr.mxu0 0.0
    %2510 = vmatpush2.msra.mxu0 0.0
    %2511 = vmatprep.subr.mxu0 0.0
    %2512 = vmatpush2.msra.mxu0 0.0
    %2513 = vmatprep.subr.mxu0 0.0
    %2514 = vmatpush2.msra.mxu0 0.0
    %2515 = vmatprep.subr.mxu0 0.0
    %2516 = vmatpush2.msra.mxu0 0.0
    %2517 = vmatprep.subr.mxu0 0.0
    %2518 = vmatpush2.msra.mxu0 0.0
    %2519 = vmatprep.mubr.f32.mxu0 0.0
    %2520 = vmatmul.mubr.f32.gmra.mxu0 %v2453
    %v2521 = vpop.f32.mrf.mxu0
    %v2522 = vadd.f32 0.0, %v2521
    %v2523 = vpop.f32.mrf.mxu0
    %2524 = vdwg.mxu0
    %v2525 = vadd.f32 %v2451, %v2522
    %v2526 = vxor.u32 %v2525, 2147483648
    %v2527 = vmul.f32 %v2526, 1.442695
    %v2528 = vpow.pop %v2527
    %v2529 = vadd.f32 %v2528, 1.0
    %v2530 = vrcp.pop %v2529
    %v2531 = vmul.f32 1.0, %v2530
    %v2532 = vtanh.pop %v2525
    %v2533 = vmul.f32 %v2531, %v2354
    %2535 = vrot.lane.b32.xlu0 %v2532, 32
    %v2536 = vpop.permute.xlu0 %2535
    %v2538 = vmul.f32 %v2531, %v2536
    %2540 = vrot.lane.b32.xlu0 %v2538, 32
    %v2541 = vpop.permute.xlu0 %2540
    %v2543 = vadd.f32 %v2533, %v2541
    %v2544 = vtanh.pop %v2543
    %2546 = vrot.lane.b32.xlu0 %v2544, 32
    %v2547 = vpop.permute.xlu0 %2546
    %v2549 = vmul.f32 %v2531, %v2547
    %2551 = vrot.lane.b32.xlu0 %v2549, 64
    %v2552 = vpop.permute.xlu0 %2551
    %v2553 = vsel %vm93, %v2552, 0
    %2555 = vmatprep.subr.mxu0 0.0
    %2556 = vmatpush1.msra.mxu0 0.0
    %2557 = vmatprep.subr.mxu0 0.0
    %2558 = vmatpush1.msra.mxu0 0.0
    %2559 = vmatprep.subr.mxu0 0.0
    %2560 = vmatpush1.msra.mxu0 0.0
    %2561 = vmatprep.subr.mxu0 0.0
    %2562 = vmatpush1.msra.mxu0 0.0
    %2563 = vmatprep.subr.mxu0 0.0
    %2564 = vmatpush1.msra.mxu0 0.0
    %2565 = vmatprep.subr.mxu0 0.0
    %2566 = vmatpush1.msra.mxu0 0.0
    %2567 = vmatprep.subr.mxu0 0.0
    %2568 = vmatpush1.msra.mxu0 0.0
    %2569 = vmatprep.subr.mxu0 0.0
    %2570 = vmatpush1.msra.mxu0 0.0
    %2571 = vmatprep.subr.mxu0 0.0
    %2572 = vmatpush1.msra.mxu0 0.0
    %2573 = vmatprep.subr.mxu0 0.0
    %2574 = vmatpush1.msra.mxu0 0.0
    %2575 = vmatprep.subr.mxu0 0.0
    %2576 = vmatpush1.msra.mxu0 0.0
    %2577 = vmatprep.subr.mxu0 0.0
    %2578 = vmatpush1.msra.mxu0 0.0
    %2579 = vmatprep.subr.mxu0 0.0
    %2580 = vmatpush1.msra.mxu0 %v86
    %2581 = vmatprep.subr.mxu0 0.0
    %2582 = vmatpush1.msra.mxu0 %v85
    %2583 = vmatprep.subr.mxu0 0.0
    %2584 = vmatpush1.msra.mxu0 %v84
    %2585 = vmatprep.subr.mxu0 0.0
    %2586 = vmatpush1.msra.mxu0 %v83
    %2587 = vmatprep.subr.mxu0 0.0
    %2588 = vmatpush2.msra.mxu0 0.0
    %2589 = vmatprep.subr.mxu0 0.0
    %2590 = vmatpush2.msra.mxu0 0.0
    %2591 = vmatprep.subr.mxu0 0.0
    %2592 = vmatpush2.msra.mxu0 0.0
    %2593 = vmatprep.subr.mxu0 0.0
    %2594 = vmatpush2.msra.mxu0 0.0
    %2595 = vmatprep.subr.mxu0 0.0
    %2596 = vmatpush2.msra.mxu0 0.0
    %2597 = vmatprep.subr.mxu0 0.0
    %2598 = vmatpush2.msra.mxu0 0.0
    %2599 = vmatprep.subr.mxu0 0.0
    %2600 = vmatpush2.msra.mxu0 0.0
    %2601 = vmatprep.subr.mxu0 0.0
    %2602 = vmatpush2.msra.mxu0 0.0
    %2603 = vmatprep.subr.mxu0 0.0
    %2604 = vmatpush2.msra.mxu0 0.0
    %2605 = vmatprep.subr.mxu0 0.0
    %2606 = vmatpush2.msra.mxu0 0.0
    %2607 = vmatprep.subr.mxu0 0.0
    %2608 = vmatpush2.msra.mxu0 0.0
    %2609 = vmatprep.subr.mxu0 0.0
    %2610 = vmatpush2.msra.mxu0 0.0
    %2611 = vmatprep.subr.mxu0 0.0
    %2612 = vmatpush2.msra.mxu0 0.0
    %2613 = vmatprep.subr.mxu0 0.0
    %2614 = vmatpush2.msra.mxu0 0.0
    %2615 = vmatprep.subr.mxu0 0.0
    %2616 = vmatpush2.msra.mxu0 0.0
    %2617 = vmatprep.subr.mxu0 0.0
    %2618 = vmatpush2.msra.mxu0 0.0
    %2619 = vmatprep.mubr.f32.mxu0 0.0
    %2620 = vmatmul.mubr.f32.gmra.mxu0 %v2553
    %v2621 = vpop.f32.mrf.mxu0
    %v2622 = vadd.f32 %v82, %v2621
    %v2623 = vpop.f32.mrf.mxu0
    %2624 = vdwg.mxu0
    %v2625 = vxor.u32 %v2622, 2147483648
    %v2626 = vmul.f32 %v2625, 1.442695
    %v2627 = vpow.pop %v2626
    %v2628 = vadd.f32 %v2627, 1.0
    %v2629 = vrcp.pop %v2628
    %v2630 = vmul.f32 1.0, %v2629
    %v2631 = vsub.f32 1.0, %v2630
    %v2633 = vmul.f32 %v2631, %v2552
    %v2634 = vmul.f32 %v2630, %v81
    %v2635 = vadd.f32 %v2633, %v2634
    %v2636 = vsel %vm93, %v2635, 0.0
    %s2637 = scalar_lea.vmem [#allocation12], 26
    %2638 = vst [vmem:[%s2637] sm:$0x3] %v2636
    %s2639 = scalar_lea.vmem [#allocation4], 26
    %v2640 = vld [vmem:[%s2639] sm:$0x3]
    %v2642 = vsel %vm93, %v2635, 0
    %2644 = vmatprep.subr.mxu0 0.0
    %2645 = vmatpush1.msra.mxu0 0.0
    %2646 = vmatprep.subr.mxu0 0.0
    %2647 = vmatpush1.msra.mxu0 0.0
    %2648 = vmatprep.subr.mxu0 0.0
    %2649 = vmatpush1.msra.mxu0 0.0
    %2650 = vmatprep.subr.mxu0 0.0
    %2651 = vmatpush1.msra.mxu0 0.0
    %2652 = vmatprep.subr.mxu0 0.0
    %2653 = vmatpush1.msra.mxu0 0.0
    %2654 = vmatprep.subr.mxu0 0.0
    %2655 = vmatpush1.msra.mxu0 0.0
    %2656 = vmatprep.subr.mxu0 0.0
    %2657 = vmatpush1.msra.mxu0 0.0
    %2658 = vmatprep.subr.mxu0 0.0
    %2659 = vmatpush1.msra.mxu0 0.0
    %2660 = vmatprep.subr.mxu0 0.0
    %2661 = vmatpush1.msra.mxu0 0.0
    %2662 = vmatprep.subr.mxu0 0.0
    %2663 = vmatpush1.msra.mxu0 0.0
    %2664 = vmatprep.subr.mxu0 0.0
    %2665 = vmatpush1.msra.mxu0 0.0
    %2666 = vmatprep.subr.mxu0 0.0
    %2667 = vmatpush1.msra.mxu0 0.0
    %2668 = vmatprep.subr.mxu0 0.0
    %2669 = vmatpush1.msra.mxu0 %v90
    %2670 = vmatprep.subr.mxu0 0.0
    %2671 = vmatpush1.msra.mxu0 %v89
    %2672 = vmatprep.subr.mxu0 0.0
    %2673 = vmatpush1.msra.mxu0 %v88
    %2674 = vmatprep.subr.mxu0 0.0
    %2675 = vmatpush1.msra.mxu0 %v87
    %2676 = vmatprep.subr.mxu0 0.0
    %2677 = vmatpush2.msra.mxu0 0.0
    %2678 = vmatprep.subr.mxu0 0.0
    %2679 = vmatpush2.msra.mxu0 0.0
    %2680 = vmatprep.subr.mxu0 0.0
    %2681 = vmatpush2.msra.mxu0 0.0
    %2682 = vmatprep.subr.mxu0 0.0
    %2683 = vmatpush2.msra.mxu0 0.0
    %2684 = vmatprep.subr.mxu0 0.0
    %2685 = vmatpush2.msra.mxu0 0.0
    %2686 = vmatprep.subr.mxu0 0.0
    %2687 = vmatpush2.msra.mxu0 0.0
    %2688 = vmatprep.subr.mxu0 0.0
    %2689 = vmatpush2.msra.mxu0 0.0
    %2690 = vmatprep.subr.mxu0 0.0
    %2691 = vmatpush2.msra.mxu0 0.0
    %2692 = vmatprep.subr.mxu0 0.0
    %2693 = vmatpush2.msra.mxu0 0.0
    %2694 = vmatprep.subr.mxu0 0.0
    %2695 = vmatpush2.msra.mxu0 0.0
    %2696 = vmatprep.subr.mxu0 0.0
    %2697 = vmatpush2.msra.mxu0 0.0
    %2698 = vmatprep.subr.mxu0 0.0
    %2699 = vmatpush2.msra.mxu0 0.0
    %2700 = vmatprep.subr.mxu0 0.0
    %2701 = vmatpush2.msra.mxu0 0.0
    %2702 = vmatprep.subr.mxu0 0.0
    %2703 = vmatpush2.msra.mxu0 0.0
    %2704 = vmatprep.subr.mxu0 0.0
    %2705 = vmatpush2.msra.mxu0 0.0
    %2706 = vmatprep.subr.mxu0 0.0
    %2707 = vmatpush2.msra.mxu0 0.0
    %2708 = vmatprep.mubr.f32.mxu0 0.0
    %2709 = vmatmul.mubr.f32.gmra.mxu0 %v2642
    %v2710 = vpop.f32.mrf.mxu0
    %v2711 = vadd.f32 0.0, %v2710
    %v2712 = vpop.f32.mrf.mxu0
    %2713 = vdwg.mxu0
    %v2714 = vadd.f32 %v2640, %v2711
    %v2715 = vxor.u32 %v2714, 2147483648
    %v2716 = vmul.f32 %v2715, 1.442695
    %v2717 = vpow.pop %v2716
    %v2718 = vadd.f32 %v2717, 1.0
    %v2719 = vrcp.pop %v2718
    %v2720 = vmul.f32 1.0, %v2719
    %v2721 = vtanh.pop %v2714
    %v2722 = vmul.f32 %v2720, %v2543
    %2724 = vrot.lane.b32.xlu0 %v2721, 32
    %v2725 = vpop.permute.xlu0 %2724
    %v2727 = vmul.f32 %v2720, %v2725
    %2729 = vrot.lane.b32.xlu0 %v2727, 32
    %v2730 = vpop.permute.xlu0 %2729
    %v2732 = vadd.f32 %v2722, %v2730
    %v2733 = vtanh.pop %v2732
    %2735 = vrot.lane.b32.xlu0 %v2733, 32
    %v2736 = vpop.permute.xlu0 %2735
    %v2738 = vmul.f32 %v2720, %v2736
    %2740 = vrot.lane.b32.xlu0 %v2738, 64
    %v2741 = vpop.permute.xlu0 %2740
    %v2742 = vsel %vm93, %v2741, 0
    %2744 = vmatprep.subr.mxu0 0.0
    %2745 = vmatpush1.msra.mxu0 0.0
    %2746 = vmatprep.subr.mxu0 0.0
    %2747 = vmatpush1.msra.mxu0 0.0
    %2748 = vmatprep.subr.mxu0 0.0
    %2749 = vmatpush1.msra.mxu0 0.0
    %2750 = vmatprep.subr.mxu0 0.0
    %2751 = vmatpush1.msra.mxu0 0.0
    %2752 = vmatprep.subr.mxu0 0.0
    %2753 = vmatpush1.msra.mxu0 0.0
    %2754 = vmatprep.subr.mxu0 0.0
    %2755 = vmatpush1.msra.mxu0 0.0
    %2756 = vmatprep.subr.mxu0 0.0
    %2757 = vmatpush1.msra.mxu0 0.0
    %2758 = vmatprep.subr.mxu0 0.0
    %2759 = vmatpush1.msra.mxu0 0.0
    %2760 = vmatprep.subr.mxu0 0.0
    %2761 = vmatpush1.msra.mxu0 0.0
    %2762 = vmatprep.subr.mxu0 0.0
    %2763 = vmatpush1.msra.mxu0 0.0
    %2764 = vmatprep.subr.mxu0 0.0
    %2765 = vmatpush1.msra.mxu0 0.0
    %2766 = vmatprep.subr.mxu0 0.0
    %2767 = vmatpush1.msra.mxu0 0.0
    %2768 = vmatprep.subr.mxu0 0.0
    %2769 = vmatpush1.msra.mxu0 %v86
    %2770 = vmatprep.subr.mxu0 0.0
    %2771 = vmatpush1.msra.mxu0 %v85
    %2772 = vmatprep.subr.mxu0 0.0
    %2773 = vmatpush1.msra.mxu0 %v84
    %2774 = vmatprep.subr.mxu0 0.0
    %2775 = vmatpush1.msra.mxu0 %v83
    %2776 = vmatprep.subr.mxu0 0.0
    %2777 = vmatpush2.msra.mxu0 0.0
    %2778 = vmatprep.subr.mxu0 0.0
    %2779 = vmatpush2.msra.mxu0 0.0
    %2780 = vmatprep.subr.mxu0 0.0
    %2781 = vmatpush2.msra.mxu0 0.0
    %2782 = vmatprep.subr.mxu0 0.0
    %2783 = vmatpush2.msra.mxu0 0.0
    %2784 = vmatprep.subr.mxu0 0.0
    %2785 = vmatpush2.msra.mxu0 0.0
    %2786 = vmatprep.subr.mxu0 0.0
    %2787 = vmatpush2.msra.mxu0 0.0
    %2788 = vmatprep.subr.mxu0 0.0
    %2789 = vmatpush2.msra.mxu0 0.0
    %2790 = vmatprep.subr.mxu0 0.0
    %2791 = vmatpush2.msra.mxu0 0.0
    %2792 = vmatprep.subr.mxu0 0.0
    %2793 = vmatpush2.msra.mxu0 0.0
    %2794 = vmatprep.subr.mxu0 0.0
    %2795 = vmatpush2.msra.mxu0 0.0
    %2796 = vmatprep.subr.mxu0 0.0
    %2797 = vmatpush2.msra.mxu0 0.0
    %2798 = vmatprep.subr.mxu0 0.0
    %2799 = vmatpush2.msra.mxu0 0.0
    %2800 = vmatprep.subr.mxu0 0.0
    %2801 = vmatpush2.msra.mxu0 0.0
    %2802 = vmatprep.subr.mxu0 0.0
    %2803 = vmatpush2.msra.mxu0 0.0
    %2804 = vmatprep.subr.mxu0 0.0
    %2805 = vmatpush2.msra.mxu0 0.0
    %2806 = vmatprep.subr.mxu0 0.0
    %2807 = vmatpush2.msra.mxu0 0.0
    %2808 = vmatprep.mubr.f32.mxu0 0.0
    %2809 = vmatmul.mubr.f32.gmra.mxu0 %v2742
    %v2810 = vpop.f32.mrf.mxu0
    %v2811 = vadd.f32 %v82, %v2810
    %v2812 = vpop.f32.mrf.mxu0
    %2813 = vdwg.mxu0
    %v2814 = vxor.u32 %v2811, 2147483648
    %v2815 = vmul.f32 %v2814, 1.442695
    %v2816 = vpow.pop %v2815
    %v2817 = vadd.f32 %v2816, 1.0
    %v2818 = vrcp.pop %v2817
    %v2819 = vmul.f32 1.0, %v2818
    %v2820 = vsub.f32 1.0, %v2819
    %v2822 = vmul.f32 %v2820, %v2741
    %v2823 = vmul.f32 %v2819, %v81
    %v2824 = vadd.f32 %v2822, %v2823
    %v2825 = vsel %vm93, %v2824, 0.0
    %s2826 = scalar_lea.vmem [#allocation12], 28
    %2827 = vst [vmem:[%s2826] sm:$0x3] %v2825
    %s2828 = scalar_lea.vmem [#allocation4], 28
    %v2829 = vld [vmem:[%s2828] sm:$0x3]
    %v2831 = vsel %vm93, %v2824, 0
    %2833 = vmatprep.subr.mxu0 0.0
    %2834 = vmatpush1.msra.mxu0 0.0
    %2835 = vmatprep.subr.mxu0 0.0
    %2836 = vmatpush1.msra.mxu0 0.0
    %2837 = vmatprep.subr.mxu0 0.0
    %2838 = vmatpush1.msra.mxu0 0.0
    %2839 = vmatprep.subr.mxu0 0.0
    %2840 = vmatpush1.msra.mxu0 0.0
    %2841 = vmatprep.subr.mxu0 0.0
    %2842 = vmatpush1.msra.mxu0 0.0
    %2843 = vmatprep.subr.mxu0 0.0
    %2844 = vmatpush1.msra.mxu0 0.0
    %2845 = vmatprep.subr.mxu0 0.0
    %2846 = vmatpush1.msra.mxu0 0.0
    %2847 = vmatprep.subr.mxu0 0.0
    %2848 = vmatpush1.msra.mxu0 0.0
    %2849 = vmatprep.subr.mxu0 0.0
    %2850 = vmatpush1.msra.mxu0 0.0
    %2851 = vmatprep.subr.mxu0 0.0
    %2852 = vmatpush1.msra.mxu0 0.0
    %2853 = vmatprep.subr.mxu0 0.0
    %2854 = vmatpush1.msra.mxu0 0.0
    %2855 = vmatprep.subr.mxu0 0.0
    %2856 = vmatpush1.msra.mxu0 0.0
    %2857 = vmatprep.subr.mxu0 0.0
    %2858 = vmatpush1.msra.mxu0 %v90
    %2859 = vmatprep.subr.mxu0 0.0
    %2860 = vmatpush1.msra.mxu0 %v89
    %2861 = vmatprep.subr.mxu0 0.0
    %2862 = vmatpush1.msra.mxu0 %v88
    %2863 = vmatprep.subr.mxu0 0.0
    %2864 = vmatpush1.msra.mxu0 %v87
    %2865 = vmatprep.subr.mxu0 0.0
    %2866 = vmatpush2.msra.mxu0 0.0
    %2867 = vmatprep.subr.mxu0 0.0
    %2868 = vmatpush2.msra.mxu0 0.0
    %2869 = vmatprep.subr.mxu0 0.0
    %2870 = vmatpush2.msra.mxu0 0.0
    %2871 = vmatprep.subr.mxu0 0.0
    %2872 = vmatpush2.msra.mxu0 0.0
    %2873 = vmatprep.subr.mxu0 0.0
    %2874 = vmatpush2.msra.mxu0 0.0
    %2875 = vmatprep.subr.mxu0 0.0
    %2876 = vmatpush2.msra.mxu0 0.0
    %2877 = vmatprep.subr.mxu0 0.0
    %2878 = vmatpush2.msra.mxu0 0.0
    %2879 = vmatprep.subr.mxu0 0.0
    %2880 = vmatpush2.msra.mxu0 0.0
    %2881 = vmatprep.subr.mxu0 0.0
    %2882 = vmatpush2.msra.mxu0 0.0
    %2883 = vmatprep.subr.mxu0 0.0
    %2884 = vmatpush2.msra.mxu0 0.0
    %2885 = vmatprep.subr.mxu0 0.0
    %2886 = vmatpush2.msra.mxu0 0.0
    %2887 = vmatprep.subr.mxu0 0.0
    %2888 = vmatpush2.msra.mxu0 0.0
    %2889 = vmatprep.subr.mxu0 0.0
    %2890 = vmatpush2.msra.mxu0 0.0
    %2891 = vmatprep.subr.mxu0 0.0
    %2892 = vmatpush2.msra.mxu0 0.0
    %2893 = vmatprep.subr.mxu0 0.0
    %2894 = vmatpush2.msra.mxu0 0.0
    %2895 = vmatprep.subr.mxu0 0.0
    %2896 = vmatpush2.msra.mxu0 0.0
    %2897 = vmatprep.mubr.f32.mxu0 0.0
    %2898 = vmatmul.mubr.f32.gmra.mxu0 %v2831
    %v2899 = vpop.f32.mrf.mxu0
    %v2900 = vadd.f32 0.0, %v2899
    %v2901 = vpop.f32.mrf.mxu0
    %2902 = vdwg.mxu0
    %v2903 = vadd.f32 %v2829, %v2900
    %v2904 = vxor.u32 %v2903, 2147483648
    %v2905 = vmul.f32 %v2904, 1.442695
    %v2906 = vpow.pop %v2905
    %v2907 = vadd.f32 %v2906, 1.0
    %v2908 = vrcp.pop %v2907
    %v2909 = vmul.f32 1.0, %v2908
    %v2910 = vtanh.pop %v2903
    %v2911 = vmul.f32 %v2909, %v2732
    %2913 = vrot.lane.b32.xlu0 %v2910, 32
    %v2914 = vpop.permute.xlu0 %2913
    %v2916 = vmul.f32 %v2909, %v2914
    %2918 = vrot.lane.b32.xlu0 %v2916, 32
    %v2919 = vpop.permute.xlu0 %2918
    %v2921 = vadd.f32 %v2911, %v2919
    %v2922 = vtanh.pop %v2921
    %2924 = vrot.lane.b32.xlu0 %v2922, 32
    %v2925 = vpop.permute.xlu0 %2924
    %v2927 = vmul.f32 %v2909, %v2925
    %2929 = vrot.lane.b32.xlu0 %v2927, 64
    %v2930 = vpop.permute.xlu0 %2929
    %v2931 = vsel %vm93, %v2930, 0
    %2933 = vmatprep.subr.mxu0 0.0
    %2934 = vmatpush1.msra.mxu0 0.0
    %2935 = vmatprep.subr.mxu0 0.0
    %2936 = vmatpush1.msra.mxu0 0.0
    %2937 = vmatprep.subr.mxu0 0.0
    %2938 = vmatpush1.msra.mxu0 0.0
    %2939 = vmatprep.subr.mxu0 0.0
    %2940 = vmatpush1.msra.mxu0 0.0
    %2941 = vmatprep.subr.mxu0 0.0
    %2942 = vmatpush1.msra.mxu0 0.0
    %2943 = vmatprep.subr.mxu0 0.0
    %2944 = vmatpush1.msra.mxu0 0.0
    %2945 = vmatprep.subr.mxu0 0.0
    %2946 = vmatpush1.msra.mxu0 0.0
    %2947 = vmatprep.subr.mxu0 0.0
    %2948 = vmatpush1.msra.mxu0 0.0
    %2949 = vmatprep.subr.mxu0 0.0
    %2950 = vmatpush1.msra.mxu0 0.0
    %2951 = vmatprep.subr.mxu0 0.0
    %2952 = vmatpush1.msra.mxu0 0.0
    %2953 = vmatprep.subr.mxu0 0.0
    %2954 = vmatpush1.msra.mxu0 0.0
    %2955 = vmatprep.subr.mxu0 0.0
    %2956 = vmatpush1.msra.mxu0 0.0
    %2957 = vmatprep.subr.mxu0 0.0
    %2958 = vmatpush1.msra.mxu0 %v86
    %2959 = vmatprep.subr.mxu0 0.0
    %2960 = vmatpush1.msra.mxu0 %v85
    %2961 = vmatprep.subr.mxu0 0.0
    %2962 = vmatpush1.msra.mxu0 %v84
    %2963 = vmatprep.subr.mxu0 0.0
    %2964 = vmatpush1.msra.mxu0 %v83
    %2965 = vmatprep.subr.mxu0 0.0
    %2966 = vmatpush2.msra.mxu0 0.0
    %2967 = vmatprep.subr.mxu0 0.0
    %2968 = vmatpush2.msra.mxu0 0.0
    %2969 = vmatprep.subr.mxu0 0.0
    %2970 = vmatpush2.msra.mxu0 0.0
    %2971 = vmatprep.subr.mxu0 0.0
    %2972 = vmatpush2.msra.mxu0 0.0
    %2973 = vmatprep.subr.mxu0 0.0
    %2974 = vmatpush2.msra.mxu0 0.0
    %2975 = vmatprep.subr.mxu0 0.0
    %2976 = vmatpush2.msra.mxu0 0.0
    %2977 = vmatprep.subr.mxu0 0.0
    %2978 = vmatpush2.msra.mxu0 0.0
    %2979 = vmatprep.subr.mxu0 0.0
    %2980 = vmatpush2.msra.mxu0 0.0
    %2981 = vmatprep.subr.mxu0 0.0
    %2982 = vmatpush2.msra.mxu0 0.0
    %2983 = vmatprep.subr.mxu0 0.0
    %2984 = vmatpush2.msra.mxu0 0.0
    %2985 = vmatprep.subr.mxu0 0.0
    %2986 = vmatpush2.msra.mxu0 0.0
    %2987 = vmatprep.subr.mxu0 0.0
    %2988 = vmatpush2.msra.mxu0 0.0
    %2989 = vmatprep.subr.mxu0 0.0
    %2990 = vmatpush2.msra.mxu0 0.0
    %2991 = vmatprep.subr.mxu0 0.0
    %2992 = vmatpush2.msra.mxu0 0.0
    %2993 = vmatprep.subr.mxu0 0.0
    %2994 = vmatpush2.msra.mxu0 0.0
    %2995 = vmatprep.subr.mxu0 0.0
    %2996 = vmatpush2.msra.mxu0 0.0
    %2997 = vmatprep.mubr.f32.mxu0 0.0
    %2998 = vmatmul.mubr.f32.gmra.mxu0 %v2931
    %v2999 = vpop.f32.mrf.mxu0
    %v3000 = vadd.f32 %v82, %v2999
    %v3001 = vpop.f32.mrf.mxu0
    %3002 = vdwg.mxu0
    %v3003 = vxor.u32 %v3000, 2147483648
    %v3004 = vmul.f32 %v3003, 1.442695
    %v3005 = vpow.pop %v3004
    %v3006 = vadd.f32 %v3005, 1.0
    %v3007 = vrcp.pop %v3006
    %v3008 = vmul.f32 1.0, %v3007
    %v3009 = vsub.f32 1.0, %v3008
    %v3011 = vmul.f32 %v3009, %v2930
    %v3012 = vmul.f32 %v3008, %v81
    %v3013 = vadd.f32 %v3011, %v3012
    %v3014 = vsel %vm93, %v3013, 0.0
    %s3015 = scalar_lea.vmem [#allocation12], 30
    %3016 = vst [vmem:[%s3015] sm:$0x3] %v3014
    %s3017 = scalar_lea.vmem [#allocation4], 30
    %v3018 = vld [vmem:[%s3017] sm:$0x3]
    %v3020 = vsel %vm93, %v3013, 0
    %3022 = vmatprep.subr.mxu0 0.0
    %3023 = vmatpush1.msra.mxu0 0.0
    %3024 = vmatprep.subr.mxu0 0.0
    %3025 = vmatpush1.msra.mxu0 0.0
    %3026 = vmatprep.subr.mxu0 0.0
    %3027 = vmatpush1.msra.mxu0 0.0
    %3028 = vmatprep.subr.mxu0 0.0
    %3029 = vmatpush1.msra.mxu0 0.0
    %3030 = vmatprep.subr.mxu0 0.0
    %3031 = vmatpush1.msra.mxu0 0.0
    %3032 = vmatprep.subr.mxu0 0.0
    %3033 = vmatpush1.msra.mxu0 0.0
    %3034 = vmatprep.subr.mxu0 0.0
    %3035 = vmatpush1.msra.mxu0 0.0
    %3036 = vmatprep.subr.mxu0 0.0
    %3037 = vmatpush1.msra.mxu0 0.0
    %3038 = vmatprep.subr.mxu0 0.0
    %3039 = vmatpush1.msra.mxu0 0.0
    %3040 = vmatprep.subr.mxu0 0.0
    %3041 = vmatpush1.msra.mxu0 0.0
    %3042 = vmatprep.subr.mxu0 0.0
    %3043 = vmatpush1.msra.mxu0 0.0
    %3044 = vmatprep.subr.mxu0 0.0
    %3045 = vmatpush1.msra.mxu0 0.0
    %3046 = vmatprep.subr.mxu0 0.0
    %3047 = vmatpush1.msra.mxu0 %v90
    %3048 = vmatprep.subr.mxu0 0.0
    %3049 = vmatpush1.msra.mxu0 %v89
    %3050 = vmatprep.subr.mxu0 0.0
    %3051 = vmatpush1.msra.mxu0 %v88
    %3052 = vmatprep.subr.mxu0 0.0
    %3053 = vmatpush1.msra.mxu0 %v87
    %3054 = vmatprep.subr.mxu0 0.0
    %3055 = vmatpush2.msra.mxu0 0.0
    %3056 = vmatprep.subr.mxu0 0.0
    %3057 = vmatpush2.msra.mxu0 0.0
    %3058 = vmatprep.subr.mxu0 0.0
    %3059 = vmatpush2.msra.mxu0 0.0
    %3060 = vmatprep.subr.mxu0 0.0
    %3061 = vmatpush2.msra.mxu0 0.0
    %3062 = vmatprep.subr.mxu0 0.0
    %3063 = vmatpush2.msra.mxu0 0.0
    %3064 = vmatprep.subr.mxu0 0.0
    %3065 = vmatpush2.msra.mxu0 0.0
    %3066 = vmatprep.subr.mxu0 0.0
    %3067 = vmatpush2.msra.mxu0 0.0
    %3068 = vmatprep.subr.mxu0 0.0
    %3069 = vmatpush2.msra.mxu0 0.0
    %3070 = vmatprep.subr.mxu0 0.0
    %3071 = vmatpush2.msra.mxu0 0.0
    %3072 = vmatprep.subr.mxu0 0.0
    %3073 = vmatpush2.msra.mxu0 0.0
    %3074 = vmatprep.subr.mxu0 0.0
    %3075 = vmatpush2.msra.mxu0 0.0
    %3076 = vmatprep.subr.mxu0 0.0
    %3077 = vmatpush2.msra.mxu0 0.0
    %3078 = vmatprep.subr.mxu0 0.0
    %3079 = vmatpush2.msra.mxu0 0.0
    %3080 = vmatprep.subr.mxu0 0.0
    %3081 = vmatpush2.msra.mxu0 0.0
    %3082 = vmatprep.subr.mxu0 0.0
    %3083 = vmatpush2.msra.mxu0 0.0
    %3084 = vmatprep.subr.mxu0 0.0
    %3085 = vmatpush2.msra.mxu0 0.0
    %3086 = vmatprep.mubr.f32.mxu0 0.0
    %3087 = vmatmul.mubr.f32.gmra.mxu0 %v3020
    %v3088 = vpop.f32.mrf.mxu0
    %v3089 = vadd.f32 0.0, %v3088
    %v3090 = vpop.f32.mrf.mxu0
    %3091 = vdwg.mxu0
    %v3092 = vadd.f32 %v3018, %v3089
    %v3093 = vxor.u32 %v3092, 2147483648
    %v3094 = vmul.f32 %v3093, 1.442695
    %v3095 = vpow.pop %v3094
    %v3096 = vadd.f32 %v3095, 1.0
    %v3097 = vrcp.pop %v3096
    %v3098 = vmul.f32 1.0, %v3097
    %v3099 = vtanh.pop %v3092
    %v3100 = vmul.f32 %v3098, %v2921
    %3102 = vrot.lane.b32.xlu0 %v3099, 32
    %v3103 = vpop.permute.xlu0 %3102
    %v3105 = vmul.f32 %v3098, %v3103
    %3107 = vrot.lane.b32.xlu0 %v3105, 32
    %v3108 = vpop.permute.xlu0 %3107
    %v3110 = vadd.f32 %v3100, %v3108
    %v3111 = vtanh.pop %v3110
    %3113 = vrot.lane.b32.xlu0 %v3111, 32
    %v3114 = vpop.permute.xlu0 %3113
    %v3116 = vmul.f32 %v3098, %v3114
    %3118 = vrot.lane.b32.xlu0 %v3116, 64
    %v3119 = vpop.permute.xlu0 %3118
    %vm3121 = vcmask 254976
    %3122 = vst.msk [vmem:[#allocation2] sm:$0x3] %vm3121, %v3119
    %3124 = vrot.lane.b32.xlu0 %v3110, 96
    %v3125 = vpop.permute.xlu0 %3124
    %3127 = vst.msk [vmem:[#allocation3] sm:$0x3] %vm3121, %v3125
    // Predicated region
    $region42: #{tpu_custom_call.1} parent=1 // pred_check
      _
    $region43: #{tpu_custom_call.1} parent=1 // pred_check_branch
      %3129 = sbr.rel (0) target = $region45
    $region44: #{tpu_custom_call.1} parent=1 // pred_region
      %s3131 = ssub.s32 512, 512
      %3132 = vsyncadd [#allocation6], %s3131
      %s3133 = sshll.u32 [#allocation12], 4
      %s3134 = int_to_ptr.vmem [resolvable:$true] %s3133
      %3139 = dma.vmem_to_hbm [thread:$0]  %s3134, 512, %s5, [#allocation6], 32, 32, 2
    $region45: #{tpu_custom_call.1} parent=1 // pred_fallthru
      _
    // Predicated region
    $region46: #{tpu_custom_call.1} parent=1 // pred_check
      _
    $region47: #{tpu_custom_call.1} parent=1 // pred_check_branch
      %3141 = sbr.rel (0) target = $region49
    $region48: #{tpu_custom_call.1} parent=1 // pred_region
      %3142 = dma.done [#allocation6], 512
    $region49: #{tpu_custom_call.1} parent=1 // pred_fallthru
      _
    %3143 = vsyncpa [#allocation5], 1
    %3144 = vsyncpa [#allocation8], 1
    %3145 = vsyncpa [#allocation11], 1
    %3146 = vsyncpa [#allocation6], 1

// kernel: tpu_custom_call.1
$region0: #{tpu_custom_call.1}
  #allocation0 [shape = 'u32[]', space=smem, size = 0x4, offset = 0x4, fixed_abs, tag = 'smem constant byte address 0x4 - core index']
  #allocation1 [shape = 'u32[144,128]{1,0:T(1,128)}', space=vmem, size = 0x12000, scoped, tag = 'internal scratch']
  #allocation2 [shape = 'f32[2,32]{1,0:T(2,128)}', space=vmem, size = 0x400, scoped, tag = 'scratch operand']
  #allocation3 [shape = 'f32[2,32]{1,0:T(2,128)}', space=vmem, size = 0x400, scoped, tag = 'scratch operand']
  %s0 = inlined_call_operand.hbm [shape: f32[16,2,128], index: 0, kind: input, shape index: {}]
  %s1 = inlined_call_operand.hbm [shape: f32[2,32], index: 1, kind: input, shape index: {}]
  %s2 = inlined_call_operand.vmem [shape: f32[2,32], index: 2, kind: input, shape index: {}]
  %s3 = inlined_call_operand.hbm [shape: f32[32,32], index: 3, kind: input, shape index: {}]
  %s4 = inlined_call_operand.hbm [shape: f32[32,128], index: 4, kind: input, shape index: {}]
  %s5 = inlined_call_operand.hbm [shape: f32[16,2,128], index: 5, kind: output, shape index: {}]
  %s6 = sld [smem:[#allocation0]]
  $region50: #{tpu_custom_call.1} parent=0
    _
  %s8 = ssub.s32 1, %s6
  %s9 = scalar_select 0, %s8, %s6
  $region1: #{tpu_custom_call.1} parent=0
    #allocation4 [shape = 'u8[16384]{0}', space=vmem, size = 0x4000, scoped, tag = 'input window, operand 0, single buffered']
    #allocation5 [shape = 's32[1]{0}', space=sflag, size = 0x4, scoped, tag = 'scoped memory for tpu_custom_call.1']
    #allocation6 [shape = 's32[1]{0}', space=sflag, size = 0x4, scoped, tag = 'scoped memory for tpu_custom_call.1']
    #allocation7 [shape = 'u8[1024]{0}', space=vmem, size = 0x400, scoped, tag = 'input window, operand 1, single buffered']
    #allocation8 [shape = 's32[1]{0}', space=sflag, size = 0x4, scoped, tag = 'scoped memory for tpu_custom_call.1']
    #allocation9 [shape = 'u8[16384]{0}', space=vmem, size = 0x4000, scoped, tag = 'input window, operand 3, single buffered']
    #allocation10 [shape = 'u8[16384]{0}', space=vmem, size = 0x4000, scoped, tag = 'input window, operand 4, single buffered']
    #allocation11 [shape = 's32[1]{0}', space=sflag, size = 0x4, scoped, tag = 'scoped memory for tpu_custom_call.1']
    #allocation12 [shape = 'u8[16384]{0}', space=vmem, size = 0x4000, scoped, tag = 'output window, operand 0, single buffered']
    %10 = vsyncpa [#allocation5], 0
    %11 = vsyncpa [#allocation8], 0
    %12 = vsyncpa [#allocation11], 0
    %13 = vsyncpa [#allocation6], 0
    // Predicated region
    $region2: #{tpu_custom_call.1} parent=1 // pred_check
      _
    $region3: #{tpu_custom_call.1} parent=1 // pred_check_branch
      %15 = sbr.rel (0) target = $region5
    $region4: #{tpu_custom_call.1} parent=1 // pred_region
      %s17 = ssub.s32 512, 512
      %18 = vsyncadd [#allocation5], %s17
      %s19 = sshll.u32 [#allocation4], 4
      %s20 = int_to_ptr.vmem [resolvable:$true] %s19
      %25 = dma.hbm_to_vmem [thread:$0]  %s0, 512, %s20, [#allocation5], 32, 32, 2
    $region5: #{tpu_custom_call.1} parent=1 // pred_fallthru
      _
    // Predicated region
    $region6: #{tpu_custom_call.1} parent=1 // pred_check
      _
    $region7: #{tpu_custom_call.1} parent=1 // pred_check_branch
      %27 = sbr.rel (0) target = $region9
    $region8: #{tpu_custom_call.1} parent=1 // pred_region
      %s29 = ssub.s32 32, 32
      %30 = vsyncadd [#allocation8], %s29
      %s32 = sshll.u32 [#allocation7], 4
      %s33 = int_to_ptr.vmem [resolvable:$true] %s32
      %35 = dma.hbm_to_vmem [thread:$0]  %s1, 32, %s33, [#allocation8]
    $region9: #{tpu_custom_call.1} parent=1 // pred_fallthru
      _
    // Predicated region
    $region10: #{tpu_custom_call.1} parent=1 // pred_check
      _
    $region11: #{tpu_custom_call.1} parent=1 // pred_check_branch
      %37 = sbr.rel (0) target = $region13
    $region12: #{tpu_custom_call.1} parent=1 // pred_region
      _
    $region13: #{tpu_custom_call.1} parent=1 // pred_fallthru
      _
    // Predicated region
    $region14: #{tpu_custom_call.1} parent=1 // pred_check
      _
    $region15: #{tpu_custom_call.1} parent=1 // pred_check_branch
      %39 = sbr.rel (0) target = $region17
    $region16: #{tpu_custom_call.1} parent=1 // pred_region
      %s41 = ssub.s32 512, 512
      %42 = vsyncadd [#allocation8], %s41
      %s43 = sshll.u32 [#allocation9], 4
      %s44 = int_to_ptr.vmem [resolvable:$true] %s43
      %49 = dma.hbm_to_vmem [thread:$0]  %s3, 512, %s44, [#allocation8], 128, 128, 8
    $region17: #{tpu_custom_call.1} parent=1 // pred_fallthru
      _
    // Predicated region
    $region18: #{tpu_custom_call.1} parent=1 // pred_check
      _
    $region19: #{tpu_custom_call.1} parent=1 // pred_check_branch
      %51 = sbr.rel (0) target = $region21
    $region20: #{tpu_custom_call.1} parent=1 // pred_region
      %s53 = ssub.s32 512, 512
      %54 = vsyncadd [#allocation11], %s53
      %s55 = sshll.u32 [#allocation10], 4
      %s56 = int_to_ptr.vmem [resolvable:$true] %s55
      %61 = dma.hbm_to_vmem [thread:$0]  %s4, 512, %s56, [#allocation11], 128, 128, 8
    $region21: #{tpu_custom_call.1} parent=1 // pred_fallthru
      _
    // Predicated region
    $region22: #{tpu_custom_call.1} parent=1 // pred_check
      _
    $region23: #{tpu_custom_call.1} parent=1 // pred_check_branch
      %63 = sbr.rel (0) target = $region25
    $region24: #{tpu_custom_call.1} parent=1 // pred_region
      %64 = dma.done [#allocation5], 512
    $region25: #{tpu_custom_call.1} parent=1 // pred_fallthru
      _
    // Predicated region
    $region26: #{tpu_custom_call.1} parent=1 // pred_check
      _
    $region27: #{tpu_custom_call.1} parent=1 // pred_check_branch
      %66 = sbr.rel (0) target = $region29
    $region28: #{tpu_custom_call.1} parent=1 // pred_region
      %67 = dma.done [#allocation8], 32
    $region29: #{tpu_custom_call.1} parent=1 // pred_fallthru
      _
    // Predicated region
    $region30: #{tpu_custom_call.1} parent=1 // pred_check
      _
    $region31: #{tpu_custom_call.1} parent=1 // pred_check_branch
      %69 = sbr.rel (0) target = $region33
    $region32: #{tpu_custom_call.1} parent=1 // pred_region
      %70 = dma.done [#allocation8], 512
    $region33: #{tpu_custom_call.1} parent=1 // pred_fallthru
      _
    // Predicated region
    $region34: #{tpu_custom_call.1} parent=1 // pred_check
      _
    $region35: #{tpu_custom_call.1} parent=1 // pred_check_branch
      %72 = sbr.rel (0) target = $region37
    $region36: #{tpu_custom_call.1} parent=1 // pred_region
      %73 = dma.done [#allocation11], 512
    $region37: #{tpu_custom_call.1} parent=1 // pred_fallthru
      _
    %p74 = scmp.eq.s32.totalorder 0, 0
    // Predicated region
    $region38: #{tpu_custom_call.1} parent=1 // pred_check
      %p75 = pneg %p74
    $region39: #{tpu_custom_call.1} parent=1 // pred_check_branch
      %77 = sbr.rel (%p75) target = $region41
    $region40: #{tpu_custom_call.1} parent=1 // pred_region
      %vm78 = vcmask 254976
      %79 = vst.msk [vmem:[#allocation2] sm:$0x3] %vm78, 0.0
      %80 = vst.msk [vmem:[#allocation3] sm:$0x3] %vm78, 0.0
    $region41: #{tpu_custom_call.1} parent=1 // pred_fallthru
      _
    %v81 = vld [vmem:[#allocation7] sm:$0x3]
    %v82 = vld [vmem:[%s2] sm:$0x3]
    %v83 = vld [vmem:[#allocation9] sm:$0xff]
    %v84 = vld [vmem:[#allocation9 + $0x8] sm:$0xff]
    %v85 = vld [vmem:[#allocation9 + $0x10] sm:$0xff]
    %v86 = vld [vmem:[#allocation9 + $0x18] sm:$0xff]
    %v87 = vld [vmem:[#allocation10] sm:$0xff]
    %v88 = vld [vmem:[#allocation10 + $0x8] sm:$0xff]
    %v89 = vld [vmem:[#allocation10 + $0x10] sm:$0xff]
    %v90 = vld [vmem:[#allocation10 + $0x18] sm:$0xff]
    %v91 = vld [vmem:[#allocation2] sm:$0x3]
    %v92 = vld [vmem:[#allocation3] sm:$0x3]
    %vm93 = vcmask 261120
    %v95 = vsel %vm93, %v91, 0
    %97 = vmatprep.subr.mxu0 0.0
    %98 = vmatpush1.msra.mxu0 0.0
    %99 = vmatprep.subr.mxu0 0.0
    %100 = vmatpush1.msra.mxu0 0.0
    %101 = vmatprep.subr.mxu0 0.0
    %102 = vmatpush1.msra.mxu0 0.0
    %103 = vmatprep.subr.mxu0 0.0
    %104 = vmatpush1.msra.mxu0 0.0
    %105 = vmatprep.subr.mxu0 0.0
    %106 = vmatpush1.msra.mxu0 0.0
    %107 = vmatprep.subr.mxu0 0.0
    %108 = vmatpush1.msra.mxu0 0.0
    %109 = vmatprep.subr.mxu0 0.0
    %110 = vmatpush1.msra.mxu0 0.0
    %111 = vmatprep.subr.mxu0 0.0
    %112 = vmatpush1.msra.mxu0 0.0
    %113 = vmatprep.subr.mxu0 0.0
    %114 = vmatpush1.msra.mxu0 0.0
    %115 = vmatprep.subr.mxu0 0.0
    %116 = vmatpush1.msra.mxu0 0.0
    %117 = vmatprep.subr.mxu0 0.0
    %118 = vmatpush1.msra.mxu0 0.0
    %119 = vmatprep.subr.mxu0 0.0
    %120 = vmatpush1.msra.mxu0 0.0
    %121 = vmatprep.subr.mxu0 0.0
    %122 = vmatpush1.msra.mxu0 %v86
    %123 = vmatprep.subr.mxu0 0.0
    %124 = vmatpush1.msra.mxu0 %v85
    %125 = vmatprep.subr.mxu0 0.0
    %126 = vmatpush1.msra.mxu0 %v84
    %127 = vmatprep.subr.mxu0 0.0
    %128 = vmatpush1.msra.mxu0 %v83
    %129 = vmatprep.subr.mxu0 0.0
    %130 = vmatpush2.msra.mxu0 0.0
    %131 = vmatprep.subr.mxu0 0.0
    %132 = vmatpush2.msra.mxu0 0.0
    %133 = vmatprep.subr.mxu0 0.0
    %134 = vmatpush2.msra.mxu0 0.0
    %135 = vmatprep.subr.mxu0 0.0
    %136 = vmatpush2.msra.mxu0 0.0
    %137 = vmatprep.subr.mxu0 0.0
    %138 = vmatpush2.msra.mxu0 0.0
    %139 = vmatprep.subr.mxu0 0.0
    %140 = vmatpush2.msra.mxu0 0.0
    %141 = vmatprep.subr.mxu0 0.0
    %142 = vmatpush2.msra.mxu0 0.0
    %143 = vmatprep.subr.mxu0 0.0
    %144 = vmatpush2.msra.mxu0 0.0
    %145 = vmatprep.subr.mxu0 0.0
    %146 = vmatpush2.msra.mxu0 0.0
    %147 = vmatprep.subr.mxu0 0.0
    %148 = vmatpush2.msra.mxu0 0.0
    %149 = vmatprep.subr.mxu0 0.0
    %150 = vmatpush2.msra.mxu0 0.0
    %151 = vmatprep.subr.mxu0 0.0
    %152 = vmatpush2.msra.mxu0 0.0
    %153 = vmatprep.subr.mxu0 0.0
    %154 = vmatpush2.msra.mxu0 0.0
    %155 = vmatprep.subr.mxu0 0.0
    %156 = vmatpush2.msra.mxu0 0.0
    %157 = vmatprep.subr.mxu0 0.0
    %158 = vmatpush2.msra.mxu0 0.0
    %159 = vmatprep.subr.mxu0 0.0
    %160 = vmatpush2.msra.mxu0 0.0
    %161 = vmatprep.mubr.f32.mxu0 0.0
    %162 = vmatmul.mubr.f32.gmra.mxu0 %v95
    %v163 = vpop.f32.mrf.mxu0
    %v164 = vadd.f32 %v82, %v163
    %v165 = vpop.f32.mrf.mxu0
    %166 = vdwg.mxu0
    %v167 = vxor.u32 %v164, 2147483648
    %v168 = vmul.f32 %v167, 1.442695
    %v169 = vpow.pop %v168
    %v170 = vadd.f32 %v169, 1.0
    %v171 = vrcp.pop %v170
    %v172 = vmul.f32 1.0, %v171
    %v173 = vsub.f32 1.0, %v172
    %v174 = vmul.f32 %v173, %v91
    %v175 = vmul.f32 %v172, %v81
    %v176 = vadd.f32 %v174, %v175
    %v177 = vsel %vm93, %v176, 0.0
    %178 = vst [vmem:[#allocation12] sm:$0x3] %v177
    %v179 = vld [vmem:[#allocation4] sm:$0x3]
    %v181 = vsel %vm93, %v176, 0
    %183 = vmatprep.subr.mxu0 0.0
    %184 = vmatpush1.msra.mxu0 0.0
    %185 = vmatprep.subr.mxu0 0.0
    %186 = vmatpush1.msra.mxu0 0.0
    %187 = vmatprep.subr.mxu0 0.0
    %188 = vmatpush1.msra.mxu0 0.0
    %189 = vmatprep.subr.mxu0 0.0
    %190 = vmatpush1.msra.mxu0 0.0
    %191 = vmatprep.subr.mxu0 0.0
    %192 = vmatpush1.msra.mxu0 0.0
    %193 = vmatprep.subr.mxu0 0.0
    %194 = vmatpush1.msra.mxu0 0.0
    %195 = vmatprep.subr.mxu0 0.0
    %196 = vmatpush1.msra.mxu0 0.0
    %197 = vmatprep.subr.mxu0 0.0
    %198 = vmatpush1.msra.mxu0 0.0
    %199 = vmatprep.subr.mxu0 0.0
    %200 = vmatpush1.msra.mxu0 0.0
    %201 = vmatprep.subr.mxu0 0.0
    %202 = vmatpush1.msra.mxu0 0.0
    %203 = vmatprep.subr.mxu0 0.0
    %204 = vmatpush1.msra.mxu0 0.0
    %205 = vmatprep.subr.mxu0 0.0
    %206 = vmatpush1.msra.mxu0 0.0
    %207 = vmatprep.subr.mxu0 0.0
    %208 = vmatpush1.msra.mxu0 %v90
    %209 = vmatprep.subr.mxu0 0.0
    %210 = vmatpush1.msra.mxu0 %v89
    %211 = vmatprep.subr.mxu0 0.0
    %212 = vmatpush1.msra.mxu0 %v88
    %213 = vmatprep.subr.mxu0 0.0
    %214 = vmatpush1.msra.mxu0 %v87
    %215 = vmatprep.subr.mxu0 0.0
    %216 = vmatpush2.msra.mxu0 0.0
    %217 = vmatprep.subr.mxu0 0.0
    %218 = vmatpush2.msra.mxu0 0.0
    %219 = vmatprep.subr.mxu0 0.0
    %220 = vmatpush2.msra.mxu0 0.0
    %221 = vmatprep.subr.mxu0 0.0
    %222 = vmatpush2.msra.mxu0 0.0
    %223 = vmatprep.subr.mxu0 0.0
    %224 = vmatpush2.msra.mxu0 0.0
    %225 = vmatprep.subr.mxu0 0.0
    %226 = vmatpush2.msra.mxu0 0.0
    %227 = vmatprep.subr.mxu0 0.0
    %228 = vmatpush2.msra.mxu0 0.0
    %229 = vmatprep.subr.mxu0 0.0
    %230 = vmatpush2.msra.mxu0 0.0
    %231 = vmatprep.subr.mxu0 0.0
    %232 = vmatpush2.msra.mxu0 0.0
    %233 = vmatprep.subr.mxu0 0.0
    %234 = vmatpush2.msra.mxu0 0.0
    %235 = vmatprep.subr.mxu0 0.0
    %236 = vmatpush2.msra.mxu0 0.0
    %237 = vmatprep.subr.mxu0 0.0
    %238 = vmatpush2.msra.mxu0 0.0
    %239 = vmatprep.subr.mxu0 0.0
    %240 = vmatpush2.msra.mxu0 0.0
    %241 = vmatprep.subr.mxu0 0.0
    %242 = vmatpush2.msra.mxu0 0.0
    %243 = vmatprep.subr.mxu0 0.0
    %244 = vmatpush2.msra.mxu0 0.0
    %245 = vmatprep.subr.mxu0 0.0
    %246 = vmatpush2.msra.mxu0 0.0
    %247 = vmatprep.mubr.f32.mxu0 0.0
    %248 = vmatmul.mubr.f32.gmra.mxu0 %v181
    %v249 = vpop.f32.mrf.mxu0
    %v250 = vadd.f32 0.0, %v249
    %v251 = vpop.f32.mrf.mxu0
    %252 = vdwg.mxu0
    %v253 = vadd.f32 %v179, %v250
    %v254 = vxor.u32 %v253, 2147483648
    %v255 = vmul.f32 %v254, 1.442695
    %v256 = vpow.pop %v255
    %v257 = vadd.f32 %v256, 1.0
    %v258 = vrcp.pop %v257
    %v259 = vmul.f32 1.0, %v258
    %v260 = vtanh.pop %v253
    %262 = vrot.lane.b32.xlu0 %v92, 32
    %v263 = vpop.permute.xlu0 %262
    %v265 = vmul.f32 %v259, %v263
    %267 = vrot.lane.b32.xlu0 %v260, 32
    %v268 = vpop.permute.xlu0 %267
    %v270 = vmul.f32 %v259, %v268
    %272 = vrot.lane.b32.xlu0 %v270, 32
    %v273 = vpop.permute.xlu0 %272
    %v275 = vadd.f32 %v265, %v273
    %v276 = vtanh.pop %v275
    %278 = vrot.lane.b32.xlu0 %v276, 32
    %v279 = vpop.permute.xlu0 %278
    %v281 = vmul.f32 %v259, %v279
    %283 = vrot.lane.b32.xlu0 %v281, 64
    %v284 = vpop.permute.xlu0 %283
    %v285 = vsel %vm93, %v284, 0
    %287 = vmatprep.subr.mxu0 0.0
    %288 = vmatpush1.msra.mxu0 0.0
    %289 = vmatprep.subr.mxu0 0.0
    %290 = vmatpush1.msra.mxu0 0.0
    %291 = vmatprep.subr.mxu0 0.0
    %292 = vmatpush1.msra.mxu0 0.0
    %293 = vmatprep.subr.mxu0 0.0
    %294 = vmatpush1.msra.mxu0 0.0
    %295 = vmatprep.subr.mxu0 0.0
    %296 = vmatpush1.msra.mxu0 0.0
    %297 = vmatprep.subr.mxu0 0.0
    %298 = vmatpush1.msra.mxu0 0.0
    %299 = vmatprep.subr.mxu0 0.0
    %300 = vmatpush1.msra.mxu0 0.0
    %301 = vmatprep.subr.mxu0 0.0
    %302 = vmatpush1.msra.mxu0 0.0
    %303 = vmatprep.subr.mxu0 0.0
    %304 = vmatpush1.msra.mxu0 0.0
    %305 = vmatprep.subr.mxu0 0.0
    %306 = vmatpush1.msra.mxu0 0.0
    %307 = vmatprep.subr.mxu0 0.0
    %308 = vmatpush1.msra.mxu0 0.0
    %309 = vmatprep.subr.mxu0 0.0
    %310 = vmatpush1.msra.mxu0 0.0
    %311 = vmatprep.subr.mxu0 0.0
    %312 = vmatpush1.msra.mxu0 %v86
    %313 = vmatprep.subr.mxu0 0.0
    %314 = vmatpush1.msra.mxu0 %v85
    %315 = vmatprep.subr.mxu0 0.0
    %316 = vmatpush1.msra.mxu0 %v84
    %317 = vmatprep.subr.mxu0 0.0
    %318 = vmatpush1.msra.mxu0 %v83
    %319 = vmatprep.subr.mxu0 0.0
    %320 = vmatpush2.msra.mxu0 0.0
    %321 = vmatprep.subr.mxu0 0.0
    %322 = vmatpush2.msra.mxu0 0.0
    %323 = vmatprep.subr.mxu0 0.0
    %324 = vmatpush2.msra.mxu0 0.0
    %325 = vmatprep.subr.mxu0 0.0
    %326 = vmatpush2.msra.mxu0 0.0
    %327 = vmatprep.subr.mxu0 0.0
    %328 = vmatpush2.msra.mxu0 0.0
    %329 = vmatprep.subr.mxu0 0.0
    %330 = vmatpush2.msra.mxu0 0.0
    %331 = vmatprep.subr.mxu0 0.0
    %332 = vmatpush2.msra.mxu0 0.0
    %333 = vmatprep.subr.mxu0 0.0
    %334 = vmatpush2.msra.mxu0 0.0
    %335 = vmatprep.subr.mxu0 0.0
    %336 = vmatpush2.msra.mxu0 0.0
    %337 = vmatprep.subr.mxu0 0.0
    %338 = vmatpush2.msra.mxu0 0.0
    %339 = vmatprep.subr.mxu0 0.0
    %340 = vmatpush2.msra.mxu0 0.0
    %341 = vmatprep.subr.mxu0 0.0
    %342 = vmatpush2.msra.mxu0 0.0
    %343 = vmatprep.subr.mxu0 0.0
    %344 = vmatpush2.msra.mxu0 0.0
    %345 = vmatprep.subr.mxu0 0.0
    %346 = vmatpush2.msra.mxu0 0.0
    %347 = vmatprep.subr.mxu0 0.0
    %348 = vmatpush2.msra.mxu0 0.0
    %349 = vmatprep.subr.mxu0 0.0
    %350 = vmatpush2.msra.mxu0 0.0
    %351 = vmatprep.mubr.f32.mxu0 0.0
    %352 = vmatmul.mubr.f32.gmra.mxu0 %v285
    %v353 = vpop.f32.mrf.mxu0
    %v354 = vadd.f32 %v82, %v353
    %v355 = vpop.f32.mrf.mxu0
    %356 = vdwg.mxu0
    %v357 = vxor.u32 %v354, 2147483648
    %v358 = vmul.f32 %v357, 1.442695
    %v359 = vpow.pop %v358
    %v360 = vadd.f32 %v359, 1.0
    %v361 = vrcp.pop %v360
    %v362 = vmul.f32 1.0, %v361
    %v363 = vsub.f32 1.0, %v362
    %v365 = vmul.f32 %v363, %v284
    %v366 = vmul.f32 %v362, %v81
    %v367 = vadd.f32 %v365, %v366
    %v368 = vsel %vm93, %v367, 0.0
    %s369 = scalar_lea.vmem [#allocation12], 2
    %370 = vst [vmem:[%s369] sm:$0x3] %v368
    %s371 = scalar_lea.vmem [#allocation4], 2
    %v372 = vld [vmem:[%s371] sm:$0x3]
    %v374 = vsel %vm93, %v367, 0
    %376 = vmatprep.subr.mxu0 0.0
    %377 = vmatpush1.msra.mxu0 0.0
    %378 = vmatprep.subr.mxu0 0.0
    %379 = vmatpush1.msra.mxu0 0.0
    %380 = vmatprep.subr.mxu0 0.0
    %381 = vmatpush1.msra.mxu0 0.0
    %382 = vmatprep.subr.mxu0 0.0
    %383 = vmatpush1.msra.mxu0 0.0
    %384 = vmatprep.subr.mxu0 0.0
    %385 = vmatpush1.msra.mxu0 0.0
    %386 = vmatprep.subr.mxu0 0.0
    %387 = vmatpush1.msra.mxu0 0.0
    %388 = vmatprep.subr.mxu0 0.0
    %389 = vmatpush1.msra.mxu0 0.0
    %390 = vmatprep.subr.mxu0 0.0
    %391 = vmatpush1.msra.mxu0 0.0
    %392 = vmatprep.subr.mxu0 0.0
    %393 = vmatpush1.msra.mxu0 0.0
    %394 = vmatprep.subr.mxu0 0.0
    %395 = vmatpush1.msra.mxu0 0.0
    %396 = vmatprep.subr.mxu0 0.0
    %397 = vmatpush1.msra.mxu0 0.0
    %398 = vmatprep.subr.mxu0 0.0
    %399 = vmatpush1.msra.mxu0 0.0
    %400 = vmatprep.subr.mxu0 0.0
    %401 = vmatpush1.msra.mxu0 %v90
    %402 = vmatprep.subr.mxu0 0.0
    %403 = vmatpush1.msra.mxu0 %v89
    %404 = vmatprep.subr.mxu0 0.0
    %405 = vmatpush1.msra.mxu0 %v88
    %406 = vmatprep.subr.mxu0 0.0
    %407 = vmatpush1.msra.mxu0 %v87
    %408 = vmatprep.subr.mxu0 0.0
    %409 = vmatpush2.msra.mxu0 0.0
    %410 = vmatprep.subr.mxu0 0.0
    %411 = vmatpush2.msra.mxu0 0.0
    %412 = vmatprep.subr.mxu0 0.0
    %413 = vmatpush2.msra.mxu0 0.0
    %414 = vmatprep.subr.mxu0 0.0
    %415 = vmatpush2.msra.mxu0 0.0
    %416 = vmatprep.subr.mxu0 0.0
    %417 = vmatpush2.msra.mxu0 0.0
    %418 = vmatprep.subr.mxu0 0.0
    %419 = vmatpush2.msra.mxu0 0.0
    %420 = vmatprep.subr.mxu0 0.0
    %421 = vmatpush2.msra.mxu0 0.0
    %422 = vmatprep.subr.mxu0 0.0
    %423 = vmatpush2.msra.mxu0 0.0
    %424 = vmatprep.subr.mxu0 0.0
    %425 = vmatpush2.msra.mxu0 0.0
    %426 = vmatprep.subr.mxu0 0.0
    %427 = vmatpush2.msra.mxu0 0.0
    %428 = vmatprep.subr.mxu0 0.0
    %429 = vmatpush2.msra.mxu0 0.0
    %430 = vmatprep.subr.mxu0 0.0
    %431 = vmatpush2.msra.mxu0 0.0
    %432 = vmatprep.subr.mxu0 0.0
    %433 = vmatpush2.msra.mxu0 0.0
    %434 = vmatprep.subr.mxu0 0.0
    %435 = vmatpush2.msra.mxu0 0.0
    %436 = vmatprep.subr.mxu0 0.0
    %437 = vmatpush2.msra.mxu0 0.0
    %438 = vmatprep.subr.mxu0 0.0
    %439 = vmatpush2.msra.mxu0 0.0
    %440 = vmatprep.mubr.f32.mxu0 0.0
    %441 = vmatmul.mubr.f32.gmra.mxu0 %v374
    %v442 = vpop.f32.mrf.mxu0
    %v443 = vadd.f32 0.0, %v442
    %v444 = vpop.f32.mrf.mxu0
    %445 = vdwg.mxu0
    %v446 = vadd.f32 %v372, %v443
    %v447 = vxor.u32 %v446, 2147483648
    %v448 = vmul.f32 %v447, 1.442695
    %v449 = vpow.pop %v448
    %v450 = vadd.f32 %v449, 1.0
    %v451 = vrcp.pop %v450
    %v452 = vmul.f32 1.0, %v451
    %v453 = vtanh.pop %v446
    %v454 = vmul.f32 %v452, %v275
    %456 = vrot.lane.b32.xlu0 %v453, 32
    %v457 = vpop.permute.xlu0 %456
    %v459 = vmul.f32 %v452, %v457
    %461 = vrot.lane.b32.xlu0 %v459, 32
    %v462 = vpop.permute.xlu0 %461
    %v464 = vadd.f32 %v454, %v462
    %v465 = vtanh.pop %v464
    %467 = vrot.lane.b32.xlu0 %v465, 32
    %v468 = vpop.permute.xlu0 %467
    %v470 = vmul.f32 %v452, %v468
    %472 = vrot.lane.b32.xlu0 %v470, 64
    %v473 = vpop.permute.xlu0 %472
    %v474 = vsel %vm93, %v473, 0
    %476 = vmatprep.subr.mxu0 0.0
    %477 = vmatpush1.msra.mxu0 0.0
    %478 = vmatprep.subr.mxu0 0.0
    %479 = vmatpush1.msra.mxu0 0.0
    %480 = vmatprep.subr.mxu0 0.0
    %481 = vmatpush1.msra.mxu0 0.0
    %482 = vmatprep.subr.mxu0 0.0
    %483 = vmatpush1.msra.mxu0 0.0
    %484 = vmatprep.subr.mxu0 0.0
    %485 = vmatpush1.msra.mxu0 0.0
    %486 = vmatprep.subr.mxu0 0.0
    %487 = vmatpush1.msra.mxu0 0.0
    %488 = vmatprep.subr.mxu0 0.0
    %489 = vmatpush1.msra.mxu0 0.0
    %490 = vmatprep.subr.mxu0 0.0
    %491 = vmatpush1.msra.mxu0 0.0
    %492 = vmatprep.subr.mxu0 0.0
    %493 = vmatpush1.msra.mxu0 0.0
    %494 = vmatprep.subr.mxu0 0.0
    %495 = vmatpush1.msra.mxu0 0.0
    %496 = vmatprep.subr.mxu0 0.0
    %497 = vmatpush1.msra.mxu0 0.0
    %498 = vmatprep.subr.mxu0 0.0
    %499 = vmatpush1.msra.mxu0 0.0
    %500 = vmatprep.subr.mxu0 0.0
    %501 = vmatpush1.msra.mxu0 %v86
    %502 = vmatprep.subr.mxu0 0.0
    %503 = vmatpush1.msra.mxu0 %v85
    %504 = vmatprep.subr.mxu0 0.0
    %505 = vmatpush1.msra.mxu0 %v84
    %506 = vmatprep.subr.mxu0 0.0
    %507 = vmatpush1.msra.mxu0 %v83
    %508 = vmatprep.subr.mxu0 0.0
    %509 = vmatpush2.msra.mxu0 0.0
    %510 = vmatprep.subr.mxu0 0.0
    %511 = vmatpush2.msra.mxu0 0.0
    %512 = vmatprep.subr.mxu0 0.0
    %513 = vmatpush2.msra.mxu0 0.0
    %514 = vmatprep.subr.mxu0 0.0
    %515 = vmatpush2.msra.mxu0 0.0
    %516 = vmatprep.subr.mxu0 0.0
    %517 = vmatpush2.msra.mxu0 0.0
    %518 = vmatprep.subr.mxu0 0.0
    %519 = vmatpush2.msra.mxu0 0.0
    %520 = vmatprep.subr.mxu0 0.0
    %521 = vmatpush2.msra.mxu0 0.0
    %522 = vmatprep.subr.mxu0 0.0
    %523 = vmatpush2.msra.mxu0 0.0
    %524 = vmatprep.subr.mxu0 0.0
    %525 = vmatpush2.msra.mxu0 0.0
    %526 = vmatprep.subr.mxu0 0.0
    %527 = vmatpush2.msra.mxu0 0.0
    %528 = vmatprep.subr.mxu0 0.0
    %529 = vmatpush2.msra.mxu0 0.0
    %530 = vmatprep.subr.mxu0 0.0
    %531 = vmatpush2.msra.mxu0 0.0
    %532 = vmatprep.subr.mxu0 0.0
    %533 = vmatpush2.msra.mxu0 0.0
    %534 = vmatprep.subr.mxu0 0.0
    %535 = vmatpush2.msra.mxu0 0.0
    %536 = vmatprep.subr.mxu0 0.0
    %537 = vmatpush2.msra.mxu0 0.0
    %538 = vmatprep.subr.mxu0 0.0
    %539 = vmatpush2.msra.mxu0 0.0
    %540 = vmatprep.mubr.f32.mxu0 0.0
    %541 = vmatmul.mubr.f32.gmra.mxu0 %v474
    %v542 = vpop.f32.mrf.mxu0
    %v543 = vadd.f32 %v82, %v542
    %v544 = vpop.f32.mrf.mxu0
    %545 = vdwg.mxu0
    %v546 = vxor.u32 %v543, 2147483648
    %v547 = vmul.f32 %v546, 1.442695
    %v548 = vpow.pop %v547
    %v549 = vadd.f32 %v548, 1.0
    %v550 = vrcp.pop %v549
    %v551 = vmul.f32 1.0, %v550
    %v552 = vsub.f32 1.0, %v551
    %v554 = vmul.f32 %v552, %v473
    %v555 = vmul.f32 %v551, %v81
    %v556 = vadd.f32 %v554, %v555
    %v557 = vsel %vm93, %v556, 0.0
    %s558 = scalar_lea.vmem [#allocation12], 4
    %559 = vst [vmem:[%s558] sm:$0x3] %v557
    %s560 = scalar_lea.vmem [#allocation4], 4
    %v561 = vld [vmem:[%s560] sm:$0x3]
    %v563 = vsel %vm93, %v556, 0
    %565 = vmatprep.subr.mxu0 0.0
    %566 = vmatpush1.msra.mxu0 0.0
    %567 = vmatprep.subr.mxu0 0.0
    %568 = vmatpush1.msra.mxu0 0.0
    %569 = vmatprep.subr.mxu0 0.0
    %570 = vmatpush1.msra.mxu0 0.0
    %571 = vmatprep.subr.mxu0 0.0
    %572 = vmatpush1.msra.mxu0 0.0
    %573 = vmatprep.subr.mxu0 0.0
    %574 = vmatpush1.msra.mxu0 0.0
    %575 = vmatprep.subr.mxu0 0.0
    %576 = vmatpush1.msra.mxu0 0.0
    %577 = vmatprep.subr.mxu0 0.0
    %578 = vmatpush1.msra.mxu0 0.0
    %579 = vmatprep.subr.mxu0 0.0
    %580 = vmatpush1.msra.mxu0 0.0
    %581 = vmatprep.subr.mxu0 0.0
    %582 = vmatpush1.msra.mxu0 0.0
    %583 = vmatprep.subr.mxu0 0.0
    %584 = vmatpush1.msra.mxu0 0.0
    %585 = vmatprep.subr.mxu0 0.0
    %586 = vmatpush1.msra.mxu0 0.0
    %587 = vmatprep.subr.mxu0 0.0
    %588 = vmatpush1.msra.mxu0 0.0
    %589 = vmatprep.subr.mxu0 0.0
    %590 = vmatpush1.msra.mxu0 %v90
    %591 = vmatprep.subr.mxu0 0.0
    %592 = vmatpush1.msra.mxu0 %v89
    %593 = vmatprep.subr.mxu0 0.0
    %594 = vmatpush1.msra.mxu0 %v88
    %595 = vmatprep.subr.mxu0 0.0
    %596 = vmatpush1.msra.mxu0 %v87
    %597 = vmatprep.subr.mxu0 0.0
    %598 = vmatpush2.msra.mxu0 0.0
    %599 = vmatprep.subr.mxu0 0.0
    %600 = vmatpush2.msra.mxu0 0.0
    %601 = vmatprep.subr.mxu0 0.0
    %602 = vmatpush2.msra.mxu0 0.0
    %603 = vmatprep.subr.mxu0 0.0
    %604 = vmatpush2.msra.mxu0 0.0
    %605 = vmatprep.subr.mxu0 0.0
    %606 = vmatpush2.msra.mxu0 0.0
    %607 = vmatprep.subr.mxu0 0.0
    %608 = vmatpush2.msra.mxu0 0.0
    %609 = vmatprep.subr.mxu0 0.0
    %610 = vmatpush2.msra.mxu0 0.0
    %611 = vmatprep.subr.mxu0 0.0
    %612 = vmatpush2.msra.mxu0 0.0
    %613 = vmatprep.subr.mxu0 0.0
    %614 = vmatpush2.msra.mxu0 0.0
    %615 = vmatprep.subr.mxu0 0.0
    %616 = vmatpush2.msra.mxu0 0.0
    %617 = vmatprep.subr.mxu0 0.0
    %618 = vmatpush2.msra.mxu0 0.0
    %619 = vmatprep.subr.mxu0 0.0
    %620 = vmatpush2.msra.mxu0 0.0
    %621 = vmatprep.subr.mxu0 0.0
    %622 = vmatpush2.msra.mxu0 0.0
    %623 = vmatprep.subr.mxu0 0.0
    %624 = vmatpush2.msra.mxu0 0.0
    %625 = vmatprep.subr.mxu0 0.0
    %626 = vmatpush2.msra.mxu0 0.0
    %627 = vmatprep.subr.mxu0 0.0
    %628 = vmatpush2.msra.mxu0 0.0
    %629 = vmatprep.mubr.f32.mxu0 0.0
    %630 = vmatmul.mubr.f32.gmra.mxu0 %v563
    %v631 = vpop.f32.mrf.mxu0
    %v632 = vadd.f32 0.0, %v631
    %v633 = vpop.f32.mrf.mxu0
    %634 = vdwg.mxu0
    %v635 = vadd.f32 %v561, %v632
    %v636 = vxor.u32 %v635, 2147483648
    %v637 = vmul.f32 %v636, 1.442695
    %v638 = vpow.pop %v637
    %v639 = vadd.f32 %v638, 1.0
    %v640 = vrcp.pop %v639
    %v641 = vmul.f32 1.0, %v640
    %v642 = vtanh.pop %v635
    %v643 = vmul.f32 %v641, %v464
    %645 = vrot.lane.b32.xlu0 %v642, 32
    %v646 = vpop.permute.xlu0 %645
    %v648 = vmul.f32 %v641, %v646
    %650 = vrot.lane.b32.xlu0 %v648, 32
    %v651 = vpop.permute.xlu0 %650
    %v653 = vadd.f32 %v643, %v651
    %v654 = vtanh.pop %v653
    %656 = vrot.lane.b32.xlu0 %v654, 32
    %v657 = vpop.permute.xlu0 %656
    %v659 = vmul.f32 %v641, %v657
    %661 = vrot.lane.b32.xlu0 %v659, 64
    %v662 = vpop.permute.xlu0 %661
    %v663 = vsel %vm93, %v662, 0
    %665 = vmatprep.subr.mxu0 0.0
    %666 = vmatpush1.msra.mxu0 0.0
    %667 = vmatprep.subr.mxu0 0.0
    %668 = vmatpush1.msra.mxu0 0.0
    %669 = vmatprep.subr.mxu0 0.0
    %670 = vmatpush1.msra.mxu0 0.0
    %671 = vmatprep.subr.mxu0 0.0
    %672 = vmatpush1.msra.mxu0 0.0
    %673 = vmatprep.subr.mxu0 0.0
    %674 = vmatpush1.msra.mxu0 0.0
    %675 = vmatprep.subr.mxu0 0.0
    %676 = vmatpush1.msra.mxu0 0.0
    %677 = vmatprep.subr.mxu0 0.0
    %678 = vmatpush1.msra.mxu0 0.0
    %679 = vmatprep.subr.mxu0 0.0
    %680 = vmatpush1.msra.mxu0 0.0
    %681 = vmatprep.subr.mxu0 0.0
    %682 = vmatpush1.msra.mxu0 0.0
    %683 = vmatprep.subr.mxu0 0.0
    %684 = vmatpush1.msra.mxu0 0.0
    %685 = vmatprep.subr.mxu0 0.0
    %686 = vmatpush1.msra.mxu0 0.0
    %687 = vmatprep.subr.mxu0 0.0
    %688 = vmatpush1.msra.mxu0 0.0
    %689 = vmatprep.subr.mxu0 0.0
    %690 = vmatpush1.msra.mxu0 %v86
    %691 = vmatprep.subr.mxu0 0.0
    %692 = vmatpush1.msra.mxu0 %v85
    %693 = vmatprep.subr.mxu0 0.0
    %694 = vmatpush1.msra.mxu0 %v84
    %695 = vmatprep.subr.mxu0 0.0
    %696 = vmatpush1.msra.mxu0 %v83
    %697 = vmatprep.subr.mxu0 0.0
    %698 = vmatpush2.msra.mxu0 0.0
    %699 = vmatprep.subr.mxu0 0.0
    %700 = vmatpush2.msra.mxu0 0.0
    %701 = vmatprep.subr.mxu0 0.0
    %702 = vmatpush2.msra.mxu0 0.0
    %703 = vmatprep.subr.mxu0 0.0
    %704 = vmatpush2.msra.mxu0 0.0
    %705 = vmatprep.subr.mxu0 0.0
    %706 = vmatpush2.msra.mxu0 0.0
    %707 = vmatprep.subr.mxu0 0.0
    %708 = vmatpush2.msra.mxu0 0.0
    %709 = vmatprep.subr.mxu0 0.0
    %710 = vmatpush2.msra.mxu0 0.0
    %711 = vmatprep.subr.mxu0 0.0
    %712 = vmatpush2.msra.mxu0 0.0
    %713 = vmatprep.subr.mxu0 0.0
    %714 = vmatpush2.msra.mxu0 0.0
    %715 = vmatprep.subr.mxu0 0.0
    %716 = vmatpush2.msra.mxu0 0.0
    %717 = vmatprep.subr.mxu0 0.0
    %718 = vmatpush2.msra.mxu0 0.0
    %719 = vmatprep.subr.mxu0 0.0
    %720 = vmatpush2.msra.mxu0 0.0
    %721 = vmatprep.subr.mxu0 0.0
    %722 = vmatpush2.msra.mxu0 0.0
    %723 = vmatprep.subr.mxu0 0.0
    %724 = vmatpush2.msra.mxu0 0.0
    %725 = vmatprep.subr.mxu0 0.0
    %726 = vmatpush2.msra.mxu0 0.0
    %727 = vmatprep.subr.mxu0 0.0
    %728 = vmatpush2.msra.mxu0 0.0
    %729 = vmatprep.mubr.f32.mxu0 0.0
    %730 = vmatmul.mubr.f32.gmra.mxu0 %v663
    %v731 = vpop.f32.mrf.mxu0
    %v732 = vadd.f32 %v82, %v731
    %v733 = vpop.f32.mrf.mxu0
    %734 = vdwg.mxu0
    %v735 = vxor.u32 %v732, 2147483648
    %v736 = vmul.f32 %v735, 1.442695
    %v737 = vpow.pop %v736
    %v738 = vadd.f32 %v737, 1.0
    %v739 = vrcp.pop %v738
    %v740 = vmul.f32 1.0, %v739
    %v741 = vsub.f32 1.0, %v740
    %v743 = vmul.f32 %v741, %v662
    %v744 = vmul.f32 %v740, %v81
    %v745 = vadd.f32 %v743, %v744
    %v746 = vsel %vm93, %v745, 0.0
    %s747 = scalar_lea.vmem [#allocation12], 6
    %748 = vst [vmem:[%s747] sm:$0x3] %v746
    %s749 = scalar_lea.vmem [#allocation4], 6
    %v750 = vld [vmem:[%s749] sm:$0x3]
    %v752 = vsel %vm93, %v745, 0
    %754 = vmatprep.subr.mxu0 0.0
    %755 = vmatpush1.msra.mxu0 0.0
    %756 = vmatprep.subr.mxu0 0.0
    %757 = vmatpush1.msra.mxu0 0.0
    %758 = vmatprep.subr.mxu0 0.0
    %759 = vmatpush1.msra.mxu0 0.0
    %760 = vmatprep.subr.mxu0 0.0
    %761 = vmatpush1.msra.mxu0 0.0
    %762 = vmatprep.subr.mxu0 0.0
    %763 = vmatpush1.msra.mxu0 0.0
    %764 = vmatprep.subr.mxu0 0.0
    %765 = vmatpush1.msra.mxu0 0.0
    %766 = vmatprep.subr.mxu0 0.0
    %767 = vmatpush1.msra.mxu0 0.0
    %768 = vmatprep.subr.mxu0 0.0
    %769 = vmatpush1.msra.mxu0 0.0
    %770 = vmatprep.subr.mxu0 0.0
    %771 = vmatpush1.msra.mxu0 0.0
    %772 = vmatprep.subr.mxu0 0.0
    %773 = vmatpush1.msra.mxu0 0.0
    %774 = vmatprep.subr.mxu0 0.0
    %775 = vmatpush1.msra.mxu0 0.0
    %776 = vmatprep.subr.mxu0 0.0
    %777 = vmatpush1.msra.mxu0 0.0
    %778 = vmatprep.subr.mxu0 0.0
    %779 = vmatpush1.msra.mxu0 %v90
    %780 = vmatprep.subr.mxu0 0.0
    %781 = vmatpush1.msra.mxu0 %v89
    %782 = vmatprep.subr.mxu0 0.0
    %783 = vmatpush1.msra.mxu0 %v88
    %784 = vmatprep.subr.mxu0 0.0
    %785 = vmatpush1.msra.mxu0 %v87
    %786 = vmatprep.subr.mxu0 0.0
    %787 = vmatpush2.msra.mxu0 0.0
    %788 = vmatprep.subr.mxu0 0.0
    %789 = vmatpush2.msra.mxu0 0.0
    %790 = vmatprep.subr.mxu0 0.0
    %791 = vmatpush2.msra.mxu0 0.0
    %792 = vmatprep.subr.mxu0 0.0
    %793 = vmatpush2.msra.mxu0 0.0
    %794 = vmatprep.subr.mxu0 0.0
    %795 = vmatpush2.msra.mxu0 0.0
    %796 = vmatprep.subr.mxu0 0.0
    %797 = vmatpush2.msra.mxu0 0.0
    %798 = vmatprep.subr.mxu0 0.0
    %799 = vmatpush2.msra.mxu0 0.0
    %800 = vmatprep.subr.mxu0 0.0
    %801 = vmatpush2.msra.mxu0 0.0
    %802 = vmatprep.subr.mxu0 0.0
    %803 = vmatpush2.msra.mxu0 0.0
    %804 = vmatprep.subr.mxu0 0.0
    %805 = vmatpush2.msra.mxu0 0.0
    %806 = vmatprep.subr.mxu0 0.0
    %807 = vmatpush2.msra.mxu0 0.0
    %808 = vmatprep.subr.mxu0 0.0
    %809 = vmatpush2.msra.mxu0 0.0
    %810 = vmatprep.subr.mxu0 0.0
    %811 = vmatpush2.msra.mxu0 0.0
    %812 = vmatprep.subr.mxu0 0.0
    %813 = vmatpush2.msra.mxu0 0.0
    %814 = vmatprep.subr.mxu0 0.0
    %815 = vmatpush2.msra.mxu0 0.0
    %816 = vmatprep.subr.mxu0 0.0
    %817 = vmatpush2.msra.mxu0 0.0
    %818 = vmatprep.mubr.f32.mxu0 0.0
    %819 = vmatmul.mubr.f32.gmra.mxu0 %v752
    %v820 = vpop.f32.mrf.mxu0
    %v821 = vadd.f32 0.0, %v820
    %v822 = vpop.f32.mrf.mxu0
    %823 = vdwg.mxu0
    %v824 = vadd.f32 %v750, %v821
    %v825 = vxor.u32 %v824, 2147483648
    %v826 = vmul.f32 %v825, 1.442695
    %v827 = vpow.pop %v826
    %v828 = vadd.f32 %v827, 1.0
    %v829 = vrcp.pop %v828
    %v830 = vmul.f32 1.0, %v829
    %v831 = vtanh.pop %v824
    %v832 = vmul.f32 %v830, %v653
    %834 = vrot.lane.b32.xlu0 %v831, 32
    %v835 = vpop.permute.xlu0 %834
    %v837 = vmul.f32 %v830, %v835
    %839 = vrot.lane.b32.xlu0 %v837, 32
    %v840 = vpop.permute.xlu0 %839
    %v842 = vadd.f32 %v832, %v840
    %v843 = vtanh.pop %v842
    %845 = vrot.lane.b32.xlu0 %v843, 32
    %v846 = vpop.permute.xlu0 %845
    %v848 = vmul.f32 %v830, %v846
    %850 = vrot.lane.b32.xlu0 %v848, 64
    %v851 = vpop.permute.xlu0 %850
    %v852 = vsel %vm93, %v851, 0
    %854 = vmatprep.subr.mxu0 0.0
    %855 = vmatpush1.msra.mxu0 0.0
    %856 = vmatprep.subr.mxu0 0.0
    %857 = vmatpush1.msra.mxu0 0.0
    %858 = vmatprep.subr.mxu0 0.0
    %859 = vmatpush1.msra.mxu0 0.0
    %860 = vmatprep.subr.mxu0 0.0
    %861 = vmatpush1.msra.mxu0 0.0
    %862 = vmatprep.subr.mxu0 0.0
    %863 = vmatpush1.msra.mxu0 0.0
    %864 = vmatprep.subr.mxu0 0.0
    %865 = vmatpush1.msra.mxu0 0.0
    %866 = vmatprep.subr.mxu0 0.0
    %867 = vmatpush1.msra.mxu0 0.0
    %868 = vmatprep.subr.mxu0 0.0
    %869 = vmatpush1.msra.mxu0 0.0
    %870 = vmatprep.subr.mxu0 0.0
    %871 = vmatpush1.msra.mxu0 0.0
    %872 = vmatprep.subr.mxu0 0.0
    %873 = vmatpush1.msra.mxu0 0.0
    %874 = vmatprep.subr.mxu0 0.0
    %875 = vmatpush1.msra.mxu0 0.0
    %876 = vmatprep.subr.mxu0 0.0
    %877 = vmatpush1.msra.mxu0 0.0
    %878 = vmatprep.subr.mxu0 0.0
    %879 = vmatpush1.msra.mxu0 %v86
    %880 = vmatprep.subr.mxu0 0.0
    %881 = vmatpush1.msra.mxu0 %v85
    %882 = vmatprep.subr.mxu0 0.0
    %883 = vmatpush1.msra.mxu0 %v84
    %884 = vmatprep.subr.mxu0 0.0
    %885 = vmatpush1.msra.mxu0 %v83
    %886 = vmatprep.subr.mxu0 0.0
    %887 = vmatpush2.msra.mxu0 0.0
    %888 = vmatprep.subr.mxu0 0.0
    %889 = vmatpush2.msra.mxu0 0.0
    %890 = vmatprep.subr.mxu0 0.0
    %891 = vmatpush2.msra.mxu0 0.0
    %892 = vmatprep.subr.mxu0 0.0
    %893 = vmatpush2.msra.mxu0 0.0
    %894 = vmatprep.subr.mxu0 0.0
    %895 = vmatpush2.msra.mxu0 0.0
    %896 = vmatprep.subr.mxu0 0.0
    %897 = vmatpush2.msra.mxu0 0.0
    %898 = vmatprep.subr.mxu0 0.0
    %899 = vmatpush2.msra.mxu0 0.0
    %900 = vmatprep.subr.mxu0 0.0
    %901 = vmatpush2.msra.mxu0 0.0
    %902 = vmatprep.subr.mxu0 0.0
    %903 = vmatpush2.msra.mxu0 0.0
    %904 = vmatprep.subr.mxu0 0.0
    %905 = vmatpush2.msra.mxu0 0.0
    %906 = vmatprep.subr.mxu0 0.0
    %907 = vmatpush2.msra.mxu0 0.0
    %908 = vmatprep.subr.mxu0 0.0
    %909 = vmatpush2.msra.mxu0 0.0
    %910 = vmatprep.subr.mxu0 0.0
    %911 = vmatpush2.msra.mxu0 0.0
    %912 = vmatprep.subr.mxu0 0.0
    %913 = vmatpush2.msra.mxu0 0.0
    %914 = vmatprep.subr.mxu0 0.0
    %915 = vmatpush2.msra.mxu0 0.0
    %916 = vmatprep.subr.mxu0 0.0
    %917 = vmatpush2.msra.mxu0 0.0
    %918 = vmatprep.mubr.f32.mxu0 0.0
    %919 = vmatmul.mubr.f32.gmra.mxu0 %v852
    %v920 = vpop.f32.mrf.mxu0
    %v921 = vadd.f32 %v82, %v920
    %v922 = vpop.f32.mrf.mxu0
    %923 = vdwg.mxu0
    %v924 = vxor.u32 %v921, 2147483648
    %v925 = vmul.f32 %v924, 1.442695
    %v926 = vpow.pop %v925
    %v927 = vadd.f32 %v926, 1.0
    %v928 = vrcp.pop %v927
    %v929 = vmul.f32 1.0, %v928
    %v930 = vsub.f32 1.0, %v929
    %v932 = vmul.f32 %v930, %v851
    %v933 = vmul.f32 %v929, %v81
    %v934 = vadd.f32 %v932, %v933
    %v935 = vsel %vm93, %v934, 0.0
    %s936 = scalar_lea.vmem [#allocation12], 8
    %937 = vst [vmem:[%s936] sm:$0x3] %v935
    %s938 = scalar_lea.vmem [#allocation4], 8
    %v939 = vld [vmem:[%s938] sm:$0x3]
    %v941 = vsel %vm93, %v934, 0
    %943 = vmatprep.subr.mxu0 0.0
    %944 = vmatpush1.msra.mxu0 0.0
    %945 = vmatprep.subr.mxu0 0.0
    %946 = vmatpush1.msra.mxu0 0.0
    %947 = vmatprep.subr.mxu0 0.0
    %948 = vmatpush1.msra.mxu0 0.0
    %949 = vmatprep.subr.mxu0 0.0
    %950 = vmatpush1.msra.mxu0 0.0
    %951 = vmatprep.subr.mxu0 0.0
    %952 = vmatpush1.msra.mxu0 0.0
    %953 = vmatprep.subr.mxu0 0.0
    %954 = vmatpush1.msra.mxu0 0.0
    %955 = vmatprep.subr.mxu0 0.0
    %956 = vmatpush1.msra.mxu0 0.0
    %957 = vmatprep.subr.mxu0 0.0
    %958 = vmatpush1.msra.mxu0 0.0
    %959 = vmatprep.subr.mxu0 0.0
    %960 = vmatpush1.msra.mxu0 0.0
    %961 = vmatprep.subr.mxu0 0.0
    %962 = vmatpush1.msra.mxu0 0.0
    %963 = vmatprep.subr.mxu0 0.0
    %964 = vmatpush1.msra.mxu0 0.0
    %965 = vmatprep.subr.mxu0 0.0
    %966 = vmatpush1.msra.mxu0 0.0
    %967 = vmatprep.subr.mxu0 0.0
    %968 = vmatpush1.msra.mxu0 %v90
    %969 = vmatprep.subr.mxu0 0.0
    %970 = vmatpush1.msra.mxu0 %v89
    %971 = vmatprep.subr.mxu0 0.0
    %972 = vmatpush1.msra.mxu0 %v88
    %973 = vmatprep.subr.mxu0 0.0
    %974 = vmatpush1.msra.mxu0 %v87
    %975 = vmatprep.subr.mxu0 0.0
    %976 = vmatpush2.msra.mxu0 0.0
    %977 = vmatprep.subr.mxu0 0.0
    %978 = vmatpush2.msra.mxu0 0.0
    %979 = vmatprep.subr.mxu0 0.0
    %980 = vmatpush2.msra.mxu0 0.0
    %981 = vmatprep.subr.mxu0 0.0
    %982 = vmatpush2.msra.mxu0 0.0
    %983 = vmatprep.subr.mxu0 0.0
    %984 = vmatpush2.msra.mxu0 0.0
    %985 = vmatprep.subr.mxu0 0.0
    %986 = vmatpush2.msra.mxu0 0.0
    %987 = vmatprep.subr.mxu0 0.0
    %988 = vmatpush2.msra.mxu0 0.0
    %989 = vmatprep.subr.mxu0 0.0
    %990 = vmatpush2.msra.mxu0 0.0
    %991 = vmatprep.subr.mxu0 0.0
    %992 = vmatpush2.msra.mxu0 0.0
    %993 = vmatprep.subr.mxu0 0.0
    %994 = vmatpush2.msra.mxu0 0.0
    %995 = vmatprep.subr.mxu0 0.0
    %996 = vmatpush2.msra.mxu0 0.0
    %997 = vmatprep.subr.mxu0 0.0
    %998 = vmatpush2.msra.mxu0 0.0
    %999 = vmatprep.subr.mxu0 0.0
    %1000 = vmatpush2.msra.mxu0 0.0
    %1001 = vmatprep.subr.mxu0 0.0
    %1002 = vmatpush2.msra.mxu0 0.0
    %1003 = vmatprep.subr.mxu0 0.0
    %1004 = vmatpush2.msra.mxu0 0.0
    %1005 = vmatprep.subr.mxu0 0.0
    %1006 = vmatpush2.msra.mxu0 0.0
    %1007 = vmatprep.mubr.f32.mxu0 0.0
    %1008 = vmatmul.mubr.f32.gmra.mxu0 %v941
    %v1009 = vpop.f32.mrf.mxu0
    %v1010 = vadd.f32 0.0, %v1009
    %v1011 = vpop.f32.mrf.mxu0
    %1012 = vdwg.mxu0
    %v1013 = vadd.f32 %v939, %v1010
    %v1014 = vxor.u32 %v1013, 2147483648
    %v1015 = vmul.f32 %v1014, 1.442695
    %v1016 = vpow.pop %v1015
    %v1017 = vadd.f32 %v1016, 1.0
    %v1018 = vrcp.pop %v1017
    %v1019 = vmul.f32 1.0, %v1018
    %v1020 = vtanh.pop %v1013
    %v1021 = vmul.f32 %v1019, %v842
    %1023 = vrot.lane.b32.xlu0 %v1020, 32
    %v1024 = vpop.permute.xlu0 %1023
    %v1026 = vmul.f32 %v1019, %v1024
    %1028 = vrot.lane.b32.xlu0 %v1026, 32
    %v1029 = vpop.permute.xlu0 %1028
    %v1031 = vadd.f32 %v1021, %v1029
    %v1032 = vtanh.pop %v1031
    %1034 = vrot.lane.b32.xlu0 %v1032, 32
    %v1035 = vpop.permute.xlu0 %1034
    %v1037 = vmul.f32 %v1019, %v1035
    %1039 = vrot.lane.b32.xlu0 %v1037, 64
    %v1040 = vpop.permute.xlu0 %1039
    %v1041 = vsel %vm93, %v1040, 0
    %1043 = vmatprep.subr.mxu0 0.0
    %1044 = vmatpush1.msra.mxu0 0.0
    %1045 = vmatprep.subr.mxu0 0.0
    %1046 = vmatpush1.msra.mxu0 0.0
    %1047 = vmatprep.subr.mxu0 0.0
    %1048 = vmatpush1.msra.mxu0 0.0
    %1049 = vmatprep.subr.mxu0 0.0
    %1050 = vmatpush1.msra.mxu0 0.0
    %1051 = vmatprep.subr.mxu0 0.0
    %1052 = vmatpush1.msra.mxu0 0.0
    %1053 = vmatprep.subr.mxu0 0.0
    %1054 = vmatpush1.msra.mxu0 0.0
    %1055 = vmatprep.subr.mxu0 0.0
    %1056 = vmatpush1.msra.mxu0 0.0
    %1057 = vmatprep.subr.mxu0 0.0
    %1058 = vmatpush1.msra.mxu0 0.0
    %1059 = vmatprep.subr.mxu0 0.0
    %1060 = vmatpush1.msra.mxu0 0.0
    %1061 = vmatprep.subr.mxu0 0.0
    %1062 = vmatpush1.msra.mxu0 0.0
    %1063 = vmatprep.subr.mxu0 0.0
    %1064 = vmatpush1.msra.mxu0 0.0
    %1065 = vmatprep.subr.mxu0 0.0
    %1066 = vmatpush1.msra.mxu0 0.0
    %1067 = vmatprep.subr.mxu0 0.0
    %1068 = vmatpush1.msra.mxu0 %v86
    %1069 = vmatprep.subr.mxu0 0.0
    %1070 = vmatpush1.msra.mxu0 %v85
    %1071 = vmatprep.subr.mxu0 0.0
    %1072 = vmatpush1.msra.mxu0 %v84
    %1073 = vmatprep.subr.mxu0 0.0
    %1074 = vmatpush1.msra.mxu0 %v83
    %1075 = vmatprep.subr.mxu0 0.0
    %1076 = vmatpush2.msra.mxu0 0.0
    %1077 = vmatprep.subr.mxu0 0.0
    %1078 = vmatpush2.msra.mxu0 0.0
    %1079 = vmatprep.subr.mxu0 0.0
    %1080 = vmatpush2.msra.mxu0 0.0
    %1081 = vmatprep.subr.mxu0 0.0
    %1082 = vmatpush2.msra.mxu0 0.0
    %1083 = vmatprep.subr.mxu0 0.0
    %1084 = vmatpush2.msra.mxu0 0.0
    %1085 = vmatprep.subr.mxu0 0.0
    %1086 = vmatpush2.msra.mxu0 0.0
    %1087 = vmatprep.subr.mxu0 0.0
    %1088 = vmatpush2.msra.mxu0 0.0
    %1089 = vmatprep.subr.mxu0 0.0
    %1090 = vmatpush2.msra.mxu0 0.0
    %1091 = vmatprep.subr.mxu0 0.0
    %1092 = vmatpush2.msra.mxu0 0.0
    %1093 = vmatprep.subr.mxu0 0.0
    %1094 = vmatpush2.msra.mxu0 0.0
    %1095 = vmatprep.subr.mxu0 0.0
    %1096 = vmatpush2.msra.mxu0 0.0
    %1097 = vmatprep.subr.mxu0 0.0
    %1098 = vmatpush2.msra.mxu0 0.0
    %1099 = vmatprep.subr.mxu0 0.0
    %1100 = vmatpush2.msra.mxu0 0.0
    %1101 = vmatprep.subr.mxu0 0.0
    %1102 = vmatpush2.msra.mxu0 0.0
    %1103 = vmatprep.subr.mxu0 0.0
    %1104 = vmatpush2.msra.mxu0 0.0
    %1105 = vmatprep.subr.mxu0 0.0
    %1106 = vmatpush2.msra.mxu0 0.0
    %1107 = vmatprep.mubr.f32.mxu0 0.0
    %1108 = vmatmul.mubr.f32.gmra.mxu0 %v1041
    %v1109 = vpop.f32.mrf.mxu0
    %v1110 = vadd.f32 %v82, %v1109
    %v1111 = vpop.f32.mrf.mxu0
    %1112 = vdwg.mxu0
    %v1113 = vxor.u32 %v1110, 2147483648
    %v1114 = vmul.f32 %v1113, 1.442695
    %v1115 = vpow.pop %v1114
    %v1116 = vadd.f32 %v1115, 1.0
    %v1117 = vrcp.pop %v1116
    %v1118 = vmul.f32 1.0, %v1117
    %v1119 = vsub.f32 1.0, %v1118
    %v1121 = vmul.f32 %v1119, %v1040
    %v1122 = vmul.f32 %v1118, %v81
    %v1123 = vadd.f32 %v1121, %v1122
    %v1124 = vsel %vm93, %v1123, 0.0
    %s1125 = scalar_lea.vmem [#allocation12], 10
    %1126 = vst [vmem:[%s1125] sm:$0x3] %v1124
    %s1127 = scalar_lea.vmem [#allocation4], 10
    %v1128 = vld [vmem:[%s1127] sm:$0x3]
    %v1130 = vsel %vm93, %v1123, 0
    %1132 = vmatprep.subr.mxu0 0.0
    %1133 = vmatpush1.msra.mxu0 0.0
    %1134 = vmatprep.subr.mxu0 0.0
    %1135 = vmatpush1.msra.mxu0 0.0
    %1136 = vmatprep.subr.mxu0 0.0
    %1137 = vmatpush1.msra.mxu0 0.0
    %1138 = vmatprep.subr.mxu0 0.0
    %1139 = vmatpush1.msra.mxu0 0.0
    %1140 = vmatprep.subr.mxu0 0.0
    %1141 = vmatpush1.msra.mxu0 0.0
    %1142 = vmatprep.subr.mxu0 0.0
    %1143 = vmatpush1.msra.mxu0 0.0
    %1144 = vmatprep.subr.mxu0 0.0
    %1145 = vmatpush1.msra.mxu0 0.0
    %1146 = vmatprep.subr.mxu0 0.0
    %1147 = vmatpush1.msra.mxu0 0.0
    %1148 = vmatprep.subr.mxu0 0.0
    %1149 = vmatpush1.msra.mxu0 0.0
    %1150 = vmatprep.subr.mxu0 0.0
    %1151 = vmatpush1.msra.mxu0 0.0
    %1152 = vmatprep.subr.mxu0 0.0
    %1153 = vmatpush1.msra.mxu0 0.0
    %1154 = vmatprep.subr.mxu0 0.0
    %1155 = vmatpush1.msra.mxu0 0.0
    %1156 = vmatprep.subr.mxu0 0.0
    %1157 = vmatpush1.msra.mxu0 %v90
    %1158 = vmatprep.subr.mxu0 0.0
    %1159 = vmatpush1.msra.mxu0 %v89
    %1160 = vmatprep.subr.mxu0 0.0
    %1161 = vmatpush1.msra.mxu0 %v88
    %1162 = vmatprep.subr.mxu0 0.0
    %1163 = vmatpush1.msra.mxu0 %v87
    %1164 = vmatprep.subr.mxu0 0.0
    %1165 = vmatpush2.msra.mxu0 0.0
    %1166 = vmatprep.subr.mxu0 0.0
    %1167 = vmatpush2.msra.mxu0 0.0
    %1168 = vmatprep.subr.mxu0 0.0
    %1169 = vmatpush2.msra.mxu0 0.0
    %1170 = vmatprep.subr.mxu0 0.0
    %1171 = vmatpush2.msra.mxu0 0.0
    %1172 = vmatprep.subr.mxu0 0.0
    %1173 = vmatpush2.msra.mxu0 0.0
    %1174 = vmatprep.subr.mxu0 0.0
    %1175 = vmatpush2.msra.mxu0 0.0
    %1176 = vmatprep.subr.mxu0 0.0
    %1177 = vmatpush2.msra.mxu0 0.0
    %1178 = vmatprep.subr.mxu0 0.0
    %1179 = vmatpush2.msra.mxu0 0.0
    %1180 = vmatprep.subr.mxu0 0.0
    %1181 = vmatpush2.msra.mxu0 0.0
    %1182 = vmatprep.subr.mxu0 0.0
    %1183 = vmatpush2.msra.mxu0 0.0
    %1184 = vmatprep.subr.mxu0 0.0
    %1185 = vmatpush2.msra.mxu0 0.0
    %1186 = vmatprep.subr.mxu0 0.0
    %1187 = vmatpush2.msra.mxu0 0.0
    %1188 = vmatprep.subr.mxu0 0.0
    %1189 = vmatpush2.msra.mxu0 0.0
    %1190 = vmatprep.subr.mxu0 0.0
    %1191 = vmatpush2.msra.mxu0 0.0
    %1192 = vmatprep.subr.mxu0 0.0
    %1193 = vmatpush2.msra.mxu0 0.0
    %1194 = vmatprep.subr.mxu0 0.0
    %1195 = vmatpush2.msra.mxu0 0.0
    %1196 = vmatprep.mubr.f32.mxu0 0.0
    %1197 = vmatmul.mubr.f32.gmra.mxu0 %v1130
    %v1198 = vpop.f32.mrf.mxu0
    %v1199 = vadd.f32 0.0, %v1198
    %v1200 = vpop.f32.mrf.mxu0
    %1201 = vdwg.mxu0
    %v1202 = vadd.f32 %v1128, %v1199
    %v1203 = vxor.u32 %v1202, 2147483648
    %v1204 = vmul.f32 %v1203, 1.442695
    %v1205 = vpow.pop %v1204
    %v1206 = vadd.f32 %v1205, 1.0
    %v1207 = vrcp.pop %v1206
    %v1208 = vmul.f32 1.0, %v1207
    %v1209 = vtanh.pop %v1202
    %v1210 = vmul.f32 %v1208, %v1031
    %1212 = vrot.lane.b32.xlu0 %v1209, 32
    %v1213 = vpop.permute.xlu0 %1212
    %v1215 = vmul.f32 %v1208, %v1213
    %1217 = vrot.lane.b32.xlu0 %v1215, 32
    %v1218 = vpop.permute.xlu0 %1217
    %v1220 = vadd.f32 %v1210, %v1218
    %v1221 = vtanh.pop %v1220
    %1223 = vrot.lane.b32.xlu0 %v1221, 32
    %v1224 = vpop.permute.xlu0 %1223
    %v1226 = vmul.f32 %v1208, %v1224
    %1228 = vrot.lane.b32.xlu0 %v1226, 64
    %v1229 = vpop.permute.xlu0 %1228
    %v1230 = vsel %vm93, %v1229, 0
    %1232 = vmatprep.subr.mxu0 0.0
    %1233 = vmatpush1.msra.mxu0 0.0
    %1234 = vmatprep.subr.mxu0 0.0
    %1235 = vmatpush1.msra.mxu0 0.0
    %1236 = vmatprep.subr.mxu0 0.0
    %1237 = vmatpush1.msra.mxu0 0.0
    %1238 = vmatprep.subr.mxu0 0.0
    %1239 = vmatpush1.msra.mxu0 0.0
    %1240 = vmatprep.subr.mxu0 0.0
    %1241 = vmatpush1.msra.mxu0 0.0
    %1242 = vmatprep.subr.mxu0 0.0
    %1243 = vmatpush1.msra.mxu0 0.0
    %1244 = vmatprep.subr.mxu0 0.0
    %1245 = vmatpush1.msra.mxu0 0.0
    %1246 = vmatprep.subr.mxu0 0.0
    %1247 = vmatpush1.msra.mxu0 0.0
    %1248 = vmatprep.subr.mxu0 0.0
    %1249 = vmatpush1.msra.mxu0 0.0
    %1250 = vmatprep.subr.mxu0 0.0
    %1251 = vmatpush1.msra.mxu0 0.0
    %1252 = vmatprep.subr.mxu0 0.0
    %1253 = vmatpush1.msra.mxu0 0.0
    %1254 = vmatprep.subr.mxu0 0.0
    %1255 = vmatpush1.msra.mxu0 0.0
    %1256 = vmatprep.subr.mxu0 0.0
    %1257 = vmatpush1.msra.mxu0 %v86
    %1258 = vmatprep.subr.mxu0 0.0
    %1259 = vmatpush1.msra.mxu0 %v85
    %1260 = vmatprep.subr.mxu0 0.0
    %1261 = vmatpush1.msra.mxu0 %v84
    %1262 = vmatprep.subr.mxu0 0.0
    %1263 = vmatpush1.msra.mxu0 %v83
    %1264 = vmatprep.subr.mxu0 0.0
    %1265 = vmatpush2.msra.mxu0 0.0
    %1266 = vmatprep.subr.mxu0 0.0
    %1267 = vmatpush2.msra.mxu0 0.0
    %1268 = vmatprep.subr.mxu0 0.0
    %1269 = vmatpush2.msra.mxu0 0.0
    %1270 = vmatprep.subr.mxu0 0.0
    %1271 = vmatpush2.msra.mxu0 0.0
    %1272 = vmatprep.subr.mxu0 0.0
    %1273 = vmatpush2.msra.mxu0 0.0
    %1274 = vmatprep.subr.mxu0 0.0
    %1275 = vmatpush2.msra.mxu0 0.0
    %1276 = vmatprep.subr.mxu0 0.0
    %1277 = vmatpush2.msra.mxu0 0.0
    %1278 = vmatprep.subr.mxu0 0.0
    %1279 = vmatpush2.msra.mxu0 0.0
    %1280 = vmatprep.subr.mxu0 0.0
    %1281 = vmatpush2.msra.mxu0 0.0
    %1282 = vmatprep.subr.mxu0 0.0
    %1283 = vmatpush2.msra.mxu0 0.0
    %1284 = vmatprep.subr.mxu0 0.0
    %1285 = vmatpush2.msra.mxu0 0.0
    %1286 = vmatprep.subr.mxu0 0.0
    %1287 = vmatpush2.msra.mxu0 0.0
    %1288 = vmatprep.subr.mxu0 0.0
    %1289 = vmatpush2.msra.mxu0 0.0
    %1290 = vmatprep.subr.mxu0 0.0
    %1291 = vmatpush2.msra.mxu0 0.0
    %1292 = vmatprep.subr.mxu0 0.0
    %1293 = vmatpush2.msra.mxu0 0.0
    %1294 = vmatprep.subr.mxu0 0.0
    %1295 = vmatpush2.msra.mxu0 0.0
    %1296 = vmatprep.mubr.f32.mxu0 0.0
    %1297 = vmatmul.mubr.f32.gmra.mxu0 %v1230
    %v1298 = vpop.f32.mrf.mxu0
    %v1299 = vadd.f32 %v82, %v1298
    %v1300 = vpop.f32.mrf.mxu0
    %1301 = vdwg.mxu0
    %v1302 = vxor.u32 %v1299, 2147483648
    %v1303 = vmul.f32 %v1302, 1.442695
    %v1304 = vpow.pop %v1303
    %v1305 = vadd.f32 %v1304, 1.0
    %v1306 = vrcp.pop %v1305
    %v1307 = vmul.f32 1.0, %v1306
    %v1308 = vsub.f32 1.0, %v1307
    %v1310 = vmul.f32 %v1308, %v1229
    %v1311 = vmul.f32 %v1307, %v81
    %v1312 = vadd.f32 %v1310, %v1311
    %v1313 = vsel %vm93, %v1312, 0.0
    %s1314 = scalar_lea.vmem [#allocation12], 12
    %1315 = vst [vmem:[%s1314] sm:$0x3] %v1313
    %s1316 = scalar_lea.vmem [#allocation4], 12
    %v1317 = vld [vmem:[%s1316] sm:$0x3]
    %v1319 = vsel %vm93, %v1312, 0
    %1321 = vmatprep.subr.mxu0 0.0
    %1322 = vmatpush1.msra.mxu0 0.0
    %1323 = vmatprep.subr.mxu0 0.0
    %1324 = vmatpush1.msra.mxu0 0.0
    %1325 = vmatprep.subr.mxu0 0.0
    %1326 = vmatpush1.msra.mxu0 0.0
    %1327 = vmatprep.subr.mxu0 0.0
    %1328 = vmatpush1.msra.mxu0 0.0
    %1329 = vmatprep.subr.mxu0 0.0
    %1330 = vmatpush1.msra.mxu0 0.0
    %1331 = vmatprep.subr.mxu0 0.0
    %1332 = vmatpush1.msra.mxu0 0.0
    %1333 = vmatprep.subr.mxu0 0.0
    %1334 = vmatpush1.msra.mxu0 0.0
    %1335 = vmatprep.subr.mxu0 0.0
    %1336 = vmatpush1.msra.mxu0 0.0
    %1337 = vmatprep.subr.mxu0 0.0
    %1338 = vmatpush1.msra.mxu0 0.0
    %1339 = vmatprep.subr.mxu0 0.0
    %1340 = vmatpush1.msra.mxu0 0.0
    %1341 = vmatprep.subr.mxu0 0.0
    %1342 = vmatpush1.msra.mxu0 0.0
    %1343 = vmatprep.subr.mxu0 0.0
    %1344 = vmatpush1.msra.mxu0 0.0
    %1345 = vmatprep.subr.mxu0 0.0
    %1346 = vmatpush1.msra.mxu0 %v90
    %1347 = vmatprep.subr.mxu0 0.0
    %1348 = vmatpush1.msra.mxu0 %v89
    %1349 = vmatprep.subr.mxu0 0.0
    %1350 = vmatpush1.msra.mxu0 %v88
    %1351 = vmatprep.subr.mxu0 0.0
    %1352 = vmatpush1.msra.mxu0 %v87
    %1353 = vmatprep.subr.mxu0 0.0
    %1354 = vmatpush2.msra.mxu0 0.0
    %1355 = vmatprep.subr.mxu0 0.0
    %1356 = vmatpush2.msra.mxu0 0.0
    %1357 = vmatprep.subr.mxu0 0.0
    %1358 = vmatpush2.msra.mxu0 0.0
    %1359 = vmatprep.subr.mxu0 0.0
    %1360 = vmatpush2.msra.mxu0 0.0
    %1361 = vmatprep.subr.mxu0 0.0
    %1362 = vmatpush2.msra.mxu0 0.0
    %1363 = vmatprep.subr.mxu0 0.0
    %1364 = vmatpush2.msra.mxu0 0.0
    %1365 = vmatprep.subr.mxu0 0.0
    %1366 = vmatpush2.msra.mxu0 0.0
    %1367 = vmatprep.subr.mxu0 0.0
    %1368 = vmatpush2.msra.mxu0 0.0
    %1369 = vmatprep.subr.mxu0 0.0
    %1370 = vmatpush2.msra.mxu0 0.0
    %1371 = vmatprep.subr.mxu0 0.0
    %1372 = vmatpush2.msra.mxu0 0.0
    %1373 = vmatprep.subr.mxu0 0.0
    %1374 = vmatpush2.msra.mxu0 0.0
    %1375 = vmatprep.subr.mxu0 0.0
    %1376 = vmatpush2.msra.mxu0 0.0
    %1377 = vmatprep.subr.mxu0 0.0
    %1378 = vmatpush2.msra.mxu0 0.0
    %1379 = vmatprep.subr.mxu0 0.0
    %1380 = vmatpush2.msra.mxu0 0.0
    %1381 = vmatprep.subr.mxu0 0.0
    %1382 = vmatpush2.msra.mxu0 0.0
    %1383 = vmatprep.subr.mxu0 0.0
    %1384 = vmatpush2.msra.mxu0 0.0
    %1385 = vmatprep.mubr.f32.mxu0 0.0
    %1386 = vmatmul.mubr.f32.gmra.mxu0 %v1319
    %v1387 = vpop.f32.mrf.mxu0
    %v1388 = vadd.f32 0.0, %v1387
    %v1389 = vpop.f32.mrf.mxu0
    %1390 = vdwg.mxu0
    %v1391 = vadd.f32 %v1317, %v1388
    %v1392 = vxor.u32 %v1391, 2147483648
    %v1393 = vmul.f32 %v1392, 1.442695
    %v1394 = vpow.pop %v1393
    %v1395 = vadd.f32 %v1394, 1.0
    %v1396 = vrcp.pop %v1395
    %v1397 = vmul.f32 1.0, %v1396
    %v1398 = vtanh.pop %v1391
    %v1399 = vmul.f32 %v1397, %v1220
    %1401 = vrot.lane.b32.xlu0 %v1398, 32
    %v1402 = vpop.permute.xlu0 %1401
    %v1404 = vmul.f32 %v1397, %v1402
    %1406 = vrot.lane.b32.xlu0 %v1404, 32
    %v1407 = vpop.permute.xlu0 %1406
    %v1409 = vadd.f32 %v1399, %v1407
    %v1410 = vtanh.pop %v1409
    %1412 = vrot.lane.b32.xlu0 %v1410, 32
    %v1413 = vpop.permute.xlu0 %1412
    %v1415 = vmul.f32 %v1397, %v1413
    %1417 = vrot.lane.b32.xlu0 %v1415, 64
    %v1418 = vpop.permute.xlu0 %1417
    %v1419 = vsel %vm93, %v1418, 0
    %1421 = vmatprep.subr.mxu0 0.0
    %1422 = vmatpush1.msra.mxu0 0.0
    %1423 = vmatprep.subr.mxu0 0.0
    %1424 = vmatpush1.msra.mxu0 0.0
    %1425 = vmatprep.subr.mxu0 0.0
    %1426 = vmatpush1.msra.mxu0 0.0
    %1427 = vmatprep.subr.mxu0 0.0
    %1428 = vmatpush1.msra.mxu0 0.0
    %1429 = vmatprep.subr.mxu0 0.0
    %1430 = vmatpush1.msra.mxu0 0.0
    %1431 = vmatprep.subr.mxu0 0.0
    %1432 = vmatpush1.msra.mxu0 0.0
    %1433 = vmatprep.subr.mxu0 0.0
    %1434 = vmatpush1.msra.mxu0 0.0
    %1435 = vmatprep.subr.mxu0 0.0
    %1436 = vmatpush1.msra.mxu0 0.0
    %1437 = vmatprep.subr.mxu0 0.0
    %1438 = vmatpush1.msra.mxu0 0.0
    %1439 = vmatprep.subr.mxu0 0.0
    %1440 = vmatpush1.msra.mxu0 0.0
    %1441 = vmatprep.subr.mxu0 0.0
    %1442 = vmatpush1.msra.mxu0 0.0
    %1443 = vmatprep.subr.mxu0 0.0
    %1444 = vmatpush1.msra.mxu0 0.0
    %1445 = vmatprep.subr.mxu0 0.0
    %1446 = vmatpush1.msra.mxu0 %v86
    %1447 = vmatprep.subr.mxu0 0.0
    %1448 = vmatpush1.msra.mxu0 %v85
    %1449 = vmatprep.subr.mxu0 0.0
    %1450 = vmatpush1.msra.mxu0 %v84
    %1451 = vmatprep.subr.mxu0 0.0
    %1452 = vmatpush1.msra.mxu0 %v83
    %1453 = vmatprep.subr.mxu0 0.0
    %1454 = vmatpush2.msra.mxu0 0.0
    %1455 = vmatprep.subr.mxu0 0.0
    %1456 = vmatpush2.msra.mxu0 0.0
    %1457 = vmatprep.subr.mxu0 0.0
    %1458 = vmatpush2.msra.mxu0 0.0
    %1459 = vmatprep.subr.mxu0 0.0
    %1460 = vmatpush2.msra.mxu0 0.0
    %1461 = vmatprep.subr.mxu0 0.0
    %1462 = vmatpush2.msra.mxu0 0.0
    %1463 = vmatprep.subr.mxu0 0.0
    %1464 = vmatpush2.msra.mxu0 0.0
    %1465 = vmatprep.subr.mxu0 0.0
    %1466 = vmatpush2.msra.mxu0 0.0
    %1467 = vmatprep.subr.mxu0 0.0
    %1468 = vmatpush2.msra.mxu0 0.0
    %1469 = vmatprep.subr.mxu0 0.0
    %1470 = vmatpush2.msra.mxu0 0.0
    %1471 = vmatprep.subr.mxu0 0.0
    %1472 = vmatpush2.msra.mxu0 0.0
    %1473 = vmatprep.subr.mxu0 0.0
    %1474 = vmatpush2.msra.mxu0 0.0
    %1475 = vmatprep.subr.mxu0 0.0
    %1476 = vmatpush2.msra.mxu0 0.0
    %1477 = vmatprep.subr.mxu0 0.0
    %1478 = vmatpush2.msra.mxu0 0.0
    %1479 = vmatprep.subr.mxu0 0.0
    %1480 = vmatpush2.msra.mxu0 0.0
    %1481 = vmatprep.subr.mxu0 0.0
    %1482 = vmatpush2.msra.mxu0 0.0
    %1483 = vmatprep.subr.mxu0 0.0
    %1484 = vmatpush2.msra.mxu0 0.0
    %1485 = vmatprep.mubr.f32.mxu0 0.0
    %1486 = vmatmul.mubr.f32.gmra.mxu0 %v1419
    %v1487 = vpop.f32.mrf.mxu0
    %v1488 = vadd.f32 %v82, %v1487
    %v1489 = vpop.f32.mrf.mxu0
    %1490 = vdwg.mxu0
    %v1491 = vxor.u32 %v1488, 2147483648
    %v1492 = vmul.f32 %v1491, 1.442695
    %v1493 = vpow.pop %v1492
    %v1494 = vadd.f32 %v1493, 1.0
    %v1495 = vrcp.pop %v1494
    %v1496 = vmul.f32 1.0, %v1495
    %v1497 = vsub.f32 1.0, %v1496
    %v1499 = vmul.f32 %v1497, %v1418
    %v1500 = vmul.f32 %v1496, %v81
    %v1501 = vadd.f32 %v1499, %v1500
    %v1502 = vsel %vm93, %v1501, 0.0
    %s1503 = scalar_lea.vmem [#allocation12], 14
    %1504 = vst [vmem:[%s1503] sm:$0x3] %v1502
    %s1505 = scalar_lea.vmem [#allocation4], 14
    %v1506 = vld [vmem:[%s1505] sm:$0x3]
    %v1508 = vsel %vm93, %v1501, 0
    %1510 = vmatprep.subr.mxu0 0.0
    %1511 = vmatpush1.msra.mxu0 0.0
    %1512 = vmatprep.subr.mxu0 0.0
    %1513 = vmatpush1.msra.mxu0 0.0
    %1514 = vmatprep.subr.mxu0 0.0
    %1515 = vmatpush1.msra.mxu0 0.0
    %1516 = vmatprep.subr.mxu0 0.0
    %1517 = vmatpush1.msra.mxu0 0.0
    %1518 = vmatprep.subr.mxu0 0.0
    %1519 = vmatpush1.msra.mxu0 0.0
    %1520 = vmatprep.subr.mxu0 0.0
    %1521 = vmatpush1.msra.mxu0 0.0
    %1522 = vmatprep.subr.mxu0 0.0
    %1523 = vmatpush1.msra.mxu0 0.0
    %1524 = vmatprep.subr.mxu0 0.0
    %1525 = vmatpush1.msra.mxu0 0.0
    %1526 = vmatprep.subr.mxu0 0.0
    %1527 = vmatpush1.msra.mxu0 0.0
    %1528 = vmatprep.subr.mxu0 0.0
    %1529 = vmatpush1.msra.mxu0 0.0
    %1530 = vmatprep.subr.mxu0 0.0
    %1531 = vmatpush1.msra.mxu0 0.0
    %1532 = vmatprep.subr.mxu0 0.0
    %1533 = vmatpush1.msra.mxu0 0.0
    %1534 = vmatprep.subr.mxu0 0.0
    %1535 = vmatpush1.msra.mxu0 %v90
    %1536 = vmatprep.subr.mxu0 0.0
    %1537 = vmatpush1.msra.mxu0 %v89
    %1538 = vmatprep.subr.mxu0 0.0
    %1539 = vmatpush1.msra.mxu0 %v88
    %1540 = vmatprep.subr.mxu0 0.0
    %1541 = vmatpush1.msra.mxu0 %v87
    %1542 = vmatprep.subr.mxu0 0.0
    %1543 = vmatpush2.msra.mxu0 0.0
    %1544 = vmatprep.subr.mxu0 0.0
    %1545 = vmatpush2.msra.mxu0 0.0
    %1546 = vmatprep.subr.mxu0 0.0
    %1547 = vmatpush2.msra.mxu0 0.0
    %1548 = vmatprep.subr.mxu0 0.0
    %1549 = vmatpush2.msra.mxu0 0.0
    %1550 = vmatprep.subr.mxu0 0.0
    %1551 = vmatpush2.msra.mxu0 0.0
    %1552 = vmatprep.subr.mxu0 0.0
    %1553 = vmatpush2.msra.mxu0 0.0
    %1554 = vmatprep.subr.mxu0 0.0
    %1555 = vmatpush2.msra.mxu0 0.0
    %1556 = vmatprep.subr.mxu0 0.0
    %1557 = vmatpush2.msra.mxu0 0.0
    %1558 = vmatprep.subr.mxu0 0.0
    %1559 = vmatpush2.msra.mxu0 0.0
    %1560 = vmatprep.subr.mxu0 0.0
    %1561 = vmatpush2.msra.mxu0 0.0
    %1562 = vmatprep.subr.mxu0 0.0
    %1563 = vmatpush2.msra.mxu0 0.0
    %1564 = vmatprep.subr.mxu0 0.0
    %1565 = vmatpush2.msra.mxu0 0.0
    %1566 = vmatprep.subr.mxu0 0.0
    %1567 = vmatpush2.msra.mxu0 0.0
    %1568 = vmatprep.subr.mxu0 0.0
    %1569 = vmatpush2.msra.mxu0 0.0
    %1570 = vmatprep.subr.mxu0 0.0
    %1571 = vmatpush2.msra.mxu0 0.0
    %1572 = vmatprep.subr.mxu0 0.0
    %1573 = vmatpush2.msra.mxu0 0.0
    %1574 = vmatprep.mubr.f32.mxu0 0.0
    %1575 = vmatmul.mubr.f32.gmra.mxu0 %v1508
    %v1576 = vpop.f32.mrf.mxu0
    %v1577 = vadd.f32 0.0, %v1576
    %v1578 = vpop.f32.mrf.mxu0
    %1579 = vdwg.mxu0
    %v1580 = vadd.f32 %v1506, %v1577
    %v1581 = vxor.u32 %v1580, 2147483648
    %v1582 = vmul.f32 %v1581, 1.442695
    %v1583 = vpow.pop %v1582
    %v1584 = vadd.f32 %v1583, 1.0
    %v1585 = vrcp.pop %v1584
    %v1586 = vmul.f32 1.0, %v1585
    %v1587 = vtanh.pop %v1580
    %v1588 = vmul.f32 %v1586, %v1409
    %1590 = vrot.lane.b32.xlu0 %v1587, 32
    %v1591 = vpop.permute.xlu0 %1590
    %v1593 = vmul.f32 %v1586, %v1591
    %1595 = vrot.lane.b32.xlu0 %v1593, 32
    %v1596 = vpop.permute.xlu0 %1595
    %v1598 = vadd.f32 %v1588, %v1596
    %v1599 = vtanh.pop %v1598
    %1601 = vrot.lane.b32.xlu0 %v1599, 32
    %v1602 = vpop.permute.xlu0 %1601
    %v1604 = vmul.f32 %v1586, %v1602
    %1606 = vrot.lane.b32.xlu0 %v1604, 64
    %v1607 = vpop.permute.xlu0 %1606
    %v1608 = vsel %vm93, %v1607, 0
    %1610 = vmatprep.subr.mxu0 0.0
    %1611 = vmatpush1.msra.mxu0 0.0
    %1612 = vmatprep.subr.mxu0 0.0
    %1613 = vmatpush1.msra.mxu0 0.0
    %1614 = vmatprep.subr.mxu0 0.0
    %1615 = vmatpush1.msra.mxu0 0.0
    %1616 = vmatprep.subr.mxu0 0.0
    %1617 = vmatpush1.msra.mxu0 0.0
    %1618 = vmatprep.subr.mxu0 0.0
    %1619 = vmatpush1.msra.mxu0 0.0
    %1620 = vmatprep.subr.mxu0 0.0
    %1621 = vmatpush1.msra.mxu0 0.0
    %1622 = vmatprep.subr.mxu0 0.0
    %1623 = vmatpush1.msra.mxu0 0.0
    %1624 = vmatprep.subr.mxu0 0.0
    %1625 = vmatpush1.msra.mxu0 0.0
    %1626 = vmatprep.subr.mxu0 0.0
    %1627 = vmatpush1.msra.mxu0 0.0
    %1628 = vmatprep.subr.mxu0 0.0
    %1629 = vmatpush1.msra.mxu0 0.0
    %1630 = vmatprep.subr.mxu0 0.0
    %1631 = vmatpush1.msra.mxu0 0.0
    %1632 = vmatprep.subr.mxu0 0.0
    %1633 = vmatpush1.msra.mxu0 0.0
    %1634 = vmatprep.subr.mxu0 0.0
    %1635 = vmatpush1.msra.mxu0 %v86
    %1636 = vmatprep.subr.mxu0 0.0
    %1637 = vmatpush1.msra.mxu0 %v85
    %1638 = vmatprep.subr.mxu0 0.0
    %1639 = vmatpush1.msra.mxu0 %v84
    %1640 = vmatprep.subr.mxu0 0.0
    %1641 = vmatpush1.msra.mxu0 %v83
    %1642 = vmatprep.subr.mxu0 0.0
    %1643 = vmatpush2.msra.mxu0 0.0
    %1644 = vmatprep.subr.mxu0 0.0
    %1645 = vmatpush2.msra.mxu0 0.0
    %1646 = vmatprep.subr.mxu0 0.0
    %1647 = vmatpush2.msra.mxu0 0.0
    %1648 = vmatprep.subr.mxu0 0.0
    %1649 = vmatpush2.msra.mxu0 0.0
    %1650 = vmatprep.subr.mxu0 0.0
    %1651 = vmatpush2.msra.mxu0 0.0
    %1652 = vmatprep.subr.mxu0 0.0
    %1653 = vmatpush2.msra.mxu0 0.0
    %1654 = vmatprep.subr.mxu0 0.0
    %1655 = vmatpush2.msra.mxu0 0.0
    %1656 = vmatprep.subr.mxu0 0.0
    %1657 = vmatpush2.msra.mxu0 0.0
    %1658 = vmatprep.subr.mxu0 0.0
    %1659 = vmatpush2.msra.mxu0 0.0
    %1660 = vmatprep.subr.mxu0 0.0
    %1661 = vmatpush2.msra.mxu0 0.0
    %1662 = vmatprep.subr.mxu0 0.0
    %1663 = vmatpush2.msra.mxu0 0.0
    %1664 = vmatprep.subr.mxu0 0.0
    %1665 = vmatpush2.msra.mxu0 0.0
    %1666 = vmatprep.subr.mxu0 0.0
    %1667 = vmatpush2.msra.mxu0 0.0
    %1668 = vmatprep.subr.mxu0 0.0
    %1669 = vmatpush2.msra.mxu0 0.0
    %1670 = vmatprep.subr.mxu0 0.0
    %1671 = vmatpush2.msra.mxu0 0.0
    %1672 = vmatprep.subr.mxu0 0.0
    %1673 = vmatpush2.msra.mxu0 0.0
    %1674 = vmatprep.mubr.f32.mxu0 0.0
    %1675 = vmatmul.mubr.f32.gmra.mxu0 %v1608
    %v1676 = vpop.f32.mrf.mxu0
    %v1677 = vadd.f32 %v82, %v1676
    %v1678 = vpop.f32.mrf.mxu0
    %1679 = vdwg.mxu0
    %v1680 = vxor.u32 %v1677, 2147483648
    %v1681 = vmul.f32 %v1680, 1.442695
    %v1682 = vpow.pop %v1681
    %v1683 = vadd.f32 %v1682, 1.0
    %v1684 = vrcp.pop %v1683
    %v1685 = vmul.f32 1.0, %v1684
    %v1686 = vsub.f32 1.0, %v1685
    %v1688 = vmul.f32 %v1686, %v1607
    %v1689 = vmul.f32 %v1685, %v81
    %v1690 = vadd.f32 %v1688, %v1689
    %v1691 = vsel %vm93, %v1690, 0.0
    %s1692 = scalar_lea.vmem [#allocation12], 16
    %1693 = vst [vmem:[%s1692] sm:$0x3] %v1691
    %s1694 = scalar_lea.vmem [#allocation4], 16
    %v1695 = vld [vmem:[%s1694] sm:$0x3]
    %v1697 = vsel %vm93, %v1690, 0
    %1699 = vmatprep.subr.mxu0 0.0
    %1700 = vmatpush1.msra.mxu0 0.0
    %1701 = vmatprep.subr.mxu0 0.0
    %1702 = vmatpush1.msra.mxu0 0.0
    %1703 = vmatprep.subr.mxu0 0.0
    %1704 = vmatpush1.msra.mxu0 0.0
    %1705 = vmatprep.subr.mxu0 0.0
    %1706 = vmatpush1.msra.mxu0 0.0
    %1707 = vmatprep.subr.mxu0 0.0
    %1708 = vmatpush1.msra.mxu0 0.0
    %1709 = vmatprep.subr.mxu0 0.0
    %1710 = vmatpush1.msra.mxu0 0.0
    %1711 = vmatprep.subr.mxu0 0.0
    %1712 = vmatpush1.msra.mxu0 0.0
    %1713 = vmatprep.subr.mxu0 0.0
    %1714 = vmatpush1.msra.mxu0 0.0
    %1715 = vmatprep.subr.mxu0 0.0
    %1716 = vmatpush1.msra.mxu0 0.0
    %1717 = vmatprep.subr.mxu0 0.0
    %1718 = vmatpush1.msra.mxu0 0.0
    %1719 = vmatprep.subr.mxu0 0.0
    %1720 = vmatpush1.msra.mxu0 0.0
    %1721 = vmatprep.subr.mxu0 0.0
    %1722 = vmatpush1.msra.mxu0 0.0
    %1723 = vmatprep.subr.mxu0 0.0
    %1724 = vmatpush1.msra.mxu0 %v90
    %1725 = vmatprep.subr.mxu0 0.0
    %1726 = vmatpush1.msra.mxu0 %v89
    %1727 = vmatprep.subr.mxu0 0.0
    %1728 = vmatpush1.msra.mxu0 %v88
    %1729 = vmatprep.subr.mxu0 0.0
    %1730 = vmatpush1.msra.mxu0 %v87
    %1731 = vmatprep.subr.mxu0 0.0
    %1732 = vmatpush2.msra.mxu0 0.0
    %1733 = vmatprep.subr.mxu0 0.0
    %1734 = vmatpush2.msra.mxu0 0.0
    %1735 = vmatprep.subr.mxu0 0.0
    %1736 = vmatpush2.msra.mxu0 0.0
    %1737 = vmatprep.subr.mxu0 0.0
    %1738 = vmatpush2.msra.mxu0 0.0
    %1739 = vmatprep.subr.mxu0 0.0
    %1740 = vmatpush2.msra.mxu0 0.0
    %1741 = vmatprep.subr.mxu0 0.0
    %1742 = vmatpush2.msra.mxu0 0.0
    %1743 = vmatprep.subr.mxu0 0.0
    %1744 = vmatpush2.msra.mxu0 0.0
    %1745 = vmatprep.subr.mxu0 0.0
    %1746 = vmatpush2.msra.mxu0 0.0
    %1747 = vmatprep.subr.mxu0 0.0
    %1748 = vmatpush2.msra.mxu0 0.0
    %1749 = vmatprep.subr.mxu0 0.0
    %1750 = vmatpush2.msra.mxu0 0.0
    %1751 = vmatprep.subr.mxu0 0.0
    %1752 = vmatpush2.msra.mxu0 0.0
    %1753 = vmatprep.subr.mxu0 0.0
    %1754 = vmatpush2.msra.mxu0 0.0
    %1755 = vmatprep.subr.mxu0 0.0
    %1756 = vmatpush2.msra.mxu0 0.0
    %1757 = vmatprep.subr.mxu0 0.0
    %1758 = vmatpush2.msra.mxu0 0.0
    %1759 = vmatprep.subr.mxu0 0.0
    %1760 = vmatpush2.msra.mxu0 0.0
    %1761 = vmatprep.subr.mxu0 0.0
    %1762 = vmatpush2.msra.mxu0 0.0
    %1763 = vmatprep.mubr.f32.mxu0 0.0
    %1764 = vmatmul.mubr.f32.gmra.mxu0 %v1697
    %v1765 = vpop.f32.mrf.mxu0
    %v1766 = vadd.f32 0.0, %v1765
    %v1767 = vpop.f32.mrf.mxu0
    %1768 = vdwg.mxu0
    %v1769 = vadd.f32 %v1695, %v1766
    %v1770 = vxor.u32 %v1769, 2147483648
    %v1771 = vmul.f32 %v1770, 1.442695
    %v1772 = vpow.pop %v1771
    %v1773 = vadd.f32 %v1772, 1.0
    %v1774 = vrcp.pop %v1773
    %v1775 = vmul.f32 1.0, %v1774
    %v1776 = vtanh.pop %v1769
    %v1777 = vmul.f32 %v1775, %v1598
    %1779 = vrot.lane.b32.xlu0 %v1776, 32
    %v1780 = vpop.permute.xlu0 %1779
    %v1782 = vmul.f32 %v1775, %v1780
    %1784 = vrot.lane.b32.xlu0 %v1782, 32
    %v1785 = vpop.permute.xlu0 %1784
    %v1787 = vadd.f32 %v1777, %v1785
    %v1788 = vtanh.pop %v1787
    %1790 = vrot.lane.b32.xlu0 %v1788, 32
    %v1791 = vpop.permute.xlu0 %1790
    %v1793 = vmul.f32 %v1775, %v1791
    %1795 = vrot.lane.b32.xlu0 %v1793, 64
    %v1796 = vpop.permute.xlu0 %1795
    %v1797 = vsel %vm93, %v1796, 0
    %1799 = vmatprep.subr.mxu0 0.0
    %1800 = vmatpush1.msra.mxu0 0.0
    %1801 = vmatprep.subr.mxu0 0.0
    %1802 = vmatpush1.msra.mxu0 0.0
    %1803 = vmatprep.subr.mxu0 0.0
    %1804 = vmatpush1.msra.mxu0 0.0
    %1805 = vmatprep.subr.mxu0 0.0
    %1806 = vmatpush1.msra.mxu0 0.0
    %1807 = vmatprep.subr.mxu0 0.0
    %1808 = vmatpush1.msra.mxu0 0.0
    %1809 = vmatprep.subr.mxu0 0.0
    %1810 = vmatpush1.msra.mxu0 0.0
    %1811 = vmatprep.subr.mxu0 0.0
    %1812 = vmatpush1.msra.mxu0 0.0
    %1813 = vmatprep.subr.mxu0 0.0
    %1814 = vmatpush1.msra.mxu0 0.0
    %1815 = vmatprep.subr.mxu0 0.0
    %1816 = vmatpush1.msra.mxu0 0.0
    %1817 = vmatprep.subr.mxu0 0.0
    %1818 = vmatpush1.msra.mxu0 0.0
    %1819 = vmatprep.subr.mxu0 0.0
    %1820 = vmatpush1.msra.mxu0 0.0
    %1821 = vmatprep.subr.mxu0 0.0
    %1822 = vmatpush1.msra.mxu0 0.0
    %1823 = vmatprep.subr.mxu0 0.0
    %1824 = vmatpush1.msra.mxu0 %v86
    %1825 = vmatprep.subr.mxu0 0.0
    %1826 = vmatpush1.msra.mxu0 %v85
    %1827 = vmatprep.subr.mxu0 0.0
    %1828 = vmatpush1.msra.mxu0 %v84
    %1829 = vmatprep.subr.mxu0 0.0
    %1830 = vmatpush1.msra.mxu0 %v83
    %1831 = vmatprep.subr.mxu0 0.0
    %1832 = vmatpush2.msra.mxu0 0.0
    %1833 = vmatprep.subr.mxu0 0.0
    %1834 = vmatpush2.msra.mxu0 0.0
    %1835 = vmatprep.subr.mxu0 0.0
    %1836 = vmatpush2.msra.mxu0 0.0
    %1837 = vmatprep.subr.mxu0 0.0
    %1838 = vmatpush2.msra.mxu0 0.0
    %1839 = vmatprep.subr.mxu0 0.0
    %1840 = vmatpush2.msra.mxu0 0.0
    %1841 = vmatprep.subr.mxu0 0.0
    %1842 = vmatpush2.msra.mxu0 0.0
    %1843 = vmatprep.subr.mxu0 0.0
    %1844 = vmatpush2.msra.mxu0 0.0
    %1845 = vmatprep.subr.mxu0 0.0
    %1846 = vmatpush2.msra.mxu0 0.0
    %1847 = vmatprep.subr.mxu0 0.0
    %1848 = vmatpush2.msra.mxu0 0.0
    %1849 = vmatprep.subr.mxu0 0.0
    %1850 = vmatpush2.msra.mxu0 0.0
    %1851 = vmatprep.subr.mxu0 0.0
    %1852 = vmatpush2.msra.mxu0 0.0
    %1853 = vmatprep.subr.mxu0 0.0
    %1854 = vmatpush2.msra.mxu0 0.0
    %1855 = vmatprep.subr.mxu0 0.0
    %1856 = vmatpush2.msra.mxu0 0.0
    %1857 = vmatprep.subr.mxu0 0.0
    %1858 = vmatpush2.msra.mxu0 0.0
    %1859 = vmatprep.subr.mxu0 0.0
    %1860 = vmatpush2.msra.mxu0 0.0
    %1861 = vmatprep.subr.mxu0 0.0
    %1862 = vmatpush2.msra.mxu0 0.0
    %1863 = vmatprep.mubr.f32.mxu0 0.0
    %1864 = vmatmul.mubr.f32.gmra.mxu0 %v1797
    %v1865 = vpop.f32.mrf.mxu0
    %v1866 = vadd.f32 %v82, %v1865
    %v1867 = vpop.f32.mrf.mxu0
    %1868 = vdwg.mxu0
    %v1869 = vxor.u32 %v1866, 2147483648
    %v1870 = vmul.f32 %v1869, 1.442695
    %v1871 = vpow.pop %v1870
    %v1872 = vadd.f32 %v1871, 1.0
    %v1873 = vrcp.pop %v1872
    %v1874 = vmul.f32 1.0, %v1873
    %v1875 = vsub.f32 1.0, %v1874
    %v1877 = vmul.f32 %v1875, %v1796
    %v1878 = vmul.f32 %v1874, %v81
    %v1879 = vadd.f32 %v1877, %v1878
    %v1880 = vsel %vm93, %v1879, 0.0
    %s1881 = scalar_lea.vmem [#allocation12], 18
    %1882 = vst [vmem:[%s1881] sm:$0x3] %v1880
    %s1883 = scalar_lea.vmem [#allocation4], 18
    %v1884 = vld [vmem:[%s1883] sm:$0x3]
    %v1886 = vsel %vm93, %v1879, 0
    %1888 = vmatprep.subr.mxu0 0.0
    %1889 = vmatpush1.msra.mxu0 0.0
    %1890 = vmatprep.subr.mxu0 0.0
    %1891 = vmatpush1.msra.mxu0 0.0
    %1892 = vmatprep.subr.mxu0 0.0
    %1893 = vmatpush1.msra.mxu0 0.0
    %1894 = vmatprep.subr.mxu0 0.0
    %1895 = vmatpush1.msra.mxu0 0.0
    %1896 = vmatprep.subr.mxu0 0.0
    %1897 = vmatpush1.msra.mxu0 0.0
    %1898 = vmatprep.subr.mxu0 0.0
    %1899 = vmatpush1.msra.mxu0 0.0
    %1900 = vmatprep.subr.mxu0 0.0
    %1901 = vmatpush1.msra.mxu0 0.0
    %1902 = vmatprep.subr.mxu0 0.0
    %1903 = vmatpush1.msra.mxu0 0.0
    %1904 = vmatprep.subr.mxu0 0.0
    %1905 = vmatpush1.msra.mxu0 0.0
    %1906 = vmatprep.subr.mxu0 0.0
    %1907 = vmatpush1.msra.mxu0 0.0
    %1908 = vmatprep.subr.mxu0 0.0
    %1909 = vmatpush1.msra.mxu0 0.0
    %1910 = vmatprep.subr.mxu0 0.0
    %1911 = vmatpush1.msra.mxu0 0.0
    %1912 = vmatprep.subr.mxu0 0.0
    %1913 = vmatpush1.msra.mxu0 %v90
    %1914 = vmatprep.subr.mxu0 0.0
    %1915 = vmatpush1.msra.mxu0 %v89
    %1916 = vmatprep.subr.mxu0 0.0
    %1917 = vmatpush1.msra.mxu0 %v88
    %1918 = vmatprep.subr.mxu0 0.0
    %1919 = vmatpush1.msra.mxu0 %v87
    %1920 = vmatprep.subr.mxu0 0.0
    %1921 = vmatpush2.msra.mxu0 0.0
    %1922 = vmatprep.subr.mxu0 0.0
    %1923 = vmatpush2.msra.mxu0 0.0
    %1924 = vmatprep.subr.mxu0 0.0
    %1925 = vmatpush2.msra.mxu0 0.0
    %1926 = vmatprep.subr.mxu0 0.0
    %1927 = vmatpush2.msra.mxu0 0.0
    %1928 = vmatprep.subr.mxu0 0.0
    %1929 = vmatpush2.msra.mxu0 0.0
    %1930 = vmatprep.subr.mxu0 0.0
    %1931 = vmatpush2.msra.mxu0 0.0
    %1932 = vmatprep.subr.mxu0 0.0
    %1933 = vmatpush2.msra.mxu0 0.0
    %1934 = vmatprep.subr.mxu0 0.0
    %1935 = vmatpush2.msra.mxu0 0.0
    %1936 = vmatprep.subr.mxu0 0.0
    %1937 = vmatpush2.msra.mxu0 0.0
    %1938 = vmatprep.subr.mxu0 0.0
    %1939 = vmatpush2.msra.mxu0 0.0
    %1940 = vmatprep.subr.mxu0 0.0
    %1941 = vmatpush2.msra.mxu0 0.0
    %1942 = vmatprep.subr.mxu0 0.0
    %1943 = vmatpush2.msra.mxu0 0.0
    %1944 = vmatprep.subr.mxu0 0.0
    %1945 = vmatpush2.msra.mxu0 0.0
    %1946 = vmatprep.subr.mxu0 0.0
    %1947 = vmatpush2.msra.mxu0 0.0
    %1948 = vmatprep.subr.mxu0 0.0
    %1949 = vmatpush2.msra.mxu0 0.0
    %1950 = vmatprep.subr.mxu0 0.0
    %1951 = vmatpush2.msra.mxu0 0.0
    %1952 = vmatprep.mubr.f32.mxu0 0.0
    %1953 = vmatmul.mubr.f32.gmra.mxu0 %v1886
    %v1954 = vpop.f32.mrf.mxu0
    %v1955 = vadd.f32 0.0, %v1954
    %v1956 = vpop.f32.mrf.mxu0
    %1957 = vdwg.mxu0
    %v1958 = vadd.f32 %v1884, %v1955
    %v1959 = vxor.u32 %v1958, 2147483648
    %v1960 = vmul.f32 %v1959, 1.442695
    %v1961 = vpow.pop %v1960
    %v1962 = vadd.f32 %v1961, 1.0
    %v1963 = vrcp.pop %v1962
    %v1964 = vmul.f32 1.0, %v1963
    %v1965 = vtanh.pop %v1958
    %v1966 = vmul.f32 %v1964, %v1787
    %1968 = vrot.lane.b32.xlu0 %v1965, 32
    %v1969 = vpop.permute.xlu0 %1968
    %v1971 = vmul.f32 %v1964, %v1969
    %1973 = vrot.lane.b32.xlu0 %v1971, 32
    %v1974 = vpop.permute.xlu0 %1973
    %v1976 = vadd.f32 %v1966, %v1974
    %v1977 = vtanh.pop %v1976
    %1979 = vrot.lane.b32.xlu0 %v1977, 32
    %v1980 = vpop.permute.xlu0 %1979
    %v1982 = vmul.f32 %v1964, %v1980
    %1984 = vrot.lane.b32.xlu0 %v1982, 64
    %v1985 = vpop.permute.xlu0 %1984
    %v1986 = vsel %vm93, %v1985, 0
    %1988 = vmatprep.subr.mxu0 0.0
    %1989 = vmatpush1.msra.mxu0 0.0
    %1990 = vmatprep.subr.mxu0 0.0
    %1991 = vmatpush1.msra.mxu0 0.0
    %1992 = vmatprep.subr.mxu0 0.0
    %1993 = vmatpush1.msra.mxu0 0.0
    %1994 = vmatprep.subr.mxu0 0.0
    %1995 = vmatpush1.msra.mxu0 0.0
    %1996 = vmatprep.subr.mxu0 0.0
    %1997 = vmatpush1.msra.mxu0 0.0
    %1998 = vmatprep.subr.mxu0 0.0
    %1999 = vmatpush1.msra.mxu0 0.0
    %2000 = vmatprep.subr.mxu0 0.0
    %2001 = vmatpush1.msra.mxu0 0.0
    %2002 = vmatprep.subr.mxu0 0.0
    %2003 = vmatpush1.msra.mxu0 0.0
    %2004 = vmatprep.subr.mxu0 0.0
    %2005 = vmatpush1.msra.mxu0 0.0
    %2006 = vmatprep.subr.mxu0 0.0
    %2007 = vmatpush1.msra.mxu0 0.0
    %2008 = vmatprep.subr.mxu0 0.0
    %2009 = vmatpush1.msra.mxu0 0.0
    %2010 = vmatprep.subr.mxu0 0.0
    %2011 = vmatpush1.msra.mxu0 0.0
    %2012 = vmatprep.subr.mxu0 0.0
    %2013 = vmatpush1.msra.mxu0 %v86
    %2014 = vmatprep.subr.mxu0 0.0
    %2015 = vmatpush1.msra.mxu0 %v85
    %2016 = vmatprep.subr.mxu0 0.0
    %2017 = vmatpush1.msra.mxu0 %v84
    %2018 = vmatprep.subr.mxu0 0.0
    %2019 = vmatpush1.msra.mxu0 %v83
    %2020 = vmatprep.subr.mxu0 0.0
    %2021 = vmatpush2.msra.mxu0 0.0
    %2022 = vmatprep.subr.mxu0 0.0
    %2023 = vmatpush2.msra.mxu0 0.0
    %2024 = vmatprep.subr.mxu0 0.0
    %2025 = vmatpush2.msra.mxu0 0.0
    %2026 = vmatprep.subr.mxu0 0.0
    %2027 = vmatpush2.msra.mxu0 0.0
    %2028 = vmatprep.subr.mxu0 0.0
    %2029 = vmatpush2.msra.mxu0 0.0
    %2030 = vmatprep.subr.mxu0 0.0
    %2031 = vmatpush2.msra.mxu0 0.0
    %2032 = vmatprep.subr.mxu0 0.0
    %2033 = vmatpush2.msra.mxu0 0.0
    %2034 = vmatprep.subr.mxu0 0.0
    %2035 = vmatpush2.msra.mxu0 0.0
    %2036 = vmatprep.subr.mxu0 0.0
    %2037 = vmatpush2.msra.mxu0 0.0
    %2038 = vmatprep.subr.mxu0 0.0
    %2039 = vmatpush2.msra.mxu0 0.0
    %2040 = vmatprep.subr.mxu0 0.0
    %2041 = vmatpush2.msra.mxu0 0.0
    %2042 = vmatprep.subr.mxu0 0.0
    %2043 = vmatpush2.msra.mxu0 0.0
    %2044 = vmatprep.subr.mxu0 0.0
    %2045 = vmatpush2.msra.mxu0 0.0
    %2046 = vmatprep.subr.mxu0 0.0
    %2047 = vmatpush2.msra.mxu0 0.0
    %2048 = vmatprep.subr.mxu0 0.0
    %2049 = vmatpush2.msra.mxu0 0.0
    %2050 = vmatprep.subr.mxu0 0.0
    %2051 = vmatpush2.msra.mxu0 0.0
    %2052 = vmatprep.mubr.f32.mxu0 0.0
    %2053 = vmatmul.mubr.f32.gmra.mxu0 %v1986
    %v2054 = vpop.f32.mrf.mxu0
    %v2055 = vadd.f32 %v82, %v2054
    %v2056 = vpop.f32.mrf.mxu0
    %2057 = vdwg.mxu0
    %v2058 = vxor.u32 %v2055, 2147483648
    %v2059 = vmul.f32 %v2058, 1.442695
    %v2060 = vpow.pop %v2059
    %v2061 = vadd.f32 %v2060, 1.0
    %v2062 = vrcp.pop %v2061
    %v2063 = vmul.f32 1.0, %v2062
    %v2064 = vsub.f32 1.0, %v2063
    %v2066 = vmul.f32 %v2064, %v1985
    %v2067 = vmul.f32 %v2063, %v81
    %v2068 = vadd.f32 %v2066, %v2067
    %v2069 = vsel %vm93, %v2068, 0.0
    %s2070 = scalar_lea.vmem [#allocation12], 20
    %2071 = vst [vmem:[%s2070] sm:$0x3] %v2069
    %s2072 = scalar_lea.vmem [#allocation4], 20
    %v2073 = vld [vmem:[%s2072] sm:$0x3]
    %v2075 = vsel %vm93, %v2068, 0
    %2077 = vmatprep.subr.mxu0 0.0
    %2078 = vmatpush1.msra.mxu0 0.0
    %2079 = vmatprep.subr.mxu0 0.0
    %2080 = vmatpush1.msra.mxu0 0.0
    %2081 = vmatprep.subr.mxu0 0.0
    %2082 = vmatpush1.msra.mxu0 0.0
    %2083 = vmatprep.subr.mxu0 0.0
    %2084 = vmatpush1.msra.mxu0 0.0
    %2085 = vmatprep.subr.mxu0 0.0
    %2086 = vmatpush1.msra.mxu0 0.0
    %2087 = vmatprep.subr.mxu0 0.0
    %2088 = vmatpush1.msra.mxu0 0.0
    %2089 = vmatprep.subr.mxu0 0.0
    %2090 = vmatpush1.msra.mxu0 0.0
    %2091 = vmatprep.subr.mxu0 0.0
    %2092 = vmatpush1.msra.mxu0 0.0
    %2093 = vmatprep.subr.mxu0 0.0
    %2094 = vmatpush1.msra.mxu0 0.0
    %2095 = vmatprep.subr.mxu0 0.0
    %2096 = vmatpush1.msra.mxu0 0.0
    %2097 = vmatprep.subr.mxu0 0.0
    %2098 = vmatpush1.msra.mxu0 0.0
    %2099 = vmatprep.subr.mxu0 0.0
    %2100 = vmatpush1.msra.mxu0 0.0
    %2101 = vmatprep.subr.mxu0 0.0
    %2102 = vmatpush1.msra.mxu0 %v90
    %2103 = vmatprep.subr.mxu0 0.0
    %2104 = vmatpush1.msra.mxu0 %v89
    %2105 = vmatprep.subr.mxu0 0.0
    %2106 = vmatpush1.msra.mxu0 %v88
    %2107 = vmatprep.subr.mxu0 0.0
    %2108 = vmatpush1.msra.mxu0 %v87
    %2109 = vmatprep.subr.mxu0 0.0
    %2110 = vmatpush2.msra.mxu0 0.0
    %2111 = vmatprep.subr.mxu0 0.0
    %2112 = vmatpush2.msra.mxu0 0.0
    %2113 = vmatprep.subr.mxu0 0.0
    %2114 = vmatpush2.msra.mxu0 0.0
    %2115 = vmatprep.subr.mxu0 0.0
    %2116 = vmatpush2.msra.mxu0 0.0
    %2117 = vmatprep.subr.mxu0 0.0
    %2118 = vmatpush2.msra.mxu0 0.0
    %2119 = vmatprep.subr.mxu0 0.0
    %2120 = vmatpush2.msra.mxu0 0.0
    %2121 = vmatprep.subr.mxu0 0.0
    %2122 = vmatpush2.msra.mxu0 0.0
    %2123 = vmatprep.subr.mxu0 0.0
    %2124 = vmatpush2.msra.mxu0 0.0
    %2125 = vmatprep.subr.mxu0 0.0
    %2126 = vmatpush2.msra.mxu0 0.0
    %2127 = vmatprep.subr.mxu0 0.0
    %2128 = vmatpush2.msra.mxu0 0.0
    %2129 = vmatprep.subr.mxu0 0.0
    %2130 = vmatpush2.msra.mxu0 0.0
    %2131 = vmatprep.subr.mxu0 0.0
    %2132 = vmatpush2.msra.mxu0 0.0
    %2133 = vmatprep.subr.mxu0 0.0
    %2134 = vmatpush2.msra.mxu0 0.0
    %2135 = vmatprep.subr.mxu0 0.0
    %2136 = vmatpush2.msra.mxu0 0.0
    %2137 = vmatprep.subr.mxu0 0.0
    %2138 = vmatpush2.msra.mxu0 0.0
    %2139 = vmatprep.subr.mxu0 0.0
    %2140 = vmatpush2.msra.mxu0 0.0
    %2141 = vmatprep.mubr.f32.mxu0 0.0
    %2142 = vmatmul.mubr.f32.gmra.mxu0 %v2075
    %v2143 = vpop.f32.mrf.mxu0
    %v2144 = vadd.f32 0.0, %v2143
    %v2145 = vpop.f32.mrf.mxu0
    %2146 = vdwg.mxu0
    %v2147 = vadd.f32 %v2073, %v2144
    %v2148 = vxor.u32 %v2147, 2147483648
    %v2149 = vmul.f32 %v2148, 1.442695
    %v2150 = vpow.pop %v2149
    %v2151 = vadd.f32 %v2150, 1.0
    %v2152 = vrcp.pop %v2151
    %v2153 = vmul.f32 1.0, %v2152
    %v2154 = vtanh.pop %v2147
    %v2155 = vmul.f32 %v2153, %v1976
    %2157 = vrot.lane.b32.xlu0 %v2154, 32
    %v2158 = vpop.permute.xlu0 %2157
    %v2160 = vmul.f32 %v2153, %v2158
    %2162 = vrot.lane.b32.xlu0 %v2160, 32
    %v2163 = vpop.permute.xlu0 %2162
    %v2165 = vadd.f32 %v2155, %v2163
    %v2166 = vtanh.pop %v2165
    %2168 = vrot.lane.b32.xlu0 %v2166, 32
    %v2169 = vpop.permute.xlu0 %2168
    %v2171 = vmul.f32 %v2153, %v2169
    %2173 = vrot.lane.b32.xlu0 %v2171, 64
    %v2174 = vpop.permute.xlu0 %2173
    %v2175 = vsel %vm93, %v2174, 0
    %2177 = vmatprep.subr.mxu0 0.0
    %2178 = vmatpush1.msra.mxu0 0.0
    %2179 = vmatprep.subr.mxu0 0.0
    %2180 = vmatpush1.msra.mxu0 0.0
    %2181 = vmatprep.subr.mxu0 0.0
    %2182 = vmatpush1.msra.mxu0 0.0
    %2183 = vmatprep.subr.mxu0 0.0
    %2184 = vmatpush1.msra.mxu0 0.0
    %2185 = vmatprep.subr.mxu0 0.0
    %2186 = vmatpush1.msra.mxu0 0.0
    %2187 = vmatprep.subr.mxu0 0.0
    %2188 = vmatpush1.msra.mxu0 0.0
    %2189 = vmatprep.subr.mxu0 0.0
    %2190 = vmatpush1.msra.mxu0 0.0
    %2191 = vmatprep.subr.mxu0 0.0
    %2192 = vmatpush1.msra.mxu0 0.0
    %2193 = vmatprep.subr.mxu0 0.0
    %2194 = vmatpush1.msra.mxu0 0.0
    %2195 = vmatprep.subr.mxu0 0.0
    %2196 = vmatpush1.msra.mxu0 0.0
    %2197 = vmatprep.subr.mxu0 0.0
    %2198 = vmatpush1.msra.mxu0 0.0
    %2199 = vmatprep.subr.mxu0 0.0
    %2200 = vmatpush1.msra.mxu0 0.0
    %2201 = vmatprep.subr.mxu0 0.0
    %2202 = vmatpush1.msra.mxu0 %v86
    %2203 = vmatprep.subr.mxu0 0.0
    %2204 = vmatpush1.msra.mxu0 %v85
    %2205 = vmatprep.subr.mxu0 0.0
    %2206 = vmatpush1.msra.mxu0 %v84
    %2207 = vmatprep.subr.mxu0 0.0
    %2208 = vmatpush1.msra.mxu0 %v83
    %2209 = vmatprep.subr.mxu0 0.0
    %2210 = vmatpush2.msra.mxu0 0.0
    %2211 = vmatprep.subr.mxu0 0.0
    %2212 = vmatpush2.msra.mxu0 0.0
    %2213 = vmatprep.subr.mxu0 0.0
    %2214 = vmatpush2.msra.mxu0 0.0
    %2215 = vmatprep.subr.mxu0 0.0
    %2216 = vmatpush2.msra.mxu0 0.0
    %2217 = vmatprep.subr.mxu0 0.0
    %2218 = vmatpush2.msra.mxu0 0.0
    %2219 = vmatprep.subr.mxu0 0.0
    %2220 = vmatpush2.msra.mxu0 0.0
    %2221 = vmatprep.subr.mxu0 0.0
    %2222 = vmatpush2.msra.mxu0 0.0
    %2223 = vmatprep.subr.mxu0 0.0
    %2224 = vmatpush2.msra.mxu0 0.0
    %2225 = vmatprep.subr.mxu0 0.0
    %2226 = vmatpush2.msra.mxu0 0.0
    %2227 = vmatprep.subr.mxu0 0.0
    %2228 = vmatpush2.msra.mxu0 0.0
    %2229 = vmatprep.subr.mxu0 0.0
    %2230 = vmatpush2.msra.mxu0 0.0
    %2231 = vmatprep.subr.mxu0 0.0
    %2232 = vmatpush2.msra.mxu0 0.0
    %2233 = vmatprep.subr.mxu0 0.0
    %2234 = vmatpush2.msra.mxu0 0.0
    %2235 = vmatprep.subr.mxu0 0.0
    %2236 = vmatpush2.msra.mxu0 0.0
    %2237 = vmatprep.subr.mxu0 0.0
    %2238 = vmatpush2.msra.mxu0 0.0
    %2239 = vmatprep.subr.mxu0 0.0
    %2240 = vmatpush2.msra.mxu0 0.0
    %2241 = vmatprep.mubr.f32.mxu0 0.0
    %2242 = vmatmul.mubr.f32.gmra.mxu0 %v2175
    %v2243 = vpop.f32.mrf.mxu0
    %v2244 = vadd.f32 %v82, %v2243
    %v2245 = vpop.f32.mrf.mxu0
    %2246 = vdwg.mxu0
    %v2247 = vxor.u32 %v2244, 2147483648
    %v2248 = vmul.f32 %v2247, 1.442695
    %v2249 = vpow.pop %v2248
    %v2250 = vadd.f32 %v2249, 1.0
    %v2251 = vrcp.pop %v2250
    %v2252 = vmul.f32 1.0, %v2251
    %v2253 = vsub.f32 1.0, %v2252
    %v2255 = vmul.f32 %v2253, %v2174
    %v2256 = vmul.f32 %v2252, %v81
    %v2257 = vadd.f32 %v2255, %v2256
    %v2258 = vsel %vm93, %v2257, 0.0
    %s2259 = scalar_lea.vmem [#allocation12], 22
    %2260 = vst [vmem:[%s2259] sm:$0x3] %v2258
    %s2261 = scalar_lea.vmem [#allocation4], 22
    %v2262 = vld [vmem:[%s2261] sm:$0x3]
    %v2264 = vsel %vm93, %v2257, 0
    %2266 = vmatprep.subr.mxu0 0.0
    %2267 = vmatpush1.msra.mxu0 0.0
    %2268 = vmatprep.subr.mxu0 0.0
    %2269 = vmatpush1.msra.mxu0 0.0
    %2270 = vmatprep.subr.mxu0 0.0
    %2271 = vmatpush1.msra.mxu0 0.0
    %2272 = vmatprep.subr.mxu0 0.0
    %2273 = vmatpush1.msra.mxu0 0.0
    %2274 = vmatprep.subr.mxu0 0.0
    %2275 = vmatpush1.msra.mxu0 0.0
    %2276 = vmatprep.subr.mxu0 0.0
    %2277 = vmatpush1.msra.mxu0 0.0
    %2278 = vmatprep.subr.mxu0 0.0
    %2279 = vmatpush1.msra.mxu0 0.0
    %2280 = vmatprep.subr.mxu0 0.0
    %2281 = vmatpush1.msra.mxu0 0.0
    %2282 = vmatprep.subr.mxu0 0.0
    %2283 = vmatpush1.msra.mxu0 0.0
    %2284 = vmatprep.subr.mxu0 0.0
    %2285 = vmatpush1.msra.mxu0 0.0
    %2286 = vmatprep.subr.mxu0 0.0
    %2287 = vmatpush1.msra.mxu0 0.0
    %2288 = vmatprep.subr.mxu0 0.0
    %2289 = vmatpush1.msra.mxu0 0.0
    %2290 = vmatprep.subr.mxu0 0.0
    %2291 = vmatpush1.msra.mxu0 %v90
    %2292 = vmatprep.subr.mxu0 0.0
    %2293 = vmatpush1.msra.mxu0 %v89
    %2294 = vmatprep.subr.mxu0 0.0
    %2295 = vmatpush1.msra.mxu0 %v88
    %2296 = vmatprep.subr.mxu0 0.0
    %2297 = vmatpush1.msra.mxu0 %v87
    %2298 = vmatprep.subr.mxu0 0.0
    %2299 = vmatpush2.msra.mxu0 0.0
    %2300 = vmatprep.subr.mxu0 0.0
    %2301 = vmatpush2.msra.mxu0 0.0
    %2302 = vmatprep.subr.mxu0 0.0
    %2303 = vmatpush2.msra.mxu0 0.0
    %2304 = vmatprep.subr.mxu0 0.0
    %2305 = vmatpush2.msra.mxu0 0.0
    %2306 = vmatprep.subr.mxu0 0.0
    %2307 = vmatpush2.msra.mxu0 0.0
    %2308 = vmatprep.subr.mxu0 0.0
    %2309 = vmatpush2.msra.mxu0 0.0
    %2310 = vmatprep.subr.mxu0 0.0
    %2311 = vmatpush2.msra.mxu0 0.0
    %2312 = vmatprep.subr.mxu0 0.0
    %2313 = vmatpush2.msra.mxu0 0.0
    %2314 = vmatprep.subr.mxu0 0.0
    %2315 = vmatpush2.msra.mxu0 0.0
    %2316 = vmatprep.subr.mxu0 0.0
    %2317 = vmatpush2.msra.mxu0 0.0
    %2318 = vmatprep.subr.mxu0 0.0
    %2319 = vmatpush2.msra.mxu0 0.0
    %2320 = vmatprep.subr.mxu0 0.0
    %2321 = vmatpush2.msra.mxu0 0.0
    %2322 = vmatprep.subr.mxu0 0.0
    %2323 = vmatpush2.msra.mxu0 0.0
    %2324 = vmatprep.subr.mxu0 0.0
    %2325 = vmatpush2.msra.mxu0 0.0
    %2326 = vmatprep.subr.mxu0 0.0
    %2327 = vmatpush2.msra.mxu0 0.0
    %2328 = vmatprep.subr.mxu0 0.0
    %2329 = vmatpush2.msra.mxu0 0.0
    %2330 = vmatprep.mubr.f32.mxu0 0.0
    %2331 = vmatmul.mubr.f32.gmra.mxu0 %v2264
    %v2332 = vpop.f32.mrf.mxu0
    %v2333 = vadd.f32 0.0, %v2332
    %v2334 = vpop.f32.mrf.mxu0
    %2335 = vdwg.mxu0
    %v2336 = vadd.f32 %v2262, %v2333
    %v2337 = vxor.u32 %v2336, 2147483648
    %v2338 = vmul.f32 %v2337, 1.442695
    %v2339 = vpow.pop %v2338
    %v2340 = vadd.f32 %v2339, 1.0
    %v2341 = vrcp.pop %v2340
    %v2342 = vmul.f32 1.0, %v2341
    %v2343 = vtanh.pop %v2336
    %v2344 = vmul.f32 %v2342, %v2165
    %2346 = vrot.lane.b32.xlu0 %v2343, 32
    %v2347 = vpop.permute.xlu0 %2346
    %v2349 = vmul.f32 %v2342, %v2347
    %2351 = vrot.lane.b32.xlu0 %v2349, 32
    %v2352 = vpop.permute.xlu0 %2351
    %v2354 = vadd.f32 %v2344, %v2352
    %v2355 = vtanh.pop %v2354
    %2357 = vrot.lane.b32.xlu0 %v2355, 32
    %v2358 = vpop.permute.xlu0 %2357
    %v2360 = vmul.f32 %v2342, %v2358
    %2362 = vrot.lane.b32.xlu0 %v2360, 64
    %v2363 = vpop.permute.xlu0 %2362
    %v2364 = vsel %vm93, %v2363, 0
    %2366 = vmatprep.subr.mxu0 0.0
    %2367 = vmatpush1.msra.mxu0 0.0
    %2368 = vmatprep.subr.mxu0 0.0
    %2369 = vmatpush1.msra.mxu0 0.0
    %2370 = vmatprep.subr.mxu0 0.0
    %2371 = vmatpush1.msra.mxu0 0.0
    %2372 = vmatprep.subr.mxu0 0.0
    %2373 = vmatpush1.msra.mxu0 0.0
    %2374 = vmatprep.subr.mxu0 0.0
    %2375 = vmatpush1.msra.mxu0 0.0
    %2376 = vmatprep.subr.mxu0 0.0
    %2377 = vmatpush1.msra.mxu0 0.0
    %2378 = vmatprep.subr.mxu0 0.0
    %2379 = vmatpush1.msra.mxu0 0.0
    %2380 = vmatprep.subr.mxu0 0.0
    %2381 = vmatpush1.msra.mxu0 0.0
    %2382 = vmatprep.subr.mxu0 0.0
    %2383 = vmatpush1.msra.mxu0 0.0
    %2384 = vmatprep.subr.mxu0 0.0
    %2385 = vmatpush1.msra.mxu0 0.0
    %2386 = vmatprep.subr.mxu0 0.0
    %2387 = vmatpush1.msra.mxu0 0.0
    %2388 = vmatprep.subr.mxu0 0.0
    %2389 = vmatpush1.msra.mxu0 0.0
    %2390 = vmatprep.subr.mxu0 0.0
    %2391 = vmatpush1.msra.mxu0 %v86
    %2392 = vmatprep.subr.mxu0 0.0
    %2393 = vmatpush1.msra.mxu0 %v85
    %2394 = vmatprep.subr.mxu0 0.0
    %2395 = vmatpush1.msra.mxu0 %v84
    %2396 = vmatprep.subr.mxu0 0.0
    %2397 = vmatpush1.msra.mxu0 %v83
    %2398 = vmatprep.subr.mxu0 0.0
    %2399 = vmatpush2.msra.mxu0 0.0
    %2400 = vmatprep.subr.mxu0 0.0
    %2401 = vmatpush2.msra.mxu0 0.0
    %2402 = vmatprep.subr.mxu0 0.0
    %2403 = vmatpush2.msra.mxu0 0.0
    %2404 = vmatprep.subr.mxu0 0.0
    %2405 = vmatpush2.msra.mxu0 0.0
    %2406 = vmatprep.subr.mxu0 0.0
    %2407 = vmatpush2.msra.mxu0 0.0
    %2408 = vmatprep.subr.mxu0 0.0
    %2409 = vmatpush2.msra.mxu0 0.0
    %2410 = vmatprep.subr.mxu0 0.0
    %2411 = vmatpush2.msra.mxu0 0.0
    %2412 = vmatprep.subr.mxu0 0.0
    %2413 = vmatpush2.msra.mxu0 0.0
    %2414 = vmatprep.subr.mxu0 0.0
    %2415 = vmatpush2.msra.mxu0 0.0
    %2416 = vmatprep.subr.mxu0 0.0
    %2417 = vmatpush2.msra.mxu0 0.0
    %2418 = vmatprep.subr.mxu0 0.0
    %2419 = vmatpush2.msra.mxu0 0.0
    %2420 = vmatprep.subr.mxu0 0.0
    %2421 = vmatpush2.msra.mxu0 0.0
    %2422 = vmatprep.subr.mxu0 0.0
    %2423 = vmatpush2.msra.mxu0 0.0
    %2424 = vmatprep.subr.mxu0 0.0
    %2425 = vmatpush2.msra.mxu0 0.0
    %2426 = vmatprep.subr.mxu0 0.0
    %2427 = vmatpush2.msra.mxu0 0.0
    %2428 = vmatprep.subr.mxu0 0.0
    %2429 = vmatpush2.msra.mxu0 0.0
    %2430 = vmatprep.mubr.f32.mxu0 0.0
    %2431 = vmatmul.mubr.f32.gmra.mxu0 %v2364
    %v2432 = vpop.f32.mrf.mxu0
    %v2433 = vadd.f32 %v82, %v2432
    %v2434 = vpop.f32.mrf.mxu0
    %2435 = vdwg.mxu0
    %v2436 = vxor.u32 %v2433, 2147483648
    %v2437 = vmul.f32 %v2436, 1.442695
    %v2438 = vpow.pop %v2437
    %v2439 = vadd.f32 %v2438, 1.0
    %v2440 = vrcp.pop %v2439
    %v2441 = vmul.f32 1.0, %v2440
    %v2442 = vsub.f32 1.0, %v2441
    %v2444 = vmul.f32 %v2442, %v2363
    %v2445 = vmul.f32 %v2441, %v81
    %v2446 = vadd.f32 %v2444, %v2445
    %v2447 = vsel %vm93, %v2446, 0.0
    %s2448 = scalar_lea.vmem [#allocation12], 24
    %2449 = vst [vmem:[%s2448] sm:$0x3] %v2447
    %s2450 = scalar_lea.vmem [#allocation4], 24
    %v2451 = vld [vmem:[%s2450] sm:$0x3]
    %v2453 = vsel %vm93, %v2446, 0
    %2455 = vmatprep.subr.mxu0 0.0
    %2456 = vmatpush1.msra.mxu0 0.0
    %2457 = vmatprep.subr.mxu0 0.0
    %2458 = vmatpush1.msra.mxu0 0.0
    %2459 = vmatprep.subr.mxu0 0.0
    %2460 = vmatpush1.msra.mxu0 0.0
    %2461 = vmatprep.subr.mxu0 0.0
    %2462 = vmatpush1.msra.mxu0 0.0
    %2463 = vmatprep.subr.mxu0 0.0
    %2464 = vmatpush1.msra.mxu0 0.0
    %2465 = vmatprep.subr.mxu0 0.0
    %2466 = vmatpush1.msra.mxu0 0.0
    %2467 = vmatprep.subr.mxu0 0.0
    %2468 = vmatpush1.msra.mxu0 0.0
    %2469 = vmatprep.subr.mxu0 0.0
    %2470 = vmatpush1.msra.mxu0 0.0
    %2471 = vmatprep.subr.mxu0 0.0
    %2472 = vmatpush1.msra.mxu0 0.0
    %2473 = vmatprep.subr.mxu0 0.0
    %2474 = vmatpush1.msra.mxu0 0.0
    %2475 = vmatprep.subr.mxu0 0.0
    %2476 = vmatpush1.msra.mxu0 0.0
    %2477 = vmatprep.subr.mxu0 0.0
    %2478 = vmatpush1.msra.mxu0 0.0
    %2479 = vmatprep.subr.mxu0 0.0
    %2480 = vmatpush1.msra.mxu0 %v90
    %2481 = vmatprep.subr.mxu0 0.0
    %2482 = vmatpush1.msra.mxu0 %v89
    %2483 = vmatprep.subr.mxu0 0.0
    %2484 = vmatpush1.msra.mxu0 %v88
    %2485 = vmatprep.subr.mxu0 0.0
    %2486 = vmatpush1.msra.mxu0 %v87
    %2487 = vmatprep.subr.mxu0 0.0
    %2488 = vmatpush2.msra.mxu0 0.0
    %2489 = vmatprep.subr.mxu0 0.0
    %2490 = vmatpush2.msra.mxu0 0.0
    %2491 = vmatprep.subr.mxu0 0.0
    %2492 = vmatpush2.msra.mxu0 0.0
    %2493 = vmatprep.subr.mxu0 0.0
    %2494 = vmatpush2.msra.mxu0 0.0
    %2495 = vmatprep.subr.mxu0 0.0
    %2496 = vmatpush2.msra.mxu0 0.0
    %2497 = vmatprep.subr.mxu0 0.0
    %2498 = vmatpush2.msra.mxu0 0.0
    %2499 = vmatprep.subr.mxu0 0.0
    %2500 = vmatpush2.msra.mxu0 0.0
    %2501 = vmatprep.subr.mxu0 0.0
    %2502 = vmatpush2.msra.mxu0 0.0
    %2503 = vmatprep.subr.mxu0 0.0
    %2504 = vmatpush2.msra.mxu0 0.0
    %2505 = vmatprep.subr.mxu0 0.0
    %2506 = vmatpush2.msra.mxu0 0.0
    %2507 = vmatprep.subr.mxu0 0.0
    %2508 = vmatpush2.msra.mxu0 0.0
    %2509 = vmatprep.subr.mxu0 0.0
    %2510 = vmatpush2.msra.mxu0 0.0
    %2511 = vmatprep.subr.mxu0 0.0
    %2512 = vmatpush2.msra.mxu0 0.0
    %2513 = vmatprep.subr.mxu0 0.0
    %2514 = vmatpush2.msra.mxu0 0.0
    %2515 = vmatprep.subr.mxu0 0.0
    %2516 = vmatpush2.msra.mxu0 0.0
    %2517 = vmatprep.subr.mxu0 0.0
    %2518 = vmatpush2.msra.mxu0 0.0
    %2519 = vmatprep.mubr.f32.mxu0 0.0
    %2520 = vmatmul.mubr.f32.gmra.mxu0 %v2453
    %v2521 = vpop.f32.mrf.mxu0
    %v2522 = vadd.f32 0.0, %v2521
    %v2523 = vpop.f32.mrf.mxu0
    %2524 = vdwg.mxu0
    %v2525 = vadd.f32 %v2451, %v2522
    %v2526 = vxor.u32 %v2525, 2147483648
    %v2527 = vmul.f32 %v2526, 1.442695
    %v2528 = vpow.pop %v2527
    %v2529 = vadd.f32 %v2528, 1.0
    %v2530 = vrcp.pop %v2529
    %v2531 = vmul.f32 1.0, %v2530
    %v2532 = vtanh.pop %v2525
    %v2533 = vmul.f32 %v2531, %v2354
    %2535 = vrot.lane.b32.xlu0 %v2532, 32
    %v2536 = vpop.permute.xlu0 %2535
    %v2538 = vmul.f32 %v2531, %v2536
    %2540 = vrot.lane.b32.xlu0 %v2538, 32
    %v2541 = vpop.permute.xlu0 %2540
    %v2543 = vadd.f32 %v2533, %v2541
    %v2544 = vtanh.pop %v2543
    %2546 = vrot.lane.b32.xlu0 %v2544, 32
    %v2547 = vpop.permute.xlu0 %2546
    %v2549 = vmul.f32 %v2531, %v2547
    %2551 = vrot.lane.b32.xlu0 %v2549, 64
    %v2552 = vpop.permute.xlu0 %2551
    %v2553 = vsel %vm93, %v2552, 0
    %2555 = vmatprep.subr.mxu0 0.0
    %2556 = vmatpush1.msra.mxu0 0.0
    %2557 = vmatprep.subr.mxu0 0.0
    %2558 = vmatpush1.msra.mxu0 0.0
    %2559 = vmatprep.subr.mxu0 0.0
    %2560 = vmatpush1.msra.mxu0 0.0
    %2561 = vmatprep.subr.mxu0 0.0
    %2562 = vmatpush1.msra.mxu0 0.0
    %2563 = vmatprep.subr.mxu0 0.0
    %2564 = vmatpush1.msra.mxu0 0.0
    %2565 = vmatprep.subr.mxu0 0.0
    %2566 = vmatpush1.msra.mxu0 0.0
    %2567 = vmatprep.subr.mxu0 0.0
    %2568 = vmatpush1.msra.mxu0 0.0
    %2569 = vmatprep.subr.mxu0 0.0
    %2570 = vmatpush1.msra.mxu0 0.0
    %2571 = vmatprep.subr.mxu0 0.0
    %2572 = vmatpush1.msra.mxu0 0.0
    %2573 = vmatprep.subr.mxu0 0.0
    %2574 = vmatpush1.msra.mxu0 0.0
    %2575 = vmatprep.subr.mxu0 0.0
    %2576 = vmatpush1.msra.mxu0 0.0
    %2577 = vmatprep.subr.mxu0 0.0
    %2578 = vmatpush1.msra.mxu0 0.0
    %2579 = vmatprep.subr.mxu0 0.0
    %2580 = vmatpush1.msra.mxu0 %v86
    %2581 = vmatprep.subr.mxu0 0.0
    %2582 = vmatpush1.msra.mxu0 %v85
    %2583 = vmatprep.subr.mxu0 0.0
    %2584 = vmatpush1.msra.mxu0 %v84
    %2585 = vmatprep.subr.mxu0 0.0
    %2586 = vmatpush1.msra.mxu0 %v83
    %2587 = vmatprep.subr.mxu0 0.0
    %2588 = vmatpush2.msra.mxu0 0.0
    %2589 = vmatprep.subr.mxu0 0.0
    %2590 = vmatpush2.msra.mxu0 0.0
    %2591 = vmatprep.subr.mxu0 0.0
    %2592 = vmatpush2.msra.mxu0 0.0
    %2593 = vmatprep.subr.mxu0 0.0
    %2594 = vmatpush2.msra.mxu0 0.0
    %2595 = vmatprep.subr.mxu0 0.0
    %2596 = vmatpush2.msra.mxu0 0.0
    %2597 = vmatprep.subr.mxu0 0.0
    %2598 = vmatpush2.msra.mxu0 0.0
    %2599 = vmatprep.subr.mxu0 0.0
    %2600 = vmatpush2.msra.mxu0 0.0
    %2601 = vmatprep.subr.mxu0 0.0
    %2602 = vmatpush2.msra.mxu0 0.0
    %2603 = vmatprep.subr.mxu0 0.0
    %2604 = vmatpush2.msra.mxu0 0.0
    %2605 = vmatprep.subr.mxu0 0.0
    %2606 = vmatpush2.msra.mxu0 0.0
    %2607 = vmatprep.subr.mxu0 0.0
    %2608 = vmatpush2.msra.mxu0 0.0
    %2609 = vmatprep.subr.mxu0 0.0
    %2610 = vmatpush2.msra.mxu0 0.0
    %2611 = vmatprep.subr.mxu0 0.0
    %2612 = vmatpush2.msra.mxu0 0.0
    %2613 = vmatprep.subr.mxu0 0.0
    %2614 = vmatpush2.msra.mxu0 0.0
    %2615 = vmatprep.subr.mxu0 0.0
    %2616 = vmatpush2.msra.mxu0 0.0
    %2617 = vmatprep.subr.mxu0 0.0
    %2618 = vmatpush2.msra.mxu0 0.0
    %2619 = vmatprep.mubr.f32.mxu0 0.0
    %2620 = vmatmul.mubr.f32.gmra.mxu0 %v2553
    %v2621 = vpop.f32.mrf.mxu0
    %v2622 = vadd.f32 %v82, %v2621
    %v2623 = vpop.f32.mrf.mxu0
    %2624 = vdwg.mxu0
    %v2625 = vxor.u32 %v2622, 2147483648
    %v2626 = vmul.f32 %v2625, 1.442695
    %v2627 = vpow.pop %v2626
    %v2628 = vadd.f32 %v2627, 1.0
    %v2629 = vrcp.pop %v2628
    %v2630 = vmul.f32 1.0, %v2629
    %v2631 = vsub.f32 1.0, %v2630
    %v2633 = vmul.f32 %v2631, %v2552
    %v2634 = vmul.f32 %v2630, %v81
    %v2635 = vadd.f32 %v2633, %v2634
    %v2636 = vsel %vm93, %v2635, 0.0
    %s2637 = scalar_lea.vmem [#allocation12], 26
    %2638 = vst [vmem:[%s2637] sm:$0x3] %v2636
    %s2639 = scalar_lea.vmem [#allocation4], 26
    %v2640 = vld [vmem:[%s2639] sm:$0x3]
    %v2642 = vsel %vm93, %v2635, 0
    %2644 = vmatprep.subr.mxu0 0.0
    %2645 = vmatpush1.msra.mxu0 0.0
    %2646 = vmatprep.subr.mxu0 0.0
    %2647 = vmatpush1.msra.mxu0 0.0
    %2648 = vmatprep.subr.mxu0 0.0
    %2649 = vmatpush1.msra.mxu0 0.0
    %2650 = vmatprep.subr.mxu0 0.0
    %2651 = vmatpush1.msra.mxu0 0.0
    %2652 = vmatprep.subr.mxu0 0.0
    %2653 = vmatpush1.msra.mxu0 0.0
    %2654 = vmatprep.subr.mxu0 0.0
    %2655 = vmatpush1.msra.mxu0 0.0
    %2656 = vmatprep.subr.mxu0 0.0
    %2657 = vmatpush1.msra.mxu0 0.0
    %2658 = vmatprep.subr.mxu0 0.0
    %2659 = vmatpush1.msra.mxu0 0.0
    %2660 = vmatprep.subr.mxu0 0.0
    %2661 = vmatpush1.msra.mxu0 0.0
    %2662 = vmatprep.subr.mxu0 0.0
    %2663 = vmatpush1.msra.mxu0 0.0
    %2664 = vmatprep.subr.mxu0 0.0
    %2665 = vmatpush1.msra.mxu0 0.0
    %2666 = vmatprep.subr.mxu0 0.0
    %2667 = vmatpush1.msra.mxu0 0.0
    %2668 = vmatprep.subr.mxu0 0.0
    %2669 = vmatpush1.msra.mxu0 %v90
    %2670 = vmatprep.subr.mxu0 0.0
    %2671 = vmatpush1.msra.mxu0 %v89
    %2672 = vmatprep.subr.mxu0 0.0
    %2673 = vmatpush1.msra.mxu0 %v88
    %2674 = vmatprep.subr.mxu0 0.0
    %2675 = vmatpush1.msra.mxu0 %v87
    %2676 = vmatprep.subr.mxu0 0.0
    %2677 = vmatpush2.msra.mxu0 0.0
    %2678 = vmatprep.subr.mxu0 0.0
    %2679 = vmatpush2.msra.mxu0 0.0
    %2680 = vmatprep.subr.mxu0 0.0
    %2681 = vmatpush2.msra.mxu0 0.0
    %2682 = vmatprep.subr.mxu0 0.0
    %2683 = vmatpush2.msra.mxu0 0.0
    %2684 = vmatprep.subr.mxu0 0.0
    %2685 = vmatpush2.msra.mxu0 0.0
    %2686 = vmatprep.subr.mxu0 0.0
    %2687 = vmatpush2.msra.mxu0 0.0
    %2688 = vmatprep.subr.mxu0 0.0
    %2689 = vmatpush2.msra.mxu0 0.0
    %2690 = vmatprep.subr.mxu0 0.0
    %2691 = vmatpush2.msra.mxu0 0.0
    %2692 = vmatprep.subr.mxu0 0.0
    %2693 = vmatpush2.msra.mxu0 0.0
    %2694 = vmatprep.subr.mxu0 0.0
    %2695 = vmatpush2.msra.mxu0 0.0
    %2696 = vmatprep.subr.mxu0 0.0
    %2697 = vmatpush2.msra.mxu0 0.0
    %2698 = vmatprep.subr.mxu0 0.0
    %2699 = vmatpush2.msra.mxu0 0.0
    %2700 = vmatprep.subr.mxu0 0.0
    %2701 = vmatpush2.msra.mxu0 0.0
    %2702 = vmatprep.subr.mxu0 0.0
    %2703 = vmatpush2.msra.mxu0 0.0
    %2704 = vmatprep.subr.mxu0 0.0
    %2705 = vmatpush2.msra.mxu0 0.0
    %2706 = vmatprep.subr.mxu0 0.0
    %2707 = vmatpush2.msra.mxu0 0.0
    %2708 = vmatprep.mubr.f32.mxu0 0.0
    %2709 = vmatmul.mubr.f32.gmra.mxu0 %v2642
    %v2710 = vpop.f32.mrf.mxu0
    %v2711 = vadd.f32 0.0, %v2710
    %v2712 = vpop.f32.mrf.mxu0
    %2713 = vdwg.mxu0
    %v2714 = vadd.f32 %v2640, %v2711
    %v2715 = vxor.u32 %v2714, 2147483648
    %v2716 = vmul.f32 %v2715, 1.442695
    %v2717 = vpow.pop %v2716
    %v2718 = vadd.f32 %v2717, 1.0
    %v2719 = vrcp.pop %v2718
    %v2720 = vmul.f32 1.0, %v2719
    %v2721 = vtanh.pop %v2714
    %v2722 = vmul.f32 %v2720, %v2543
    %2724 = vrot.lane.b32.xlu0 %v2721, 32
    %v2725 = vpop.permute.xlu0 %2724
    %v2727 = vmul.f32 %v2720, %v2725
    %2729 = vrot.lane.b32.xlu0 %v2727, 32
    %v2730 = vpop.permute.xlu0 %2729
    %v2732 = vadd.f32 %v2722, %v2730
    %v2733 = vtanh.pop %v2732
    %2735 = vrot.lane.b32.xlu0 %v2733, 32
    %v2736 = vpop.permute.xlu0 %2735
    %v2738 = vmul.f32 %v2720, %v2736
    %2740 = vrot.lane.b32.xlu0 %v2738, 64
    %v2741 = vpop.permute.xlu0 %2740
    %v2742 = vsel %vm93, %v2741, 0
    %2744 = vmatprep.subr.mxu0 0.0
    %2745 = vmatpush1.msra.mxu0 0.0
    %2746 = vmatprep.subr.mxu0 0.0
    %2747 = vmatpush1.msra.mxu0 0.0
    %2748 = vmatprep.subr.mxu0 0.0
    %2749 = vmatpush1.msra.mxu0 0.0
    %2750 = vmatprep.subr.mxu0 0.0
    %2751 = vmatpush1.msra.mxu0 0.0
    %2752 = vmatprep.subr.mxu0 0.0
    %2753 = vmatpush1.msra.mxu0 0.0
    %2754 = vmatprep.subr.mxu0 0.0
    %2755 = vmatpush1.msra.mxu0 0.0
    %2756 = vmatprep.subr.mxu0 0.0
    %2757 = vmatpush1.msra.mxu0 0.0
    %2758 = vmatprep.subr.mxu0 0.0
    %2759 = vmatpush1.msra.mxu0 0.0
    %2760 = vmatprep.subr.mxu0 0.0
    %2761 = vmatpush1.msra.mxu0 0.0
    %2762 = vmatprep.subr.mxu0 0.0
    %2763 = vmatpush1.msra.mxu0 0.0
    %2764 = vmatprep.subr.mxu0 0.0
    %2765 = vmatpush1.msra.mxu0 0.0
    %2766 = vmatprep.subr.mxu0 0.0
    %2767 = vmatpush1.msra.mxu0 0.0
    %2768 = vmatprep.subr.mxu0 0.0
    %2769 = vmatpush1.msra.mxu0 %v86
    %2770 = vmatprep.subr.mxu0 0.0
    %2771 = vmatpush1.msra.mxu0 %v85
    %2772 = vmatprep.subr.mxu0 0.0
    %2773 = vmatpush1.msra.mxu0 %v84
    %2774 = vmatprep.subr.mxu0 0.0
    %2775 = vmatpush1.msra.mxu0 %v83
    %2776 = vmatprep.subr.mxu0 0.0
    %2777 = vmatpush2.msra.mxu0 0.0
    %2778 = vmatprep.subr.mxu0 0.0
    %2779 = vmatpush2.msra.mxu0 0.0
    %2780 = vmatprep.subr.mxu0 0.0
    %2781 = vmatpush2.msra.mxu0 0.0
    %2782 = vmatprep.subr.mxu0 0.0
    %2783 = vmatpush2.msra.mxu0 0.0
    %2784 = vmatprep.subr.mxu0 0.0
    %2785 = vmatpush2.msra.mxu0 0.0
    %2786 = vmatprep.subr.mxu0 0.0
    %2787 = vmatpush2.msra.mxu0 0.0
    %2788 = vmatprep.subr.mxu0 0.0
    %2789 = vmatpush2.msra.mxu0 0.0
    %2790 = vmatprep.subr.mxu0 0.0
    %2791 = vmatpush2.msra.mxu0 0.0
    %2792 = vmatprep.subr.mxu0 0.0
    %2793 = vmatpush2.msra.mxu0 0.0
    %2794 = vmatprep.subr.mxu0 0.0
    %2795 = vmatpush2.msra.mxu0 0.0
    %2796 = vmatprep.subr.mxu0 0.0
    %2797 = vmatpush2.msra.mxu0 0.0
    %2798 = vmatprep.subr.mxu0 0.0
    %2799 = vmatpush2.msra.mxu0 0.0
    %2800 = vmatprep.subr.mxu0 0.0
    %2801 = vmatpush2.msra.mxu0 0.0
    %2802 = vmatprep.subr.mxu0 0.0
    %2803 = vmatpush2.msra.mxu0 0.0
    %2804 = vmatprep.subr.mxu0 0.0
    %2805 = vmatpush2.msra.mxu0 0.0
    %2806 = vmatprep.subr.mxu0 0.0
    %2807 = vmatpush2.msra.mxu0 0.0
    %2808 = vmatprep.mubr.f32.mxu0 0.0
    %2809 = vmatmul.mubr.f32.gmra.mxu0 %v2742
    %v2810 = vpop.f32.mrf.mxu0
    %v2811 = vadd.f32 %v82, %v2810
    %v2812 = vpop.f32.mrf.mxu0
    %2813 = vdwg.mxu0
    %v2814 = vxor.u32 %v2811, 2147483648
    %v2815 = vmul.f32 %v2814, 1.442695
    %v2816 = vpow.pop %v2815
    %v2817 = vadd.f32 %v2816, 1.0
    %v2818 = vrcp.pop %v2817
    %v2819 = vmul.f32 1.0, %v2818
    %v2820 = vsub.f32 1.0, %v2819
    %v2822 = vmul.f32 %v2820, %v2741
    %v2823 = vmul.f32 %v2819, %v81
    %v2824 = vadd.f32 %v2822, %v2823
    %v2825 = vsel %vm93, %v2824, 0.0
    %s2826 = scalar_lea.vmem [#allocation12], 28
    %2827 = vst [vmem:[%s2826] sm:$0x3] %v2825
    %s2828 = scalar_lea.vmem [#allocation4], 28
    %v2829 = vld [vmem:[%s2828] sm:$0x3]
    %v2831 = vsel %vm93, %v2824, 0
    %2833 = vmatprep.subr.mxu0 0.0
    %2834 = vmatpush1.msra.mxu0 0.0
    %2835 = vmatprep.subr.mxu0 0.0
    %2836 = vmatpush1.msra.mxu0 0.0
    %2837 = vmatprep.subr.mxu0 0.0
    %2838 = vmatpush1.msra.mxu0 0.0
    %2839 = vmatprep.subr.mxu0 0.0
    %2840 = vmatpush1.msra.mxu0 0.0
    %2841 = vmatprep.subr.mxu0 0.0
    %2842 = vmatpush1.msra.mxu0 0.0
    %2843 = vmatprep.subr.mxu0 0.0
    %2844 = vmatpush1.msra.mxu0 0.0
    %2845 = vmatprep.subr.mxu0 0.0
    %2846 = vmatpush1.msra.mxu0 0.0
    %2847 = vmatprep.subr.mxu0 0.0
    %2848 = vmatpush1.msra.mxu0 0.0
    %2849 = vmatprep.subr.mxu0 0.0
    %2850 = vmatpush1.msra.mxu0 0.0
    %2851 = vmatprep.subr.mxu0 0.0
    %2852 = vmatpush1.msra.mxu0 0.0
    %2853 = vmatprep.subr.mxu0 0.0
    %2854 = vmatpush1.msra.mxu0 0.0
    %2855 = vmatprep.subr.mxu0 0.0
    %2856 = vmatpush1.msra.mxu0 0.0
    %2857 = vmatprep.subr.mxu0 0.0
    %2858 = vmatpush1.msra.mxu0 %v90
    %2859 = vmatprep.subr.mxu0 0.0
    %2860 = vmatpush1.msra.mxu0 %v89
    %2861 = vmatprep.subr.mxu0 0.0
    %2862 = vmatpush1.msra.mxu0 %v88
    %2863 = vmatprep.subr.mxu0 0.0
    %2864 = vmatpush1.msra.mxu0 %v87
    %2865 = vmatprep.subr.mxu0 0.0
    %2866 = vmatpush2.msra.mxu0 0.0
    %2867 = vmatprep.subr.mxu0 0.0
    %2868 = vmatpush2.msra.mxu0 0.0
    %2869 = vmatprep.subr.mxu0 0.0
    %2870 = vmatpush2.msra.mxu0 0.0
    %2871 = vmatprep.subr.mxu0 0.0
    %2872 = vmatpush2.msra.mxu0 0.0
    %2873 = vmatprep.subr.mxu0 0.0
    %2874 = vmatpush2.msra.mxu0 0.0
    %2875 = vmatprep.subr.mxu0 0.0
    %2876 = vmatpush2.msra.mxu0 0.0
    %2877 = vmatprep.subr.mxu0 0.0
    %2878 = vmatpush2.msra.mxu0 0.0
    %2879 = vmatprep.subr.mxu0 0.0
    %2880 = vmatpush2.msra.mxu0 0.0
    %2881 = vmatprep.subr.mxu0 0.0
    %2882 = vmatpush2.msra.mxu0 0.0
    %2883 = vmatprep.subr.mxu0 0.0
    %2884 = vmatpush2.msra.mxu0 0.0
    %2885 = vmatprep.subr.mxu0 0.0
    %2886 = vmatpush2.msra.mxu0 0.0
    %2887 = vmatprep.subr.mxu0 0.0
    %2888 = vmatpush2.msra.mxu0 0.0
    %2889 = vmatprep.subr.mxu0 0.0
    %2890 = vmatpush2.msra.mxu0 0.0
    %2891 = vmatprep.subr.mxu0 0.0
    %2892 = vmatpush2.msra.mxu0 0.0
    %2893 = vmatprep.subr.mxu0 0.0
    %2894 = vmatpush2.msra.mxu0 0.0
    %2895 = vmatprep.subr.mxu0 0.0
    %2896 = vmatpush2.msra.mxu0 0.0
    %2897 = vmatprep.mubr.f32.mxu0 0.0
    %2898 = vmatmul.mubr.f32.gmra.mxu0 %v2831
    %v2899 = vpop.f32.mrf.mxu0
    %v2900 = vadd.f32 0.0, %v2899
    %v2901 = vpop.f32.mrf.mxu0
    %2902 = vdwg.mxu0
    %v2903 = vadd.f32 %v2829, %v2900
    %v2904 = vxor.u32 %v2903, 2147483648
    %v2905 = vmul.f32 %v2904, 1.442695
    %v2906 = vpow.pop %v2905
    %v2907 = vadd.f32 %v2906, 1.0
    %v2908 = vrcp.pop %v2907
    %v2909 = vmul.f32 1.0, %v2908
    %v2910 = vtanh.pop %v2903
    %v2911 = vmul.f32 %v2909, %v2732
    %2913 = vrot.lane.b32.xlu0 %v2910, 32
    %v2914 = vpop.permute.xlu0 %2913
    %v2916 = vmul.f32 %v2909, %v2914
    %2918 = vrot.lane.b32.xlu0 %v2916, 32
    %v2919 = vpop.permute.xlu0 %2918
    %v2921 = vadd.f32 %v2911, %v2919
    %v2922 = vtanh.pop %v2921
    %2924 = vrot.lane.b32.xlu0 %v2922, 32
    %v2925 = vpop.permute.xlu0 %2924
    %v2927 = vmul.f32 %v2909, %v2925
    %2929 = vrot.lane.b32.xlu0 %v2927, 64
    %v2930 = vpop.permute.xlu0 %2929
    %v2931 = vsel %vm93, %v2930, 0
    %2933 = vmatprep.subr.mxu0 0.0
    %2934 = vmatpush1.msra.mxu0 0.0
    %2935 = vmatprep.subr.mxu0 0.0
    %2936 = vmatpush1.msra.mxu0 0.0
    %2937 = vmatprep.subr.mxu0 0.0
    %2938 = vmatpush1.msra.mxu0 0.0
    %2939 = vmatprep.subr.mxu0 0.0
    %2940 = vmatpush1.msra.mxu0 0.0
    %2941 = vmatprep.subr.mxu0 0.0
    %2942 = vmatpush1.msra.mxu0 0.0
    %2943 = vmatprep.subr.mxu0 0.0
    %2944 = vmatpush1.msra.mxu0 0.0
    %2945 = vmatprep.subr.mxu0 0.0
    %2946 = vmatpush1.msra.mxu0 0.0
    %2947 = vmatprep.subr.mxu0 0.0
    %2948 = vmatpush1.msra.mxu0 0.0
    %2949 = vmatprep.subr.mxu0 0.0
    %2950 = vmatpush1.msra.mxu0 0.0
    %2951 = vmatprep.subr.mxu0 0.0
    %2952 = vmatpush1.msra.mxu0 0.0
    %2953 = vmatprep.subr.mxu0 0.0
    %2954 = vmatpush1.msra.mxu0 0.0
    %2955 = vmatprep.subr.mxu0 0.0
    %2956 = vmatpush1.msra.mxu0 0.0
    %2957 = vmatprep.subr.mxu0 0.0
    %2958 = vmatpush1.msra.mxu0 %v86
    %2959 = vmatprep.subr.mxu0 0.0
    %2960 = vmatpush1.msra.mxu0 %v85
    %2961 = vmatprep.subr.mxu0 0.0
    %2962 = vmatpush1.msra.mxu0 %v84
    %2963 = vmatprep.subr.mxu0 0.0
    %2964 = vmatpush1.msra.mxu0 %v83
    %2965 = vmatprep.subr.mxu0 0.0
    %2966 = vmatpush2.msra.mxu0 0.0
    %2967 = vmatprep.subr.mxu0 0.0
    %2968 = vmatpush2.msra.mxu0 0.0
    %2969 = vmatprep.subr.mxu0 0.0
    %2970 = vmatpush2.msra.mxu0 0.0
    %2971 = vmatprep.subr.mxu0 0.0
    %2972 = vmatpush2.msra.mxu0 0.0
    %2973 = vmatprep.subr.mxu0 0.0
    %2974 = vmatpush2.msra.mxu0 0.0
    %2975 = vmatprep.subr.mxu0 0.0
    %2976 = vmatpush2.msra.mxu0 0.0
    %2977 = vmatprep.subr.mxu0 0.0
    %2978 = vmatpush2.msra.mxu0 0.0
    %2979 = vmatprep.subr.mxu0 0.0
    %2980 = vmatpush2.msra.mxu0 0.0
    %2981 = vmatprep.subr.mxu0 0.0
    %2982 = vmatpush2.msra.mxu0 0.0
    %2983 = vmatprep.subr.mxu0 0.0
    %2984 = vmatpush2.msra.mxu0 0.0
    %2985 = vmatprep.subr.mxu0 0.0
    %2986 = vmatpush2.msra.mxu0 0.0
    %2987 = vmatprep.subr.mxu0 0.0
    %2988 = vmatpush2.msra.mxu0 0.0
    %2989 = vmatprep.subr.mxu0 0.0
    %2990 = vmatpush2.msra.mxu0 0.0
    %2991 = vmatprep.subr.mxu0 0.0
    %2992 = vmatpush2.msra.mxu0 0.0
    %2993 = vmatprep.subr.mxu0 0.0
    %2994 = vmatpush2.msra.mxu0 0.0
    %2995 = vmatprep.subr.mxu0 0.0
    %2996 = vmatpush2.msra.mxu0 0.0
    %2997 = vmatprep.mubr.f32.mxu0 0.0
    %2998 = vmatmul.mubr.f32.gmra.mxu0 %v2931
    %v2999 = vpop.f32.mrf.mxu0
    %v3000 = vadd.f32 %v82, %v2999
    %v3001 = vpop.f32.mrf.mxu0
    %3002 = vdwg.mxu0
    %v3003 = vxor.u32 %v3000, 2147483648
    %v3004 = vmul.f32 %v3003, 1.442695
    %v3005 = vpow.pop %v3004
    %v3006 = vadd.f32 %v3005, 1.0
    %v3007 = vrcp.pop %v3006
    %v3008 = vmul.f32 1.0, %v3007
    %v3009 = vsub.f32 1.0, %v3008
    %v3011 = vmul.f32 %v3009, %v2930
    %v3012 = vmul.f32 %v3008, %v81
    %v3013 = vadd.f32 %v3011, %v3012
    %v3014 = vsel %vm93, %v3013, 0.0
    %s3015 = scalar_lea.vmem [#allocation12], 30
    %3016 = vst [vmem:[%s3015] sm:$0x3] %v3014
    %s3017 = scalar_lea.vmem [#allocation4], 30
    %v3018 = vld [vmem:[%s3017] sm:$0x3]
    %v3020 = vsel %vm93, %v3013, 0
    %3022 = vmatprep.subr.mxu0 0.0
    %3023 = vmatpush1.msra.mxu0 0.0
    %3024 = vmatprep.subr.mxu0 0.0
    %3025 = vmatpush1.msra.mxu0 0.0
    %3026 = vmatprep.subr.mxu0 0.0
    %3027 = vmatpush1.msra.mxu0 0.0
    %3028 = vmatprep.subr.mxu0 0.0
    %3029 = vmatpush1.msra.mxu0 0.0
    %3030 = vmatprep.subr.mxu0 0.0
    %3031 = vmatpush1.msra.mxu0 0.0
    %3032 = vmatprep.subr.mxu0 0.0
    %3033 = vmatpush1.msra.mxu0 0.0
    %3034 = vmatprep.subr.mxu0 0.0
    %3035 = vmatpush1.msra.mxu0 0.0
    %3036 = vmatprep.subr.mxu0 0.0
    %3037 = vmatpush1.msra.mxu0 0.0
    %3038 = vmatprep.subr.mxu0 0.0
    %3039 = vmatpush1.msra.mxu0 0.0
    %3040 = vmatprep.subr.mxu0 0.0
    %3041 = vmatpush1.msra.mxu0 0.0
    %3042 = vmatprep.subr.mxu0 0.0
    %3043 = vmatpush1.msra.mxu0 0.0
    %3044 = vmatprep.subr.mxu0 0.0
    %3045 = vmatpush1.msra.mxu0 0.0
    %3046 = vmatprep.subr.mxu0 0.0
    %3047 = vmatpush1.msra.mxu0 %v90
    %3048 = vmatprep.subr.mxu0 0.0
    %3049 = vmatpush1.msra.mxu0 %v89
    %3050 = vmatprep.subr.mxu0 0.0
    %3051 = vmatpush1.msra.mxu0 %v88
    %3052 = vmatprep.subr.mxu0 0.0
    %3053 = vmatpush1.msra.mxu0 %v87
    %3054 = vmatprep.subr.mxu0 0.0
    %3055 = vmatpush2.msra.mxu0 0.0
    %3056 = vmatprep.subr.mxu0 0.0
    %3057 = vmatpush2.msra.mxu0 0.0
    %3058 = vmatprep.subr.mxu0 0.0
    %3059 = vmatpush2.msra.mxu0 0.0
    %3060 = vmatprep.subr.mxu0 0.0
    %3061 = vmatpush2.msra.mxu0 0.0
    %3062 = vmatprep.subr.mxu0 0.0
    %3063 = vmatpush2.msra.mxu0 0.0
    %3064 = vmatprep.subr.mxu0 0.0
    %3065 = vmatpush2.msra.mxu0 0.0
    %3066 = vmatprep.subr.mxu0 0.0
    %3067 = vmatpush2.msra.mxu0 0.0
    %3068 = vmatprep.subr.mxu0 0.0
    %3069 = vmatpush2.msra.mxu0 0.0
    %3070 = vmatprep.subr.mxu0 0.0
    %3071 = vmatpush2.msra.mxu0 0.0
    %3072 = vmatprep.subr.mxu0 0.0
    %3073 = vmatpush2.msra.mxu0 0.0
    %3074 = vmatprep.subr.mxu0 0.0
    %3075 = vmatpush2.msra.mxu0 0.0
    %3076 = vmatprep.subr.mxu0 0.0
    %3077 = vmatpush2.msra.mxu0 0.0
    %3078 = vmatprep.subr.mxu0 0.0
    %3079 = vmatpush2.msra.mxu0 0.0
    %3080 = vmatprep.subr.mxu0 0.0
    %3081 = vmatpush2.msra.mxu0 0.0
    %3082 = vmatprep.subr.mxu0 0.0
    %3083 = vmatpush2.msra.mxu0 0.0
    %3084 = vmatprep.subr.mxu0 0.0
    %3085 = vmatpush2.msra.mxu0 0.0
    %3086 = vmatprep.mubr.f32.mxu0 0.0
    %3087 = vmatmul.mubr.f32.gmra.mxu0 %v3020
    %v3088 = vpop.f32.mrf.mxu0
    %v3089 = vadd.f32 0.0, %v3088
    %v3090 = vpop.f32.mrf.mxu0
    %3091 = vdwg.mxu0
    %v3092 = vadd.f32 %v3018, %v3089
    %v3093 = vxor.u32 %v3092, 2147483648
    %v3094 = vmul.f32 %v3093, 1.442695
    %v3095 = vpow.pop %v3094
    %v3096 = vadd.f32 %v3095, 1.0
    %v3097 = vrcp.pop %v3096
    %v3098 = vmul.f32 1.0, %v3097
    %v3099 = vtanh.pop %v3092
    %v3100 = vmul.f32 %v3098, %v2921
    %3102 = vrot.lane.b32.xlu0 %v3099, 32
    %v3103 = vpop.permute.xlu0 %3102
    %v3105 = vmul.f32 %v3098, %v3103
    %3107 = vrot.lane.b32.xlu0 %v3105, 32
    %v3108 = vpop.permute.xlu0 %3107
    %v3110 = vadd.f32 %v3100, %v3108
    %v3111 = vtanh.pop %v3110
    %3113 = vrot.lane.b32.xlu0 %v3111, 32
    %v3114 = vpop.permute.xlu0 %3113
    %v3116 = vmul.f32 %v3098, %v3114
    %3118 = vrot.lane.b32.xlu0 %v3116, 64
    %v3119 = vpop.permute.xlu0 %3118
    %vm3121 = vcmask 254976
    %3122 = vst.msk [vmem:[#allocation2] sm:$0x3] %vm3121, %v3119
    %3124 = vrot.lane.b32.xlu0 %v3110, 96
    %v3125 = vpop.permute.xlu0 %3124
    %3127 = vst.msk [vmem:[#allocation3] sm:$0x3] %vm3121, %v3125
    // Predicated region
    $region42: #{tpu_custom_call.1} parent=1 // pred_check
      _
    $region43: #{tpu_custom_call.1} parent=1 // pred_check_branch
      %3129 = sbr.rel (0) target = $region45
    $region44: #{tpu_custom_call.1} parent=1 // pred_region
      %s3131 = ssub.s32 512, 512
      %3132 = vsyncadd [#allocation6], %s3131
      %s3133 = sshll.u32 [#allocation12], 4
      %s3134 = int_to_ptr.vmem [resolvable:$true] %s3133
      %3139 = dma.vmem_to_hbm [thread:$0]  %s3134, 512, %s5, [#allocation6], 32, 32, 2
    $region45: #{tpu_custom_call.1} parent=1 // pred_fallthru
      _
    // Predicated region
    $region46: #{tpu_custom_call.1} parent=1 // pred_check
      _
    $region47: #{tpu_custom_call.1} parent=1 // pred_check_branch
      %3141 = sbr.rel (0) target = $region49
    $region48: #{tpu_custom_call.1} parent=1 // pred_region
      %3142 = dma.done [#allocation6], 512
    $region49: #{tpu_custom_call.1} parent=1 // pred_fallthru
      _
    %3143 = vsyncpa [#allocation5], 1
    %3144 = vsyncpa [#allocation8], 1
    %3145 = vsyncpa [#allocation11], 1
    %3146 = vsyncpa [#allocation6], 1

</llo_original>
